<compile_context>
chip_gen: v5e
topology: v5e:2x2
jax: 0.10.0
libtpu: 0.0.40
codegen_flags: <defaults>
</compile_context>

<pallas_src>
import math

import jax
import jax.numpy as jnp
from jax import lax
from jax.experimental import pallas as pl
from jax.experimental.pallas import tpu as pltpu


# ----------------------------------------------------------------------------
# helpers
# ----------------------------------------------------------------------------
def _pick_chunk(S, cap):
    """Largest chunk <= cap that divides S and keeps the sublane dim tiling-friendly."""
    if S <= cap:
        return S
    for ts in range(cap, 7, -1):
        if ts % 8 == 0 and S % ts == 0:
            return ts
    # TODO(synk): ragged S with no multiple-of-8 divisor falls back to one full-S chunk;
    # pad S upstream for very long ragged sequences to bound VMEM.
    return S


# ----------------------------------------------------------------------------
# Kernel 1: hoisted LSTM input projection (both directions, one fused bf16 slab)
# ----------------------------------------------------------------------------
def _proj_kernel(hs_ref, w_ref, b_ref, xg_ref):
    """One (batch, seq-chunk) tile: xg = hs @ [W_ih_f^T | W_ih_b^T] + (b_ih + b_hh)."""
    x = hs_ref[0].astype(w_ref.dtype)                         # fp32 -> bf16 cast fused in-kernel
    xg = jnp.dot(x, w_ref[...], preferred_element_type=jnp.float32) + b_ref[...]
    xg_ref[0] = xg.astype(xg_ref.dtype)                       # single wide store, bf16 fast path


# ----------------------------------------------------------------------------
# Kernel 2: fused bidirectional recurrence, emitting head statistics
# ----------------------------------------------------------------------------
def _make_rec_kernel(H, ts_b, compute_dtype):
    G = 4 * H

    def rec_kernel(xgf_ref, xgb_ref, whh_ref, out_ref,
                   h2_ref, cf_ref, cb_ref, s2_ref, cap_ref):
        step = pl.program_id(0)

        @pl.when(step == 0)
        def _init():
            h2_ref[...] = jnp.zeros_like(h2_ref)
            cf_ref[...] = jnp.zeros_like(cf_ref)
            cb_ref[...] = jnp.zeros_like(cb_ref)
            s2_ref[...] = jnp.zeros_like(s2_ref)

        w_bd = whh_ref[...]                       # [2H, 8H] block-diag W_hh, hoisted out of loop
        h2 = h2_ref[...]
        c_f = cf_ref[...]
        c_b = cb_ref[...]
        s2 = s2_ref[...]
        h2_first = h2

        def cell(g, c):
            # PyTorch gate order: i, f, g, o
            i = jax.nn.sigmoid(g[:, 0:H])
            f = jax.nn.sigmoid(g[:, H:2 * H])
            gg = jnp.tanh(g[:, 2 * H:3 * H])
            o = jax.nn.sigmoid(g[:, 3 * H:4 * H])
            c_new = f * c + i * gg
            return o * jnp.tanh(c_new), c_new

        # fused fwd/bwd recurrence: one bf16 block-diag MXU push + gate math per timestep.
        for k in range(ts_b):
            ga = jnp.dot(h2.astype(compute_dtype), w_bd,
                         preferred_element_type=jnp.float32)             # [B, 8H]
            g_f = ga[:, :G] + xgf_ref[:, k, :].astype(jnp.float32)
            g_b = ga[:, G:] + xgb_ref[:, ts_b - 1 - k, :].astype(jnp.float32)
            h_f, c_f = cell(g_f, c_f)
            h_b, c_b = cell(g_b, c_b)
            h2 = jnp.concatenate([h_f, h_b], axis=-1)                    # [B, 2H]
            s2 = s2 + h2
            if k == 0:
                h2_first = h2          # [h_fwd[t0 of chunk] | h_bwd[t_last of chunk]]

        h2_ref[...] = h2
        cf_ref[...] = c_f
        cb_ref[...] = c_b
        s2_ref[...] = s2

        @pl.when(step == 0)
        def _capture():
            cap_ref[...] = h2_first    # [h_fwd[0] | h_bwd[S-1]]

        @pl.when(step == pl.num_programs(0) - 1)
        def _finalize():
            out_ref[0] = s2            # per-direction running sums over all timesteps
            out_ref[1] = h2            # [h_fwd[S-1] | h_bwd[0]]  (final carries)
            out_ref[2] = cap_ref[...]  # [h_fwd[0]   | h_bwd[S-1]]

    return rec_kernel


# ----------------------------------------------------------------------------
# Fused Conv1d(k=3,pad=1) + AdaptiveAvgPool1d(1) + Linear + sigmoid head (plain JAX)
# ----------------------------------------------------------------------------
def _head_from_stats(stats, p, S):
    # mean_t conv(x)[t] = b + (1/S) [ (sum_t x[t])@(W0+W1+W2) - x[S-1]@W0 - x[0]@W2 ]
    # with x[t] = concat(h_f[t], h_b[t]); conv taps pre-split per direction.
    H = p["w_hh_f"].shape[1]
    s_all, h_fin, h_cap = stats[0], stats[1], stats[2]
    s_f, s_b = s_all[:, :H], s_all[:, H:]
    x_last_f, x_first_b = h_fin[:, :H], h_fin[:, H:]
    x_first_f, x_last_b = h_cap[:, :H], h_cap[:, H:]
    cw = p["conv_w"]                                           # [128, 2H, 3]
    wk0_f, wk0_b = cw[:, :H, 0].T, cw[:, H:, 0].T              # [H, 128]
    wk2_f, wk2_b = cw[:, :H, 2].T, cw[:, H:, 2].T
    wks_f = cw[:, :H, :].sum(-1).T
    wks_b = cw[:, H:, :].sum(-1).T
    with jax.default_matmul_precision("highest"):
        acc = (s_f @ wks_f + s_b @ wks_b
               - x_last_f @ wk0_f - x_last_b @ wk0_b
               - x_first_f @ wk2_f - x_first_b @ wk2_b)
        pooled = p["conv_b"][None, :] + acc / S                # AvgPool; dropout = id at inference
        logits = pooled @ p["cls_w"].T + p["cls_b"][None, :]
    return jax.nn.sigmoid(logits)[:, 0]                       # torch .squeeze(): [B,1] -> [B]


# ----------------------------------------------------------------------------
# Wrapper: projection kernel + recurrence kernel + head
# ----------------------------------------------------------------------------
def pallas_forward(hidden_states, p, compute_dtype=jnp.bfloat16):
    """hidden_states: [B, S, 768] float32 -> probs [B]."""
    B, S, D = hidden_states.shape
    H = p["w_hh_f"].shape[1]
    G = 4 * H

    # -------- stage 1: hoisted input projection (fused [B, S, 8H] bf16 slab) --------
    w_ih = jnp.concatenate([p["w_ih_f"].T, p["w_ih_b"].T], axis=1).astype(compute_dtype)  # [D, 8H]
    b_all = jnp.concatenate([p["b_ih_f"] + p["b_hh_f"],
                             p["b_ih_b"] + p["b_hh_b"]])[None, :].astype(jnp.float32)     # [1, 8H]

    ts_a = _pick_chunk(S, 1024)
    nc_a = S // ts_a
    xg = pl.pallas_call(
        _proj_kernel,
        out_shape=jax.ShapeDtypeStruct((B, S, 2 * G), compute_dtype),
        grid_spec=pltpu.PrefetchScalarGridSpec(
            num_scalar_prefetch=0,
            grid=(B, nc_a),
            in_specs=[pl.BlockSpec((1, ts_a, D), lambda b, i: (b, i, 0)),
                      pl.BlockSpec(w_ih.shape, lambda b, i: (0, 0)),
                      pl.BlockSpec(b_all.shape, lambda b, i: (0, 0))],
            out_specs=pl.BlockSpec((1, ts_a, 2 * G), lambda b, i: (b, i, 0))),
        compiler_params=pltpu.CompilerParams(
            dimension_semantics=("parallel", "parallel"),
            vmem_limit_bytes=32 * 1024 * 1024),
    )(hidden_states, w_ih, b_all)

    # -------- stage 2: fused bidirectional recurrence (block-diag h @ W_hh) --------
    w_bd = jnp.zeros((2 * H, 2 * G), jnp.float32)
    w_bd = w_bd.at[:H, :G].set(p["w_hh_f"].T).at[H:, G:].set(p["w_hh_b"].T)
    w_bd = w_bd.astype(compute_dtype)                          # bf16 on the serial critical path

    ts_b = _pick_chunk(S, 32)
    nc_b = S // ts_b
    rec_kernel = _make_rec_kernel(H, ts_b, compute_dtype)

    stats = pl.pallas_call(
        rec_kernel,
        out_shape=jax.ShapeDtypeStruct((3, B, 2 * H), jnp.float32),
        grid_spec=pltpu.PrefetchScalarGridSpec(
            num_scalar_prefetch=0,
            grid=(nc_b,),
            in_specs=[
                # same xg slab read twice: fwd-ordered fwd-gate cols, rev-ordered bwd-gate cols
                pl.BlockSpec((B, ts_b, G), lambda i: (0, i, 0)),
                pl.BlockSpec((B, ts_b, G), lambda i: (0, nc_b - 1 - i, 1)),
                pl.BlockSpec((2 * H, 2 * G), lambda i: (0, 0)),
            ],
            out_specs=pl.BlockSpec((3, B, 2 * H), lambda i: (0, 0, 0)),
            scratch_shapes=[pltpu.VMEM((B, 2 * H), jnp.float32),   # h (both directions), fp32
                            pltpu.VMEM((B, H), jnp.float32),       # c forward, fp32
                            pltpu.VMEM((B, H), jnp.float32),       # c backward, fp32
                            pltpu.VMEM((B, 2 * H), jnp.float32),   # running sums
                            pltpu.VMEM((B, 2 * H), jnp.float32)]), # first-step capture
        compiler_params=pltpu.CompilerParams(
            dimension_semantics=("arbitrary",),                    # sequential carry via scratch
            vmem_limit_bytes=32 * 1024 * 1024),
    )(xg, xg, w_bd)

    # -------- head: conv/pool/classifier on the tiny statistics --------
    return _head_from_stats(stats, p, S)


# ----------------------------------------------------------------------------
# Plain-JAX glue: deterministic BERT-embedding stub + parameter construction
# ----------------------------------------------------------------------------
def bert_embed_stub(p, input_ids, attention_mask, token_type_ids):
    # TODO(synk): full pretrained 12-layer encoder not reproduced (no checkpoint);
    # attention_mask unused because the attention layers are not instantiated.
    del attention_mask
    S = input_ids.shape[1]
    h = p["word_emb"][input_ids] + p["pos_emb"][:S][None] + p["type_emb"][token_type_ids]
    mu = h.mean(-1, keepdims=True)
    var = h.var(-1, keepdims=True)
    return (h - mu) / jnp.sqrt(var + 1e-12) * p["ln_g"] + p["ln_b"]


def bert_lstm_cnn_forward(p, input_ids, attention_mask, token_type_ids,
                          compute_dtype=jnp.bfloat16):
    hidden_states = bert_embed_stub(p, input_ids, attention_mask, token_type_ids)
    return pallas_forward(hidden_states, p, compute_dtype=compute_dtype)


def init_params(key, vocab_size, max_seq, D=768, H=128, C_out=128):
    ks = jax.random.split(key, 16)
    u = lambda k, shp, s: jax.random.uniform(k, shp, jnp.float32, minval=-s, maxval=s)
    k_lstm = 1.0 / math.sqrt(H)
    k_conv = 1.0 / math.sqrt(2 * H * 3)
    k_cls = 1.0 / math.sqrt(C_out)
    return {
        # BERT-embedding stub
        "word_emb": 0.02 * jax.random.normal(ks[0], (vocab_size, D), jnp.float32),
        "pos_emb": 0.02 * jax.random.normal(ks[1], (max_seq, D), jnp.float32),
        "type_emb": 0.02 * jax.random.normal(ks[2], (2, D), jnp.float32),
        "ln_g": jnp.ones((D,), jnp.float32),
        "ln_b": jnp.zeros((D,), jnp.float32),
        # nn.LSTM(768, 128, bidirectional=True) — PyTorch weight layout
        "w_ih_f": u(ks[3], (4 * H, D), k_lstm),
        "w_hh_f": u(ks[4], (4 * H, H), k_lstm),
        "b_ih_f": u(ks[5], (4 * H,), k_lstm),
        "b_hh_f": u(ks[6], (4 * H,), k_lstm),
        "w_ih_b": u(ks[7], (4 * H, D), k_lstm),
        "w_hh_b": u(ks[8], (4 * H, H), k_lstm),
        "b_ih_b": u(ks[9], (4 * H,), k_lstm),
        "b_hh_b": u(ks[10], (4 * H,), k_lstm),
        # nn.Conv1d(256, 128, kernel_size=3, padding=1) — [O, C, K]
        "conv_w": u(ks[11], (C_out, 2 * H, 3), k_conv),
        "conv_b": u(ks[12], (C_out,), k_conv),
        # nn.Linear(128, 1)
        "cls_w": u(ks[13], (1, C_out), k_cls),
        "cls_b": u(ks[14], (1,), k_cls),
    }


# ----------------------------------------------------------------------------
# Pure-JAX reference (literal conv + avgpool) for the numerical check
# ----------------------------------------------------------------------------
def reference_head(hidden_states, p):
    with jax.default_matmul_precision("highest"):
        B, S, D = hidden_states.shape
        H = p["w_hh_f"].shape[1]

        def run_dir(wih, whh, bih, bhh, reverse):
            xg = jnp.einsum("bsd,gd->bsg", hidden_states, wih) + bih + bhh      # [B,S,4H]
            xg_t = jnp.swapaxes(xg, 0, 1)                                        # [S,B,4H]
            if reverse:
                xg_t = xg_t[::-1]

            def step(carry, x):
                h, c = carry
                gates = x + h @ whh.T
                i, f, g, o = jnp.split(gates, 4, axis=-1)
                i = jax.nn.sigmoid(i); f = jax.nn.sigmoid(f)
                g = jnp.tanh(g); o = jax.nn.sigmoid(o)
                c = f * c + i * g
                h = o * jnp.tanh(c)
                return (h, c), h

            _, hs = lax.scan(step, (jnp.zeros((B, H)), jnp.zeros((B, H))), xg_t)
            if reverse:
                hs = hs[::-1]
            return jnp.swapaxes(hs, 0, 1)                                        # [B,S,H]

        out_f = run_dir(p["w_ih_f"], p["w_hh_f"], p["b_ih_f"], p["b_hh_f"], False)
        out_b = run_dir(p["w_ih_b"], p["w_hh_b"], p["b_ih_b"], p["b_hh_b"], True)
        lstm_out = jnp.concatenate([out_f, out_b], axis=-1)                      # [B,S,2H]

        x = jnp.swapaxes(lstm_out, 1, 2)                                         # [B,2H,S]  NCL
        y = lax.conv_general_dilated(x, p["conv_w"], (1,), [(1, 1)],
                                     dimension_numbers=("NCH", "OIH", "NCH"))
        y = y + p["conv_b"][None, :, None]
        pooled = y.mean(axis=2)                                                  # AdaptiveAvgPool1d(1)
        logits = pooled @ p["cls_w"].T + p["cls_b"]
        return jax.nn.sigmoid(logits)[:, 0]


# ----------------------------------------------------------------------------
if __name__ == "__main__":
    B, S = 2, 8
    VOCAB = 100

    key = jax.random.PRNGKey(0)
    pkey, dkey = jax.random.split(key)
    params = init_params(pkey, VOCAB, S)

    input_ids = jax.random.randint(dkey, (B, S), 0, VOCAB, dtype=jnp.int32)
    attention_mask = jnp.ones((B, S), jnp.int32)
    token_type_ids = jnp.zeros((B, S), jnp.int32)

    hidden_states = bert_embed_stub(params, input_ids, attention_mask, token_type_ids)
    ref = jax.block_until_ready(reference_head(hidden_states, params))

    fwd = jax.jit(bert_lstm_cnn_forward, static_argnames=("compute_dtype",))

    # fp32 path: tight numerical check against the literal conv/avgpool reference.
    probs32 = jax.block_until_ready(
        fwd(params, input_ids, attention_mask, token_type_ids, compute_dtype=jnp.float32))
    assert probs32.shape == (B,)
    err32 = float(jnp.max(jnp.abs(probs32 - ref)))
    assert err32 < 1e-3, f"fp32 kernel mismatch vs reference: {err32}"

    # bf16 path (default / fast): bf16 projection, bf16 xg storage, bf16 W_hh on MXU.
    probs16 = jax.block_until_ready(
        fwd(params, input_ids, attention_mask, token_type_ids, compute_dtype=jnp.bfloat16))
    assert probs16.shape == (B,)
    err16 = float(jnp.max(jnp.abs(probs16 - ref)))
    assert err16 < 2e-2, f"bf16 kernel mismatch vs reference: {err16}"

    print("KERNEL_OK")
</pallas_src>

<mosaic_0001>
module attributes {stable_mosaic.version = 11 : i64} {
  func.func @_proj_kernel(%arg0: i32, %arg1: i32, %arg2: memref<1x8x768xf32, #tpu.memory_space<vmem>>, %arg3: memref<768x1024xf32, #tpu.memory_space<vmem>>, %arg4: memref<1x1024xf32, #tpu.memory_space<vmem>>, %arg5: memref<1x8x1024xf32, #tpu.memory_space<vmem>>) attributes {dimension_semantics = [#tpu.dimension_semantics<parallel>, #tpu.dimension_semantics<parallel>], iteration_bounds = array<i64: 2, 1>, scalar_prefetch = 0 : i64, scratch_operands = 0 : i64, tpu.core_type = #tpu.core_type<tc>, window_params = [{transform_indices = @transform_0, window_bounds = array<i64: 1, 8, 768>}, {pipeline_mode = #tpu.pipeline_mode<synchronous>, transform_indices = @transform_1, window_bounds = array<i64: 768, 1024>}, {pipeline_mode = #tpu.pipeline_mode<synchronous>, transform_indices = @transform_2, window_bounds = array<i64: 1, 1024>}, {transform_indices = @transform_3, window_bounds = array<i64: 1, 8, 1024>}]} {
    %c0 = arith.constant 0 : index
    %c0_0 = arith.constant 0 : index
    %c0_1 = arith.constant 0 : index
    %0 = vector.load %arg2[%c0, %c0_0, %c0_1] : memref<1x8x768xf32, #tpu.memory_space<vmem>>, vector<1x8x768xf32>
    %1 = vector.shape_cast %0 : vector<1x8x768xf32> to vector<8x768xf32>
    %c0_2 = arith.constant 0 : index
    %c0_3 = arith.constant 0 : index
    %2 = vector.load %arg3[%c0_2, %c0_3] : memref<768x1024xf32, #tpu.memory_space<vmem>>, vector<768x1024xf32>
    %cst = arith.constant dense<0.000000e+00> : vector<8x1024xf32>
    %3 = tpu.matmul %1, %2, %cst {dimension_numbers = #tpu.dot_dimension_numbers<[1], [0], [0], [1], [0, 0, 1, 1], [], []>} : vector<8x768xf32>, vector<768x1024xf32>, vector<8x1024xf32> -> vector<8x1024xf32>
    %c0_4 = arith.constant 0 : index
    %c0_5 = arith.constant 0 : index
    %4 = vector.load %arg4[%c0_4, %c0_5] : memref<1x1024xf32, #tpu.memory_space<vmem>>, vector<1x1024xf32>
    %5 = vector.broadcast %4 : vector<1x1024xf32> to vector<8x1024xf32>
    %6 = arith.addf %3, %5 : vector<8x1024xf32>
    %c0_6 = arith.constant 0 : index
    %c0_7 = arith.constant 0 : index
    %c0_8 = arith.constant 0 : index
    %7 = vector.load %arg5[%c0_6, %c0_7, %c0_8] : memref<1x8x1024xf32, #tpu.memory_space<vmem>>, vector<1x8x1024xf32>
    %8 = vector.shape_cast %7 : vector<1x8x1024xf32> to vector<8x1024xf32>
    %9 = vector.shape_cast %6 : vector<8x1024xf32> to vector<1x8x1024xf32>
    tpu.vector_store %arg5[%c0_6, %c0_7, %c0_8], %9 {strides = array<i32>} : memref<1x8x1024xf32, #tpu.memory_space<vmem>>, vector<1x8x1024xf32>,
    return
  }
  func.func @transform_0(%arg0: i32, %arg1: i32) -> (i32, i32, i32) {
    %c0_i32 = arith.constant 0 : i32
    %c0_i32_0 = arith.constant 0 : i32
    return %arg0, %arg1, %c0_i32 : i32, i32, i32
  }
  func.func @transform_1(%arg0: i32, %arg1: i32) -> (i32, i32) {
    %c0_i32 = arith.constant 0 : i32
    %c0_i32_0 = arith.constant 0 : i32
    %c0_i32_1 = arith.constant 0 : i32
    return %c0_i32, %c0_i32_0 : i32, i32
  }
  func.func @transform_2(%arg0: i32, %arg1: i32) -> (i32, i32) {
    %c0_i32 = arith.constant 0 : i32
    %c0_i32_0 = arith.constant 0 : i32
    %c0_i32_1 = arith.constant 0 : i32
    return %c0_i32, %c0_i32_0 : i32, i32
  }
  func.func @transform_3(%arg0: i32, %arg1: i32) -> (i32, i32, i32) {
    %c0_i32 = arith.constant 0 : i32
    %c0_i32_0 = arith.constant 0 : i32
    return %arg0, %arg1, %c0_i32 : i32, i32, i32
  }
}

module attributes {stable_mosaic.version = 11 : i64} {
  func.func @rec_kernel(%arg0: i32, %arg1: memref<2x8x512xf32, #tpu.memory_space<vmem>>, %arg2: memref<2x8x512xf32, #tpu.memory_space<vmem>>, %arg3: memref<256x1024xf32, #tpu.memory_space<vmem>>, %arg4: memref<3x2x256xf32, #tpu.memory_space<vmem>>, %arg5: memref<2x256xf32, #tpu.memory_space<vmem>>, %arg6: memref<2x128xf32, #tpu.memory_space<vmem>>, %arg7: memref<2x128xf32, #tpu.memory_space<vmem>>, %arg8: memref<2x256xf32, #tpu.memory_space<vmem>>, %arg9: memref<2x256xf32, #tpu.memory_space<vmem>>) attributes {dimension_semantics = [#tpu.dimension_semantics<arbitrary>], iteration_bounds = array<i64: 1>, scalar_prefetch = 0 : i64, scratch_operands = 5 : i64, tpu.core_type = #tpu.core_type<tc>, window_params = [{transform_indices = @transform_0, window_bounds = array<i64: 2, 8, 512>}, {transform_indices = @transform_1, window_bounds = array<i64: 2, 8, 512>}, {pipeline_mode = #tpu.pipeline_mode<synchronous>, transform_indices = @transform_2, window_bounds = array<i64: 256, 1024>}, {pipeline_mode = #tpu.pipeline_mode<synchronous>, transform_indices = @transform_3, window_bounds = array<i64: 3, 2, 256>}]} {
    %c0_i32 = arith.constant 0 : i32
    %0 = arith.cmpi eq, %arg0, %c0_i32 : i32
    %1 = arith.extui %0 : i1 to i32
    %c0_i32_0 = arith.constant 0 : i32
    %2 = arith.cmpi ne, %1, %c0_i32_0 : i32
    scf.if %2 {
      %cst_118 = arith.constant 0.000000e+00 : f32
      %506 = vector.broadcast %cst_118 : f32 to vector<2x256xf32>
      %c0_119 = arith.constant 0 : index
      %c0_120 = arith.constant 0 : index
      %507 = vector.load %arg5[%c0_119, %c0_120] : memref<2x256xf32, #tpu.memory_space<vmem>>, vector<2x256xf32>
      tpu.vector_store %arg5[%c0_119, %c0_120], %506 {strides = array<i32>} : memref<2x256xf32, #tpu.memory_space<vmem>>, vector<2x256xf32>,
      %cst_121 = arith.constant 0.000000e+00 : f32
      %508 = vector.broadcast %cst_121 : f32 to vector<2x128xf32>
      %c0_122 = arith.constant 0 : index
      %c0_123 = arith.constant 0 : index
      %509 = vector.load %arg6[%c0_122, %c0_123] : memref<2x128xf32, #tpu.memory_space<vmem>>, vector<2x128xf32>
      tpu.vector_store %arg6[%c0_122, %c0_123], %508 {strides = array<i32>} : memref<2x128xf32, #tpu.memory_space<vmem>>, vector<2x128xf32>,
      %cst_124 = arith.constant 0.000000e+00 : f32
      %510 = vector.broadcast %cst_124 : f32 to vector<2x128xf32>
      %c0_125 = arith.constant 0 : index
      %c0_126 = arith.constant 0 : index
      %511 = vector.load %arg7[%c0_125, %c0_126] : memref<2x128xf32, #tpu.memory_space<vmem>>, vector<2x128xf32>
      tpu.vector_store %arg7[%c0_125, %c0_126], %510 {strides = array<i32>} : memref<2x128xf32, #tpu.memory_space<vmem>>, vector<2x128xf32>,
      %cst_127 = arith.constant 0.000000e+00 : f32
      %512 = vector.broadcast %cst_127 : f32 to vector<2x256xf32>
      %c0_128 = arith.constant 0 : index
      %c0_129 = arith.constant 0 : index
      %513 = vector.load %arg8[%c0_128, %c0_129] : memref<2x256xf32, #tpu.memory_space<vmem>>, vector<2x256xf32>
      tpu.vector_store %arg8[%c0_128, %c0_129], %512 {strides = array<i32>} : memref<2x256xf32, #tpu.memory_space<vmem>>, vector<2x256xf32>,
    } else {
    }
    %c0 = arith.constant 0 : index
    %c0_1 = arith.constant 0 : index
    %3 = vector.load %arg3[%c0, %c0_1] : memref<256x1024xf32, #tpu.memory_space<vmem>>, vector<256x1024xf32>
    %c0_2 = arith.constant 0 : index
    %c0_3 = arith.constant 0 : index
    %4 = vector.load %arg5[%c0_2, %c0_3] : memref<2x256xf32, #tpu.memory_space<vmem>>, vector<2x256xf32>
    %c0_4 = arith.constant 0 : index
    %c0_5 = arith.constant 0 : index
    %5 = vector.load %arg6[%c0_4, %c0_5] : memref<2x128xf32, #tpu.memory_space<vmem>>, vector<2x128xf32>
    %c0_6 = arith.constant 0 : index
    %c0_7 = arith.constant 0 : index
    %6 = vector.load %arg7[%c0_6, %c0_7] : memref<2x128xf32, #tpu.memory_space<vmem>>, vector<2x128xf32>
    %c0_8 = arith.constant 0 : index
    %c0_9 = arith.constant 0 : index
    %7 = vector.load %arg8[%c0_8, %c0_9] : memref<2x256xf32, #tpu.memory_space<vmem>>, vector<2x256xf32>
    %cst = arith.constant dense<0.000000e+00> : vector<2x1024xf32>
    %8 = tpu.matmul %4, %3, %cst {dimension_numbers = #tpu.dot_dimension_numbers<[1], [0], [0], [1], [0, 0, 1, 1], [], []>} : vector<2x256xf32>, vector<256x1024xf32>, vector<2x1024xf32> -> vector<2x1024xf32>
    %9 = vector.extract_strided_slice %8 {offsets = [0, 0], sizes = [2, 512], strides = [1, 1]} : vector<2x1024xf32> to vector<2x512xf32>
    %c0_10 = arith.constant 0 : index
    %c0_11 = arith.constant 0 : index
    %c0_12 = arith.constant 0 : index
    %10 = vector.load %arg1[%c0_10, %c0_11, %c0_12] : memref<2x8x512xf32, #tpu.memory_space<vmem>>, vector<2x1x512xf32>
    %11 = vector.shape_cast %10 : vector<2x1x512xf32> to vector<2x512xf32>
    %12 = arith.addf %9, %11 : vector<2x512xf32>
    %13 = vector.extract_strided_slice %8 {offsets = [0, 512], sizes = [2, 512], strides = [1, 1]} : vector<2x1024xf32> to vector<2x512xf32>
    %c0_13 = arith.constant 0 : index
    %c7 = arith.constant 7 : index
    %c0_14 = arith.constant 0 : index
    %14 = vector.load %arg2[%c0_13, %c7, %c0_14] : memref<2x8x512xf32, #tpu.memory_space<vmem>>, vector<2x1x512xf32>
    %15 = vector.shape_cast %14 : vector<2x1x512xf32> to vector<2x512xf32>
    %16 = arith.addf %13, %15 : vector<2x512xf32>
    %17 = vector.extract_strided_slice %12 {offsets = [0, 0], sizes = [2, 128], strides = [1, 1]} : vector<2x512xf32> to vector<2x128xf32>
    %18 = arith.negf %17 : vector<2x128xf32>
    %19 = math.exp %18 : vector<2x128xf32>
    %cst_15 = arith.constant 1.000000e+00 : f32
    %20 = vector.broadcast %cst_15 : f32 to vector<2x128xf32>
    %21 = arith.addf %20, %19 : vector<2x128xf32>
    %22 = arith.divf %20, %21 : vector<2x128xf32>
    %23 = vector.extract_strided_slice %12 {offsets = [0, 128], sizes = [2, 128], strides = [1, 1]} : vector<2x512xf32> to vector<2x128xf32>
    %24 = arith.negf %23 : vector<2x128xf32>
    %25 = math.exp %24 : vector<2x128xf32>
    %cst_16 = arith.constant 1.000000e+00 : f32
    %26 = vector.broadcast %cst_16 : f32 to vector<2x128xf32>
    %27 = arith.addf %26, %25 : vector<2x128xf32>
    %28 = arith.divf %26, %27 : vector<2x128xf32>
    %29 = vector.extract_strided_slice %12 {offsets = [0, 256], sizes = [2, 128], strides = [1, 1]} : vector<2x512xf32> to vector<2x128xf32>
    %30 = math.tanh %29 : vector<2x128xf32>
    %31 = vector.extract_strided_slice %12 {offsets = [0, 384], sizes = [2, 128], strides = [1, 1]} : vector<2x512xf32> to vector<2x128xf32>
    %32 = arith.negf %31 : vector<2x128xf32>
    %33 = math.exp %32 : vector<2x128xf32>
    %cst_17 = arith.constant 1.000000e+00 : f32
    %34 = vector.broadcast %cst_17 : f32 to vector<2x128xf32>
    %35 = arith.addf %34, %33 : vector<2x128xf32>
    %36 = arith.divf %34, %35 : vector<2x128xf32>
    %37 = arith.mulf %28, %5 : vector<2x128xf32>
    %38 = arith.mulf %22, %30 : vector<2x128xf32>
    %39 = arith.addf %37, %38 : vector<2x128xf32>
    %40 = math.tanh %39 : vector<2x128xf32>
    %41 = arith.mulf %36, %40 : vector<2x128xf32>
    %42 = vector.extract_strided_slice %16 {offsets = [0, 0], sizes = [2, 128], strides = [1, 1]} : vector<2x512xf32> to vector<2x128xf32>
    %43 = arith.negf %42 : vector<2x128xf32>
    %44 = math.exp %43 : vector<2x128xf32>
    %cst_18 = arith.constant 1.000000e+00 : f32
    %45 = vector.broadcast %cst_18 : f32 to vector<2x128xf32>
    %46 = arith.addf %45, %44 : vector<2x128xf32>
    %47 = arith.divf %45, %46 : vector<2x128xf32>
    %48 = vector.extract_strided_slice %16 {offsets = [0, 128], sizes = [2, 128], strides = [1, 1]} : vector<2x512xf32> to vector<2x128xf32>
    %49 = arith.negf %48 : vector<2x128xf32>
    %50 = math.exp %49 : vector<2x128xf32>
    %cst_19 = arith.constant 1.000000e+00 : f32
    %51 = vector.broadcast %cst_19 : f32 to vector<2x128xf32>
    %52 = arith.addf %51, %50 : vector<2x128xf32>
    %53 = arith.divf %51, %52 : vector<2x128xf32>
    %54 = vector.extract_strided_slice %16 {offsets = [0, 256], sizes = [2, 128], strides = [1, 1]} : vector<2x512xf32> to vector<2x128xf32>
    %55 = math.tanh %54 : vector<2x128xf32>
    %56 = vector.extract_strided_slice %16 {offsets = [0, 384], sizes = [2, 128], strides = [1, 1]} : vector<2x512xf32> to vector<2x128xf32>
    %57 = arith.negf %56 : vector<2x128xf32>
    %58 = math.exp %57 : vector<2x128xf32>
    %cst_20 = arith.constant 1.000000e+00 : f32
    %59 = vector.broadcast %cst_20 : f32 to vector<2x128xf32>
    %60 = arith.addf %59, %58 : vector<2x128xf32>
    %61 = arith.divf %59, %60 : vector<2x128xf32>
    %62 = arith.mulf %53, %6 : vector<2x128xf32>
    %63 = arith.mulf %47, %55 : vector<2x128xf32>
    %64 = arith.addf %62, %63 : vector<2x128xf32>
    %65 = math.tanh %64 : vector<2x128xf32>
    %66 = arith.mulf %61, %65 : vector<2x128xf32>
    %67 = tpu.concatenate %41, %66 in 1 : vector<2x128xf32>, vector<2x128xf32> -> vector<2x256xf32>
    %68 = arith.addf %7, %67 : vector<2x256xf32>
    %cst_21 = arith.constant dense<0.000000e+00> : vector<2x1024xf32>
    %69 = tpu.matmul %67, %3, %cst_21 {dimension_numbers = #tpu.dot_dimension_numbers<[1], [0], [0], [1], [0, 0, 1, 1], [], []>} : vector<2x256xf32>, vector<256x1024xf32>, vector<2x1024xf32> -> vector<2x1024xf32>
    %70 = vector.extract_strided_slice %69 {offsets = [0, 0], sizes = [2, 512], strides = [1, 1]} : vector<2x1024xf32> to vector<2x512xf32>
    %c0_22 = arith.constant 0 : index
    %c1 = arith.constant 1 : index
    %c0_23 = arith.constant 0 : index
    %71 = vector.load %arg1[%c0_22, %c1, %c0_23] : memref<2x8x512xf32, #tpu.memory_space<vmem>>, vector<2x1x512xf32>
    %72 = vector.shape_cast %71 : vector<2x1x512xf32> to vector<2x512xf32>
    %73 = arith.addf %70, %72 : vector<2x512xf32>
    %74 = vector.extract_strided_slice %69 {offsets = [0, 512], sizes = [2, 512], strides = [1, 1]} : vector<2x1024xf32> to vector<2x512xf32>
    %c0_24 = arith.constant 0 : index
    %c6 = arith.constant 6 : index
    %c0_25 = arith.constant 0 : index
    %75 = vector.load %arg2[%c0_24, %c6, %c0_25] : memref<2x8x512xf32, #tpu.memory_space<vmem>>, vector<2x1x512xf32>
    %76 = vector.shape_cast %75 : vector<2x1x512xf32> to vector<2x512xf32>
    %77 = arith.addf %74, %76 : vector<2x512xf32>
    %78 = vector.extract_strided_slice %73 {offsets = [0, 0], sizes = [2, 128], strides = [1, 1]} : vector<2x512xf32> to vector<2x128xf32>
    %79 = arith.negf %78 : vector<2x128xf32>
    %80 = math.exp %79 : vector<2x128xf32>
    %cst_26 = arith.constant 1.000000e+00 : f32
    %81 = vector.broadcast %cst_26 : f32 to vector<2x128xf32>
    %82 = arith.addf %81, %80 : vector<2x128xf32>
    %83 = arith.divf %81, %82 : vector<2x128xf32>
    %84 = vector.extract_strided_slice %73 {offsets = [0, 128], sizes = [2, 128], strides = [1, 1]} : vector<2x512xf32> to vector<2x128xf32>
    %85 = arith.negf %84 : vector<2x128xf32>
    %86 = math.exp %85 : vector<2x128xf32>
    %cst_27 = arith.constant 1.000000e+00 : f32
    %87 = vector.broadcast %cst_27 : f32 to vector<2x128xf32>
    %88 = arith.addf %87, %86 : vector<2x128xf32>
    %89 = arith.divf %87, %88 : vector<2x128xf32>
    %90 = vector.extract_strided_slice %73 {offsets = [0, 256], sizes = [2, 128], strides = [1, 1]} : vector<2x512xf32> to vector<2x128xf32>
    %91 = math.tanh %90 : vector<2x128xf32>
    %92 = vector.extract_strided_slice %73 {offsets = [0, 384], sizes = [2, 128], strides = [1, 1]} : vector<2x512xf32> to vector<2x128xf32>
    %93 = arith.negf %92 : vector<2x128xf32>
    %94 = math.exp %93 : vector<2x128xf32>
    %cst_28 = arith.constant 1.000000e+00 : f32
    %95 = vector.broadcast %cst_28 : f32 to vector<2x128xf32>
    %96 = arith.addf %95, %94 : vector<2x128xf32>
    %97 = arith.divf %95, %96 : vector<2x128xf32>
    %98 = arith.mulf %89, %39 : vector<2x128xf32>
    %99 = arith.mulf %83, %91 : vector<2x128xf32>
    %100 = arith.addf %98, %99 : vector<2x128xf32>
    %101 = math.tanh %100 : vector<2x128xf32>
    %102 = arith.mulf %97, %101 : vector<2x128xf32>
    %103 = vector.extract_strided_slice %77 {offsets = [0, 0], sizes = [2, 128], strides = [1, 1]} : vector<2x512xf32> to vector<2x128xf32>
    %104 = arith.negf %103 : vector<2x128xf32>
    %105 = math.exp %104 : vector<2x128xf32>
    %cst_29 = arith.constant 1.000000e+00 : f32
    %106 = vector.broadcast %cst_29 : f32 to vector<2x128xf32>
    %107 = arith.addf %106, %105 : vector<2x128xf32>
    %108 = arith.divf %106, %107 : vector<2x128xf32>
    %109 = vector.extract_strided_slice %77 {offsets = [0, 128], sizes = [2, 128], strides = [1, 1]} : vector<2x512xf32> to vector<2x128xf32>
    %110 = arith.negf %109 : vector<2x128xf32>
    %111 = math.exp %110 : vector<2x128xf32>
    %cst_30 = arith.constant 1.000000e+00 : f32
    %112 = vector.broadcast %cst_30 : f32 to vector<2x128xf32>
    %113 = arith.addf %112, %111 : vector<2x128xf32>
    %114 = arith.divf %112, %113 : vector<2x128xf32>
    %115 = vector.extract_strided_slice %77 {offsets = [0, 256], sizes = [2, 128], strides = [1, 1]} : vector<2x512xf32> to vector<2x128xf32>
    %116 = math.tanh %115 : vector<2x128xf32>
    %117 = vector.extract_strided_slice %77 {offsets = [0, 384], sizes = [2, 128], strides = [1, 1]} : vector<2x512xf32> to vector<2x128xf32>
    %118 = arith.negf %117 : vector<2x128xf32>
    %119 = math.exp %118 : vector<2x128xf32>
    %cst_31 = arith.constant 1.000000e+00 : f32
    %120 = vector.broadcast %cst_31 : f32 to vector<2x128xf32>
    %121 = arith.addf %120, %119 : vector<2x128xf32>
    %122 = arith.divf %120, %121 : vector<2x128xf32>
    %123 = arith.mulf %114, %64 : vector<2x128xf32>
    %124 = arith.mulf %108, %116 : vector<2x128xf32>
    %125 = arith.addf %123, %124 : vector<2x128xf32>
    %126 = math.tanh %125 : vector<2x128xf32>
    %127 = arith.mulf %122, %126 : vector<2x128xf32>
    %128 = tpu.concatenate %102, %127 in 1 : vector<2x128xf32>, vector<2x128xf32> -> vector<2x256xf32>
    %129 = arith.addf %68, %128 : vector<2x256xf32>
    %cst_32 = arith.constant dense<0.000000e+00> : vector<2x1024xf32>
    %130 = tpu.matmul %128, %3, %cst_32 {dimension_numbers = #tpu.dot_dimension_numbers<[1], [0], [0], [1], [0, 0, 1, 1], [], []>} : vector<2x256xf32>, vector<256x1024xf32>, vector<2x1024xf32> -> vector<2x1024xf32>
    %131 = vector.extract_strided_slice %130 {offsets = [0, 0], sizes = [2, 512], strides = [1, 1]} : vector<2x1024xf32> to vector<2x512xf32>
    %c0_33 = arith.constant 0 : index
    %c2 = arith.constant 2 : index
    %c0_34 = arith.constant 0 : index
    %132 = vector.load %arg1[%c0_33, %c2, %c0_34] : memref<2x8x512xf32, #tpu.memory_space<vmem>>, vector<2x1x512xf32>
    %133 = vector.shape_cast %132 : vector<2x1x512xf32> to vector<2x512xf32>
    %134 = arith.addf %131, %133 : vector<2x512xf32>
    %135 = vector.extract_strided_slice %130 {offsets = [0, 512], sizes = [2, 512], strides = [1, 1]} : vector<2x1024xf32> to vector<2x512xf32>
    %c0_35 = arith.constant 0 : index
    %c5 = arith.constant 5 : index
    %c0_36 = arith.constant 0 : index
    %136 = vector.load %arg2[%c0_35, %c5, %c0_36] : memref<2x8x512xf32, #tpu.memory_space<vmem>>, vector<2x1x512xf32>
    %137 = vector.shape_cast %136 : vector<2x1x512xf32> to vector<2x512xf32>
    %138 = arith.addf %135, %137 : vector<2x512xf32>
    %139 = vector.extract_strided_slice %134 {offsets = [0, 0], sizes = [2, 128], strides = [1, 1]} : vector<2x512xf32> to vector<2x128xf32>
    %140 = arith.negf %139 : vector<2x128xf32>
    %141 = math.exp %140 : vector<2x128xf32>
    %cst_37 = arith.constant 1.000000e+00 : f32
    %142 = vector.broadcast %cst_37 : f32 to vector<2x128xf32>
    %143 = arith.addf %142, %141 : vector<2x128xf32>
    %144 = arith.divf %142, %143 : vector<2x128xf32>
    %145 = vector.extract_strided_slice %134 {offsets = [0, 128], sizes = [2, 128], strides = [1, 1]} : vector<2x512xf32> to vector<2x128xf32>
    %146 = arith.negf %145 : vector<2x128xf32>
    %147 = math.exp %146 : vector<2x128xf32>
    %cst_38 = arith.constant 1.000000e+00 : f32
    %148 = vector.broadcast %cst_38 : f32 to vector<2x128xf32>
    %149 = arith.addf %148, %147 : vector<2x128xf32>
    %150 = arith.divf %148, %149 : vector<2x128xf32>
    %151 = vector.extract_strided_slice %134 {offsets = [0, 256], sizes = [2, 128], strides = [1, 1]} : vector<2x512xf32> to vector<2x128xf32>
    %152 = math.tanh %151 : vector<2x128xf32>
    %153 = vector.extract_strided_slice %134 {offsets = [0, 384], sizes = [2, 128], strides = [1, 1]} : vector<2x512xf32> to vector<2x128xf32>
    %154 = arith.negf %153 : vector<2x128xf32>
    %155 = math.exp %154 : vector<2x128xf32>
    %cst_39 = arith.constant 1.000000e+00 : f32
    %156 = vector.broadcast %cst_39 : f32 to vector<2x128xf32>
    %157 = arith.addf %156, %155 : vector<2x128xf32>
    %158 = arith.divf %156, %157 : vector<2x128xf32>
    %159 = arith.mulf %150, %100 : vector<2x128xf32>
    %160 = arith.mulf %144, %152 : vector<2x128xf32>
    %161 = arith.addf %159, %160 : vector<2x128xf32>
    %162 = math.tanh %161 : vector<2x128xf32>
    %163 = arith.mulf %158, %162 : vector<2x128xf32>
    %164 = vector.extract_strided_slice %138 {offsets = [0, 0], sizes = [2, 128], strides = [1, 1]} : vector<2x512xf32> to vector<2x128xf32>
    %165 = arith.negf %164 : vector<2x128xf32>
    %166 = math.exp %165 : vector<2x128xf32>
    %cst_40 = arith.constant 1.000000e+00 : f32
    %167 = vector.broadcast %cst_40 : f32 to vector<2x128xf32>
    %168 = arith.addf %167, %166 : vector<2x128xf32>
    %169 = arith.divf %167, %168 : vector<2x128xf32>
    %170 = vector.extract_strided_slice %138 {offsets = [0, 128], sizes = [2, 128], strides = [1, 1]} : vector<2x512xf32> to vector<2x128xf32>
    %171 = arith.negf %170 : vector<2x128xf32>
    %172 = math.exp %171 : vector<2x128xf32>
    %cst_41 = arith.constant 1.000000e+00 : f32
    %173 = vector.broadcast %cst_41 : f32 to vector<2x128xf32>
    %174 = arith.addf %173, %172 : vector<2x128xf32>
    %175 = arith.divf %173, %174 : vector<2x128xf32>
    %176 = vector.extract_strided_slice %138 {offsets = [0, 256], sizes = [2, 128], strides = [1, 1]} : vector<2x512xf32> to vector<2x128xf32>
    %177 = math.tanh %176 : vector<2x128xf32>
    %178 = vector.extract_strided_slice %138 {offsets = [0, 384], sizes = [2, 128], strides = [1, 1]} : vector<2x512xf32> to vector<2x128xf32>
    %179 = arith.negf %178 : vector<2x128xf32>
    %180 = math.exp %179 : vector<2x128xf32>
    %cst_42 = arith.constant 1.000000e+00 : f32
    %181 = vector.broadcast %cst_42 : f32 to vector<2x128xf32>
    %182 = arith.addf %181, %180 : vector<2x128xf32>
    %183 = arith.divf %181, %182 : vector<2x128xf32>
    %184 = arith.mulf %175, %125 : vector<2x128xf32>
    %185 = arith.mulf %169, %177 : vector<2x128xf32>
    %186 = arith.addf %184, %185 : vector<2x128xf32>
    %187 = math.tanh %186 : vector<2x128xf32>
    %188 = arith.mulf %183, %187 : vector<2x128xf32>
    %189 = tpu.concatenate %163, %188 in 1 : vector<2x128xf32>, vector<2x128xf32> -> vector<2x256xf32>
    %190 = arith.addf %129, %189 : vector<2x256xf32>
    %cst_43 = arith.constant dense<0.000000e+00> : vector<2x1024xf32>
    %191 = tpu.matmul %189, %3, %cst_43 {dimension_numbers = #tpu.dot_dimension_numbers<[1], [0], [0], [1], [0, 0, 1, 1], [], []>} : vector<2x256xf32>, vector<256x1024xf32>, vector<2x1024xf32> -> vector<2x1024xf32>
    %192 = vector.extract_strided_slice %191 {offsets = [0, 0], sizes = [2, 512], strides = [1, 1]} : vector<2x1024xf32> to vector<2x512xf32>
    %c0_44 = arith.constant 0 : index
    %c3 = arith.constant 3 : index
    %c0_45 = arith.constant 0 : index
    %193 = vector.load %arg1[%c0_44, %c3, %c0_45] : memref<2x8x512xf32, #tpu.memory_space<vmem>>, vector<2x1x512xf32>
    %194 = vector.shape_cast %193 : vector<2x1x512xf32> to vector<2x512xf32>
    %195 = arith.addf %192, %194 : vector<2x512xf32>
    %196 = vector.extract_strided_slice %191 {offsets = [0, 512], sizes = [2, 512], strides = [1, 1]} : vector<2x1024xf32> to vector<2x512xf32>
    %c0_46 = arith.constant 0 : index
    %c4 = arith.constant 4 : index
    %c0_47 = arith.constant 0 : index
    %197 = vector.load %arg2[%c0_46, %c4, %c0_47] : memref<2x8x512xf32, #tpu.memory_space<vmem>>, vector<2x1x512xf32>
    %198 = vector.shape_cast %197 : vector<2x1x512xf32> to vector<2x512xf32>
    %199 = arith.addf %196, %198 : vector<2x512xf32>
    %200 = vector.extract_strided_slice %195 {offsets = [0, 0], sizes = [2, 128], strides = [1, 1]} : vector<2x512xf32> to vector<2x128xf32>
    %201 = arith.negf %200 : vector<2x128xf32>
    %202 = math.exp %201 : vector<2x128xf32>
    %cst_48 = arith.constant 1.000000e+00 : f32
    %203 = vector.broadcast %cst_48 : f32 to vector<2x128xf32>
    %204 = arith.addf %203, %202 : vector<2x128xf32>
    %205 = arith.divf %203, %204 : vector<2x128xf32>
    %206 = vector.extract_strided_slice %195 {offsets = [0, 128], sizes = [2, 128], strides = [1, 1]} : vector<2x512xf32> to vector<2x128xf32>
    %207 = arith.negf %206 : vector<2x128xf32>
    %208 = math.exp %207 : vector<2x128xf32>
    %cst_49 = arith.constant 1.000000e+00 : f32
    %209 = vector.broadcast %cst_49 : f32 to vector<2x128xf32>
    %210 = arith.addf %209, %208 : vector<2x128xf32>
    %211 = arith.divf %209, %210 : vector<2x128xf32>
    %212 = vector.extract_strided_slice %195 {offsets = [0, 256], sizes = [2, 128], strides = [1, 1]} : vector<2x512xf32> to vector<2x128xf32>
    %213 = math.tanh %212 : vector<2x128xf32>
    %214 = vector.extract_strided_slice %195 {offsets = [0, 384], sizes = [2, 128], strides = [1, 1]} : vector<2x512xf32> to vector<2x128xf32>
    %215 = arith.negf %214 : vector<2x128xf32>
    %216 = math.exp %215 : vector<2x128xf32>
    %cst_50 = arith.constant 1.000000e+00 : f32
    %217 = vector.broadcast %cst_50 : f32 to vector<2x128xf32>
    %218 = arith.addf %217, %216 : vector<2x128xf32>
    %219 = arith.divf %217, %218 : vector<2x128xf32>
    %220 = arith.mulf %211, %161 : vector<2x128xf32>
    %221 = arith.mulf %205, %213 : vector<2x128xf32>
    %222 = arith.addf %220, %221 : vector<2x128xf32>
    %223 = math.tanh %222 : vector<2x128xf32>
    %224 = arith.mulf %219, %223 : vector<2x128xf32>
    %225 = vector.extract_strided_slice %199 {offsets = [0, 0], sizes = [2, 128], strides = [1, 1]} : vector<2x512xf32> to vector<2x128xf32>
    %226 = arith.negf %225 : vector<2x128xf32>
    %227 = math.exp %226 : vector<2x128xf32>
    %cst_51 = arith.constant 1.000000e+00 : f32
    %228 = vector.broadcast %cst_51 : f32 to vector<2x128xf32>
    %229 = arith.addf %228, %227 : vector<2x128xf32>
    %230 = arith.divf %228, %229 : vector<2x128xf32>
    %231 = vector.extract_strided_slice %199 {offsets = [0, 128], sizes = [2, 128], strides = [1, 1]} : vector<2x512xf32> to vector<2x128xf32>
    %232 = arith.negf %231 : vector<2x128xf32>
    %233 = math.exp %232 : vector<2x128xf32>
    %cst_52 = arith.constant 1.000000e+00 : f32
    %234 = vector.broadcast %cst_52 : f32 to vector<2x128xf32>
    %235 = arith.addf %234, %233 : vector<2x128xf32>
    %236 = arith.divf %234, %235 : vector<2x128xf32>
    %237 = vector.extract_strided_slice %199 {offsets = [0, 256], sizes = [2, 128], strides = [1, 1]} : vector<2x512xf32> to vector<2x128xf32>
    %238 = math.tanh %237 : vector<2x128xf32>
    %239 = vector.extract_strided_slice %199 {offsets = [0, 384], sizes = [2, 128], strides = [1, 1]} : vector<2x512xf32> to vector<2x128xf32>
    %240 = arith.negf %239 : vector<2x128xf32>
    %241 = math.exp %240 : vector<2x128xf32>
    %cst_53 = arith.constant 1.000000e+00 : f32
    %242 = vector.broadcast %cst_53 : f32 to vector<2x128xf32>
    %243 = arith.addf %242, %241 : vector<2x128xf32>
    %244 = arith.divf %242, %243 : vector<2x128xf32>
    %245 = arith.mulf %236, %186 : vector<2x128xf32>
    %246 = arith.mulf %230, %238 : vector<2x128xf32>
    %247 = arith.addf %245, %246 : vector<2x128xf32>
    %248 = math.tanh %247 : vector<2x128xf32>
    %249 = arith.mulf %244, %248 : vector<2x128xf32>
    %250 = tpu.concatenate %224, %249 in 1 : vector<2x128xf32>, vector<2x128xf32> -> vector<2x256xf32>
    %251 = arith.addf %190, %250 : vector<2x256xf32>
    %cst_54 = arith.constant dense<0.000000e+00> : vector<2x1024xf32>
    %252 = tpu.matmul %250, %3, %cst_54 {dimension_numbers = #tpu.dot_dimension_numbers<[1], [0], [0], [1], [0, 0, 1, 1], [], []>} : vector<2x256xf32>, vector<256x1024xf32>, vector<2x1024xf32> -> vector<2x1024xf32>
    %253 = vector.extract_strided_slice %252 {offsets = [0, 0], sizes = [2, 512], strides = [1, 1]} : vector<2x1024xf32> to vector<2x512xf32>
    %c0_55 = arith.constant 0 : index
    %c4_56 = arith.constant 4 : index
    %c0_57 = arith.constant 0 : index
    %254 = vector.load %arg1[%c0_55, %c4_56, %c0_57] : memref<2x8x512xf32, #tpu.memory_space<vmem>>, vector<2x1x512xf32>
    %255 = vector.shape_cast %254 : vector<2x1x512xf32> to vector<2x512xf32>
    %256 = arith.addf %253, %255 : vector<2x512xf32>
    %257 = vector.extract_strided_slice %252 {offsets = [0, 512], sizes = [2, 512], strides = [1, 1]} : vector<2x1024xf32> to vector<2x512xf32>
    %c0_58 = arith.constant 0 : index
    %c3_59 = arith.constant 3 : index
    %c0_60 = arith.constant 0 : index
    %258 = vector.load %arg2[%c0_58, %c3_59, %c0_60] : memref<2x8x512xf32, #tpu.memory_space<vmem>>, vector<2x1x512xf32>
    %259 = vector.shape_cast %258 : vector<2x1x512xf32> to vector<2x512xf32>
    %260 = arith.addf %257, %259 : vector<2x512xf32>
    %261 = vector.extract_strided_slice %256 {offsets = [0, 0], sizes = [2, 128], strides = [1, 1]} : vector<2x512xf32> to vector<2x128xf32>
    %262 = arith.negf %261 : vector<2x128xf32>
    %263 = math.exp %262 : vector<2x128xf32>
    %cst_61 = arith.constant 1.000000e+00 : f32
    %264 = vector.broadcast %cst_61 : f32 to vector<2x128xf32>
    %265 = arith.addf %264, %263 : vector<2x128xf32>
    %266 = arith.divf %264, %265 : vector<2x128xf32>
    %267 = vector.extract_strided_slice %256 {offsets = [0, 128], sizes = [2, 128], strides = [1, 1]} : vector<2x512xf32> to vector<2x128xf32>
    %268 = arith.negf %267 : vector<2x128xf32>
    %269 = math.exp %268 : vector<2x128xf32>
    %cst_62 = arith.constant 1.000000e+00 : f32
    %270 = vector.broadcast %cst_62 : f32 to vector<2x128xf32>
    %271 = arith.addf %270, %269 : vector<2x128xf32>
    %272 = arith.divf %270, %271 : vector<2x128xf32>
    %273 = vector.extract_strided_slice %256 {offsets = [0, 256], sizes = [2, 128], strides = [1, 1]} : vector<2x512xf32> to vector<2x128xf32>
    %274 = math.tanh %273 : vector<2x128xf32>
    %275 = vector.extract_strided_slice %256 {offsets = [0, 384], sizes = [2, 128], strides = [1, 1]} : vector<2x512xf32> to vector<2x128xf32>
    %276 = arith.negf %275 : vector<2x128xf32>
    %277 = math.exp %276 : vector<2x128xf32>
    %cst_63 = arith.constant 1.000000e+00 : f32
    %278 = vector.broadcast %cst_63 : f32 to vector<2x128xf32>
    %279 = arith.addf %278, %277 : vector<2x128xf32>
    %280 = arith.divf %278, %279 : vector<2x128xf32>
    %281 = arith.mulf %272, %222 : vector<2x128xf32>
    %282 = arith.mulf %266, %274 : vector<2x128xf32>
    %283 = arith.addf %281, %282 : vector<2x128xf32>
    %284 = math.tanh %283 : vector<2x128xf32>
    %285 = arith.mulf %280, %284 : vector<2x128xf32>
    %286 = vector.extract_strided_slice %260 {offsets = [0, 0], sizes = [2, 128], strides = [1, 1]} : vector<2x512xf32> to vector<2x128xf32>
    %287 = arith.negf %286 : vector<2x128xf32>
    %288 = math.exp %287 : vector<2x128xf32>
    %cst_64 = arith.constant 1.000000e+00 : f32
    %289 = vector.broadcast %cst_64 : f32 to vector<2x128xf32>
    %290 = arith.addf %289, %288 : vector<2x128xf32>
    %291 = arith.divf %289, %290 : vector<2x128xf32>
    %292 = vector.extract_strided_slice %260 {offsets = [0, 128], sizes = [2, 128], strides = [1, 1]} : vector<2x512xf32> to vector<2x128xf32>
    %293 = arith.negf %292 : vector<2x128xf32>
    %294 = math.exp %293 : vector<2x128xf32>
    %cst_65 = arith.constant 1.000000e+00 : f32
    %295 = vector.broadcast %cst_65 : f32 to vector<2x128xf32>
    %296 = arith.addf %295, %294 : vector<2x128xf32>
    %297 = arith.divf %295, %296 : vector<2x128xf32>
    %298 = vector.extract_strided_slice %260 {offsets = [0, 256], sizes = [2, 128], strides = [1, 1]} : vector<2x512xf32> to vector<2x128xf32>
    %299 = math.tanh %298 : vector<2x128xf32>
    %300 = vector.extract_strided_slice %260 {offsets = [0, 384], sizes = [2, 128], strides = [1, 1]} : vector<2x512xf32> to vector<2x128xf32>
    %301 = arith.negf %300 : vector<2x128xf32>
    %302 = math.exp %301 : vector<2x128xf32>
    %cst_66 = arith.constant 1.000000e+00 : f32
    %303 = vector.broadcast %cst_66 : f32 to vector<2x128xf32>
    %304 = arith.addf %303, %302 : vector<2x128xf32>
    %305 = arith.divf %303, %304 : vector<2x128xf32>
    %306 = arith.mulf %297, %247 : vector<2x128xf32>
    %307 = arith.mulf %291, %299 : vector<2x128xf32>
    %308 = arith.addf %306, %307 : vector<2x128xf32>
    %309 = math.tanh %308 : vector<2x128xf32>
    %310 = arith.mulf %305, %309 : vector<2x128xf32>
    %311 = tpu.concatenate %285, %310 in 1 : vector<2x128xf32>, vector<2x128xf32> -> vector<2x256xf32>
    %312 = arith.addf %251, %311 : vector<2x256xf32>
    %cst_67 = arith.constant dense<0.000000e+00> : vector<2x1024xf32>
    %313 = tpu.matmul %311, %3, %cst_67 {dimension_numbers = #tpu.dot_dimension_numbers<[1], [0], [0], [1], [0, 0, 1, 1], [], []>} : vector<2x256xf32>, vector<256x1024xf32>, vector<2x1024xf32> -> vector<2x1024xf32>
    %314 = vector.extract_strided_slice %313 {offsets = [0, 0], sizes = [2, 512], strides = [1, 1]} : vector<2x1024xf32> to vector<2x512xf32>
    %c0_68 = arith.constant 0 : index
    %c5_69 = arith.constant 5 : index
    %c0_70 = arith.constant 0 : index
    %315 = vector.load %arg1[%c0_68, %c5_69, %c0_70] : memref<2x8x512xf32, #tpu.memory_space<vmem>>, vector<2x1x512xf32>
    %316 = vector.shape_cast %315 : vector<2x1x512xf32> to vector<2x512xf32>
    %317 = arith.addf %314, %316 : vector<2x512xf32>
    %318 = vector.extract_strided_slice %313 {offsets = [0, 512], sizes = [2, 512], strides = [1, 1]} : vector<2x1024xf32> to vector<2x512xf32>
    %c0_71 = arith.constant 0 : index
    %c2_72 = arith.constant 2 : index
    %c0_73 = arith.constant 0 : index
    %319 = vector.load %arg2[%c0_71, %c2_72, %c0_73] : memref<2x8x512xf32, #tpu.memory_space<vmem>>, vector<2x1x512xf32>
    %320 = vector.shape_cast %319 : vector<2x1x512xf32> to vector<2x512xf32>
    %321 = arith.addf %318, %320 : vector<2x512xf32>
    %322 = vector.extract_strided_slice %317 {offsets = [0, 0], sizes = [2, 128], strides = [1, 1]} : vector<2x512xf32> to vector<2x128xf32>
    %323 = arith.negf %322 : vector<2x128xf32>
    %324 = math.exp %323 : vector<2x128xf32>
    %cst_74 = arith.constant 1.000000e+00 : f32
    %325 = vector.broadcast %cst_74 : f32 to vector<2x128xf32>
    %326 = arith.addf %325, %324 : vector<2x128xf32>
    %327 = arith.divf %325, %326 : vector<2x128xf32>
    %328 = vector.extract_strided_slice %317 {offsets = [0, 128], sizes = [2, 128], strides = [1, 1]} : vector<2x512xf32> to vector<2x128xf32>
    %329 = arith.negf %328 : vector<2x128xf32>
    %330 = math.exp %329 : vector<2x128xf32>
    %cst_75 = arith.constant 1.000000e+00 : f32
    %331 = vector.broadcast %cst_75 : f32 to vector<2x128xf32>
    %332 = arith.addf %331, %330 : vector<2x128xf32>
    %333 = arith.divf %331, %332 : vector<2x128xf32>
    %334 = vector.extract_strided_slice %317 {offsets = [0, 256], sizes = [2, 128], strides = [1, 1]} : vector<2x512xf32> to vector<2x128xf32>
    %335 = math.tanh %334 : vector<2x128xf32>
    %336 = vector.extract_strided_slice %317 {offsets = [0, 384], sizes = [2, 128], strides = [1, 1]} : vector<2x512xf32> to vector<2x128xf32>
    %337 = arith.negf %336 : vector<2x128xf32>
    %338 = math.exp %337 : vector<2x128xf32>
    %cst_76 = arith.constant 1.000000e+00 : f32
    %339 = vector.broadcast %cst_76 : f32 to vector<2x128xf32>
    %340 = arith.addf %339, %338 : vector<2x128xf32>
    %341 = arith.divf %339, %340 : vector<2x128xf32>
    %342 = arith.mulf %333, %283 : vector<2x128xf32>
    %343 = arith.mulf %327, %335 : vector<2x128xf32>
    %344 = arith.addf %342, %343 : vector<2x128xf32>
    %345 = math.tanh %344 : vector<2x128xf32>
    %346 = arith.mulf %341, %345 : vector<2x128xf32>
    %347 = vector.extract_strided_slice %321 {offsets = [0, 0], sizes = [2, 128], strides = [1, 1]} : vector<2x512xf32> to vector<2x128xf32>
    %348 = arith.negf %347 : vector<2x128xf32>
    %349 = math.exp %348 : vector<2x128xf32>
    %cst_77 = arith.constant 1.000000e+00 : f32
    %350 = vector.broadcast %cst_77 : f32 to vector<2x128xf32>
    %351 = arith.addf %350, %349 : vector<2x128xf32>
    %352 = arith.divf %350, %351 : vector<2x128xf32>
    %353 = vector.extract_strided_slice %321 {offsets = [0, 128], sizes = [2, 128], strides = [1, 1]} : vector<2x512xf32> to vector<2x128xf32>
    %354 = arith.negf %353 : vector<2x128xf32>
    %355 = math.exp %354 : vector<2x128xf32>
    %cst_78 = arith.constant 1.000000e+00 : f32
    %356 = vector.broadcast %cst_78 : f32 to vector<2x128xf32>
    %357 = arith.addf %356, %355 : vector<2x128xf32>
    %358 = arith.divf %356, %357 : vector<2x128xf32>
    %359 = vector.extract_strided_slice %321 {offsets = [0, 256], sizes = [2, 128], strides = [1, 1]} : vector<2x512xf32> to vector<2x128xf32>
    %360 = math.tanh %359 : vector<2x128xf32>
    %361 = vector.extract_strided_slice %321 {offsets = [0, 384], sizes = [2, 128], strides = [1, 1]} : vector<2x512xf32> to vector<2x128xf32>
    %362 = arith.negf %361 : vector<2x128xf32>
    %363 = math.exp %362 : vector<2x128xf32>
    %cst_79 = arith.constant 1.000000e+00 : f32
    %364 = vector.broadcast %cst_79 : f32 to vector<2x128xf32>
    %365 = arith.addf %364, %363 : vector<2x128xf32>
    %366 = arith.divf %364, %365 : vector<2x128xf32>
    %367 = arith.mulf %358, %308 : vector<2x128xf32>
    %368 = arith.mulf %352, %360 : vector<2x128xf32>
    %369 = arith.addf %367, %368 : vector<2x128xf32>
    %370 = math.tanh %369 : vector<2x128xf32>
    %371 = arith.mulf %366, %370 : vector<2x128xf32>
    %372 = tpu.concatenate %346, %371 in 1 : vector<2x128xf32>, vector<2x128xf32> -> vector<2x256xf32>
    %373 = arith.addf %312, %372 : vector<2x256xf32>
    %cst_80 = arith.constant dense<0.000000e+00> : vector<2x1024xf32>
    %374 = tpu.matmul %372, %3, %cst_80 {dimension_numbers = #tpu.dot_dimension_numbers<[1], [0], [0], [1], [0, 0, 1, 1], [], []>} : vector<2x256xf32>, vector<256x1024xf32>, vector<2x1024xf32> -> vector<2x1024xf32>
    %375 = vector.extract_strided_slice %374 {offsets = [0, 0], sizes = [2, 512], strides = [1, 1]} : vector<2x1024xf32> to vector<2x512xf32>
    %c0_81 = arith.constant 0 : index
    %c6_82 = arith.constant 6 : index
    %c0_83 = arith.constant 0 : index
    %376 = vector.load %arg1[%c0_81, %c6_82, %c0_83] : memref<2x8x512xf32, #tpu.memory_space<vmem>>, vector<2x1x512xf32>
    %377 = vector.shape_cast %376 : vector<2x1x512xf32> to vector<2x512xf32>
    %378 = arith.addf %375, %377 : vector<2x512xf32>
    %379 = vector.extract_strided_slice %374 {offsets = [0, 512], sizes = [2, 512], strides = [1, 1]} : vector<2x1024xf32> to vector<2x512xf32>
    %c0_84 = arith.constant 0 : index
    %c1_85 = arith.constant 1 : index
    %c0_86 = arith.constant 0 : index
    %380 = vector.load %arg2[%c0_84, %c1_85, %c0_86] : memref<2x8x512xf32, #tpu.memory_space<vmem>>, vector<2x1x512xf32>
    %381 = vector.shape_cast %380 : vector<2x1x512xf32> to vector<2x512xf32>
    %382 = arith.addf %379, %381 : vector<2x512xf32>
    %383 = vector.extract_strided_slice %378 {offsets = [0, 0], sizes = [2, 128], strides = [1, 1]} : vector<2x512xf32> to vector<2x128xf32>
    %384 = arith.negf %383 : vector<2x128xf32>
    %385 = math.exp %384 : vector<2x128xf32>
    %cst_87 = arith.constant 1.000000e+00 : f32
    %386 = vector.broadcast %cst_87 : f32 to vector<2x128xf32>
    %387 = arith.addf %386, %385 : vector<2x128xf32>
    %388 = arith.divf %386, %387 : vector<2x128xf32>
    %389 = vector.extract_strided_slice %378 {offsets = [0, 128], sizes = [2, 128], strides = [1, 1]} : vector<2x512xf32> to vector<2x128xf32>
    %390 = arith.negf %389 : vector<2x128xf32>
    %391 = math.exp %390 : vector<2x128xf32>
    %cst_88 = arith.constant 1.000000e+00 : f32
    %392 = vector.broadcast %cst_88 : f32 to vector<2x128xf32>
    %393 = arith.addf %392, %391 : vector<2x128xf32>
    %394 = arith.divf %392, %393 : vector<2x128xf32>
    %395 = vector.extract_strided_slice %378 {offsets = [0, 256], sizes = [2, 128], strides = [1, 1]} : vector<2x512xf32> to vector<2x128xf32>
    %396 = math.tanh %395 : vector<2x128xf32>
    %397 = vector.extract_strided_slice %378 {offsets = [0, 384], sizes = [2, 128], strides = [1, 1]} : vector<2x512xf32> to vector<2x128xf32>
    %398 = arith.negf %397 : vector<2x128xf32>
    %399 = math.exp %398 : vector<2x128xf32>
    %cst_89 = arith.constant 1.000000e+00 : f32
    %400 = vector.broadcast %cst_89 : f32 to vector<2x128xf32>
    %401 = arith.addf %400, %399 : vector<2x128xf32>
    %402 = arith.divf %400, %401 : vector<2x128xf32>
    %403 = arith.mulf %394, %344 : vector<2x128xf32>
    %404 = arith.mulf %388, %396 : vector<2x128xf32>
    %405 = arith.addf %403, %404 : vector<2x128xf32>
    %406 = math.tanh %405 : vector<2x128xf32>
    %407 = arith.mulf %402, %406 : vector<2x128xf32>
    %408 = vector.extract_strided_slice %382 {offsets = [0, 0], sizes = [2, 128], strides = [1, 1]} : vector<2x512xf32> to vector<2x128xf32>
    %409 = arith.negf %408 : vector<2x128xf32>
    %410 = math.exp %409 : vector<2x128xf32>
    %cst_90 = arith.constant 1.000000e+00 : f32
    %411 = vector.broadcast %cst_90 : f32 to vector<2x128xf32>
    %412 = arith.addf %411, %410 : vector<2x128xf32>
    %413 = arith.divf %411, %412 : vector<2x128xf32>
    %414 = vector.extract_strided_slice %382 {offsets = [0, 128], sizes = [2, 128], strides = [1, 1]} : vector<2x512xf32> to vector<2x128xf32>
    %415 = arith.negf %414 : vector<2x128xf32>
    %416 = math.exp %415 : vector<2x128xf32>
    %cst_91 = arith.constant 1.000000e+00 : f32
    %417 = vector.broadcast %cst_91 : f32 to vector<2x128xf32>
    %418 = arith.addf %417, %416 : vector<2x128xf32>
    %419 = arith.divf %417, %418 : vector<2x128xf32>
    %420 = vector.extract_strided_slice %382 {offsets = [0, 256], sizes = [2, 128], strides = [1, 1]} : vector<2x512xf32> to vector<2x128xf32>
    %421 = math.tanh %420 : vector<2x128xf32>
    %422 = vector.extract_strided_slice %382 {offsets = [0, 384], sizes = [2, 128], strides = [1, 1]} : vector<2x512xf32> to vector<2x128xf32>
    %423 = arith.negf %422 : vector<2x128xf32>
    %424 = math.exp %423 : vector<2x128xf32>
    %cst_92 = arith.constant 1.000000e+00 : f32
    %425 = vector.broadcast %cst_92 : f32 to vector<2x128xf32>
    %426 = arith.addf %425, %424 : vector<2x128xf32>
    %427 = arith.divf %425, %426 : vector<2x128xf32>
    %428 = arith.mulf %419, %369 : vector<2x128xf32>
    %429 = arith.mulf %413, %421 : vector<2x128xf32>
    %430 = arith.addf %428, %429 : vector<2x128xf32>
    %431 = math.tanh %430 : vector<2x128xf32>
    %432 = arith.mulf %427, %431 : vector<2x128xf32>
    %433 = tpu.concatenate %407, %432 in 1 : vector<2x128xf32>, vector<2x128xf32> -> vector<2x256xf32>
    %434 = arith.addf %373, %433 : vector<2x256xf32>
    %cst_93 = arith.constant dense<0.000000e+00> : vector<2x1024xf32>
    %435 = tpu.matmul %433, %3, %cst_93 {dimension_numbers = #tpu.dot_dimension_numbers<[1], [0], [0], [1], [0, 0, 1, 1], [], []>} : vector<2x256xf32>, vector<256x1024xf32>, vector<2x1024xf32> -> vector<2x1024xf32>
    %436 = vector.extract_strided_slice %435 {offsets = [0, 0], sizes = [2, 512], strides = [1, 1]} : vector<2x1024xf32> to vector<2x512xf32>
    %c0_94 = arith.constant 0 : index
    %c7_95 = arith.constant 7 : index
    %c0_96 = arith.constant 0 : index
    %437 = vector.load %arg1[%c0_94, %c7_95, %c0_96] : memref<2x8x512xf32, #tpu.memory_space<vmem>>, vector<2x1x512xf32>
    %438 = vector.shape_cast %437 : vector<2x1x512xf32> to vector<2x512xf32>
    %439 = arith.addf %436, %438 : vector<2x512xf32>
    %440 = vector.extract_strided_slice %435 {offsets = [0, 512], sizes = [2, 512], strides = [1, 1]} : vector<2x1024xf32> to vector<2x512xf32>
    %c0_97 = arith.constant 0 : index
    %c0_98 = arith.constant 0 : index
    %c0_99 = arith.constant 0 : index
    %441 = vector.load %arg2[%c0_97, %c0_98, %c0_99] : memref<2x8x512xf32, #tpu.memory_space<vmem>>, vector<2x1x512xf32>
    %442 = vector.shape_cast %441 : vector<2x1x512xf32> to vector<2x512xf32>
    %443 = arith.addf %440, %442 : vector<2x512xf32>
    %444 = vector.extract_strided_slice %439 {offsets = [0, 0], sizes = [2, 128], strides = [1, 1]} : vector<2x512xf32> to vector<2x128xf32>
    %445 = arith.negf %444 : vector<2x128xf32>
    %446 = math.exp %445 : vector<2x128xf32>
    %cst_100 = arith.constant 1.000000e+00 : f32
    %447 = vector.broadcast %cst_100 : f32 to vector<2x128xf32>
    %448 = arith.addf %447, %446 : vector<2x128xf32>
    %449 = arith.divf %447, %448 : vector<2x128xf32>
    %450 = vector.extract_strided_slice %439 {offsets = [0, 128], sizes = [2, 128], strides = [1, 1]} : vector<2x512xf32> to vector<2x128xf32>
    %451 = arith.negf %450 : vector<2x128xf32>
    %452 = math.exp %451 : vector<2x128xf32>
    %cst_101 = arith.constant 1.000000e+00 : f32
    %453 = vector.broadcast %cst_101 : f32 to vector<2x128xf32>
    %454 = arith.addf %453, %452 : vector<2x128xf32>
    %455 = arith.divf %453, %454 : vector<2x128xf32>
    %456 = vector.extract_strided_slice %439 {offsets = [0, 256], sizes = [2, 128], strides = [1, 1]} : vector<2x512xf32> to vector<2x128xf32>
    %457 = math.tanh %456 : vector<2x128xf32>
    %458 = vector.extract_strided_slice %439 {offsets = [0, 384], sizes = [2, 128], strides = [1, 1]} : vector<2x512xf32> to vector<2x128xf32>
    %459 = arith.negf %458 : vector<2x128xf32>
    %460 = math.exp %459 : vector<2x128xf32>
    %cst_102 = arith.constant 1.000000e+00 : f32
    %461 = vector.broadcast %cst_102 : f32 to vector<2x128xf32>
    %462 = arith.addf %461, %460 : vector<2x128xf32>
    %463 = arith.divf %461, %462 : vector<2x128xf32>
    %464 = arith.mulf %455, %405 : vector<2x128xf32>
    %465 = arith.mulf %449, %457 : vector<2x128xf32>
    %466 = arith.addf %464, %465 : vector<2x128xf32>
    %467 = math.tanh %466 : vector<2x128xf32>
    %468 = arith.mulf %463, %467 : vector<2x128xf32>
    %469 = vector.extract_strided_slice %443 {offsets = [0, 0], sizes = [2, 128], strides = [1, 1]} : vector<2x512xf32> to vector<2x128xf32>
    %470 = arith.negf %469 : vector<2x128xf32>
    %471 = math.exp %470 : vector<2x128xf32>
    %cst_103 = arith.constant 1.000000e+00 : f32
    %472 = vector.broadcast %cst_103 : f32 to vector<2x128xf32>
    %473 = arith.addf %472, %471 : vector<2x128xf32>
    %474 = arith.divf %472, %473 : vector<2x128xf32>
    %475 = vector.extract_strided_slice %443 {offsets = [0, 128], sizes = [2, 128], strides = [1, 1]} : vector<2x512xf32> to vector<2x128xf32>
    %476 = arith.negf %475 : vector<2x128xf32>
    %477 = math.exp %476 : vector<2x128xf32>
    %cst_104 = arith.constant 1.000000e+00 : f32
    %478 = vector.broadcast %cst_104 : f32 to vector<2x128xf32>
    %479 = arith.addf %478, %477 : vector<2x128xf32>
    %480 = arith.divf %478, %479 : vector<2x128xf32>
    %481 = vector.extract_strided_slice %443 {offsets = [0, 256], sizes = [2, 128], strides = [1, 1]} : vector<2x512xf32> to vector<2x128xf32>
    %482 = math.tanh %481 : vector<2x128xf32>
    %483 = vector.extract_strided_slice %443 {offsets = [0, 384], sizes = [2, 128], strides = [1, 1]} : vector<2x512xf32> to vector<2x128xf32>
    %484 = arith.negf %483 : vector<2x128xf32>
    %485 = math.exp %484 : vector<2x128xf32>
    %cst_105 = arith.constant 1.000000e+00 : f32
    %486 = vector.broadcast %cst_105 : f32 to vector<2x128xf32>
    %487 = arith.addf %486, %485 : vector<2x128xf32>
    %488 = arith.divf %486, %487 : vector<2x128xf32>
    %489 = arith.mulf %480, %430 : vector<2x128xf32>
    %490 = arith.mulf %474, %482 : vector<2x128xf32>
    %491 = arith.addf %489, %490 : vector<2x128xf32>
    %492 = math.tanh %491 : vector<2x128xf32>
    %493 = arith.mulf %488, %492 : vector<2x128xf32>
    %494 = tpu.concatenate %468, %493 in 1 : vector<2x128xf32>, vector<2x128xf32> -> vector<2x256xf32>
    %495 = arith.addf %434, %494 : vector<2x256xf32>
    %c0_106 = arith.constant 0 : index
    %c0_107 = arith.constant 0 : index
    %496 = vector.load %arg5[%c0_106, %c0_107] : memref<2x256xf32, #tpu.memory_space<vmem>>, vector<2x256xf32>
    tpu.vector_store %arg5[%c0_106, %c0_107], %494 {strides = array<i32>} : memref<2x256xf32, #tpu.memory_space<vmem>>, vector<2x256xf32>,
    %c0_108 = arith.constant 0 : index
    %c0_109 = arith.constant 0 : index
    %497 = vector.load %arg6[%c0_108, %c0_109] : memref<2x128xf32, #tpu.memory_space<vmem>>, vector<2x128xf32>
    tpu.vector_store %arg6[%c0_108, %c0_109], %466 {strides = array<i32>} : memref<2x128xf32, #tpu.memory_space<vmem>>, vector<2x128xf32>,
    %c0_110 = arith.constant 0 : index
    %c0_111 = arith.constant 0 : index
    %498 = vector.load %arg7[%c0_110, %c0_111] : memref<2x128xf32, #tpu.memory_space<vmem>>, vector<2x128xf32>
    tpu.vector_store %arg7[%c0_110, %c0_111], %491 {strides = array<i32>} : memref<2x128xf32, #tpu.memory_space<vmem>>, vector<2x128xf32>,
    %c0_112 = arith.constant 0 : index
    %c0_113 = arith.constant 0 : index
    %499 = vector.load %arg8[%c0_112, %c0_113] : memref<2x256xf32, #tpu.memory_space<vmem>>, vector<2x256xf32>
    tpu.vector_store %arg8[%c0_112, %c0_113], %495 {strides = array<i32>} : memref<2x256xf32, #tpu.memory_space<vmem>>, vector<2x256xf32>,
    %c0_i32_114 = arith.constant 0 : i32
    %500 = arith.cmpi eq, %arg0, %c0_i32_114 : i32
    %501 = arith.extui %500 : i1 to i32
    %c0_i32_115 = arith.constant 0 : i32
    %502 = arith.cmpi ne, %501, %c0_i32_115 : i32
    scf.if %502 {
      %c0_118 = arith.constant 0 : index
      %c0_119 = arith.constant 0 : index
      %506 = vector.load %arg9[%c0_118, %c0_119] : memref<2x256xf32, #tpu.memory_space<vmem>>, vector<2x256xf32>
      tpu.vector_store %arg9[%c0_118, %c0_119], %67 {strides = array<i32>} : memref<2x256xf32, #tpu.memory_space<vmem>>, vector<2x256xf32>,
    } else {
    }
    %c0_i32_116 = arith.constant 0 : i32
    %503 = arith.cmpi eq, %arg0, %c0_i32_116 : i32
    %504 = arith.extui %503 : i1 to i32
    %c0_i32_117 = arith.constant 0 : i32
    %505 = arith.cmpi ne, %504, %c0_i32_117 : i32
    scf.if %505 {
      %c0_118 = arith.constant 0 : index
      %c0_119 = arith.constant 0 : index
      %c0_120 = arith.constant 0 : index
      %506 = vector.load %arg4[%c0_118, %c0_119, %c0_120] : memref<3x2x256xf32, #tpu.memory_space<vmem>>, vector<1x2x256xf32>
      %507 = vector.shape_cast %506 : vector<1x2x256xf32> to vector<2x256xf32>
      %508 = vector.shape_cast %495 : vector<2x256xf32> to vector<1x2x256xf32>
      tpu.vector_store %arg4[%c0_118, %c0_119, %c0_120], %508 {strides = array<i32>} : memref<3x2x256xf32, #tpu.memory_space<vmem>>, vector<1x2x256xf32>,
      %c1_121 = arith.constant 1 : index
      %c0_122 = arith.constant 0 : index
      %c0_123 = arith.constant 0 : index
      %509 = vector.load %arg4[%c1_121, %c0_122, %c0_123] : memref<3x2x256xf32, #tpu.memory_space<vmem>>, vector<1x2x256xf32>
      %510 = vector.shape_cast %509 : vector<1x2x256xf32> to vector<2x256xf32>
      %511 = vector.shape_cast %494 : vector<2x256xf32> to vector<1x2x256xf32>
      tpu.vector_store %arg4[%c1_121, %c0_122, %c0_123], %511 {strides = array<i32>} : memref<3x2x256xf32, #tpu.memory_space<vmem>>, vector<1x2x256xf32>,
      %c0_124 = arith.constant 0 : index
      %c0_125 = arith.constant 0 : index
      %512 = vector.load %arg9[%c0_124, %c0_125] : memref<2x256xf32, #tpu.memory_space<vmem>>, vector<2x256xf32>
      %c2_126 = arith.constant 2 : index
      %c0_127 = arith.constant 0 : index
      %c0_128 = arith.constant 0 : index
      %513 = vector.load %arg4[%c2_126, %c0_127, %c0_128] : memref<3x2x256xf32, #tpu.memory_space<vmem>>, vector<1x2x256xf32>
      %514 = vector.shape_cast %513 : vector<1x2x256xf32> to vector<2x256xf32>
      %515 = vector.shape_cast %512 : vector<2x256xf32> to vector<1x2x256xf32>
      tpu.vector_store %arg4[%c2_126, %c0_127, %c0_128], %515 {strides = array<i32>} : memref<3x2x256xf32, #tpu.memory_space<vmem>>, vector<1x2x256xf32>,
    } else {
    }
    return
  }
  func.func @transform_0(%arg0: i32) -> (i32, i32, i32) {
    %c0_i32 = arith.constant 0 : i32
    %c0_i32_0 = arith.constant 0 : i32
    %c0_i32_1 = arith.constant 0 : i32
    return %c0_i32, %arg0, %c0_i32_0 : i32, i32, i32
  }
  func.func @transform_1(%arg0: i32) -> (i32, i32, i32) {
    %c0_i32 = arith.constant 0 : i32
    %0 = arith.subi %c0_i32, %arg0 : i32
    %c0_i32_0 = arith.constant 0 : i32
    %c1_i32 = arith.constant 1 : i32
    %c0_i32_1 = arith.constant 0 : i32
    return %c0_i32_0, %0, %c1_i32 : i32, i32, i32
  }
  func.func @transform_2(%arg0: i32) -> (i32, i32) {
    %c0_i32 = arith.constant 0 : i32
    %c0_i32_0 = arith.constant 0 : i32
    %c0_i32_1 = arith.constant 0 : i32
    return %c0_i32, %c0_i32_0 : i32, i32
  }
  func.func @transform_3(%arg0: i32) -> (i32, i32, i32) {
    %c0_i32 = arith.constant 0 : i32
    %c0_i32_0 = arith.constant 0 : i32
    %c0_i32_1 = arith.constant 0 : i32
    %c0_i32_2 = arith.constant 0 : i32
    return %c0_i32, %c0_i32_0, %c0_i32_1 : i32, i32, i32
  }
}

</mosaic_0001>

<llo_original>
// kernel: bert_lstm_cnn_forward.2
$region0: #{bert_lstm_cnn_forward.2}
  #allocation0 [shape = 'u32[]', space=smem, size = 0x4, offset = 0x4, fixed_abs, tag = 'smem constant byte address 0x4 - core index']
  #allocation1 [shape = 'u32[72,128]{1,0:T(1,128)}', space=vmem, size = 0x9000, scoped, tag = 'internal scratch']
  %s0 = inlined_call_operand.vmem [shape: f32[2,8,768], index: 0, kind: input, shape index: {}]
  %s1 = inlined_call_operand.vmem [shape: f32[768,1024], index: 1, kind: input, shape index: {}]
  %s2 = inlined_call_operand.vmem [shape: f32[1,1024], index: 2, kind: input, shape index: {}]
  %s3 = inlined_call_operand.vmem [shape: f32[2,8,1024], index: 3, kind: output, shape index: {}]
  %s4 = sld [smem:[#allocation0]]
  $region45: #{bert_lstm_cnn_forward.2} parent=0
    _
  %s6 = ssub.s32 1, %s4
  %s7 = scalar_select 0, %s6, %s4
  loop: start=0, step=1, limit=4
  $region2: #{bert_lstm_cnn_forward.2} parent=0 // loop_pre_header
    _
  $region3: #{bert_lstm_cnn_forward.2} parent=0 // loop_header
    %s9 = sphi 0, %s13
    %p10 = scmp.ge.s32.totalorder %s9, 4
    %s16 = sphi 0, %s28
    %s17 = sphi 0, %s24
    %s18 = sphi 0, %s16
    %s19 = sphi 0, %s17
    %s20 = sphi 0, %s18
    %s21 = sphi 0, %s19
    %s33 = sphi 0, %s35
    %s36 = sphi 0, %s33
    %s37 = sphi 0, %s36
    %s53 = sphi 0, %s37
    %s57 = sphi 0, %s57
    %s59 = sphi 0, %s57
    %s60 = sphi 0, %s59
    %s74 = sphi 0, %s60
    %s78 = sphi 0, %s78
    %s80 = sphi 0, %s78
    %s81 = sphi 0, %s80
    %s95 = sphi 0, %s81
    %s103 = sphi 0, %s105
    %s106 = sphi 0, %s103
    %s107 = sphi 0, %s106
    %s123 = sphi 0, %s107
  $region4: #{bert_lstm_cnn_forward.2} parent=0 // loop_header_branch
    %12 = sbr.rel (%p10) target = $region8
  $region5: #{bert_lstm_cnn_forward.2} parent=0 // loop_body
    %s14 = ssub.s32 %s9, 1
    %s15 = ssub.s32 %s9, 2
    %s22 = sadd.s32 1, %s17
    %p23 = scmp.ge.s32.totalorder %s22, 1
    %s24 = scalar_select %p23, 0, %s22
    %s25 = sadd.s32 1, %s16
    %s26 = scalar_select %p23, %s25, %s16
    %p27 = scmp.ge.s32.totalorder %s26, 2
    %s28 = scalar_select %p27, 0, %s26
    %s29 = ssub.s32 %s16, %s28
    %s30 = ssub.s32 %s17, %s24
    %s31 = sor.u32 %s29, %s30
    %p32 = scmp.eq.s32.totalorder %s31, 0
    %s34 = sadd.s32 %s33, 1
    %s35 = scalar_select %p32, %s33, %s34
    %p38 = pneg %p32
    %p39 = scmp.eq.s32.totalorder %s9, 1
    %p40 = por %p38, %p39
    %p41 = scmp.ne.s32.totalorder %s33, %s36
    %p42 = scmp.eq.s32.totalorder %s9, 0
    %p43 = por %p41, %p42
    %p44 = scmp.ne.s32.totalorder %s33, %s36
    %p45 = scmp.eq.s32.totalorder %s14, 1
    %p46 = por %p44, %p45
    %p47 = scmp.ne.s32.totalorder %s36, %s37
    %p48 = scmp.eq.s32.totalorder %s14, 0
    %p49 = por %p47, %p48
    %p50 = scmp.ne.s32.totalorder %s36, %s37
    %p51 = scmp.eq.s32.totalorder %s15, 1
    %p52 = por %p50, %p51
    %p54 = scmp.ne.s32.totalorder %s37, %s53
    %p55 = scmp.eq.s32.totalorder %s15, 0
    %p56 = por %p54, %p55
    %s58 = sadd.s32 %s57, 1
    %p61 = scmp.eq.s32.totalorder %s9, 1
    %p62 = scmp.ne.s32.totalorder %s57, %s59
    %p63 = scmp.eq.s32.totalorder %s9, 0
    %p64 = por %p62, %p63
    %p65 = scmp.ne.s32.totalorder %s57, %s59
    %p66 = scmp.eq.s32.totalorder %s14, 1
    %p67 = por %p65, %p66
    %p68 = scmp.ne.s32.totalorder %s59, %s60
    %p69 = scmp.eq.s32.totalorder %s14, 0
    %p70 = por %p68, %p69
    %p71 = scmp.ne.s32.totalorder %s59, %s60
    %p72 = scmp.eq.s32.totalorder %s15, 1
    %p73 = por %p71, %p72
    %p75 = scmp.ne.s32.totalorder %s60, %s74
    %p76 = scmp.eq.s32.totalorder %s15, 0
    %p77 = por %p75, %p76
    %s79 = sadd.s32 %s78, 1
    %p82 = scmp.eq.s32.totalorder %s9, 1
    %p83 = scmp.ne.s32.totalorder %s78, %s80
    %p84 = scmp.eq.s32.totalorder %s9, 0
    %p85 = por %p83, %p84
    %p86 = scmp.ne.s32.totalorder %s78, %s80
    %p87 = scmp.eq.s32.totalorder %s14, 1
    %p88 = por %p86, %p87
    %p89 = scmp.ne.s32.totalorder %s80, %s81
    %p90 = scmp.eq.s32.totalorder %s14, 0
    %p91 = por %p89, %p90
    %p92 = scmp.ne.s32.totalorder %s80, %s81
    %p93 = scmp.eq.s32.totalorder %s15, 1
    %p94 = por %p92, %p93
    %p96 = scmp.ne.s32.totalorder %s81, %s95
    %p97 = scmp.eq.s32.totalorder %s15, 0
    %p98 = por %p96, %p97
    %s99 = ssub.s32 %s16, %s28
    %s100 = ssub.s32 %s17, %s24
    %s101 = sor.u32 %s99, %s100
    %p102 = scmp.eq.s32.totalorder %s101, 0
    %s104 = sadd.s32 %s103, 1
    %s105 = scalar_select %p102, %s103, %s104
    %p108 = pneg %p102
    %p109 = scmp.eq.s32.totalorder %s9, 1
    %p110 = por %p108, %p109
    %p111 = scmp.ne.s32.totalorder %s103, %s106
    %p112 = scmp.eq.s32.totalorder %s9, 0
    %p113 = por %p111, %p112
    %p114 = scmp.ne.s32.totalorder %s103, %s106
    %p115 = scmp.eq.s32.totalorder %s14, 1
    %p116 = por %p114, %p115
    %p117 = scmp.ne.s32.totalorder %s106, %s107
    %p118 = scmp.eq.s32.totalorder %s14, 0
    %p119 = por %p117, %p118
    %p120 = scmp.ne.s32.totalorder %s106, %s107
    %p121 = scmp.eq.s32.totalorder %s15, 1
    %p122 = por %p120, %p121
    %p124 = scmp.ne.s32.totalorder %s107, %s123
    %p125 = scmp.eq.s32.totalorder %s15, 0
    %p126 = por %p124, %p125
    %p127 = scmp.le.s32.totalorder 1, %s9
    %p128 = scmp.lt.s32.totalorder %s9, 3
    %p129 = pnand %p127, %p128
    %p130 = pneg %p129
    // Predicated region
    $region9: #{bert_lstm_cnn_forward.2} parent=5 // pred_check
      _
    $region10: #{bert_lstm_cnn_forward.2} parent=5 // pred_check_branch
      %132 = sbr.rel (%p129) target = $region12
    $region11: #{bert_lstm_cnn_forward.2} parent=5 // pred_region
      %s133 = ssub.s32 %s9, 1
      // Predicated region
      $region13: #{bert_lstm_cnn_forward.2} parent=11 // pred_check
        %p134 = pneg %p70
      $region14: #{bert_lstm_cnn_forward.2} parent=11 // pred_check_branch
        %136 = sbr.rel (%p134) target = $region16
      $region15: #{bert_lstm_cnn_forward.2} parent=11 // pred_region
        _
      $region16: #{bert_lstm_cnn_forward.2} parent=11 // pred_fallthru
        _
      // Predicated region
      $region17: #{bert_lstm_cnn_forward.2} parent=11 // pred_check
        %p137 = pneg %p91
      $region18: #{bert_lstm_cnn_forward.2} parent=11 // pred_check_branch
        %139 = sbr.rel (%p137) target = $region20
      $region19: #{bert_lstm_cnn_forward.2} parent=11 // pred_region
        _
      $region20: #{bert_lstm_cnn_forward.2} parent=11 // pred_fallthru
        _
    $region12: #{bert_lstm_cnn_forward.2} parent=5 // pred_fallthru
      _
    %p140 = scmp.lt.s32.totalorder %s9, 2
    // Predicated region
    $region21: #{bert_lstm_cnn_forward.2} parent=5 // pred_check
      %p141 = pneg %p140
    $region22: #{bert_lstm_cnn_forward.2} parent=5 // pred_check_branch
      %143 = sbr.rel (%p141) target = $region24
    $region23: #{bert_lstm_cnn_forward.2} parent=5 // pred_region
      // Predicated region
      $region25: #{bert_lstm_cnn_forward.2} parent=23 // pred_check
        %p144 = pneg %p43
      $region26: #{bert_lstm_cnn_forward.2} parent=23 // pred_check_branch
        %146 = sbr.rel (%p144) target = $region28
      $region27: #{bert_lstm_cnn_forward.2} parent=23 // pred_region
        %p147 = scmp.lt.s32.totalorder %s16, 1
        %s148 = scalar_select %p147, %s16, 1
        %p149 = scmp.lt.s32.totalorder %s17, 0
        %s150 = scalar_select %p149, %s17, 0
        %s151 = smul.addr %s150, 6
        %s152 = smul.addr %s148, 6
        %s153 = sadd.s32 %s151, %s152
        %s154 = smul.addr %s153, 8
        %s155 = scalar_lea.vmem %s0, %s154
      $region28: #{bert_lstm_cnn_forward.2} parent=23 // pred_fallthru
        _
    $region24: #{bert_lstm_cnn_forward.2} parent=5 // pred_fallthru
      _
    %p156 = scmp.le.s32.totalorder 1, %s9
    %p157 = scmp.lt.s32.totalorder %s9, 3
    %p158 = pnand %p156, %p157
    %p159 = pneg %p158
    // Predicated region
    $region29: #{bert_lstm_cnn_forward.2} parent=5 // pred_check
      _
    $region30: #{bert_lstm_cnn_forward.2} parent=5 // pred_check_branch
      %161 = sbr.rel (%p158) target = $region32
    $region31: #{bert_lstm_cnn_forward.2} parent=5 // pred_region
      %s162 = ssub.s32 %s9, 1
      %p163 = scmp.lt.s32.totalorder %s18, 1
      %s164 = scalar_select %p163, %s18, 1
      %p165 = scmp.lt.s32.totalorder %s19, 0
      %s166 = scalar_select %p165, %s19, 0
      %s167 = smul.addr %s166, 6
      %s168 = smul.addr %s164, 6
      %s169 = sadd.s32 %s167, %s168
      %s170 = smul.addr %s169, 8
      %s171 = scalar_lea.vmem %s0, %s170
      %p172 = pneg %p49
      %p173 = pneg %p46
      %p174 = pneg %p70
      %p175 = pneg %p67
      %p176 = pneg %p91
      %p177 = pneg %p88
      %p178 = pneg %p119
      %p179 = pneg %p116
      %p180 = scmp.lt.s32.totalorder %s18, 1
      %s181 = scalar_select %p180, %s18, 1
      %p182 = scmp.lt.s32.totalorder %s19, 0
      %s183 = scalar_select %p182, %s19, 0
      %s184 = smul.addr %s183, 8
      %s185 = smul.addr %s181, 8
      %s186 = sadd.s32 %s184, %s185
      %s187 = smul.addr %s186, 8
      %s188 = scalar_lea.vmem %s3, %s187
      %p189 = scmp.lt.s32.totalorder %s18, 1
      %s190 = scalar_select %p189, %s18, 1
      %p191 = scmp.lt.s32.totalorder %s19, 0
      %s192 = scalar_select %p191, %s19, 0
      %s193 = smul.addr %s192, 6
      %s194 = smul.addr %s190, 6
      %s195 = sadd.s32 %s193, %s194
      %s196 = smul.addr %s195, 8
      %s197 = scalar_lea.vmem %s0, %s196
      %p198 = scmp.lt.s32.totalorder %s18, 1
      %s199 = scalar_select %p198, %s18, 1
      %p200 = scmp.lt.s32.totalorder %s19, 0
      %s201 = scalar_select %p200, %s19, 0
      %s202 = smul.addr %s201, 8
      %s203 = smul.addr %s199, 8
      %s204 = sadd.s32 %s202, %s203
      %s205 = smul.addr %s204, 8
      %s206 = scalar_lea.vmem %s3, %s205
      %v207 = vld [vmem:[%s197] sm:$0xff]
      %v208 = vld [vmem:[%s197 + $0x8] sm:$0xff]
      %v209 = vld [vmem:[%s197 + $0x10] sm:$0xff]
      %v210 = vld [vmem:[%s197 + $0x18] sm:$0xff]
      %v211 = vld [vmem:[%s197 + $0x20] sm:$0xff]
      %v212 = vld [vmem:[%s197 + $0x28] sm:$0xff]
      %v213 = vld [vmem:[%s1] sm:$0xff]
      %v214 = vld [vmem:[%s1 + $0x8] sm:$0xff]
      %v215 = vld [vmem:[%s1 + $0x10] sm:$0xff]
      %v216 = vld [vmem:[%s1 + $0x18] sm:$0xff]
      %v217 = vld [vmem:[%s1 + $0x20] sm:$0xff]
      %v218 = vld [vmem:[%s1 + $0x28] sm:$0xff]
      %v219 = vld [vmem:[%s1 + $0x30] sm:$0xff]
      %v220 = vld [vmem:[%s1 + $0x38] sm:$0xff]
      %v221 = vld [vmem:[%s1 + $0x40] sm:$0xff]
      %v222 = vld [vmem:[%s1 + $0x48] sm:$0xff]
      %v223 = vld [vmem:[%s1 + $0x50] sm:$0xff]
      %v224 = vld [vmem:[%s1 + $0x58] sm:$0xff]
      %v225 = vld [vmem:[%s1 + $0x60] sm:$0xff]
      %v226 = vld [vmem:[%s1 + $0x68] sm:$0xff]
      %v227 = vld [vmem:[%s1 + $0x70] sm:$0xff]
      %v228 = vld [vmem:[%s1 + $0x78] sm:$0xff]
      %v229 = vld [vmem:[%s1 + $0x80] sm:$0xff]
      %v230 = vld [vmem:[%s1 + $0x88] sm:$0xff]
      %v231 = vld [vmem:[%s1 + $0x90] sm:$0xff]
      %v232 = vld [vmem:[%s1 + $0x98] sm:$0xff]
      %v233 = vld [vmem:[%s1 + $0xa0] sm:$0xff]
      %v234 = vld [vmem:[%s1 + $0xa8] sm:$0xff]
      %v235 = vld [vmem:[%s1 + $0xb0] sm:$0xff]
      %v236 = vld [vmem:[%s1 + $0xb8] sm:$0xff]
      %v237 = vld [vmem:[%s1 + $0xc0] sm:$0xff]
      %v238 = vld [vmem:[%s1 + $0xc8] sm:$0xff]
      %v239 = vld [vmem:[%s1 + $0xd0] sm:$0xff]
      %v240 = vld [vmem:[%s1 + $0xd8] sm:$0xff]
      %v241 = vld [vmem:[%s1 + $0xe0] sm:$0xff]
      %v242 = vld [vmem:[%s1 + $0xe8] sm:$0xff]
      %v243 = vld [vmem:[%s1 + $0xf0] sm:$0xff]
      %v244 = vld [vmem:[%s1 + $0xf8] sm:$0xff]
      %v245 = vld [vmem:[%s1 + $0x100] sm:$0xff]
      %v246 = vld [vmem:[%s1 + $0x108] sm:$0xff]
      %v247 = vld [vmem:[%s1 + $0x110] sm:$0xff]
      %v248 = vld [vmem:[%s1 + $0x118] sm:$0xff]
      %v249 = vld [vmem:[%s1 + $0x120] sm:$0xff]
      %v250 = vld [vmem:[%s1 + $0x128] sm:$0xff]
      %v251 = vld [vmem:[%s1 + $0x130] sm:$0xff]
      %v252 = vld [vmem:[%s1 + $0x138] sm:$0xff]
      %v253 = vld [vmem:[%s1 + $0x140] sm:$0xff]
      %v254 = vld [vmem:[%s1 + $0x148] sm:$0xff]
      %v255 = vld [vmem:[%s1 + $0x150] sm:$0xff]
      %v256 = vld [vmem:[%s1 + $0x158] sm:$0xff]
      %v257 = vld [vmem:[%s1 + $0x160] sm:$0xff]
      %v258 = vld [vmem:[%s1 + $0x168] sm:$0xff]
      %v259 = vld [vmem:[%s1 + $0x170] sm:$0xff]
      %v260 = vld [vmem:[%s1 + $0x178] sm:$0xff]
      %v261 = vld [vmem:[%s1 + $0x180] sm:$0xff]
      %v262 = vld [vmem:[%s1 + $0x188] sm:$0xff]
      %v263 = vld [vmem:[%s1 + $0x190] sm:$0xff]
      %v264 = vld [vmem:[%s1 + $0x198] sm:$0xff]
      %v265 = vld [vmem:[%s1 + $0x1a0] sm:$0xff]
      %v266 = vld [vmem:[%s1 + $0x1a8] sm:$0xff]
      %v267 = vld [vmem:[%s1 + $0x1b0] sm:$0xff]
      %v268 = vld [vmem:[%s1 + $0x1b8] sm:$0xff]
      %v269 = vld [vmem:[%s1 + $0x1c0] sm:$0xff]
      %v270 = vld [vmem:[%s1 + $0x1c8] sm:$0xff]
      %v271 = vld [vmem:[%s1 + $0x1d0] sm:$0xff]
      %v272 = vld [vmem:[%s1 + $0x1d8] sm:$0xff]
      %v273 = vld [vmem:[%s1 + $0x1e0] sm:$0xff]
      %v274 = vld [vmem:[%s1 + $0x1e8] sm:$0xff]
      %v275 = vld [vmem:[%s1 + $0x1f0] sm:$0xff]
      %v276 = vld [vmem:[%s1 + $0x1f8] sm:$0xff]
      %v277 = vld [vmem:[%s1 + $0x200] sm:$0xff]
      %v278 = vld [vmem:[%s1 + $0x208] sm:$0xff]
      %v279 = vld [vmem:[%s1 + $0x210] sm:$0xff]
      %v280 = vld [vmem:[%s1 + $0x218] sm:$0xff]
      %v281 = vld [vmem:[%s1 + $0x220] sm:$0xff]
      %v282 = vld [vmem:[%s1 + $0x228] sm:$0xff]
      %v283 = vld [vmem:[%s1 + $0x230] sm:$0xff]
      %v284 = vld [vmem:[%s1 + $0x238] sm:$0xff]
      %v285 = vld [vmem:[%s1 + $0x240] sm:$0xff]
      %v286 = vld [vmem:[%s1 + $0x248] sm:$0xff]
      %v287 = vld [vmem:[%s1 + $0x250] sm:$0xff]
      %v288 = vld [vmem:[%s1 + $0x258] sm:$0xff]
      %v289 = vld [vmem:[%s1 + $0x260] sm:$0xff]
      %v290 = vld [vmem:[%s1 + $0x268] sm:$0xff]
      %v291 = vld [vmem:[%s1 + $0x270] sm:$0xff]
      %v292 = vld [vmem:[%s1 + $0x278] sm:$0xff]
      %v293 = vld [vmem:[%s1 + $0x280] sm:$0xff]
      %v294 = vld [vmem:[%s1 + $0x288] sm:$0xff]
      %v295 = vld [vmem:[%s1 + $0x290] sm:$0xff]
      %v296 = vld [vmem:[%s1 + $0x298] sm:$0xff]
      %v297 = vld [vmem:[%s1 + $0x2a0] sm:$0xff]
      %v298 = vld [vmem:[%s1 + $0x2a8] sm:$0xff]
      %v299 = vld [vmem:[%s1 + $0x2b0] sm:$0xff]
      %v300 = vld [vmem:[%s1 + $0x2b8] sm:$0xff]
      %v301 = vld [vmem:[%s1 + $0x2c0] sm:$0xff]
      %v302 = vld [vmem:[%s1 + $0x2c8] sm:$0xff]
      %v303 = vld [vmem:[%s1 + $0x2d0] sm:$0xff]
      %v304 = vld [vmem:[%s1 + $0x2d8] sm:$0xff]
      %v305 = vld [vmem:[%s1 + $0x2e0] sm:$0xff]
      %v306 = vld [vmem:[%s1 + $0x2e8] sm:$0xff]
      %v307 = vld [vmem:[%s1 + $0x2f0] sm:$0xff]
      %v308 = vld [vmem:[%s1 + $0x2f8] sm:$0xff]
      %v309 = vld [vmem:[%s1 + $0x300] sm:$0xff]
      %v310 = vld [vmem:[%s1 + $0x308] sm:$0xff]
      %v311 = vld [vmem:[%s1 + $0x310] sm:$0xff]
      %v312 = vld [vmem:[%s1 + $0x318] sm:$0xff]
      %v313 = vld [vmem:[%s1 + $0x320] sm:$0xff]
      %v314 = vld [vmem:[%s1 + $0x328] sm:$0xff]
      %v315 = vld [vmem:[%s1 + $0x330] sm:$0xff]
      %v316 = vld [vmem:[%s1 + $0x338] sm:$0xff]
      %v317 = vld [vmem:[%s1 + $0x340] sm:$0xff]
      %v318 = vld [vmem:[%s1 + $0x348] sm:$0xff]
      %v319 = vld [vmem:[%s1 + $0x350] sm:$0xff]
      %v320 = vld [vmem:[%s1 + $0x358] sm:$0xff]
      %v321 = vld [vmem:[%s1 + $0x360] sm:$0xff]
      %v322 = vld [vmem:[%s1 + $0x368] sm:$0xff]
      %v323 = vld [vmem:[%s1 + $0x370] sm:$0xff]
      %v324 = vld [vmem:[%s1 + $0x378] sm:$0xff]
      %v325 = vld [vmem:[%s1 + $0x380] sm:$0xff]
      %v326 = vld [vmem:[%s1 + $0x388] sm:$0xff]
      %v327 = vld [vmem:[%s1 + $0x390] sm:$0xff]
      %v328 = vld [vmem:[%s1 + $0x398] sm:$0xff]
      %v329 = vld [vmem:[%s1 + $0x3a0] sm:$0xff]
      %v330 = vld [vmem:[%s1 + $0x3a8] sm:$0xff]
      %v331 = vld [vmem:[%s1 + $0x3b0] sm:$0xff]
      %v332 = vld [vmem:[%s1 + $0x3b8] sm:$0xff]
      %v333 = vld [vmem:[%s1 + $0x3c0] sm:$0xff]
      %v334 = vld [vmem:[%s1 + $0x3c8] sm:$0xff]
      %v335 = vld [vmem:[%s1 + $0x3d0] sm:$0xff]
      %v336 = vld [vmem:[%s1 + $0x3d8] sm:$0xff]
      %v337 = vld [vmem:[%s1 + $0x3e0] sm:$0xff]
      %v338 = vld [vmem:[%s1 + $0x3e8] sm:$0xff]
      %v339 = vld [vmem:[%s1 + $0x3f0] sm:$0xff]
      %v340 = vld [vmem:[%s1 + $0x3f8] sm:$0xff]
      %v341 = vld [vmem:[%s1 + $0x400] sm:$0xff]
      %v342 = vld [vmem:[%s1 + $0x408] sm:$0xff]
      %v343 = vld [vmem:[%s1 + $0x410] sm:$0xff]
      %v344 = vld [vmem:[%s1 + $0x418] sm:$0xff]
      %v345 = vld [vmem:[%s1 + $0x420] sm:$0xff]
      %v346 = vld [vmem:[%s1 + $0x428] sm:$0xff]
      %v347 = vld [vmem:[%s1 + $0x430] sm:$0xff]
      %v348 = vld [vmem:[%s1 + $0x438] sm:$0xff]
      %v349 = vld [vmem:[%s1 + $0x440] sm:$0xff]
      %v350 = vld [vmem:[%s1 + $0x448] sm:$0xff]
      %v351 = vld [vmem:[%s1 + $0x450] sm:$0xff]
      %v352 = vld [vmem:[%s1 + $0x458] sm:$0xff]
      %v353 = vld [vmem:[%s1 + $0x460] sm:$0xff]
      %v354 = vld [vmem:[%s1 + $0x468] sm:$0xff]
      %v355 = vld [vmem:[%s1 + $0x470] sm:$0xff]
      %v356 = vld [vmem:[%s1 + $0x478] sm:$0xff]
      %v357 = vld [vmem:[%s1 + $0x480] sm:$0xff]
      %v358 = vld [vmem:[%s1 + $0x488] sm:$0xff]
      %v359 = vld [vmem:[%s1 + $0x490] sm:$0xff]
      %v360 = vld [vmem:[%s1 + $0x498] sm:$0xff]
      %v361 = vld [vmem:[%s1 + $0x4a0] sm:$0xff]
      %v362 = vld [vmem:[%s1 + $0x4a8] sm:$0xff]
      %v363 = vld [vmem:[%s1 + $0x4b0] sm:$0xff]
      %v364 = vld [vmem:[%s1 + $0x4b8] sm:$0xff]
      %v365 = vld [vmem:[%s1 + $0x4c0] sm:$0xff]
      %v366 = vld [vmem:[%s1 + $0x4c8] sm:$0xff]
      %v367 = vld [vmem:[%s1 + $0x4d0] sm:$0xff]
      %v368 = vld [vmem:[%s1 + $0x4d8] sm:$0xff]
      %v369 = vld [vmem:[%s1 + $0x4e0] sm:$0xff]
      %v370 = vld [vmem:[%s1 + $0x4e8] sm:$0xff]
      %v371 = vld [vmem:[%s1 + $0x4f0] sm:$0xff]
      %v372 = vld [vmem:[%s1 + $0x4f8] sm:$0xff]
      %v373 = vld [vmem:[%s1 + $0x500] sm:$0xff]
      %v374 = vld [vmem:[%s1 + $0x508] sm:$0xff]
      %v375 = vld [vmem:[%s1 + $0x510] sm:$0xff]
      %v376 = vld [vmem:[%s1 + $0x518] sm:$0xff]
      %v377 = vld [vmem:[%s1 + $0x520] sm:$0xff]
      %v378 = vld [vmem:[%s1 + $0x528] sm:$0xff]
      %v379 = vld [vmem:[%s1 + $0x530] sm:$0xff]
      %v380 = vld [vmem:[%s1 + $0x538] sm:$0xff]
      %v381 = vld [vmem:[%s1 + $0x540] sm:$0xff]
      %v382 = vld [vmem:[%s1 + $0x548] sm:$0xff]
      %v383 = vld [vmem:[%s1 + $0x550] sm:$0xff]
      %v384 = vld [vmem:[%s1 + $0x558] sm:$0xff]
      %v385 = vld [vmem:[%s1 + $0x560] sm:$0xff]
      %v386 = vld [vmem:[%s1 + $0x568] sm:$0xff]
      %v387 = vld [vmem:[%s1 + $0x570] sm:$0xff]
      %v388 = vld [vmem:[%s1 + $0x578] sm:$0xff]
      %v389 = vld [vmem:[%s1 + $0x580] sm:$0xff]
      %v390 = vld [vmem:[%s1 + $0x588] sm:$0xff]
      %v391 = vld [vmem:[%s1 + $0x590] sm:$0xff]
      %v392 = vld [vmem:[%s1 + $0x598] sm:$0xff]
      %v393 = vld [vmem:[%s1 + $0x5a0] sm:$0xff]
      %v394 = vld [vmem:[%s1 + $0x5a8] sm:$0xff]
      %v395 = vld [vmem:[%s1 + $0x5b0] sm:$0xff]
      %v396 = vld [vmem:[%s1 + $0x5b8] sm:$0xff]
      %v397 = vld [vmem:[%s1 + $0x5c0] sm:$0xff]
      %v398 = vld [vmem:[%s1 + $0x5c8] sm:$0xff]
      %v399 = vld [vmem:[%s1 + $0x5d0] sm:$0xff]
      %v400 = vld [vmem:[%s1 + $0x5d8] sm:$0xff]
      %v401 = vld [vmem:[%s1 + $0x5e0] sm:$0xff]
      %v402 = vld [vmem:[%s1 + $0x5e8] sm:$0xff]
      %v403 = vld [vmem:[%s1 + $0x5f0] sm:$0xff]
      %v404 = vld [vmem:[%s1 + $0x5f8] sm:$0xff]
      %v405 = vld [vmem:[%s1 + $0x600] sm:$0xff]
      %v406 = vld [vmem:[%s1 + $0x608] sm:$0xff]
      %v407 = vld [vmem:[%s1 + $0x610] sm:$0xff]
      %v408 = vld [vmem:[%s1 + $0x618] sm:$0xff]
      %v409 = vld [vmem:[%s1 + $0x620] sm:$0xff]
      %v410 = vld [vmem:[%s1 + $0x628] sm:$0xff]
      %v411 = vld [vmem:[%s1 + $0x630] sm:$0xff]
      %v412 = vld [vmem:[%s1 + $0x638] sm:$0xff]
      %v413 = vld [vmem:[%s1 + $0x640] sm:$0xff]
      %v414 = vld [vmem:[%s1 + $0x648] sm:$0xff]
      %v415 = vld [vmem:[%s1 + $0x650] sm:$0xff]
      %v416 = vld [vmem:[%s1 + $0x658] sm:$0xff]
      %v417 = vld [vmem:[%s1 + $0x660] sm:$0xff]
      %v418 = vld [vmem:[%s1 + $0x668] sm:$0xff]
      %v419 = vld [vmem:[%s1 + $0x670] sm:$0xff]
      %v420 = vld [vmem:[%s1 + $0x678] sm:$0xff]
      %v421 = vld [vmem:[%s1 + $0x680] sm:$0xff]
      %v422 = vld [vmem:[%s1 + $0x688] sm:$0xff]
      %v423 = vld [vmem:[%s1 + $0x690] sm:$0xff]
      %v424 = vld [vmem:[%s1 + $0x698] sm:$0xff]
      %v425 = vld [vmem:[%s1 + $0x6a0] sm:$0xff]
      %v426 = vld [vmem:[%s1 + $0x6a8] sm:$0xff]
      %v427 = vld [vmem:[%s1 + $0x6b0] sm:$0xff]
      %v428 = vld [vmem:[%s1 + $0x6b8] sm:$0xff]
      %v429 = vld [vmem:[%s1 + $0x6c0] sm:$0xff]
      %v430 = vld [vmem:[%s1 + $0x6c8] sm:$0xff]
      %v431 = vld [vmem:[%s1 + $0x6d0] sm:$0xff]
      %v432 = vld [vmem:[%s1 + $0x6d8] sm:$0xff]
      %v433 = vld [vmem:[%s1 + $0x6e0] sm:$0xff]
      %v434 = vld [vmem:[%s1 + $0x6e8] sm:$0xff]
      %v435 = vld [vmem:[%s1 + $0x6f0] sm:$0xff]
      %v436 = vld [vmem:[%s1 + $0x6f8] sm:$0xff]
      %v437 = vld [vmem:[%s1 + $0x700] sm:$0xff]
      %v438 = vld [vmem:[%s1 + $0x708] sm:$0xff]
      %v439 = vld [vmem:[%s1 + $0x710] sm:$0xff]
      %v440 = vld [vmem:[%s1 + $0x718] sm:$0xff]
      %v441 = vld [vmem:[%s1 + $0x720] sm:$0xff]
      %v442 = vld [vmem:[%s1 + $0x728] sm:$0xff]
      %v443 = vld [vmem:[%s1 + $0x730] sm:$0xff]
      %v444 = vld [vmem:[%s1 + $0x738] sm:$0xff]
      %v445 = vld [vmem:[%s1 + $0x740] sm:$0xff]
      %v446 = vld [vmem:[%s1 + $0x748] sm:$0xff]
      %v447 = vld [vmem:[%s1 + $0x750] sm:$0xff]
      %v448 = vld [vmem:[%s1 + $0x758] sm:$0xff]
      %v449 = vld [vmem:[%s1 + $0x760] sm:$0xff]
      %v450 = vld [vmem:[%s1 + $0x768] sm:$0xff]
      %v451 = vld [vmem:[%s1 + $0x770] sm:$0xff]
      %v452 = vld [vmem:[%s1 + $0x778] sm:$0xff]
      %v453 = vld [vmem:[%s1 + $0x780] sm:$0xff]
      %v454 = vld [vmem:[%s1 + $0x788] sm:$0xff]
      %v455 = vld [vmem:[%s1 + $0x790] sm:$0xff]
      %v456 = vld [vmem:[%s1 + $0x798] sm:$0xff]
      %v457 = vld [vmem:[%s1 + $0x7a0] sm:$0xff]
      %v458 = vld [vmem:[%s1 + $0x7a8] sm:$0xff]
      %v459 = vld [vmem:[%s1 + $0x7b0] sm:$0xff]
      %v460 = vld [vmem:[%s1 + $0x7b8] sm:$0xff]
      %v461 = vld [vmem:[%s1 + $0x7c0] sm:$0xff]
      %v462 = vld [vmem:[%s1 + $0x7c8] sm:$0xff]
      %v463 = vld [vmem:[%s1 + $0x7d0] sm:$0xff]
      %v464 = vld [vmem:[%s1 + $0x7d8] sm:$0xff]
      %v465 = vld [vmem:[%s1 + $0x7e0] sm:$0xff]
      %v466 = vld [vmem:[%s1 + $0x7e8] sm:$0xff]
      %v467 = vld [vmem:[%s1 + $0x7f0] sm:$0xff]
      %v468 = vld [vmem:[%s1 + $0x7f8] sm:$0xff]
      %v469 = vld [vmem:[%s1 + $0x800] sm:$0xff]
      %v470 = vld [vmem:[%s1 + $0x808] sm:$0xff]
      %v471 = vld [vmem:[%s1 + $0x810] sm:$0xff]
      %v472 = vld [vmem:[%s1 + $0x818] sm:$0xff]
      %v473 = vld [vmem:[%s1 + $0x820] sm:$0xff]
      %v474 = vld [vmem:[%s1 + $0x828] sm:$0xff]
      %v475 = vld [vmem:[%s1 + $0x830] sm:$0xff]
      %v476 = vld [vmem:[%s1 + $0x838] sm:$0xff]
      %v477 = vld [vmem:[%s1 + $0x840] sm:$0xff]
      %v478 = vld [vmem:[%s1 + $0x848] sm:$0xff]
      %v479 = vld [vmem:[%s1 + $0x850] sm:$0xff]
      %v480 = vld [vmem:[%s1 + $0x858] sm:$0xff]
      %v481 = vld [vmem:[%s1 + $0x860] sm:$0xff]
      %v482 = vld [vmem:[%s1 + $0x868] sm:$0xff]
      %v483 = vld [vmem:[%s1 + $0x870] sm:$0xff]
      %v484 = vld [vmem:[%s1 + $0x878] sm:$0xff]
      %v485 = vld [vmem:[%s1 + $0x880] sm:$0xff]
      %v486 = vld [vmem:[%s1 + $0x888] sm:$0xff]
      %v487 = vld [vmem:[%s1 + $0x890] sm:$0xff]
      %v488 = vld [vmem:[%s1 + $0x898] sm:$0xff]
      %v489 = vld [vmem:[%s1 + $0x8a0] sm:$0xff]
      %v490 = vld [vmem:[%s1 + $0x8a8] sm:$0xff]
      %v491 = vld [vmem:[%s1 + $0x8b0] sm:$0xff]
      %v492 = vld [vmem:[%s1 + $0x8b8] sm:$0xff]
      %v493 = vld [vmem:[%s1 + $0x8c0] sm:$0xff]
      %v494 = vld [vmem:[%s1 + $0x8c8] sm:$0xff]
      %v495 = vld [vmem:[%s1 + $0x8d0] sm:$0xff]
      %v496 = vld [vmem:[%s1 + $0x8d8] sm:$0xff]
      %v497 = vld [vmem:[%s1 + $0x8e0] sm:$0xff]
      %v498 = vld [vmem:[%s1 + $0x8e8] sm:$0xff]
      %v499 = vld [vmem:[%s1 + $0x8f0] sm:$0xff]
      %v500 = vld [vmem:[%s1 + $0x8f8] sm:$0xff]
      %v501 = vld [vmem:[%s1 + $0x900] sm:$0xff]
      %v502 = vld [vmem:[%s1 + $0x908] sm:$0xff]
      %v503 = vld [vmem:[%s1 + $0x910] sm:$0xff]
      %v504 = vld [vmem:[%s1 + $0x918] sm:$0xff]
      %v505 = vld [vmem:[%s1 + $0x920] sm:$0xff]
      %v506 = vld [vmem:[%s1 + $0x928] sm:$0xff]
      %v507 = vld [vmem:[%s1 + $0x930] sm:$0xff]
      %v508 = vld [vmem:[%s1 + $0x938] sm:$0xff]
      %v509 = vld [vmem:[%s1 + $0x940] sm:$0xff]
      %v510 = vld [vmem:[%s1 + $0x948] sm:$0xff]
      %v511 = vld [vmem:[%s1 + $0x950] sm:$0xff]
      %v512 = vld [vmem:[%s1 + $0x958] sm:$0xff]
      %v513 = vld [vmem:[%s1 + $0x960] sm:$0xff]
      %v514 = vld [vmem:[%s1 + $0x968] sm:$0xff]
      %v515 = vld [vmem:[%s1 + $0x970] sm:$0xff]
      %v516 = vld [vmem:[%s1 + $0x978] sm:$0xff]
      %v517 = vld [vmem:[%s1 + $0x980] sm:$0xff]
      %v518 = vld [vmem:[%s1 + $0x988] sm:$0xff]
      %v519 = vld [vmem:[%s1 + $0x990] sm:$0xff]
      %v520 = vld [vmem:[%s1 + $0x998] sm:$0xff]
      %v521 = vld [vmem:[%s1 + $0x9a0] sm:$0xff]
      %v522 = vld [vmem:[%s1 + $0x9a8] sm:$0xff]
      %v523 = vld [vmem:[%s1 + $0x9b0] sm:$0xff]
      %v524 = vld [vmem:[%s1 + $0x9b8] sm:$0xff]
      %v525 = vld [vmem:[%s1 + $0x9c0] sm:$0xff]
      %v526 = vld [vmem:[%s1 + $0x9c8] sm:$0xff]
      %v527 = vld [vmem:[%s1 + $0x9d0] sm:$0xff]
      %v528 = vld [vmem:[%s1 + $0x9d8] sm:$0xff]
      %v529 = vld [vmem:[%s1 + $0x9e0] sm:$0xff]
      %v530 = vld [vmem:[%s1 + $0x9e8] sm:$0xff]
      %v531 = vld [vmem:[%s1 + $0x9f0] sm:$0xff]
      %v532 = vld [vmem:[%s1 + $0x9f8] sm:$0xff]
      %v533 = vld [vmem:[%s1 + $0xa00] sm:$0xff]
      %v534 = vld [vmem:[%s1 + $0xa08] sm:$0xff]
      %v535 = vld [vmem:[%s1 + $0xa10] sm:$0xff]
      %v536 = vld [vmem:[%s1 + $0xa18] sm:$0xff]
      %v537 = vld [vmem:[%s1 + $0xa20] sm:$0xff]
      %v538 = vld [vmem:[%s1 + $0xa28] sm:$0xff]
      %v539 = vld [vmem:[%s1 + $0xa30] sm:$0xff]
      %v540 = vld [vmem:[%s1 + $0xa38] sm:$0xff]
      %v541 = vld [vmem:[%s1 + $0xa40] sm:$0xff]
      %v542 = vld [vmem:[%s1 + $0xa48] sm:$0xff]
      %v543 = vld [vmem:[%s1 + $0xa50] sm:$0xff]
      %v544 = vld [vmem:[%s1 + $0xa58] sm:$0xff]
      %v545 = vld [vmem:[%s1 + $0xa60] sm:$0xff]
      %v546 = vld [vmem:[%s1 + $0xa68] sm:$0xff]
      %v547 = vld [vmem:[%s1 + $0xa70] sm:$0xff]
      %v548 = vld [vmem:[%s1 + $0xa78] sm:$0xff]
      %v549 = vld [vmem:[%s1 + $0xa80] sm:$0xff]
      %v550 = vld [vmem:[%s1 + $0xa88] sm:$0xff]
      %v551 = vld [vmem:[%s1 + $0xa90] sm:$0xff]
      %v552 = vld [vmem:[%s1 + $0xa98] sm:$0xff]
      %v553 = vld [vmem:[%s1 + $0xaa0] sm:$0xff]
      %v554 = vld [vmem:[%s1 + $0xaa8] sm:$0xff]
      %v555 = vld [vmem:[%s1 + $0xab0] sm:$0xff]
      %v556 = vld [vmem:[%s1 + $0xab8] sm:$0xff]
      %v557 = vld [vmem:[%s1 + $0xac0] sm:$0xff]
      %v558 = vld [vmem:[%s1 + $0xac8] sm:$0xff]
      %v559 = vld [vmem:[%s1 + $0xad0] sm:$0xff]
      %v560 = vld [vmem:[%s1 + $0xad8] sm:$0xff]
      %v561 = vld [vmem:[%s1 + $0xae0] sm:$0xff]
      %v562 = vld [vmem:[%s1 + $0xae8] sm:$0xff]
      %v563 = vld [vmem:[%s1 + $0xaf0] sm:$0xff]
      %v564 = vld [vmem:[%s1 + $0xaf8] sm:$0xff]
      %v565 = vld [vmem:[%s1 + $0xb00] sm:$0xff]
      %v566 = vld [vmem:[%s1 + $0xb08] sm:$0xff]
      %v567 = vld [vmem:[%s1 + $0xb10] sm:$0xff]
      %v568 = vld [vmem:[%s1 + $0xb18] sm:$0xff]
      %v569 = vld [vmem:[%s1 + $0xb20] sm:$0xff]
      %v570 = vld [vmem:[%s1 + $0xb28] sm:$0xff]
      %v571 = vld [vmem:[%s1 + $0xb30] sm:$0xff]
      %v572 = vld [vmem:[%s1 + $0xb38] sm:$0xff]
      %v573 = vld [vmem:[%s1 + $0xb40] sm:$0xff]
      %v574 = vld [vmem:[%s1 + $0xb48] sm:$0xff]
      %v575 = vld [vmem:[%s1 + $0xb50] sm:$0xff]
      %v576 = vld [vmem:[%s1 + $0xb58] sm:$0xff]
      %v577 = vld [vmem:[%s1 + $0xb60] sm:$0xff]
      %v578 = vld [vmem:[%s1 + $0xb68] sm:$0xff]
      %v579 = vld [vmem:[%s1 + $0xb70] sm:$0xff]
      %v580 = vld [vmem:[%s1 + $0xb78] sm:$0xff]
      %v581 = vld [vmem:[%s1 + $0xb80] sm:$0xff]
      %v582 = vld [vmem:[%s1 + $0xb88] sm:$0xff]
      %v583 = vld [vmem:[%s1 + $0xb90] sm:$0xff]
      %v584 = vld [vmem:[%s1 + $0xb98] sm:$0xff]
      %v585 = vld [vmem:[%s1 + $0xba0] sm:$0xff]
      %v586 = vld [vmem:[%s1 + $0xba8] sm:$0xff]
      %v587 = vld [vmem:[%s1 + $0xbb0] sm:$0xff]
      %v588 = vld [vmem:[%s1 + $0xbb8] sm:$0xff]
      %v589 = vld [vmem:[%s1 + $0xbc0] sm:$0xff]
      %v590 = vld [vmem:[%s1 + $0xbc8] sm:$0xff]
      %v591 = vld [vmem:[%s1 + $0xbd0] sm:$0xff]
      %v592 = vld [vmem:[%s1 + $0xbd8] sm:$0xff]
      %v593 = vld [vmem:[%s1 + $0xbe0] sm:$0xff]
      %v594 = vld [vmem:[%s1 + $0xbe8] sm:$0xff]
      %v595 = vld [vmem:[%s1 + $0xbf0] sm:$0xff]
      %v596 = vld [vmem:[%s1 + $0xbf8] sm:$0xff]
      %v597 = vld [vmem:[%s1 + $0xc00] sm:$0xff]
      %v598 = vld [vmem:[%s1 + $0xc08] sm:$0xff]
      %v599 = vld [vmem:[%s1 + $0xc10] sm:$0xff]
      %v600 = vld [vmem:[%s1 + $0xc18] sm:$0xff]
      %v601 = vld [vmem:[%s1 + $0xc20] sm:$0xff]
      %v602 = vld [vmem:[%s1 + $0xc28] sm:$0xff]
      %v603 = vld [vmem:[%s1 + $0xc30] sm:$0xff]
      %v604 = vld [vmem:[%s1 + $0xc38] sm:$0xff]
      %v605 = vld [vmem:[%s1 + $0xc40] sm:$0xff]
      %v606 = vld [vmem:[%s1 + $0xc48] sm:$0xff]
      %v607 = vld [vmem:[%s1 + $0xc50] sm:$0xff]
      %v608 = vld [vmem:[%s1 + $0xc58] sm:$0xff]
      %v609 = vld [vmem:[%s1 + $0xc60] sm:$0xff]
      %v610 = vld [vmem:[%s1 + $0xc68] sm:$0xff]
      %v611 = vld [vmem:[%s1 + $0xc70] sm:$0xff]
      %v612 = vld [vmem:[%s1 + $0xc78] sm:$0xff]
      %v613 = vld [vmem:[%s1 + $0xc80] sm:$0xff]
      %v614 = vld [vmem:[%s1 + $0xc88] sm:$0xff]
      %v615 = vld [vmem:[%s1 + $0xc90] sm:$0xff]
      %v616 = vld [vmem:[%s1 + $0xc98] sm:$0xff]
      %v617 = vld [vmem:[%s1 + $0xca0] sm:$0xff]
      %v618 = vld [vmem:[%s1 + $0xca8] sm:$0xff]
      %v619 = vld [vmem:[%s1 + $0xcb0] sm:$0xff]
      %v620 = vld [vmem:[%s1 + $0xcb8] sm:$0xff]
      %v621 = vld [vmem:[%s1 + $0xcc0] sm:$0xff]
      %v622 = vld [vmem:[%s1 + $0xcc8] sm:$0xff]
      %v623 = vld [vmem:[%s1 + $0xcd0] sm:$0xff]
      %v624 = vld [vmem:[%s1 + $0xcd8] sm:$0xff]
      %v625 = vld [vmem:[%s1 + $0xce0] sm:$0xff]
      %v626 = vld [vmem:[%s1 + $0xce8] sm:$0xff]
      %v627 = vld [vmem:[%s1 + $0xcf0] sm:$0xff]
      %v628 = vld [vmem:[%s1 + $0xcf8] sm:$0xff]
      %v629 = vld [vmem:[%s1 + $0xd00] sm:$0xff]
      %v630 = vld [vmem:[%s1 + $0xd08] sm:$0xff]
      %v631 = vld [vmem:[%s1 + $0xd10] sm:$0xff]
      %v632 = vld [vmem:[%s1 + $0xd18] sm:$0xff]
      %v633 = vld [vmem:[%s1 + $0xd20] sm:$0xff]
      %v634 = vld [vmem:[%s1 + $0xd28] sm:$0xff]
      %v635 = vld [vmem:[%s1 + $0xd30] sm:$0xff]
      %v636 = vld [vmem:[%s1 + $0xd38] sm:$0xff]
      %v637 = vld [vmem:[%s1 + $0xd40] sm:$0xff]
      %v638 = vld [vmem:[%s1 + $0xd48] sm:$0xff]
      %v639 = vld [vmem:[%s1 + $0xd50] sm:$0xff]
      %v640 = vld [vmem:[%s1 + $0xd58] sm:$0xff]
      %v641 = vld [vmem:[%s1 + $0xd60] sm:$0xff]
      %v642 = vld [vmem:[%s1 + $0xd68] sm:$0xff]
      %v643 = vld [vmem:[%s1 + $0xd70] sm:$0xff]
      %v644 = vld [vmem:[%s1 + $0xd78] sm:$0xff]
      %v645 = vld [vmem:[%s1 + $0xd80] sm:$0xff]
      %v646 = vld [vmem:[%s1 + $0xd88] sm:$0xff]
      %v647 = vld [vmem:[%s1 + $0xd90] sm:$0xff]
      %v648 = vld [vmem:[%s1 + $0xd98] sm:$0xff]
      %v649 = vld [vmem:[%s1 + $0xda0] sm:$0xff]
      %v650 = vld [vmem:[%s1 + $0xda8] sm:$0xff]
      %v651 = vld [vmem:[%s1 + $0xdb0] sm:$0xff]
      %v652 = vld [vmem:[%s1 + $0xdb8] sm:$0xff]
      %v653 = vld [vmem:[%s1 + $0xdc0] sm:$0xff]
      %v654 = vld [vmem:[%s1 + $0xdc8] sm:$0xff]
      %v655 = vld [vmem:[%s1 + $0xdd0] sm:$0xff]
      %v656 = vld [vmem:[%s1 + $0xdd8] sm:$0xff]
      %v657 = vld [vmem:[%s1 + $0xde0] sm:$0xff]
      %v658 = vld [vmem:[%s1 + $0xde8] sm:$0xff]
      %v659 = vld [vmem:[%s1 + $0xdf0] sm:$0xff]
      %v660 = vld [vmem:[%s1 + $0xdf8] sm:$0xff]
      %v661 = vld [vmem:[%s1 + $0xe00] sm:$0xff]
      %v662 = vld [vmem:[%s1 + $0xe08] sm:$0xff]
      %v663 = vld [vmem:[%s1 + $0xe10] sm:$0xff]
      %v664 = vld [vmem:[%s1 + $0xe18] sm:$0xff]
      %v665 = vld [vmem:[%s1 + $0xe20] sm:$0xff]
      %v666 = vld [vmem:[%s1 + $0xe28] sm:$0xff]
      %v667 = vld [vmem:[%s1 + $0xe30] sm:$0xff]
      %v668 = vld [vmem:[%s1 + $0xe38] sm:$0xff]
      %v669 = vld [vmem:[%s1 + $0xe40] sm:$0xff]
      %v670 = vld [vmem:[%s1 + $0xe48] sm:$0xff]
      %v671 = vld [vmem:[%s1 + $0xe50] sm:$0xff]
      %v672 = vld [vmem:[%s1 + $0xe58] sm:$0xff]
      %v673 = vld [vmem:[%s1 + $0xe60] sm:$0xff]
      %v674 = vld [vmem:[%s1 + $0xe68] sm:$0xff]
      %v675 = vld [vmem:[%s1 + $0xe70] sm:$0xff]
      %v676 = vld [vmem:[%s1 + $0xe78] sm:$0xff]
      %v677 = vld [vmem:[%s1 + $0xe80] sm:$0xff]
      %v678 = vld [vmem:[%s1 + $0xe88] sm:$0xff]
      %v679 = vld [vmem:[%s1 + $0xe90] sm:$0xff]
      %v680 = vld [vmem:[%s1 + $0xe98] sm:$0xff]
      %v681 = vld [vmem:[%s1 + $0xea0] sm:$0xff]
      %v682 = vld [vmem:[%s1 + $0xea8] sm:$0xff]
      %v683 = vld [vmem:[%s1 + $0xeb0] sm:$0xff]
      %v684 = vld [vmem:[%s1 + $0xeb8] sm:$0xff]
      %v685 = vld [vmem:[%s1 + $0xec0] sm:$0xff]
      %v686 = vld [vmem:[%s1 + $0xec8] sm:$0xff]
      %v687 = vld [vmem:[%s1 + $0xed0] sm:$0xff]
      %v688 = vld [vmem:[%s1 + $0xed8] sm:$0xff]
      %v689 = vld [vmem:[%s1 + $0xee0] sm:$0xff]
      %v690 = vld [vmem:[%s1 + $0xee8] sm:$0xff]
      %v691 = vld [vmem:[%s1 + $0xef0] sm:$0xff]
      %v692 = vld [vmem:[%s1 + $0xef8] sm:$0xff]
      %v693 = vld [vmem:[%s1 + $0xf00] sm:$0xff]
      %v694 = vld [vmem:[%s1 + $0xf08] sm:$0xff]
      %v695 = vld [vmem:[%s1 + $0xf10] sm:$0xff]
      %v696 = vld [vmem:[%s1 + $0xf18] sm:$0xff]
      %v697 = vld [vmem:[%s1 + $0xf20] sm:$0xff]
      %v698 = vld [vmem:[%s1 + $0xf28] sm:$0xff]
      %v699 = vld [vmem:[%s1 + $0xf30] sm:$0xff]
      %v700 = vld [vmem:[%s1 + $0xf38] sm:$0xff]
      %v701 = vld [vmem:[%s1 + $0xf40] sm:$0xff]
      %v702 = vld [vmem:[%s1 + $0xf48] sm:$0xff]
      %v703 = vld [vmem:[%s1 + $0xf50] sm:$0xff]
      %v704 = vld [vmem:[%s1 + $0xf58] sm:$0xff]
      %v705 = vld [vmem:[%s1 + $0xf60] sm:$0xff]
      %v706 = vld [vmem:[%s1 + $0xf68] sm:$0xff]
      %v707 = vld [vmem:[%s1 + $0xf70] sm:$0xff]
      %v708 = vld [vmem:[%s1 + $0xf78] sm:$0xff]
      %v709 = vld [vmem:[%s1 + $0xf80] sm:$0xff]
      %v710 = vld [vmem:[%s1 + $0xf88] sm:$0xff]
      %v711 = vld [vmem:[%s1 + $0xf90] sm:$0xff]
      %v712 = vld [vmem:[%s1 + $0xf98] sm:$0xff]
      %v713 = vld [vmem:[%s1 + $0xfa0] sm:$0xff]
      %v714 = vld [vmem:[%s1 + $0xfa8] sm:$0xff]
      %v715 = vld [vmem:[%s1 + $0xfb0] sm:$0xff]
      %v716 = vld [vmem:[%s1 + $0xfb8] sm:$0xff]
      %v717 = vld [vmem:[%s1 + $0xfc0] sm:$0xff]
      %v718 = vld [vmem:[%s1 + $0xfc8] sm:$0xff]
      %v719 = vld [vmem:[%s1 + $0xfd0] sm:$0xff]
      %v720 = vld [vmem:[%s1 + $0xfd8] sm:$0xff]
      %v721 = vld [vmem:[%s1 + $0xfe0] sm:$0xff]
      %v722 = vld [vmem:[%s1 + $0xfe8] sm:$0xff]
      %v723 = vld [vmem:[%s1 + $0xff0] sm:$0xff]
      %v724 = vld [vmem:[%s1 + $0xff8] sm:$0xff]
      %v725 = vld [vmem:[%s1 + $0x1000] sm:$0xff]
      %v726 = vld [vmem:[%s1 + $0x1008] sm:$0xff]
      %v727 = vld [vmem:[%s1 + $0x1010] sm:$0xff]
      %v728 = vld [vmem:[%s1 + $0x1018] sm:$0xff]
      %v729 = vld [vmem:[%s1 + $0x1020] sm:$0xff]
      %v730 = vld [vmem:[%s1 + $0x1028] sm:$0xff]
      %v731 = vld [vmem:[%s1 + $0x1030] sm:$0xff]
      %v732 = vld [vmem:[%s1 + $0x1038] sm:$0xff]
      %v733 = vld [vmem:[%s1 + $0x1040] sm:$0xff]
      %v734 = vld [vmem:[%s1 + $0x1048] sm:$0xff]
      %v735 = vld [vmem:[%s1 + $0x1050] sm:$0xff]
      %v736 = vld [vmem:[%s1 + $0x1058] sm:$0xff]
      %v737 = vld [vmem:[%s1 + $0x1060] sm:$0xff]
      %v738 = vld [vmem:[%s1 + $0x1068] sm:$0xff]
      %v739 = vld [vmem:[%s1 + $0x1070] sm:$0xff]
      %v740 = vld [vmem:[%s1 + $0x1078] sm:$0xff]
      %v741 = vld [vmem:[%s1 + $0x1080] sm:$0xff]
      %v742 = vld [vmem:[%s1 + $0x1088] sm:$0xff]
      %v743 = vld [vmem:[%s1 + $0x1090] sm:$0xff]
      %v744 = vld [vmem:[%s1 + $0x1098] sm:$0xff]
      %v745 = vld [vmem:[%s1 + $0x10a0] sm:$0xff]
      %v746 = vld [vmem:[%s1 + $0x10a8] sm:$0xff]
      %v747 = vld [vmem:[%s1 + $0x10b0] sm:$0xff]
      %v748 = vld [vmem:[%s1 + $0x10b8] sm:$0xff]
      %v749 = vld [vmem:[%s1 + $0x10c0] sm:$0xff]
      %v750 = vld [vmem:[%s1 + $0x10c8] sm:$0xff]
      %v751 = vld [vmem:[%s1 + $0x10d0] sm:$0xff]
      %v752 = vld [vmem:[%s1 + $0x10d8] sm:$0xff]
      %v753 = vld [vmem:[%s1 + $0x10e0] sm:$0xff]
      %v754 = vld [vmem:[%s1 + $0x10e8] sm:$0xff]
      %v755 = vld [vmem:[%s1 + $0x10f0] sm:$0xff]
      %v756 = vld [vmem:[%s1 + $0x10f8] sm:$0xff]
      %v757 = vld [vmem:[%s1 + $0x1100] sm:$0xff]
      %v758 = vld [vmem:[%s1 + $0x1108] sm:$0xff]
      %v759 = vld [vmem:[%s1 + $0x1110] sm:$0xff]
      %v760 = vld [vmem:[%s1 + $0x1118] sm:$0xff]
      %v761 = vld [vmem:[%s1 + $0x1120] sm:$0xff]
      %v762 = vld [vmem:[%s1 + $0x1128] sm:$0xff]
      %v763 = vld [vmem:[%s1 + $0x1130] sm:$0xff]
      %v764 = vld [vmem:[%s1 + $0x1138] sm:$0xff]
      %v765 = vld [vmem:[%s1 + $0x1140] sm:$0xff]
      %v766 = vld [vmem:[%s1 + $0x1148] sm:$0xff]
      %v767 = vld [vmem:[%s1 + $0x1150] sm:$0xff]
      %v768 = vld [vmem:[%s1 + $0x1158] sm:$0xff]
      %v769 = vld [vmem:[%s1 + $0x1160] sm:$0xff]
      %v770 = vld [vmem:[%s1 + $0x1168] sm:$0xff]
      %v771 = vld [vmem:[%s1 + $0x1170] sm:$0xff]
      %v772 = vld [vmem:[%s1 + $0x1178] sm:$0xff]
      %v773 = vld [vmem:[%s1 + $0x1180] sm:$0xff]
      %v774 = vld [vmem:[%s1 + $0x1188] sm:$0xff]
      %v775 = vld [vmem:[%s1 + $0x1190] sm:$0xff]
      %v776 = vld [vmem:[%s1 + $0x1198] sm:$0xff]
      %v777 = vld [vmem:[%s1 + $0x11a0] sm:$0xff]
      %v778 = vld [vmem:[%s1 + $0x11a8] sm:$0xff]
      %v779 = vld [vmem:[%s1 + $0x11b0] sm:$0xff]
      %v780 = vld [vmem:[%s1 + $0x11b8] sm:$0xff]
      %v781 = vld [vmem:[%s1 + $0x11c0] sm:$0xff]
      %v782 = vld [vmem:[%s1 + $0x11c8] sm:$0xff]
      %v783 = vld [vmem:[%s1 + $0x11d0] sm:$0xff]
      %v784 = vld [vmem:[%s1 + $0x11d8] sm:$0xff]
      %v785 = vld [vmem:[%s1 + $0x11e0] sm:$0xff]
      %v786 = vld [vmem:[%s1 + $0x11e8] sm:$0xff]
      %v787 = vld [vmem:[%s1 + $0x11f0] sm:$0xff]
      %v788 = vld [vmem:[%s1 + $0x11f8] sm:$0xff]
      %v789 = vld [vmem:[%s1 + $0x1200] sm:$0xff]
      %v790 = vld [vmem:[%s1 + $0x1208] sm:$0xff]
      %v791 = vld [vmem:[%s1 + $0x1210] sm:$0xff]
      %v792 = vld [vmem:[%s1 + $0x1218] sm:$0xff]
      %v793 = vld [vmem:[%s1 + $0x1220] sm:$0xff]
      %v794 = vld [vmem:[%s1 + $0x1228] sm:$0xff]
      %v795 = vld [vmem:[%s1 + $0x1230] sm:$0xff]
      %v796 = vld [vmem:[%s1 + $0x1238] sm:$0xff]
      %v797 = vld [vmem:[%s1 + $0x1240] sm:$0xff]
      %v798 = vld [vmem:[%s1 + $0x1248] sm:$0xff]
      %v799 = vld [vmem:[%s1 + $0x1250] sm:$0xff]
      %v800 = vld [vmem:[%s1 + $0x1258] sm:$0xff]
      %v801 = vld [vmem:[%s1 + $0x1260] sm:$0xff]
      %v802 = vld [vmem:[%s1 + $0x1268] sm:$0xff]
      %v803 = vld [vmem:[%s1 + $0x1270] sm:$0xff]
      %v804 = vld [vmem:[%s1 + $0x1278] sm:$0xff]
      %v805 = vld [vmem:[%s1 + $0x1280] sm:$0xff]
      %v806 = vld [vmem:[%s1 + $0x1288] sm:$0xff]
      %v807 = vld [vmem:[%s1 + $0x1290] sm:$0xff]
      %v808 = vld [vmem:[%s1 + $0x1298] sm:$0xff]
      %v809 = vld [vmem:[%s1 + $0x12a0] sm:$0xff]
      %v810 = vld [vmem:[%s1 + $0x12a8] sm:$0xff]
      %v811 = vld [vmem:[%s1 + $0x12b0] sm:$0xff]
      %v812 = vld [vmem:[%s1 + $0x12b8] sm:$0xff]
      %v813 = vld [vmem:[%s1 + $0x12c0] sm:$0xff]
      %v814 = vld [vmem:[%s1 + $0x12c8] sm:$0xff]
      %v815 = vld [vmem:[%s1 + $0x12d0] sm:$0xff]
      %v816 = vld [vmem:[%s1 + $0x12d8] sm:$0xff]
      %v817 = vld [vmem:[%s1 + $0x12e0] sm:$0xff]
      %v818 = vld [vmem:[%s1 + $0x12e8] sm:$0xff]
      %v819 = vld [vmem:[%s1 + $0x12f0] sm:$0xff]
      %v820 = vld [vmem:[%s1 + $0x12f8] sm:$0xff]
      %v821 = vld [vmem:[%s1 + $0x1300] sm:$0xff]
      %v822 = vld [vmem:[%s1 + $0x1308] sm:$0xff]
      %v823 = vld [vmem:[%s1 + $0x1310] sm:$0xff]
      %v824 = vld [vmem:[%s1 + $0x1318] sm:$0xff]
      %v825 = vld [vmem:[%s1 + $0x1320] sm:$0xff]
      %v826 = vld [vmem:[%s1 + $0x1328] sm:$0xff]
      %v827 = vld [vmem:[%s1 + $0x1330] sm:$0xff]
      %v828 = vld [vmem:[%s1 + $0x1338] sm:$0xff]
      %v829 = vld [vmem:[%s1 + $0x1340] sm:$0xff]
      %v830 = vld [vmem:[%s1 + $0x1348] sm:$0xff]
      %v831 = vld [vmem:[%s1 + $0x1350] sm:$0xff]
      %v832 = vld [vmem:[%s1 + $0x1358] sm:$0xff]
      %v833 = vld [vmem:[%s1 + $0x1360] sm:$0xff]
      %v834 = vld [vmem:[%s1 + $0x1368] sm:$0xff]
      %v835 = vld [vmem:[%s1 + $0x1370] sm:$0xff]
      %v836 = vld [vmem:[%s1 + $0x1378] sm:$0xff]
      %v837 = vld [vmem:[%s1 + $0x1380] sm:$0xff]
      %v838 = vld [vmem:[%s1 + $0x1388] sm:$0xff]
      %v839 = vld [vmem:[%s1 + $0x1390] sm:$0xff]
      %v840 = vld [vmem:[%s1 + $0x1398] sm:$0xff]
      %v841 = vld [vmem:[%s1 + $0x13a0] sm:$0xff]
      %v842 = vld [vmem:[%s1 + $0x13a8] sm:$0xff]
      %v843 = vld [vmem:[%s1 + $0x13b0] sm:$0xff]
      %v844 = vld [vmem:[%s1 + $0x13b8] sm:$0xff]
      %v845 = vld [vmem:[%s1 + $0x13c0] sm:$0xff]
      %v846 = vld [vmem:[%s1 + $0x13c8] sm:$0xff]
      %v847 = vld [vmem:[%s1 + $0x13d0] sm:$0xff]
      %v848 = vld [vmem:[%s1 + $0x13d8] sm:$0xff]
      %v849 = vld [vmem:[%s1 + $0x13e0] sm:$0xff]
      %v850 = vld [vmem:[%s1 + $0x13e8] sm:$0xff]
      %v851 = vld [vmem:[%s1 + $0x13f0] sm:$0xff]
      %v852 = vld [vmem:[%s1 + $0x13f8] sm:$0xff]
      %v853 = vld [vmem:[%s1 + $0x1400] sm:$0xff]
      %v854 = vld [vmem:[%s1 + $0x1408] sm:$0xff]
      %v855 = vld [vmem:[%s1 + $0x1410] sm:$0xff]
      %v856 = vld [vmem:[%s1 + $0x1418] sm:$0xff]
      %v857 = vld [vmem:[%s1 + $0x1420] sm:$0xff]
      %v858 = vld [vmem:[%s1 + $0x1428] sm:$0xff]
      %v859 = vld [vmem:[%s1 + $0x1430] sm:$0xff]
      %v860 = vld [vmem:[%s1 + $0x1438] sm:$0xff]
      %v861 = vld [vmem:[%s1 + $0x1440] sm:$0xff]
      %v862 = vld [vmem:[%s1 + $0x1448] sm:$0xff]
      %v863 = vld [vmem:[%s1 + $0x1450] sm:$0xff]
      %v864 = vld [vmem:[%s1 + $0x1458] sm:$0xff]
      %v865 = vld [vmem:[%s1 + $0x1460] sm:$0xff]
      %v866 = vld [vmem:[%s1 + $0x1468] sm:$0xff]
      %v867 = vld [vmem:[%s1 + $0x1470] sm:$0xff]
      %v868 = vld [vmem:[%s1 + $0x1478] sm:$0xff]
      %v869 = vld [vmem:[%s1 + $0x1480] sm:$0xff]
      %v870 = vld [vmem:[%s1 + $0x1488] sm:$0xff]
      %v871 = vld [vmem:[%s1 + $0x1490] sm:$0xff]
      %v872 = vld [vmem:[%s1 + $0x1498] sm:$0xff]
      %v873 = vld [vmem:[%s1 + $0x14a0] sm:$0xff]
      %v874 = vld [vmem:[%s1 + $0x14a8] sm:$0xff]
      %v875 = vld [vmem:[%s1 + $0x14b0] sm:$0xff]
      %v876 = vld [vmem:[%s1 + $0x14b8] sm:$0xff]
      %v877 = vld [vmem:[%s1 + $0x14c0] sm:$0xff]
      %v878 = vld [vmem:[%s1 + $0x14c8] sm:$0xff]
      %v879 = vld [vmem:[%s1 + $0x14d0] sm:$0xff]
      %v880 = vld [vmem:[%s1 + $0x14d8] sm:$0xff]
      %v881 = vld [vmem:[%s1 + $0x14e0] sm:$0xff]
      %v882 = vld [vmem:[%s1 + $0x14e8] sm:$0xff]
      %v883 = vld [vmem:[%s1 + $0x14f0] sm:$0xff]
      %v884 = vld [vmem:[%s1 + $0x14f8] sm:$0xff]
      %v885 = vld [vmem:[%s1 + $0x1500] sm:$0xff]
      %v886 = vld [vmem:[%s1 + $0x1508] sm:$0xff]
      %v887 = vld [vmem:[%s1 + $0x1510] sm:$0xff]
      %v888 = vld [vmem:[%s1 + $0x1518] sm:$0xff]
      %v889 = vld [vmem:[%s1 + $0x1520] sm:$0xff]
      %v890 = vld [vmem:[%s1 + $0x1528] sm:$0xff]
      %v891 = vld [vmem:[%s1 + $0x1530] sm:$0xff]
      %v892 = vld [vmem:[%s1 + $0x1538] sm:$0xff]
      %v893 = vld [vmem:[%s1 + $0x1540] sm:$0xff]
      %v894 = vld [vmem:[%s1 + $0x1548] sm:$0xff]
      %v895 = vld [vmem:[%s1 + $0x1550] sm:$0xff]
      %v896 = vld [vmem:[%s1 + $0x1558] sm:$0xff]
      %v897 = vld [vmem:[%s1 + $0x1560] sm:$0xff]
      %v898 = vld [vmem:[%s1 + $0x1568] sm:$0xff]
      %v899 = vld [vmem:[%s1 + $0x1570] sm:$0xff]
      %v900 = vld [vmem:[%s1 + $0x1578] sm:$0xff]
      %v901 = vld [vmem:[%s1 + $0x1580] sm:$0xff]
      %v902 = vld [vmem:[%s1 + $0x1588] sm:$0xff]
      %v903 = vld [vmem:[%s1 + $0x1590] sm:$0xff]
      %v904 = vld [vmem:[%s1 + $0x1598] sm:$0xff]
      %v905 = vld [vmem:[%s1 + $0x15a0] sm:$0xff]
      %v906 = vld [vmem:[%s1 + $0x15a8] sm:$0xff]
      %v907 = vld [vmem:[%s1 + $0x15b0] sm:$0xff]
      %v908 = vld [vmem:[%s1 + $0x15b8] sm:$0xff]
      %v909 = vld [vmem:[%s1 + $0x15c0] sm:$0xff]
      %v910 = vld [vmem:[%s1 + $0x15c8] sm:$0xff]
      %v911 = vld [vmem:[%s1 + $0x15d0] sm:$0xff]
      %v912 = vld [vmem:[%s1 + $0x15d8] sm:$0xff]
      %v913 = vld [vmem:[%s1 + $0x15e0] sm:$0xff]
      %v914 = vld [vmem:[%s1 + $0x15e8] sm:$0xff]
      %v915 = vld [vmem:[%s1 + $0x15f0] sm:$0xff]
      %v916 = vld [vmem:[%s1 + $0x15f8] sm:$0xff]
      %v917 = vld [vmem:[%s1 + $0x1600] sm:$0xff]
      %v918 = vld [vmem:[%s1 + $0x1608] sm:$0xff]
      %v919 = vld [vmem:[%s1 + $0x1610] sm:$0xff]
      %v920 = vld [vmem:[%s1 + $0x1618] sm:$0xff]
      %v921 = vld [vmem:[%s1 + $0x1620] sm:$0xff]
      %v922 = vld [vmem:[%s1 + $0x1628] sm:$0xff]
      %v923 = vld [vmem:[%s1 + $0x1630] sm:$0xff]
      %v924 = vld [vmem:[%s1 + $0x1638] sm:$0xff]
      %v925 = vld [vmem:[%s1 + $0x1640] sm:$0xff]
      %v926 = vld [vmem:[%s1 + $0x1648] sm:$0xff]
      %v927 = vld [vmem:[%s1 + $0x1650] sm:$0xff]
      %v928 = vld [vmem:[%s1 + $0x1658] sm:$0xff]
      %v929 = vld [vmem:[%s1 + $0x1660] sm:$0xff]
      %v930 = vld [vmem:[%s1 + $0x1668] sm:$0xff]
      %v931 = vld [vmem:[%s1 + $0x1670] sm:$0xff]
      %v932 = vld [vmem:[%s1 + $0x1678] sm:$0xff]
      %v933 = vld [vmem:[%s1 + $0x1680] sm:$0xff]
      %v934 = vld [vmem:[%s1 + $0x1688] sm:$0xff]
      %v935 = vld [vmem:[%s1 + $0x1690] sm:$0xff]
      %v936 = vld [vmem:[%s1 + $0x1698] sm:$0xff]
      %v937 = vld [vmem:[%s1 + $0x16a0] sm:$0xff]
      %v938 = vld [vmem:[%s1 + $0x16a8] sm:$0xff]
      %v939 = vld [vmem:[%s1 + $0x16b0] sm:$0xff]
      %v940 = vld [vmem:[%s1 + $0x16b8] sm:$0xff]
      %v941 = vld [vmem:[%s1 + $0x16c0] sm:$0xff]
      %v942 = vld [vmem:[%s1 + $0x16c8] sm:$0xff]
      %v943 = vld [vmem:[%s1 + $0x16d0] sm:$0xff]
      %v944 = vld [vmem:[%s1 + $0x16d8] sm:$0xff]
      %v945 = vld [vmem:[%s1 + $0x16e0] sm:$0xff]
      %v946 = vld [vmem:[%s1 + $0x16e8] sm:$0xff]
      %v947 = vld [vmem:[%s1 + $0x16f0] sm:$0xff]
      %v948 = vld [vmem:[%s1 + $0x16f8] sm:$0xff]
      %v949 = vld [vmem:[%s1 + $0x1700] sm:$0xff]
      %v950 = vld [vmem:[%s1 + $0x1708] sm:$0xff]
      %v951 = vld [vmem:[%s1 + $0x1710] sm:$0xff]
      %v952 = vld [vmem:[%s1 + $0x1718] sm:$0xff]
      %v953 = vld [vmem:[%s1 + $0x1720] sm:$0xff]
      %v954 = vld [vmem:[%s1 + $0x1728] sm:$0xff]
      %v955 = vld [vmem:[%s1 + $0x1730] sm:$0xff]
      %v956 = vld [vmem:[%s1 + $0x1738] sm:$0xff]
      %v957 = vld [vmem:[%s1 + $0x1740] sm:$0xff]
      %v958 = vld [vmem:[%s1 + $0x1748] sm:$0xff]
      %v959 = vld [vmem:[%s1 + $0x1750] sm:$0xff]
      %v960 = vld [vmem:[%s1 + $0x1758] sm:$0xff]
      %v961 = vld [vmem:[%s1 + $0x1760] sm:$0xff]
      %v962 = vld [vmem:[%s1 + $0x1768] sm:$0xff]
      %v963 = vld [vmem:[%s1 + $0x1770] sm:$0xff]
      %v964 = vld [vmem:[%s1 + $0x1778] sm:$0xff]
      %v965 = vld [vmem:[%s1 + $0x1780] sm:$0xff]
      %v966 = vld [vmem:[%s1 + $0x1788] sm:$0xff]
      %v967 = vld [vmem:[%s1 + $0x1790] sm:$0xff]
      %v968 = vld [vmem:[%s1 + $0x1798] sm:$0xff]
      %v969 = vld [vmem:[%s1 + $0x17a0] sm:$0xff]
      %v970 = vld [vmem:[%s1 + $0x17a8] sm:$0xff]
      %v971 = vld [vmem:[%s1 + $0x17b0] sm:$0xff]
      %v972 = vld [vmem:[%s1 + $0x17b8] sm:$0xff]
      %v973 = vld [vmem:[%s1 + $0x17c0] sm:$0xff]
      %v974 = vld [vmem:[%s1 + $0x17c8] sm:$0xff]
      %v975 = vld [vmem:[%s1 + $0x17d0] sm:$0xff]
      %v976 = vld [vmem:[%s1 + $0x17d8] sm:$0xff]
      %v977 = vld [vmem:[%s1 + $0x17e0] sm:$0xff]
      %v978 = vld [vmem:[%s1 + $0x17e8] sm:$0xff]
      %v979 = vld [vmem:[%s1 + $0x17f0] sm:$0xff]
      %v980 = vld [vmem:[%s1 + $0x17f8] sm:$0xff]
      %v981 = vld [vmem:[%s2] sm:$0xff]
      %v983 = vperm.slane %v981, 0
      %v984 = vperm.slane %v981, 1
      %v985 = vperm.slane %v981, 2
      %v986 = vperm.slane %v981, 3
      %v987 = vperm.slane %v981, 4
      %v988 = vperm.slane %v981, 5
      %v989 = vperm.slane %v981, 6
      %v990 = vperm.slane %v981, 7
      %999 = vmatpush.msra.mxu0 %v333
      %1000 = vmatpush.msra.mxu0 %v325
      %1001 = vmatpush.msra.mxu0 %v317
      %1002 = vmatpush.msra.mxu0 %v309
      %1003 = vmatpush.msra.mxu0 %v301
      %1004 = vmatpush.msra.mxu0 %v293
      %1005 = vmatpush.msra.mxu0 %v285
      %1006 = vmatpush.msra.mxu0 %v277
      %1007 = vmatpush.msra.mxu0 %v269
      %1008 = vmatpush.msra.mxu0 %v261
      %1009 = vmatpush.msra.mxu0 %v253
      %1010 = vmatpush.msra.mxu0 %v245
      %1011 = vmatpush.msra.mxu0 %v237
      %1012 = vmatpush.msra.mxu0 %v229
      %1013 = vmatpush.msra.mxu0 %v221
      %1014 = vmatpush.msra.mxu0 %v213
      %1015 = vmatmul.f32.gmra.mxu0 %v207
      %v1016 = vpop.f32.mrf.mxu0
      %v1017 = vadd.f32 %v983, %v1016
      %1018 = vdwg.mxu0
      %1019 = vmatpush.msra.mxu0 %v461
      %1020 = vmatpush.msra.mxu0 %v453
      %1021 = vmatpush.msra.mxu0 %v445
      %1022 = vmatpush.msra.mxu0 %v437
      %1023 = vmatpush.msra.mxu0 %v429
      %1024 = vmatpush.msra.mxu0 %v421
      %1025 = vmatpush.msra.mxu0 %v413
      %1026 = vmatpush.msra.mxu0 %v405
      %1027 = vmatpush.msra.mxu0 %v397
      %1028 = vmatpush.msra.mxu0 %v389
      %1029 = vmatpush.msra.mxu0 %v381
      %1030 = vmatpush.msra.mxu0 %v373
      %1031 = vmatpush.msra.mxu0 %v365
      %1032 = vmatpush.msra.mxu0 %v357
      %1033 = vmatpush.msra.mxu0 %v349
      %1034 = vmatpush.msra.mxu0 %v341
      %1035 = vmatmul.f32.gmra.mxu0 %v208
      %v1036 = vpop.f32.mrf.mxu0
      %v1037 = vadd.f32 %v1017, %v1036
      %1038 = vdwg.mxu0
      %1039 = vmatpush.msra.mxu0 %v589
      %1040 = vmatpush.msra.mxu0 %v581
      %1041 = vmatpush.msra.mxu0 %v573
      %1042 = vmatpush.msra.mxu0 %v565
      %1043 = vmatpush.msra.mxu0 %v557
      %1044 = vmatpush.msra.mxu0 %v549
      %1045 = vmatpush.msra.mxu0 %v541
      %1046 = vmatpush.msra.mxu0 %v533
      %1047 = vmatpush.msra.mxu0 %v525
      %1048 = vmatpush.msra.mxu0 %v517
      %1049 = vmatpush.msra.mxu0 %v509
      %1050 = vmatpush.msra.mxu0 %v501
      %1051 = vmatpush.msra.mxu0 %v493
      %1052 = vmatpush.msra.mxu0 %v485
      %1053 = vmatpush.msra.mxu0 %v477
      %1054 = vmatpush.msra.mxu0 %v469
      %1055 = vmatmul.f32.gmra.mxu0 %v209
      %v1056 = vpop.f32.mrf.mxu0
      %v1057 = vadd.f32 %v1037, %v1056
      %1058 = vdwg.mxu0
      %1059 = vmatpush.msra.mxu0 %v717
      %1060 = vmatpush.msra.mxu0 %v709
      %1061 = vmatpush.msra.mxu0 %v701
      %1062 = vmatpush.msra.mxu0 %v693
      %1063 = vmatpush.msra.mxu0 %v685
      %1064 = vmatpush.msra.mxu0 %v677
      %1065 = vmatpush.msra.mxu0 %v669
      %1066 = vmatpush.msra.mxu0 %v661
      %1067 = vmatpush.msra.mxu0 %v653
      %1068 = vmatpush.msra.mxu0 %v645
      %1069 = vmatpush.msra.mxu0 %v637
      %1070 = vmatpush.msra.mxu0 %v629
      %1071 = vmatpush.msra.mxu0 %v621
      %1072 = vmatpush.msra.mxu0 %v613
      %1073 = vmatpush.msra.mxu0 %v605
      %1074 = vmatpush.msra.mxu0 %v597
      %1075 = vmatmul.f32.gmra.mxu0 %v210
      %v1076 = vpop.f32.mrf.mxu0
      %v1077 = vadd.f32 %v1057, %v1076
      %1078 = vdwg.mxu0
      %1079 = vmatpush.msra.mxu0 %v845
      %1080 = vmatpush.msra.mxu0 %v837
      %1081 = vmatpush.msra.mxu0 %v829
      %1082 = vmatpush.msra.mxu0 %v821
      %1083 = vmatpush.msra.mxu0 %v813
      %1084 = vmatpush.msra.mxu0 %v805
      %1085 = vmatpush.msra.mxu0 %v797
      %1086 = vmatpush.msra.mxu0 %v789
      %1087 = vmatpush.msra.mxu0 %v781
      %1088 = vmatpush.msra.mxu0 %v773
      %1089 = vmatpush.msra.mxu0 %v765
      %1090 = vmatpush.msra.mxu0 %v757
      %1091 = vmatpush.msra.mxu0 %v749
      %1092 = vmatpush.msra.mxu0 %v741
      %1093 = vmatpush.msra.mxu0 %v733
      %1094 = vmatpush.msra.mxu0 %v725
      %1095 = vmatmul.f32.gmra.mxu0 %v211
      %v1096 = vpop.f32.mrf.mxu0
      %v1097 = vadd.f32 %v1077, %v1096
      %1098 = vdwg.mxu0
      %1099 = vmatpush.msra.mxu0 %v973
      %1100 = vmatpush.msra.mxu0 %v965
      %1101 = vmatpush.msra.mxu0 %v957
      %1102 = vmatpush.msra.mxu0 %v949
      %1103 = vmatpush.msra.mxu0 %v941
      %1104 = vmatpush.msra.mxu0 %v933
      %1105 = vmatpush.msra.mxu0 %v925
      %1106 = vmatpush.msra.mxu0 %v917
      %1107 = vmatpush.msra.mxu0 %v909
      %1108 = vmatpush.msra.mxu0 %v901
      %1109 = vmatpush.msra.mxu0 %v893
      %1110 = vmatpush.msra.mxu0 %v885
      %1111 = vmatpush.msra.mxu0 %v877
      %1112 = vmatpush.msra.mxu0 %v869
      %1113 = vmatpush.msra.mxu0 %v861
      %1114 = vmatpush.msra.mxu0 %v853
      %1115 = vmatmul.f32.gmra.mxu0 %v212
      %v1116 = vpop.f32.mrf.mxu0
      %v1117 = vadd.f32 %v1097, %v1116
      %1118 = vdwg.mxu0
      %1119 = vmatpush.msra.mxu0 %v334
      %1120 = vmatpush.msra.mxu0 %v326
      %1121 = vmatpush.msra.mxu0 %v318
      %1122 = vmatpush.msra.mxu0 %v310
      %1123 = vmatpush.msra.mxu0 %v302
      %1124 = vmatpush.msra.mxu0 %v294
      %1125 = vmatpush.msra.mxu0 %v286
      %1126 = vmatpush.msra.mxu0 %v278
      %1127 = vmatpush.msra.mxu0 %v270
      %1128 = vmatpush.msra.mxu0 %v262
      %1129 = vmatpush.msra.mxu0 %v254
      %1130 = vmatpush.msra.mxu0 %v246
      %1131 = vmatpush.msra.mxu0 %v238
      %1132 = vmatpush.msra.mxu0 %v230
      %1133 = vmatpush.msra.mxu0 %v222
      %1134 = vmatpush.msra.mxu0 %v214
      %1135 = vmatmul.f32.gmra.mxu0 %v207
      %v1136 = vpop.f32.mrf.mxu0
      %v1137 = vadd.f32 %v984, %v1136
      %1138 = vdwg.mxu0
      %1139 = vmatpush.msra.mxu0 %v462
      %1140 = vmatpush.msra.mxu0 %v454
      %1141 = vmatpush.msra.mxu0 %v446
      %1142 = vmatpush.msra.mxu0 %v438
      %1143 = vmatpush.msra.mxu0 %v430
      %1144 = vmatpush.msra.mxu0 %v422
      %1145 = vmatpush.msra.mxu0 %v414
      %1146 = vmatpush.msra.mxu0 %v406
      %1147 = vmatpush.msra.mxu0 %v398
      %1148 = vmatpush.msra.mxu0 %v390
      %1149 = vmatpush.msra.mxu0 %v382
      %1150 = vmatpush.msra.mxu0 %v374
      %1151 = vmatpush.msra.mxu0 %v366
      %1152 = vmatpush.msra.mxu0 %v358
      %1153 = vmatpush.msra.mxu0 %v350
      %1154 = vmatpush.msra.mxu0 %v342
      %1155 = vmatmul.f32.gmra.mxu0 %v208
      %v1156 = vpop.f32.mrf.mxu0
      %v1157 = vadd.f32 %v1137, %v1156
      %1158 = vdwg.mxu0
      %1159 = vmatpush.msra.mxu0 %v590
      %1160 = vmatpush.msra.mxu0 %v582
      %1161 = vmatpush.msra.mxu0 %v574
      %1162 = vmatpush.msra.mxu0 %v566
      %1163 = vmatpush.msra.mxu0 %v558
      %1164 = vmatpush.msra.mxu0 %v550
      %1165 = vmatpush.msra.mxu0 %v542
      %1166 = vmatpush.msra.mxu0 %v534
      %1167 = vmatpush.msra.mxu0 %v526
      %1168 = vmatpush.msra.mxu0 %v518
      %1169 = vmatpush.msra.mxu0 %v510
      %1170 = vmatpush.msra.mxu0 %v502
      %1171 = vmatpush.msra.mxu0 %v494
      %1172 = vmatpush.msra.mxu0 %v486
      %1173 = vmatpush.msra.mxu0 %v478
      %1174 = vmatpush.msra.mxu0 %v470
      %1175 = vmatmul.f32.gmra.mxu0 %v209
      %v1176 = vpop.f32.mrf.mxu0
      %v1177 = vadd.f32 %v1157, %v1176
      %1178 = vdwg.mxu0
      %1179 = vmatpush.msra.mxu0 %v718
      %1180 = vmatpush.msra.mxu0 %v710
      %1181 = vmatpush.msra.mxu0 %v702
      %1182 = vmatpush.msra.mxu0 %v694
      %1183 = vmatpush.msra.mxu0 %v686
      %1184 = vmatpush.msra.mxu0 %v678
      %1185 = vmatpush.msra.mxu0 %v670
      %1186 = vmatpush.msra.mxu0 %v662
      %1187 = vmatpush.msra.mxu0 %v654
      %1188 = vmatpush.msra.mxu0 %v646
      %1189 = vmatpush.msra.mxu0 %v638
      %1190 = vmatpush.msra.mxu0 %v630
      %1191 = vmatpush.msra.mxu0 %v622
      %1192 = vmatpush.msra.mxu0 %v614
      %1193 = vmatpush.msra.mxu0 %v606
      %1194 = vmatpush.msra.mxu0 %v598
      %1195 = vmatmul.f32.gmra.mxu0 %v210
      %v1196 = vpop.f32.mrf.mxu0
      %v1197 = vadd.f32 %v1177, %v1196
      %1198 = vdwg.mxu0
      %1199 = vmatpush.msra.mxu0 %v846
      %1200 = vmatpush.msra.mxu0 %v838
      %1201 = vmatpush.msra.mxu0 %v830
      %1202 = vmatpush.msra.mxu0 %v822
      %1203 = vmatpush.msra.mxu0 %v814
      %1204 = vmatpush.msra.mxu0 %v806
      %1205 = vmatpush.msra.mxu0 %v798
      %1206 = vmatpush.msra.mxu0 %v790
      %1207 = vmatpush.msra.mxu0 %v782
      %1208 = vmatpush.msra.mxu0 %v774
      %1209 = vmatpush.msra.mxu0 %v766
      %1210 = vmatpush.msra.mxu0 %v758
      %1211 = vmatpush.msra.mxu0 %v750
      %1212 = vmatpush.msra.mxu0 %v742
      %1213 = vmatpush.msra.mxu0 %v734
      %1214 = vmatpush.msra.mxu0 %v726
      %1215 = vmatmul.f32.gmra.mxu0 %v211
      %v1216 = vpop.f32.mrf.mxu0
      %v1217 = vadd.f32 %v1197, %v1216
      %1218 = vdwg.mxu0
      %1219 = vmatpush.msra.mxu0 %v974
      %1220 = vmatpush.msra.mxu0 %v966
      %1221 = vmatpush.msra.mxu0 %v958
      %1222 = vmatpush.msra.mxu0 %v950
      %1223 = vmatpush.msra.mxu0 %v942
      %1224 = vmatpush.msra.mxu0 %v934
      %1225 = vmatpush.msra.mxu0 %v926
      %1226 = vmatpush.msra.mxu0 %v918
      %1227 = vmatpush.msra.mxu0 %v910
      %1228 = vmatpush.msra.mxu0 %v902
      %1229 = vmatpush.msra.mxu0 %v894
      %1230 = vmatpush.msra.mxu0 %v886
      %1231 = vmatpush.msra.mxu0 %v878
      %1232 = vmatpush.msra.mxu0 %v870
      %1233 = vmatpush.msra.mxu0 %v862
      %1234 = vmatpush.msra.mxu0 %v854
      %1235 = vmatmul.f32.gmra.mxu0 %v212
      %v1236 = vpop.f32.mrf.mxu0
      %v1237 = vadd.f32 %v1217, %v1236
      %1238 = vdwg.mxu0
      %1239 = vmatpush.msra.mxu0 %v335
      %1240 = vmatpush.msra.mxu0 %v327
      %1241 = vmatpush.msra.mxu0 %v319
      %1242 = vmatpush.msra.mxu0 %v311
      %1243 = vmatpush.msra.mxu0 %v303
      %1244 = vmatpush.msra.mxu0 %v295
      %1245 = vmatpush.msra.mxu0 %v287
      %1246 = vmatpush.msra.mxu0 %v279
      %1247 = vmatpush.msra.mxu0 %v271
      %1248 = vmatpush.msra.mxu0 %v263
      %1249 = vmatpush.msra.mxu0 %v255
      %1250 = vmatpush.msra.mxu0 %v247
      %1251 = vmatpush.msra.mxu0 %v239
      %1252 = vmatpush.msra.mxu0 %v231
      %1253 = vmatpush.msra.mxu0 %v223
      %1254 = vmatpush.msra.mxu0 %v215
      %1255 = vmatmul.f32.gmra.mxu0 %v207
      %v1256 = vpop.f32.mrf.mxu0
      %v1257 = vadd.f32 %v985, %v1256
      %1258 = vdwg.mxu0
      %1259 = vmatpush.msra.mxu0 %v463
      %1260 = vmatpush.msra.mxu0 %v455
      %1261 = vmatpush.msra.mxu0 %v447
      %1262 = vmatpush.msra.mxu0 %v439
      %1263 = vmatpush.msra.mxu0 %v431
      %1264 = vmatpush.msra.mxu0 %v423
      %1265 = vmatpush.msra.mxu0 %v415
      %1266 = vmatpush.msra.mxu0 %v407
      %1267 = vmatpush.msra.mxu0 %v399
      %1268 = vmatpush.msra.mxu0 %v391
      %1269 = vmatpush.msra.mxu0 %v383
      %1270 = vmatpush.msra.mxu0 %v375
      %1271 = vmatpush.msra.mxu0 %v367
      %1272 = vmatpush.msra.mxu0 %v359
      %1273 = vmatpush.msra.mxu0 %v351
      %1274 = vmatpush.msra.mxu0 %v343
      %1275 = vmatmul.f32.gmra.mxu0 %v208
      %v1276 = vpop.f32.mrf.mxu0
      %v1277 = vadd.f32 %v1257, %v1276
      %1278 = vdwg.mxu0
      %1279 = vmatpush.msra.mxu0 %v591
      %1280 = vmatpush.msra.mxu0 %v583
      %1281 = vmatpush.msra.mxu0 %v575
      %1282 = vmatpush.msra.mxu0 %v567
      %1283 = vmatpush.msra.mxu0 %v559
      %1284 = vmatpush.msra.mxu0 %v551
      %1285 = vmatpush.msra.mxu0 %v543
      %1286 = vmatpush.msra.mxu0 %v535
      %1287 = vmatpush.msra.mxu0 %v527
      %1288 = vmatpush.msra.mxu0 %v519
      %1289 = vmatpush.msra.mxu0 %v511
      %1290 = vmatpush.msra.mxu0 %v503
      %1291 = vmatpush.msra.mxu0 %v495
      %1292 = vmatpush.msra.mxu0 %v487
      %1293 = vmatpush.msra.mxu0 %v479
      %1294 = vmatpush.msra.mxu0 %v471
      %1295 = vmatmul.f32.gmra.mxu0 %v209
      %v1296 = vpop.f32.mrf.mxu0
      %v1297 = vadd.f32 %v1277, %v1296
      %1298 = vdwg.mxu0
      %1299 = vmatpush.msra.mxu0 %v719
      %1300 = vmatpush.msra.mxu0 %v711
      %1301 = vmatpush.msra.mxu0 %v703
      %1302 = vmatpush.msra.mxu0 %v695
      %1303 = vmatpush.msra.mxu0 %v687
      %1304 = vmatpush.msra.mxu0 %v679
      %1305 = vmatpush.msra.mxu0 %v671
      %1306 = vmatpush.msra.mxu0 %v663
      %1307 = vmatpush.msra.mxu0 %v655
      %1308 = vmatpush.msra.mxu0 %v647
      %1309 = vmatpush.msra.mxu0 %v639
      %1310 = vmatpush.msra.mxu0 %v631
      %1311 = vmatpush.msra.mxu0 %v623
      %1312 = vmatpush.msra.mxu0 %v615
      %1313 = vmatpush.msra.mxu0 %v607
      %1314 = vmatpush.msra.mxu0 %v599
      %1315 = vmatmul.f32.gmra.mxu0 %v210
      %v1316 = vpop.f32.mrf.mxu0
      %v1317 = vadd.f32 %v1297, %v1316
      %1318 = vdwg.mxu0
      %1319 = vmatpush.msra.mxu0 %v847
      %1320 = vmatpush.msra.mxu0 %v839
      %1321 = vmatpush.msra.mxu0 %v831
      %1322 = vmatpush.msra.mxu0 %v823
      %1323 = vmatpush.msra.mxu0 %v815
      %1324 = vmatpush.msra.mxu0 %v807
      %1325 = vmatpush.msra.mxu0 %v799
      %1326 = vmatpush.msra.mxu0 %v791
      %1327 = vmatpush.msra.mxu0 %v783
      %1328 = vmatpush.msra.mxu0 %v775
      %1329 = vmatpush.msra.mxu0 %v767
      %1330 = vmatpush.msra.mxu0 %v759
      %1331 = vmatpush.msra.mxu0 %v751
      %1332 = vmatpush.msra.mxu0 %v743
      %1333 = vmatpush.msra.mxu0 %v735
      %1334 = vmatpush.msra.mxu0 %v727
      %1335 = vmatmul.f32.gmra.mxu0 %v211
      %v1336 = vpop.f32.mrf.mxu0
      %v1337 = vadd.f32 %v1317, %v1336
      %1338 = vdwg.mxu0
      %1339 = vmatpush.msra.mxu0 %v975
      %1340 = vmatpush.msra.mxu0 %v967
      %1341 = vmatpush.msra.mxu0 %v959
      %1342 = vmatpush.msra.mxu0 %v951
      %1343 = vmatpush.msra.mxu0 %v943
      %1344 = vmatpush.msra.mxu0 %v935
      %1345 = vmatpush.msra.mxu0 %v927
      %1346 = vmatpush.msra.mxu0 %v919
      %1347 = vmatpush.msra.mxu0 %v911
      %1348 = vmatpush.msra.mxu0 %v903
      %1349 = vmatpush.msra.mxu0 %v895
      %1350 = vmatpush.msra.mxu0 %v887
      %1351 = vmatpush.msra.mxu0 %v879
      %1352 = vmatpush.msra.mxu0 %v871
      %1353 = vmatpush.msra.mxu0 %v863
      %1354 = vmatpush.msra.mxu0 %v855
      %1355 = vmatmul.f32.gmra.mxu0 %v212
      %v1356 = vpop.f32.mrf.mxu0
      %v1357 = vadd.f32 %v1337, %v1356
      %1358 = vdwg.mxu0
      %1359 = vmatpush.msra.mxu0 %v336
      %1360 = vmatpush.msra.mxu0 %v328
      %1361 = vmatpush.msra.mxu0 %v320
      %1362 = vmatpush.msra.mxu0 %v312
      %1363 = vmatpush.msra.mxu0 %v304
      %1364 = vmatpush.msra.mxu0 %v296
      %1365 = vmatpush.msra.mxu0 %v288
      %1366 = vmatpush.msra.mxu0 %v280
      %1367 = vmatpush.msra.mxu0 %v272
      %1368 = vmatpush.msra.mxu0 %v264
      %1369 = vmatpush.msra.mxu0 %v256
      %1370 = vmatpush.msra.mxu0 %v248
      %1371 = vmatpush.msra.mxu0 %v240
      %1372 = vmatpush.msra.mxu0 %v232
      %1373 = vmatpush.msra.mxu0 %v224
      %1374 = vmatpush.msra.mxu0 %v216
      %1375 = vmatmul.f32.gmra.mxu0 %v207
      %v1376 = vpop.f32.mrf.mxu0
      %v1377 = vadd.f32 %v986, %v1376
      %1378 = vdwg.mxu0
      %1379 = vmatpush.msra.mxu0 %v464
      %1380 = vmatpush.msra.mxu0 %v456
      %1381 = vmatpush.msra.mxu0 %v448
      %1382 = vmatpush.msra.mxu0 %v440
      %1383 = vmatpush.msra.mxu0 %v432
      %1384 = vmatpush.msra.mxu0 %v424
      %1385 = vmatpush.msra.mxu0 %v416
      %1386 = vmatpush.msra.mxu0 %v408
      %1387 = vmatpush.msra.mxu0 %v400
      %1388 = vmatpush.msra.mxu0 %v392
      %1389 = vmatpush.msra.mxu0 %v384
      %1390 = vmatpush.msra.mxu0 %v376
      %1391 = vmatpush.msra.mxu0 %v368
      %1392 = vmatpush.msra.mxu0 %v360
      %1393 = vmatpush.msra.mxu0 %v352
      %1394 = vmatpush.msra.mxu0 %v344
      %1395 = vmatmul.f32.gmra.mxu0 %v208
      %v1396 = vpop.f32.mrf.mxu0
      %v1397 = vadd.f32 %v1377, %v1396
      %1398 = vdwg.mxu0
      %1399 = vmatpush.msra.mxu0 %v592
      %1400 = vmatpush.msra.mxu0 %v584
      %1401 = vmatpush.msra.mxu0 %v576
      %1402 = vmatpush.msra.mxu0 %v568
      %1403 = vmatpush.msra.mxu0 %v560
      %1404 = vmatpush.msra.mxu0 %v552
      %1405 = vmatpush.msra.mxu0 %v544
      %1406 = vmatpush.msra.mxu0 %v536
      %1407 = vmatpush.msra.mxu0 %v528
      %1408 = vmatpush.msra.mxu0 %v520
      %1409 = vmatpush.msra.mxu0 %v512
      %1410 = vmatpush.msra.mxu0 %v504
      %1411 = vmatpush.msra.mxu0 %v496
      %1412 = vmatpush.msra.mxu0 %v488
      %1413 = vmatpush.msra.mxu0 %v480
      %1414 = vmatpush.msra.mxu0 %v472
      %1415 = vmatmul.f32.gmra.mxu0 %v209
      %v1416 = vpop.f32.mrf.mxu0
      %v1417 = vadd.f32 %v1397, %v1416
      %1418 = vdwg.mxu0
      %1419 = vmatpush.msra.mxu0 %v720
      %1420 = vmatpush.msra.mxu0 %v712
      %1421 = vmatpush.msra.mxu0 %v704
      %1422 = vmatpush.msra.mxu0 %v696
      %1423 = vmatpush.msra.mxu0 %v688
      %1424 = vmatpush.msra.mxu0 %v680
      %1425 = vmatpush.msra.mxu0 %v672
      %1426 = vmatpush.msra.mxu0 %v664
      %1427 = vmatpush.msra.mxu0 %v656
      %1428 = vmatpush.msra.mxu0 %v648
      %1429 = vmatpush.msra.mxu0 %v640
      %1430 = vmatpush.msra.mxu0 %v632
      %1431 = vmatpush.msra.mxu0 %v624
      %1432 = vmatpush.msra.mxu0 %v616
      %1433 = vmatpush.msra.mxu0 %v608
      %1434 = vmatpush.msra.mxu0 %v600
      %1435 = vmatmul.f32.gmra.mxu0 %v210
      %v1436 = vpop.f32.mrf.mxu0
      %v1437 = vadd.f32 %v1417, %v1436
      %1438 = vdwg.mxu0
      %1439 = vmatpush.msra.mxu0 %v848
      %1440 = vmatpush.msra.mxu0 %v840
      %1441 = vmatpush.msra.mxu0 %v832
      %1442 = vmatpush.msra.mxu0 %v824
      %1443 = vmatpush.msra.mxu0 %v816
      %1444 = vmatpush.msra.mxu0 %v808
      %1445 = vmatpush.msra.mxu0 %v800
      %1446 = vmatpush.msra.mxu0 %v792
      %1447 = vmatpush.msra.mxu0 %v784
      %1448 = vmatpush.msra.mxu0 %v776
      %1449 = vmatpush.msra.mxu0 %v768
      %1450 = vmatpush.msra.mxu0 %v760
      %1451 = vmatpush.msra.mxu0 %v752
      %1452 = vmatpush.msra.mxu0 %v744
      %1453 = vmatpush.msra.mxu0 %v736
      %1454 = vmatpush.msra.mxu0 %v728
      %1455 = vmatmul.f32.gmra.mxu0 %v211
      %v1456 = vpop.f32.mrf.mxu0
      %v1457 = vadd.f32 %v1437, %v1456
      %1458 = vdwg.mxu0
      %1459 = vmatpush.msra.mxu0 %v976
      %1460 = vmatpush.msra.mxu0 %v968
      %1461 = vmatpush.msra.mxu0 %v960
      %1462 = vmatpush.msra.mxu0 %v952
      %1463 = vmatpush.msra.mxu0 %v944
      %1464 = vmatpush.msra.mxu0 %v936
      %1465 = vmatpush.msra.mxu0 %v928
      %1466 = vmatpush.msra.mxu0 %v920
      %1467 = vmatpush.msra.mxu0 %v912
      %1468 = vmatpush.msra.mxu0 %v904
      %1469 = vmatpush.msra.mxu0 %v896
      %1470 = vmatpush.msra.mxu0 %v888
      %1471 = vmatpush.msra.mxu0 %v880
      %1472 = vmatpush.msra.mxu0 %v872
      %1473 = vmatpush.msra.mxu0 %v864
      %1474 = vmatpush.msra.mxu0 %v856
      %1475 = vmatmul.f32.gmra.mxu0 %v212
      %v1476 = vpop.f32.mrf.mxu0
      %v1477 = vadd.f32 %v1457, %v1476
      %1478 = vdwg.mxu0
      %1479 = vmatpush.msra.mxu0 %v337
      %1480 = vmatpush.msra.mxu0 %v329
      %1481 = vmatpush.msra.mxu0 %v321
      %1482 = vmatpush.msra.mxu0 %v313
      %1483 = vmatpush.msra.mxu0 %v305
      %1484 = vmatpush.msra.mxu0 %v297
      %1485 = vmatpush.msra.mxu0 %v289
      %1486 = vmatpush.msra.mxu0 %v281
      %1487 = vmatpush.msra.mxu0 %v273
      %1488 = vmatpush.msra.mxu0 %v265
      %1489 = vmatpush.msra.mxu0 %v257
      %1490 = vmatpush.msra.mxu0 %v249
      %1491 = vmatpush.msra.mxu0 %v241
      %1492 = vmatpush.msra.mxu0 %v233
      %1493 = vmatpush.msra.mxu0 %v225
      %1494 = vmatpush.msra.mxu0 %v217
      %1495 = vmatmul.f32.gmra.mxu0 %v207
      %v1496 = vpop.f32.mrf.mxu0
      %v1497 = vadd.f32 %v987, %v1496
      %1498 = vdwg.mxu0
      %1499 = vmatpush.msra.mxu0 %v465
      %1500 = vmatpush.msra.mxu0 %v457
      %1501 = vmatpush.msra.mxu0 %v449
      %1502 = vmatpush.msra.mxu0 %v441
      %1503 = vmatpush.msra.mxu0 %v433
      %1504 = vmatpush.msra.mxu0 %v425
      %1505 = vmatpush.msra.mxu0 %v417
      %1506 = vmatpush.msra.mxu0 %v409
      %1507 = vmatpush.msra.mxu0 %v401
      %1508 = vmatpush.msra.mxu0 %v393
      %1509 = vmatpush.msra.mxu0 %v385
      %1510 = vmatpush.msra.mxu0 %v377
      %1511 = vmatpush.msra.mxu0 %v369
      %1512 = vmatpush.msra.mxu0 %v361
      %1513 = vmatpush.msra.mxu0 %v353
      %1514 = vmatpush.msra.mxu0 %v345
      %1515 = vmatmul.f32.gmra.mxu0 %v208
      %v1516 = vpop.f32.mrf.mxu0
      %v1517 = vadd.f32 %v1497, %v1516
      %1518 = vdwg.mxu0
      %1519 = vmatpush.msra.mxu0 %v593
      %1520 = vmatpush.msra.mxu0 %v585
      %1521 = vmatpush.msra.mxu0 %v577
      %1522 = vmatpush.msra.mxu0 %v569
      %1523 = vmatpush.msra.mxu0 %v561
      %1524 = vmatpush.msra.mxu0 %v553
      %1525 = vmatpush.msra.mxu0 %v545
      %1526 = vmatpush.msra.mxu0 %v537
      %1527 = vmatpush.msra.mxu0 %v529
      %1528 = vmatpush.msra.mxu0 %v521
      %1529 = vmatpush.msra.mxu0 %v513
      %1530 = vmatpush.msra.mxu0 %v505
      %1531 = vmatpush.msra.mxu0 %v497
      %1532 = vmatpush.msra.mxu0 %v489
      %1533 = vmatpush.msra.mxu0 %v481
      %1534 = vmatpush.msra.mxu0 %v473
      %1535 = vmatmul.f32.gmra.mxu0 %v209
      %v1536 = vpop.f32.mrf.mxu0
      %v1537 = vadd.f32 %v1517, %v1536
      %1538 = vdwg.mxu0
      %1539 = vmatpush.msra.mxu0 %v721
      %1540 = vmatpush.msra.mxu0 %v713
      %1541 = vmatpush.msra.mxu0 %v705
      %1542 = vmatpush.msra.mxu0 %v697
      %1543 = vmatpush.msra.mxu0 %v689
      %1544 = vmatpush.msra.mxu0 %v681
      %1545 = vmatpush.msra.mxu0 %v673
      %1546 = vmatpush.msra.mxu0 %v665
      %1547 = vmatpush.msra.mxu0 %v657
      %1548 = vmatpush.msra.mxu0 %v649
      %1549 = vmatpush.msra.mxu0 %v641
      %1550 = vmatpush.msra.mxu0 %v633
      %1551 = vmatpush.msra.mxu0 %v625
      %1552 = vmatpush.msra.mxu0 %v617
      %1553 = vmatpush.msra.mxu0 %v609
      %1554 = vmatpush.msra.mxu0 %v601
      %1555 = vmatmul.f32.gmra.mxu0 %v210
      %v1556 = vpop.f32.mrf.mxu0
      %v1557 = vadd.f32 %v1537, %v1556
      %1558 = vdwg.mxu0
      %1559 = vmatpush.msra.mxu0 %v849
      %1560 = vmatpush.msra.mxu0 %v841
      %1561 = vmatpush.msra.mxu0 %v833
      %1562 = vmatpush.msra.mxu0 %v825
      %1563 = vmatpush.msra.mxu0 %v817
      %1564 = vmatpush.msra.mxu0 %v809
      %1565 = vmatpush.msra.mxu0 %v801
      %1566 = vmatpush.msra.mxu0 %v793
      %1567 = vmatpush.msra.mxu0 %v785
      %1568 = vmatpush.msra.mxu0 %v777
      %1569 = vmatpush.msra.mxu0 %v769
      %1570 = vmatpush.msra.mxu0 %v761
      %1571 = vmatpush.msra.mxu0 %v753
      %1572 = vmatpush.msra.mxu0 %v745
      %1573 = vmatpush.msra.mxu0 %v737
      %1574 = vmatpush.msra.mxu0 %v729
      %1575 = vmatmul.f32.gmra.mxu0 %v211
      %v1576 = vpop.f32.mrf.mxu0
      %v1577 = vadd.f32 %v1557, %v1576
      %1578 = vdwg.mxu0
      %1579 = vmatpush.msra.mxu0 %v977
      %1580 = vmatpush.msra.mxu0 %v969
      %1581 = vmatpush.msra.mxu0 %v961
      %1582 = vmatpush.msra.mxu0 %v953
      %1583 = vmatpush.msra.mxu0 %v945
      %1584 = vmatpush.msra.mxu0 %v937
      %1585 = vmatpush.msra.mxu0 %v929
      %1586 = vmatpush.msra.mxu0 %v921
      %1587 = vmatpush.msra.mxu0 %v913
      %1588 = vmatpush.msra.mxu0 %v905
      %1589 = vmatpush.msra.mxu0 %v897
      %1590 = vmatpush.msra.mxu0 %v889
      %1591 = vmatpush.msra.mxu0 %v881
      %1592 = vmatpush.msra.mxu0 %v873
      %1593 = vmatpush.msra.mxu0 %v865
      %1594 = vmatpush.msra.mxu0 %v857
      %1595 = vmatmul.f32.gmra.mxu0 %v212
      %v1596 = vpop.f32.mrf.mxu0
      %v1597 = vadd.f32 %v1577, %v1596
      %1598 = vdwg.mxu0
      %1599 = vmatpush.msra.mxu0 %v338
      %1600 = vmatpush.msra.mxu0 %v330
      %1601 = vmatpush.msra.mxu0 %v322
      %1602 = vmatpush.msra.mxu0 %v314
      %1603 = vmatpush.msra.mxu0 %v306
      %1604 = vmatpush.msra.mxu0 %v298
      %1605 = vmatpush.msra.mxu0 %v290
      %1606 = vmatpush.msra.mxu0 %v282
      %1607 = vmatpush.msra.mxu0 %v274
      %1608 = vmatpush.msra.mxu0 %v266
      %1609 = vmatpush.msra.mxu0 %v258
      %1610 = vmatpush.msra.mxu0 %v250
      %1611 = vmatpush.msra.mxu0 %v242
      %1612 = vmatpush.msra.mxu0 %v234
      %1613 = vmatpush.msra.mxu0 %v226
      %1614 = vmatpush.msra.mxu0 %v218
      %1615 = vmatmul.f32.gmra.mxu0 %v207
      %v1616 = vpop.f32.mrf.mxu0
      %v1617 = vadd.f32 %v988, %v1616
      %1618 = vdwg.mxu0
      %1619 = vmatpush.msra.mxu0 %v466
      %1620 = vmatpush.msra.mxu0 %v458
      %1621 = vmatpush.msra.mxu0 %v450
      %1622 = vmatpush.msra.mxu0 %v442
      %1623 = vmatpush.msra.mxu0 %v434
      %1624 = vmatpush.msra.mxu0 %v426
      %1625 = vmatpush.msra.mxu0 %v418
      %1626 = vmatpush.msra.mxu0 %v410
      %1627 = vmatpush.msra.mxu0 %v402
      %1628 = vmatpush.msra.mxu0 %v394
      %1629 = vmatpush.msra.mxu0 %v386
      %1630 = vmatpush.msra.mxu0 %v378
      %1631 = vmatpush.msra.mxu0 %v370
      %1632 = vmatpush.msra.mxu0 %v362
      %1633 = vmatpush.msra.mxu0 %v354
      %1634 = vmatpush.msra.mxu0 %v346
      %1635 = vmatmul.f32.gmra.mxu0 %v208
      %v1636 = vpop.f32.mrf.mxu0
      %v1637 = vadd.f32 %v1617, %v1636
      %1638 = vdwg.mxu0
      %1639 = vmatpush.msra.mxu0 %v594
      %1640 = vmatpush.msra.mxu0 %v586
      %1641 = vmatpush.msra.mxu0 %v578
      %1642 = vmatpush.msra.mxu0 %v570
      %1643 = vmatpush.msra.mxu0 %v562
      %1644 = vmatpush.msra.mxu0 %v554
      %1645 = vmatpush.msra.mxu0 %v546
      %1646 = vmatpush.msra.mxu0 %v538
      %1647 = vmatpush.msra.mxu0 %v530
      %1648 = vmatpush.msra.mxu0 %v522
      %1649 = vmatpush.msra.mxu0 %v514
      %1650 = vmatpush.msra.mxu0 %v506
      %1651 = vmatpush.msra.mxu0 %v498
      %1652 = vmatpush.msra.mxu0 %v490
      %1653 = vmatpush.msra.mxu0 %v482
      %1654 = vmatpush.msra.mxu0 %v474
      %1655 = vmatmul.f32.gmra.mxu0 %v209
      %v1656 = vpop.f32.mrf.mxu0
      %v1657 = vadd.f32 %v1637, %v1656
      %1658 = vdwg.mxu0
      %1659 = vmatpush.msra.mxu0 %v722
      %1660 = vmatpush.msra.mxu0 %v714
      %1661 = vmatpush.msra.mxu0 %v706
      %1662 = vmatpush.msra.mxu0 %v698
      %1663 = vmatpush.msra.mxu0 %v690
      %1664 = vmatpush.msra.mxu0 %v682
      %1665 = vmatpush.msra.mxu0 %v674
      %1666 = vmatpush.msra.mxu0 %v666
      %1667 = vmatpush.msra.mxu0 %v658
      %1668 = vmatpush.msra.mxu0 %v650
      %1669 = vmatpush.msra.mxu0 %v642
      %1670 = vmatpush.msra.mxu0 %v634
      %1671 = vmatpush.msra.mxu0 %v626
      %1672 = vmatpush.msra.mxu0 %v618
      %1673 = vmatpush.msra.mxu0 %v610
      %1674 = vmatpush.msra.mxu0 %v602
      %1675 = vmatmul.f32.gmra.mxu0 %v210
      %v1676 = vpop.f32.mrf.mxu0
      %v1677 = vadd.f32 %v1657, %v1676
      %1678 = vdwg.mxu0
      %1679 = vmatpush.msra.mxu0 %v850
      %1680 = vmatpush.msra.mxu0 %v842
      %1681 = vmatpush.msra.mxu0 %v834
      %1682 = vmatpush.msra.mxu0 %v826
      %1683 = vmatpush.msra.mxu0 %v818
      %1684 = vmatpush.msra.mxu0 %v810
      %1685 = vmatpush.msra.mxu0 %v802
      %1686 = vmatpush.msra.mxu0 %v794
      %1687 = vmatpush.msra.mxu0 %v786
      %1688 = vmatpush.msra.mxu0 %v778
      %1689 = vmatpush.msra.mxu0 %v770
      %1690 = vmatpush.msra.mxu0 %v762
      %1691 = vmatpush.msra.mxu0 %v754
      %1692 = vmatpush.msra.mxu0 %v746
      %1693 = vmatpush.msra.mxu0 %v738
      %1694 = vmatpush.msra.mxu0 %v730
      %1695 = vmatmul.f32.gmra.mxu0 %v211
      %v1696 = vpop.f32.mrf.mxu0
      %v1697 = vadd.f32 %v1677, %v1696
      %1698 = vdwg.mxu0
      %1699 = vmatpush.msra.mxu0 %v978
      %1700 = vmatpush.msra.mxu0 %v970
      %1701 = vmatpush.msra.mxu0 %v962
      %1702 = vmatpush.msra.mxu0 %v954
      %1703 = vmatpush.msra.mxu0 %v946
      %1704 = vmatpush.msra.mxu0 %v938
      %1705 = vmatpush.msra.mxu0 %v930
      %1706 = vmatpush.msra.mxu0 %v922
      %1707 = vmatpush.msra.mxu0 %v914
      %1708 = vmatpush.msra.mxu0 %v906
      %1709 = vmatpush.msra.mxu0 %v898
      %1710 = vmatpush.msra.mxu0 %v890
      %1711 = vmatpush.msra.mxu0 %v882
      %1712 = vmatpush.msra.mxu0 %v874
      %1713 = vmatpush.msra.mxu0 %v866
      %1714 = vmatpush.msra.mxu0 %v858
      %1715 = vmatmul.f32.gmra.mxu0 %v212
      %v1716 = vpop.f32.mrf.mxu0
      %v1717 = vadd.f32 %v1697, %v1716
      %1718 = vdwg.mxu0
      %1719 = vmatpush.msra.mxu0 %v339
      %1720 = vmatpush.msra.mxu0 %v331
      %1721 = vmatpush.msra.mxu0 %v323
      %1722 = vmatpush.msra.mxu0 %v315
      %1723 = vmatpush.msra.mxu0 %v307
      %1724 = vmatpush.msra.mxu0 %v299
      %1725 = vmatpush.msra.mxu0 %v291
      %1726 = vmatpush.msra.mxu0 %v283
      %1727 = vmatpush.msra.mxu0 %v275
      %1728 = vmatpush.msra.mxu0 %v267
      %1729 = vmatpush.msra.mxu0 %v259
      %1730 = vmatpush.msra.mxu0 %v251
      %1731 = vmatpush.msra.mxu0 %v243
      %1732 = vmatpush.msra.mxu0 %v235
      %1733 = vmatpush.msra.mxu0 %v227
      %1734 = vmatpush.msra.mxu0 %v219
      %1735 = vmatmul.f32.gmra.mxu0 %v207
      %v1736 = vpop.f32.mrf.mxu0
      %v1737 = vadd.f32 %v989, %v1736
      %1738 = vdwg.mxu0
      %1739 = vmatpush.msra.mxu0 %v467
      %1740 = vmatpush.msra.mxu0 %v459
      %1741 = vmatpush.msra.mxu0 %v451
      %1742 = vmatpush.msra.mxu0 %v443
      %1743 = vmatpush.msra.mxu0 %v435
      %1744 = vmatpush.msra.mxu0 %v427
      %1745 = vmatpush.msra.mxu0 %v419
      %1746 = vmatpush.msra.mxu0 %v411
      %1747 = vmatpush.msra.mxu0 %v403
      %1748 = vmatpush.msra.mxu0 %v395
      %1749 = vmatpush.msra.mxu0 %v387
      %1750 = vmatpush.msra.mxu0 %v379
      %1751 = vmatpush.msra.mxu0 %v371
      %1752 = vmatpush.msra.mxu0 %v363
      %1753 = vmatpush.msra.mxu0 %v355
      %1754 = vmatpush.msra.mxu0 %v347
      %1755 = vmatmul.f32.gmra.mxu0 %v208
      %v1756 = vpop.f32.mrf.mxu0
      %v1757 = vadd.f32 %v1737, %v1756
      %1758 = vdwg.mxu0
      %1759 = vmatpush.msra.mxu0 %v595
      %1760 = vmatpush.msra.mxu0 %v587
      %1761 = vmatpush.msra.mxu0 %v579
      %1762 = vmatpush.msra.mxu0 %v571
      %1763 = vmatpush.msra.mxu0 %v563
      %1764 = vmatpush.msra.mxu0 %v555
      %1765 = vmatpush.msra.mxu0 %v547
      %1766 = vmatpush.msra.mxu0 %v539
      %1767 = vmatpush.msra.mxu0 %v531
      %1768 = vmatpush.msra.mxu0 %v523
      %1769 = vmatpush.msra.mxu0 %v515
      %1770 = vmatpush.msra.mxu0 %v507
      %1771 = vmatpush.msra.mxu0 %v499
      %1772 = vmatpush.msra.mxu0 %v491
      %1773 = vmatpush.msra.mxu0 %v483
      %1774 = vmatpush.msra.mxu0 %v475
      %1775 = vmatmul.f32.gmra.mxu0 %v209
      %v1776 = vpop.f32.mrf.mxu0
      %v1777 = vadd.f32 %v1757, %v1776
      %1778 = vdwg.mxu0
      %1779 = vmatpush.msra.mxu0 %v723
      %1780 = vmatpush.msra.mxu0 %v715
      %1781 = vmatpush.msra.mxu0 %v707
      %1782 = vmatpush.msra.mxu0 %v699
      %1783 = vmatpush.msra.mxu0 %v691
      %1784 = vmatpush.msra.mxu0 %v683
      %1785 = vmatpush.msra.mxu0 %v675
      %1786 = vmatpush.msra.mxu0 %v667
      %1787 = vmatpush.msra.mxu0 %v659
      %1788 = vmatpush.msra.mxu0 %v651
      %1789 = vmatpush.msra.mxu0 %v643
      %1790 = vmatpush.msra.mxu0 %v635
      %1791 = vmatpush.msra.mxu0 %v627
      %1792 = vmatpush.msra.mxu0 %v619
      %1793 = vmatpush.msra.mxu0 %v611
      %1794 = vmatpush.msra.mxu0 %v603
      %1795 = vmatmul.f32.gmra.mxu0 %v210
      %v1796 = vpop.f32.mrf.mxu0
      %v1797 = vadd.f32 %v1777, %v1796
      %1798 = vdwg.mxu0
      %1799 = vmatpush.msra.mxu0 %v851
      %1800 = vmatpush.msra.mxu0 %v843
      %1801 = vmatpush.msra.mxu0 %v835
      %1802 = vmatpush.msra.mxu0 %v827
      %1803 = vmatpush.msra.mxu0 %v819
      %1804 = vmatpush.msra.mxu0 %v811
      %1805 = vmatpush.msra.mxu0 %v803
      %1806 = vmatpush.msra.mxu0 %v795
      %1807 = vmatpush.msra.mxu0 %v787
      %1808 = vmatpush.msra.mxu0 %v779
      %1809 = vmatpush.msra.mxu0 %v771
      %1810 = vmatpush.msra.mxu0 %v763
      %1811 = vmatpush.msra.mxu0 %v755
      %1812 = vmatpush.msra.mxu0 %v747
      %1813 = vmatpush.msra.mxu0 %v739
      %1814 = vmatpush.msra.mxu0 %v731
      %1815 = vmatmul.f32.gmra.mxu0 %v211
      %v1816 = vpop.f32.mrf.mxu0
      %v1817 = vadd.f32 %v1797, %v1816
      %1818 = vdwg.mxu0
      %1819 = vmatpush.msra.mxu0 %v979
      %1820 = vmatpush.msra.mxu0 %v971
      %1821 = vmatpush.msra.mxu0 %v963
      %1822 = vmatpush.msra.mxu0 %v955
      %1823 = vmatpush.msra.mxu0 %v947
      %1824 = vmatpush.msra.mxu0 %v939
      %1825 = vmatpush.msra.mxu0 %v931
      %1826 = vmatpush.msra.mxu0 %v923
      %1827 = vmatpush.msra.mxu0 %v915
      %1828 = vmatpush.msra.mxu0 %v907
      %1829 = vmatpush.msra.mxu0 %v899
      %1830 = vmatpush.msra.mxu0 %v891
      %1831 = vmatpush.msra.mxu0 %v883
      %1832 = vmatpush.msra.mxu0 %v875
      %1833 = vmatpush.msra.mxu0 %v867
      %1834 = vmatpush.msra.mxu0 %v859
      %1835 = vmatmul.f32.gmra.mxu0 %v212
      %v1836 = vpop.f32.mrf.mxu0
      %v1837 = vadd.f32 %v1817, %v1836
      %1838 = vdwg.mxu0
      %1839 = vmatpush.msra.mxu0 %v340
      %1840 = vmatpush.msra.mxu0 %v332
      %1841 = vmatpush.msra.mxu0 %v324
      %1842 = vmatpush.msra.mxu0 %v316
      %1843 = vmatpush.msra.mxu0 %v308
      %1844 = vmatpush.msra.mxu0 %v300
      %1845 = vmatpush.msra.mxu0 %v292
      %1846 = vmatpush.msra.mxu0 %v284
      %1847 = vmatpush.msra.mxu0 %v276
      %1848 = vmatpush.msra.mxu0 %v268
      %1849 = vmatpush.msra.mxu0 %v260
      %1850 = vmatpush.msra.mxu0 %v252
      %1851 = vmatpush.msra.mxu0 %v244
      %1852 = vmatpush.msra.mxu0 %v236
      %1853 = vmatpush.msra.mxu0 %v228
      %1854 = vmatpush.msra.mxu0 %v220
      %1855 = vmatmul.f32.gmra.mxu0 %v207
      %v1856 = vpop.f32.mrf.mxu0
      %v1857 = vadd.f32 %v990, %v1856
      %1858 = vdwg.mxu0
      %1859 = vmatpush.msra.mxu0 %v468
      %1860 = vmatpush.msra.mxu0 %v460
      %1861 = vmatpush.msra.mxu0 %v452
      %1862 = vmatpush.msra.mxu0 %v444
      %1863 = vmatpush.msra.mxu0 %v436
      %1864 = vmatpush.msra.mxu0 %v428
      %1865 = vmatpush.msra.mxu0 %v420
      %1866 = vmatpush.msra.mxu0 %v412
      %1867 = vmatpush.msra.mxu0 %v404
      %1868 = vmatpush.msra.mxu0 %v396
      %1869 = vmatpush.msra.mxu0 %v388
      %1870 = vmatpush.msra.mxu0 %v380
      %1871 = vmatpush.msra.mxu0 %v372
      %1872 = vmatpush.msra.mxu0 %v364
      %1873 = vmatpush.msra.mxu0 %v356
      %1874 = vmatpush.msra.mxu0 %v348
      %1875 = vmatmul.f32.gmra.mxu0 %v208
      %v1876 = vpop.f32.mrf.mxu0
      %v1877 = vadd.f32 %v1857, %v1876
      %1878 = vdwg.mxu0
      %1879 = vmatpush.msra.mxu0 %v596
      %1880 = vmatpush.msra.mxu0 %v588
      %1881 = vmatpush.msra.mxu0 %v580
      %1882 = vmatpush.msra.mxu0 %v572
      %1883 = vmatpush.msra.mxu0 %v564
      %1884 = vmatpush.msra.mxu0 %v556
      %1885 = vmatpush.msra.mxu0 %v548
      %1886 = vmatpush.msra.mxu0 %v540
      %1887 = vmatpush.msra.mxu0 %v532
      %1888 = vmatpush.msra.mxu0 %v524
      %1889 = vmatpush.msra.mxu0 %v516
      %1890 = vmatpush.msra.mxu0 %v508
      %1891 = vmatpush.msra.mxu0 %v500
      %1892 = vmatpush.msra.mxu0 %v492
      %1893 = vmatpush.msra.mxu0 %v484
      %1894 = vmatpush.msra.mxu0 %v476
      %1895 = vmatmul.f32.gmra.mxu0 %v209
      %v1896 = vpop.f32.mrf.mxu0
      %v1897 = vadd.f32 %v1877, %v1896
      %1898 = vdwg.mxu0
      %1899 = vmatpush.msra.mxu0 %v724
      %1900 = vmatpush.msra.mxu0 %v716
      %1901 = vmatpush.msra.mxu0 %v708
      %1902 = vmatpush.msra.mxu0 %v700
      %1903 = vmatpush.msra.mxu0 %v692
      %1904 = vmatpush.msra.mxu0 %v684
      %1905 = vmatpush.msra.mxu0 %v676
      %1906 = vmatpush.msra.mxu0 %v668
      %1907 = vmatpush.msra.mxu0 %v660
      %1908 = vmatpush.msra.mxu0 %v652
      %1909 = vmatpush.msra.mxu0 %v644
      %1910 = vmatpush.msra.mxu0 %v636
      %1911 = vmatpush.msra.mxu0 %v628
      %1912 = vmatpush.msra.mxu0 %v620
      %1913 = vmatpush.msra.mxu0 %v612
      %1914 = vmatpush.msra.mxu0 %v604
      %1915 = vmatmul.f32.gmra.mxu0 %v210
      %v1916 = vpop.f32.mrf.mxu0
      %v1917 = vadd.f32 %v1897, %v1916
      %1918 = vdwg.mxu0
      %1919 = vmatpush.msra.mxu0 %v852
      %1920 = vmatpush.msra.mxu0 %v844
      %1921 = vmatpush.msra.mxu0 %v836
      %1922 = vmatpush.msra.mxu0 %v828
      %1923 = vmatpush.msra.mxu0 %v820
      %1924 = vmatpush.msra.mxu0 %v812
      %1925 = vmatpush.msra.mxu0 %v804
      %1926 = vmatpush.msra.mxu0 %v796
      %1927 = vmatpush.msra.mxu0 %v788
      %1928 = vmatpush.msra.mxu0 %v780
      %1929 = vmatpush.msra.mxu0 %v772
      %1930 = vmatpush.msra.mxu0 %v764
      %1931 = vmatpush.msra.mxu0 %v756
      %1932 = vmatpush.msra.mxu0 %v748
      %1933 = vmatpush.msra.mxu0 %v740
      %1934 = vmatpush.msra.mxu0 %v732
      %1935 = vmatmul.f32.gmra.mxu0 %v211
      %v1936 = vpop.f32.mrf.mxu0
      %v1937 = vadd.f32 %v1917, %v1936
      %1938 = vdwg.mxu0
      %1939 = vmatpush.msra.mxu0 %v980
      %1940 = vmatpush.msra.mxu0 %v972
      %1941 = vmatpush.msra.mxu0 %v964
      %1942 = vmatpush.msra.mxu0 %v956
      %1943 = vmatpush.msra.mxu0 %v948
      %1944 = vmatpush.msra.mxu0 %v940
      %1945 = vmatpush.msra.mxu0 %v932
      %1946 = vmatpush.msra.mxu0 %v924
      %1947 = vmatpush.msra.mxu0 %v916
      %1948 = vmatpush.msra.mxu0 %v908
      %1949 = vmatpush.msra.mxu0 %v900
      %1950 = vmatpush.msra.mxu0 %v892
      %1951 = vmatpush.msra.mxu0 %v884
      %1952 = vmatpush.msra.mxu0 %v876
      %1953 = vmatpush.msra.mxu0 %v868
      %1954 = vmatpush.msra.mxu0 %v860
      %1955 = vmatmul.f32.gmra.mxu0 %v212
      %v1956 = vpop.f32.mrf.mxu0
      %v1957 = vadd.f32 %v1937, %v1956
      %1958 = vdwg.mxu0
      %1959 = vst [vmem:[%s206] sm:$0xff] %v1117
      %1960 = vst [vmem:[%s206 + $0x8] sm:$0xff] %v1237
      %1961 = vst [vmem:[%s206 + $0x10] sm:$0xff] %v1357
      %1962 = vst [vmem:[%s206 + $0x18] sm:$0xff] %v1477
      %1963 = vst [vmem:[%s206 + $0x20] sm:$0xff] %v1597
      %1964 = vst [vmem:[%s206 + $0x28] sm:$0xff] %v1717
      %1965 = vst [vmem:[%s206 + $0x30] sm:$0xff] %v1837
      %1966 = vst [vmem:[%s206 + $0x38] sm:$0xff] %v1957
      %p1967 = scmp.lt.s32.totalorder %s18, 1
      %s1968 = scalar_select %p1967, %s18, 1
      %p1969 = scmp.lt.s32.totalorder %s19, 0
      %s1970 = scalar_select %p1969, %s19, 0
      %s1971 = smul.addr %s1970, 8
      %s1972 = smul.addr %s1968, 8
      %s1973 = sadd.s32 %s1971, %s1972
      %s1974 = smul.addr %s1973, 8
      %s1975 = scalar_lea.vmem %s3, %s1974
      // Predicated region
      $region33: #{bert_lstm_cnn_forward.2} parent=31 // pred_check
        %p1976 = pneg %p116
      $region34: #{bert_lstm_cnn_forward.2} parent=31 // pred_check_branch
        %1978 = sbr.rel (%p1976) target = $region36
      $region35: #{bert_lstm_cnn_forward.2} parent=31 // pred_region
        _
      $region36: #{bert_lstm_cnn_forward.2} parent=31 // pred_fallthru
        _
    $region32: #{bert_lstm_cnn_forward.2} parent=5 // pred_fallthru
      _
    %p1979 = scmp.le.s32.totalorder 2, %s9
    // Predicated region
    $region37: #{bert_lstm_cnn_forward.2} parent=5 // pred_check
      %p1980 = pneg %p1979
    $region38: #{bert_lstm_cnn_forward.2} parent=5 // pred_check_branch
      %1982 = sbr.rel (%p1980) target = $region40
    $region39: #{bert_lstm_cnn_forward.2} parent=5 // pred_region
      %s1983 = ssub.s32 %s9, 2
      // Predicated region
      $region41: #{bert_lstm_cnn_forward.2} parent=39 // pred_check
        %p1984 = pneg %p122
      $region42: #{bert_lstm_cnn_forward.2} parent=39 // pred_check_branch
        %1986 = sbr.rel (%p1984) target = $region44
      $region43: #{bert_lstm_cnn_forward.2} parent=39 // pred_region
        %p1987 = scmp.lt.s32.totalorder %s20, 1
        %s1988 = scalar_select %p1987, %s20, 1
        %p1989 = scmp.lt.s32.totalorder %s21, 0
        %s1990 = scalar_select %p1989, %s21, 0
        %s1991 = smul.addr %s1990, 8
        %s1992 = smul.addr %s1988, 8
        %s1993 = sadd.s32 %s1991, %s1992
        %s1994 = smul.addr %s1993, 8
        %s1995 = scalar_lea.vmem %s3, %s1994
      $region44: #{bert_lstm_cnn_forward.2} parent=39 // pred_fallthru
        _
    $region40: #{bert_lstm_cnn_forward.2} parent=5 // pred_fallthru
      _
  $region6: #{bert_lstm_cnn_forward.2} parent=0 // loop_footer
    %s13 = sadd.s32 1, %s9
  $region7: #{bert_lstm_cnn_forward.2} parent=0 // loop_footer_branch
    %8 = sbr.rel target = $region3
  $region8: #{bert_lstm_cnn_forward.2} parent=0 // loop_exit
    _

// kernel: bert_lstm_cnn_forward.3
$region0: #{bert_lstm_cnn_forward.3}
  #allocation0 [shape = 'u32[]', space=smem, size = 0x4, offset = 0x4, fixed_abs, tag = 'smem constant byte address 0x4 - core index']
  #allocation1 [shape = 'u32[72,128]{1,0:T(1,128)}', space=vmem, size = 0x9000, scoped, tag = 'internal scratch']
  #allocation2 [shape = 'f32[2,256]{1,0:T(2,128)}', space=vmem, size = 0x800, scoped, tag = 'scratch operand']
  #allocation3 [shape = 'f32[2,128]{1,0:T(2,128)}', space=vmem, size = 0x400, scoped, tag = 'scratch operand']
  #allocation4 [shape = 'f32[2,128]{1,0:T(2,128)}', space=vmem, size = 0x400, scoped, tag = 'scratch operand']
  #allocation5 [shape = 'f32[2,256]{1,0:T(2,128)}', space=vmem, size = 0x800, scoped, tag = 'scratch operand']
  #allocation6 [shape = 'f32[2,256]{1,0:T(2,128)}', space=vmem, size = 0x800, scoped, tag = 'scratch operand']
  %s0 = inlined_call_operand.vmem [shape: f32[2,8,1024], index: 0, kind: input, shape index: {}, may-alias: {0,1}]
  %s1 = inlined_call_operand.vmem [shape: f32[2,8,1024], index: 1, kind: input, shape index: {}, may-alias: {0,1}]
  %s2 = inlined_call_operand.vmem [shape: f32[256,1024], index: 2, kind: input, shape index: {}]
  %s3 = inlined_call_operand.vmem [shape: f32[3,2,256], index: 3, kind: output, shape index: {}]
  %s4 = sld [smem:[#allocation0]]
  $region76: #{bert_lstm_cnn_forward.3} parent=0
    _
  %s6 = ssub.s32 1, %s4
  %s7 = scalar_select 0, %s6, %s4
  $region1: #{bert_lstm_cnn_forward.3} parent=0
    #allocation7 [shape = 'u8[32768]{0}', space=vmem, size = 0x8000, scoped, tag = 'input window, operand 0, single buffered']
    #allocation8 [shape = 'u8[32768]{0}', space=vmem, size = 0x8000, scoped, tag = 'input window, operand 1, single buffered']
    // Predicated region
    $region2: #{bert_lstm_cnn_forward.3} parent=1 // pred_check
      _
    $region3: #{bert_lstm_cnn_forward.3} parent=1 // pred_check_branch
      %9 = sbr.rel (0) target = $region5
    $region4: #{bert_lstm_cnn_forward.3} parent=1 // pred_region
      // Predicated region
      $region6: #{bert_lstm_cnn_forward.3} parent=4 // pred_check
        _
      $region7: #{bert_lstm_cnn_forward.3} parent=4 // pred_check_branch
        %11 = sbr.rel (0) target = $region9
      $region8: #{bert_lstm_cnn_forward.3} parent=4 // pred_region
        // Predicated region
        $region10: #{bert_lstm_cnn_forward.3} parent=8 // pred_check
          _
        $region11: #{bert_lstm_cnn_forward.3} parent=8 // pred_check_branch
          %13 = sbr.rel (0) target = $region13
        $region12: #{bert_lstm_cnn_forward.3} parent=8 // pred_region
          loop: start=0, step=1, limit=1
          $region14: #{bert_lstm_cnn_forward.3} parent=12 // loop_pre_header
            _
          $region15: #{bert_lstm_cnn_forward.3} parent=12 // loop_header
            %s15 = sphi 0, %s19
            %p16 = scmp.ge.s32.totalorder %s15, 1
            %s20 = sphi %s0, %s0
            %s21 = sphi [#allocation7], [#allocation7]
          $region16: #{bert_lstm_cnn_forward.3} parent=12 // loop_header_branch
            %18 = sbr.rel (%p16) target = $region20
          $region17: #{bert_lstm_cnn_forward.3} parent=12 // loop_body
            %v22 = vld [vmem:[%s20] sm:$0xff]
            %23 = vst [vmem:[%s21] sm:$0xff] %v22
            %v24 = vld [vmem:[%s20 + $0x8] sm:$0xff]
            %25 = vst [vmem:[%s21 + $0x8] sm:$0xff] %v24
            %v26 = vld [vmem:[%s20 + $0x10] sm:$0xff]
            %27 = vst [vmem:[%s21 + $0x10] sm:$0xff] %v26
            %v28 = vld [vmem:[%s20 + $0x18] sm:$0xff]
            %29 = vst [vmem:[%s21 + $0x18] sm:$0xff] %v28
            %v30 = vld [vmem:[%s20 + $0x40] sm:$0xff]
            %31 = vst [vmem:[%s21 + $0x20] sm:$0xff] %v30
            %v32 = vld [vmem:[%s20 + $0x48] sm:$0xff]
            %33 = vst [vmem:[%s21 + $0x28] sm:$0xff] %v32
            %v34 = vld [vmem:[%s20 + $0x50] sm:$0xff]
            %35 = vst [vmem:[%s21 + $0x30] sm:$0xff] %v34
            %v36 = vld [vmem:[%s20 + $0x58] sm:$0xff]
            %37 = vst [vmem:[%s21 + $0x38] sm:$0xff] %v36
          $region18: #{bert_lstm_cnn_forward.3} parent=12 // loop_footer
            %s19 = sadd.s32 1, %s15
          $region19: #{bert_lstm_cnn_forward.3} parent=12 // loop_footer_branch
            %14 = sbr.rel target = $region15
          $region20: #{bert_lstm_cnn_forward.3} parent=12 // loop_exit
            _
        $region13: #{bert_lstm_cnn_forward.3} parent=8 // pred_fallthru
          _
        // Predicated region
        $region21: #{bert_lstm_cnn_forward.3} parent=8 // pred_check
          _
        $region22: #{bert_lstm_cnn_forward.3} parent=8 // pred_check_branch
          %39 = sbr.rel target = $region24
        $region23: #{bert_lstm_cnn_forward.3} parent=8 // pred_region
          _
        $region24: #{bert_lstm_cnn_forward.3} parent=8 // pred_fallthru
          _
      $region9: #{bert_lstm_cnn_forward.3} parent=4 // pred_fallthru
        _
      %40 = vnop
    $region5: #{bert_lstm_cnn_forward.3} parent=1 // pred_fallthru
      _
    // Predicated region
    $region25: #{bert_lstm_cnn_forward.3} parent=1 // pred_check
      _
    $region26: #{bert_lstm_cnn_forward.3} parent=1 // pred_check_branch
      %42 = sbr.rel (0) target = $region28
    $region27: #{bert_lstm_cnn_forward.3} parent=1 // pred_region
      %s43 = ssub.s32 0, 0
      %s44 = smul.addr %s43, 8
      %s45 = sadd.s32 4, %s44
      %s46 = smul.addr %s45, 8
      %s47 = scalar_lea.vmem %s1, %s46
      // Predicated region
      $region29: #{bert_lstm_cnn_forward.3} parent=27 // pred_check
        _
      $region30: #{bert_lstm_cnn_forward.3} parent=27 // pred_check_branch
        %49 = sbr.rel (0) target = $region32
      $region31: #{bert_lstm_cnn_forward.3} parent=27 // pred_region
        // Predicated region
        $region33: #{bert_lstm_cnn_forward.3} parent=31 // pred_check
          _
        $region34: #{bert_lstm_cnn_forward.3} parent=31 // pred_check_branch
          %51 = sbr.rel (0) target = $region36
        $region35: #{bert_lstm_cnn_forward.3} parent=31 // pred_region
          loop: start=0, step=1, limit=1
          $region37: #{bert_lstm_cnn_forward.3} parent=35 // loop_pre_header
            _
          $region38: #{bert_lstm_cnn_forward.3} parent=35 // loop_header
            %s53 = sphi 0, %s57
            %p54 = scmp.ge.s32.totalorder %s53, 1
            %s58 = sphi %s47, %s47
            %s59 = sphi [#allocation8], [#allocation8]
          $region39: #{bert_lstm_cnn_forward.3} parent=35 // loop_header_branch
            %56 = sbr.rel (%p54) target = $region43
          $region40: #{bert_lstm_cnn_forward.3} parent=35 // loop_body
            %v60 = vld [vmem:[%s58] sm:$0xff]
            %61 = vst [vmem:[%s59] sm:$0xff] %v60
            %v62 = vld [vmem:[%s58 + $0x8] sm:$0xff]
            %63 = vst [vmem:[%s59 + $0x8] sm:$0xff] %v62
            %v64 = vld [vmem:[%s58 + $0x10] sm:$0xff]
            %65 = vst [vmem:[%s59 + $0x10] sm:$0xff] %v64
            %v66 = vld [vmem:[%s58 + $0x18] sm:$0xff]
            %67 = vst [vmem:[%s59 + $0x18] sm:$0xff] %v66
            %v68 = vld [vmem:[%s58 + $0x40] sm:$0xff]
            %69 = vst [vmem:[%s59 + $0x20] sm:$0xff] %v68
            %v70 = vld [vmem:[%s58 + $0x48] sm:$0xff]
            %71 = vst [vmem:[%s59 + $0x28] sm:$0xff] %v70
            %v72 = vld [vmem:[%s58 + $0x50] sm:$0xff]
            %73 = vst [vmem:[%s59 + $0x30] sm:$0xff] %v72
            %v74 = vld [vmem:[%s58 + $0x58] sm:$0xff]
            %75 = vst [vmem:[%s59 + $0x38] sm:$0xff] %v74
          $region41: #{bert_lstm_cnn_forward.3} parent=35 // loop_footer
            %s57 = sadd.s32 1, %s53
          $region42: #{bert_lstm_cnn_forward.3} parent=35 // loop_footer_branch
            %52 = sbr.rel target = $region38
          $region43: #{bert_lstm_cnn_forward.3} parent=35 // loop_exit
            _
        $region36: #{bert_lstm_cnn_forward.3} parent=31 // pred_fallthru
          _
        // Predicated region
        $region44: #{bert_lstm_cnn_forward.3} parent=31 // pred_check
          _
        $region45: #{bert_lstm_cnn_forward.3} parent=31 // pred_check_branch
          %77 = sbr.rel target = $region47
        $region46: #{bert_lstm_cnn_forward.3} parent=31 // pred_region
          _
        $region47: #{bert_lstm_cnn_forward.3} parent=31 // pred_fallthru
          _
      $region32: #{bert_lstm_cnn_forward.3} parent=27 // pred_fallthru
        _
      %78 = vnop
    $region28: #{bert_lstm_cnn_forward.3} parent=1 // pred_fallthru
      _
    // Predicated region
    $region48: #{bert_lstm_cnn_forward.3} parent=1 // pred_check
      _
    $region49: #{bert_lstm_cnn_forward.3} parent=1 // pred_check_branch
      %80 = sbr.rel (0) target = $region51
    $region50: #{bert_lstm_cnn_forward.3} parent=1 // pred_region
      _
    $region51: #{bert_lstm_cnn_forward.3} parent=1 // pred_fallthru
      _
    // Predicated region
    $region52: #{bert_lstm_cnn_forward.3} parent=1 // pred_check
      _
    $region53: #{bert_lstm_cnn_forward.3} parent=1 // pred_check_branch
      %82 = sbr.rel (0) target = $region55
    $region54: #{bert_lstm_cnn_forward.3} parent=1 // pred_region
      _
    $region55: #{bert_lstm_cnn_forward.3} parent=1 // pred_fallthru
      _
    // Predicated region
    $region56: #{bert_lstm_cnn_forward.3} parent=1 // pred_check
      _
    $region57: #{bert_lstm_cnn_forward.3} parent=1 // pred_check_branch
      %84 = sbr.rel (0) target = $region59
    $region58: #{bert_lstm_cnn_forward.3} parent=1 // pred_region
      _
    $region59: #{bert_lstm_cnn_forward.3} parent=1 // pred_fallthru
      _
    %s85 = ssub.s32 0, 0
    %p86 = scmp.eq.s32.totalorder 0, 0
    // Predicated region
    $region60: #{bert_lstm_cnn_forward.3} parent=1 // pred_check
      %p87 = pneg %p86
    $region61: #{bert_lstm_cnn_forward.3} parent=1 // pred_check_branch
      %89 = sbr.rel (%p87) target = $region63
    $region62: #{bert_lstm_cnn_forward.3} parent=1 // pred_region
      %90 = vst [vmem:[#allocation2] sm:$0xf] 0.0
      %91 = vst [vmem:[#allocation3] sm:$0x3] 0.0
      %92 = vst [vmem:[#allocation4] sm:$0x3] 0.0
      %93 = vst [vmem:[#allocation5] sm:$0xf] 0.0
    $region63: #{bert_lstm_cnn_forward.3} parent=1 // pred_fallthru
      _
    %v94 = vld [vmem:[%s2] sm:$0xff]
    %v95 = vld [vmem:[%s2 + $0x8] sm:$0xff]
    %v96 = vld [vmem:[%s2 + $0x10] sm:$0xff]
    %v97 = vld [vmem:[%s2 + $0x18] sm:$0xff]
    %v98 = vld [vmem:[%s2 + $0x20] sm:$0xff]
    %v99 = vld [vmem:[%s2 + $0x28] sm:$0xff]
    %v100 = vld [vmem:[%s2 + $0x30] sm:$0xff]
    %v101 = vld [vmem:[%s2 + $0x38] sm:$0xff]
    %v102 = vld [vmem:[%s2 + $0x40] sm:$0xff]
    %v103 = vld [vmem:[%s2 + $0x48] sm:$0xff]
    %v104 = vld [vmem:[%s2 + $0x50] sm:$0xff]
    %v105 = vld [vmem:[%s2 + $0x58] sm:$0xff]
    %v106 = vld [vmem:[%s2 + $0x60] sm:$0xff]
    %v107 = vld [vmem:[%s2 + $0x68] sm:$0xff]
    %v108 = vld [vmem:[%s2 + $0x70] sm:$0xff]
    %v109 = vld [vmem:[%s2 + $0x78] sm:$0xff]
    %v110 = vld [vmem:[%s2 + $0x80] sm:$0xff]
    %v111 = vld [vmem:[%s2 + $0x88] sm:$0xff]
    %v112 = vld [vmem:[%s2 + $0x90] sm:$0xff]
    %v113 = vld [vmem:[%s2 + $0x98] sm:$0xff]
    %v114 = vld [vmem:[%s2 + $0xa0] sm:$0xff]
    %v115 = vld [vmem:[%s2 + $0xa8] sm:$0xff]
    %v116 = vld [vmem:[%s2 + $0xb0] sm:$0xff]
    %v117 = vld [vmem:[%s2 + $0xb8] sm:$0xff]
    %v118 = vld [vmem:[%s2 + $0xc0] sm:$0xff]
    %v119 = vld [vmem:[%s2 + $0xc8] sm:$0xff]
    %v120 = vld [vmem:[%s2 + $0xd0] sm:$0xff]
    %v121 = vld [vmem:[%s2 + $0xd8] sm:$0xff]
    %v122 = vld [vmem:[%s2 + $0xe0] sm:$0xff]
    %v123 = vld [vmem:[%s2 + $0xe8] sm:$0xff]
    %v124 = vld [vmem:[%s2 + $0xf0] sm:$0xff]
    %v125 = vld [vmem:[%s2 + $0xf8] sm:$0xff]
    %v126 = vld [vmem:[%s2 + $0x100] sm:$0xff]
    %v127 = vld [vmem:[%s2 + $0x108] sm:$0xff]
    %v128 = vld [vmem:[%s2 + $0x110] sm:$0xff]
    %v129 = vld [vmem:[%s2 + $0x118] sm:$0xff]
    %v130 = vld [vmem:[%s2 + $0x120] sm:$0xff]
    %v131 = vld [vmem:[%s2 + $0x128] sm:$0xff]
    %v132 = vld [vmem:[%s2 + $0x130] sm:$0xff]
    %v133 = vld [vmem:[%s2 + $0x138] sm:$0xff]
    %v134 = vld [vmem:[%s2 + $0x140] sm:$0xff]
    %v135 = vld [vmem:[%s2 + $0x148] sm:$0xff]
    %v136 = vld [vmem:[%s2 + $0x150] sm:$0xff]
    %v137 = vld [vmem:[%s2 + $0x158] sm:$0xff]
    %v138 = vld [vmem:[%s2 + $0x160] sm:$0xff]
    %v139 = vld [vmem:[%s2 + $0x168] sm:$0xff]
    %v140 = vld [vmem:[%s2 + $0x170] sm:$0xff]
    %v141 = vld [vmem:[%s2 + $0x178] sm:$0xff]
    %v142 = vld [vmem:[%s2 + $0x180] sm:$0xff]
    %v143 = vld [vmem:[%s2 + $0x188] sm:$0xff]
    %v144 = vld [vmem:[%s2 + $0x190] sm:$0xff]
    %v145 = vld [vmem:[%s2 + $0x198] sm:$0xff]
    %v146 = vld [vmem:[%s2 + $0x1a0] sm:$0xff]
    %v147 = vld [vmem:[%s2 + $0x1a8] sm:$0xff]
    %v148 = vld [vmem:[%s2 + $0x1b0] sm:$0xff]
    %v149 = vld [vmem:[%s2 + $0x1b8] sm:$0xff]
    %v150 = vld [vmem:[%s2 + $0x1c0] sm:$0xff]
    %v151 = vld [vmem:[%s2 + $0x1c8] sm:$0xff]
    %v152 = vld [vmem:[%s2 + $0x1d0] sm:$0xff]
    %v153 = vld [vmem:[%s2 + $0x1d8] sm:$0xff]
    %v154 = vld [vmem:[%s2 + $0x1e0] sm:$0xff]
    %v155 = vld [vmem:[%s2 + $0x1e8] sm:$0xff]
    %v156 = vld [vmem:[%s2 + $0x1f0] sm:$0xff]
    %v157 = vld [vmem:[%s2 + $0x1f8] sm:$0xff]
    %v158 = vld [vmem:[%s2 + $0x200] sm:$0xff]
    %v159 = vld [vmem:[%s2 + $0x208] sm:$0xff]
    %v160 = vld [vmem:[%s2 + $0x210] sm:$0xff]
    %v161 = vld [vmem:[%s2 + $0x218] sm:$0xff]
    %v162 = vld [vmem:[%s2 + $0x220] sm:$0xff]
    %v163 = vld [vmem:[%s2 + $0x228] sm:$0xff]
    %v164 = vld [vmem:[%s2 + $0x230] sm:$0xff]
    %v165 = vld [vmem:[%s2 + $0x238] sm:$0xff]
    %v166 = vld [vmem:[%s2 + $0x240] sm:$0xff]
    %v167 = vld [vmem:[%s2 + $0x248] sm:$0xff]
    %v168 = vld [vmem:[%s2 + $0x250] sm:$0xff]
    %v169 = vld [vmem:[%s2 + $0x258] sm:$0xff]
    %v170 = vld [vmem:[%s2 + $0x260] sm:$0xff]
    %v171 = vld [vmem:[%s2 + $0x268] sm:$0xff]
    %v172 = vld [vmem:[%s2 + $0x270] sm:$0xff]
    %v173 = vld [vmem:[%s2 + $0x278] sm:$0xff]
    %v174 = vld [vmem:[%s2 + $0x280] sm:$0xff]
    %v175 = vld [vmem:[%s2 + $0x288] sm:$0xff]
    %v176 = vld [vmem:[%s2 + $0x290] sm:$0xff]
    %v177 = vld [vmem:[%s2 + $0x298] sm:$0xff]
    %v178 = vld [vmem:[%s2 + $0x2a0] sm:$0xff]
    %v179 = vld [vmem:[%s2 + $0x2a8] sm:$0xff]
    %v180 = vld [vmem:[%s2 + $0x2b0] sm:$0xff]
    %v181 = vld [vmem:[%s2 + $0x2b8] sm:$0xff]
    %v182 = vld [vmem:[%s2 + $0x2c0] sm:$0xff]
    %v183 = vld [vmem:[%s2 + $0x2c8] sm:$0xff]
    %v184 = vld [vmem:[%s2 + $0x2d0] sm:$0xff]
    %v185 = vld [vmem:[%s2 + $0x2d8] sm:$0xff]
    %v186 = vld [vmem:[%s2 + $0x2e0] sm:$0xff]
    %v187 = vld [vmem:[%s2 + $0x2e8] sm:$0xff]
    %v188 = vld [vmem:[%s2 + $0x2f0] sm:$0xff]
    %v189 = vld [vmem:[%s2 + $0x2f8] sm:$0xff]
    %v190 = vld [vmem:[%s2 + $0x300] sm:$0xff]
    %v191 = vld [vmem:[%s2 + $0x308] sm:$0xff]
    %v192 = vld [vmem:[%s2 + $0x310] sm:$0xff]
    %v193 = vld [vmem:[%s2 + $0x318] sm:$0xff]
    %v194 = vld [vmem:[%s2 + $0x320] sm:$0xff]
    %v195 = vld [vmem:[%s2 + $0x328] sm:$0xff]
    %v196 = vld [vmem:[%s2 + $0x330] sm:$0xff]
    %v197 = vld [vmem:[%s2 + $0x338] sm:$0xff]
    %v198 = vld [vmem:[%s2 + $0x340] sm:$0xff]
    %v199 = vld [vmem:[%s2 + $0x348] sm:$0xff]
    %v200 = vld [vmem:[%s2 + $0x350] sm:$0xff]
    %v201 = vld [vmem:[%s2 + $0x358] sm:$0xff]
    %v202 = vld [vmem:[%s2 + $0x360] sm:$0xff]
    %v203 = vld [vmem:[%s2 + $0x368] sm:$0xff]
    %v204 = vld [vmem:[%s2 + $0x370] sm:$0xff]
    %v205 = vld [vmem:[%s2 + $0x378] sm:$0xff]
    %v206 = vld [vmem:[%s2 + $0x380] sm:$0xff]
    %v207 = vld [vmem:[%s2 + $0x388] sm:$0xff]
    %v208 = vld [vmem:[%s2 + $0x390] sm:$0xff]
    %v209 = vld [vmem:[%s2 + $0x398] sm:$0xff]
    %v210 = vld [vmem:[%s2 + $0x3a0] sm:$0xff]
    %v211 = vld [vmem:[%s2 + $0x3a8] sm:$0xff]
    %v212 = vld [vmem:[%s2 + $0x3b0] sm:$0xff]
    %v213 = vld [vmem:[%s2 + $0x3b8] sm:$0xff]
    %v214 = vld [vmem:[%s2 + $0x3c0] sm:$0xff]
    %v215 = vld [vmem:[%s2 + $0x3c8] sm:$0xff]
    %v216 = vld [vmem:[%s2 + $0x3d0] sm:$0xff]
    %v217 = vld [vmem:[%s2 + $0x3d8] sm:$0xff]
    %v218 = vld [vmem:[%s2 + $0x3e0] sm:$0xff]
    %v219 = vld [vmem:[%s2 + $0x3e8] sm:$0xff]
    %v220 = vld [vmem:[%s2 + $0x3f0] sm:$0xff]
    %v221 = vld [vmem:[%s2 + $0x3f8] sm:$0xff]
    %v222 = vld [vmem:[%s2 + $0x400] sm:$0xff]
    %v223 = vld [vmem:[%s2 + $0x408] sm:$0xff]
    %v224 = vld [vmem:[%s2 + $0x410] sm:$0xff]
    %v225 = vld [vmem:[%s2 + $0x418] sm:$0xff]
    %v226 = vld [vmem:[%s2 + $0x420] sm:$0xff]
    %v227 = vld [vmem:[%s2 + $0x428] sm:$0xff]
    %v228 = vld [vmem:[%s2 + $0x430] sm:$0xff]
    %v229 = vld [vmem:[%s2 + $0x438] sm:$0xff]
    %v230 = vld [vmem:[%s2 + $0x440] sm:$0xff]
    %v231 = vld [vmem:[%s2 + $0x448] sm:$0xff]
    %v232 = vld [vmem:[%s2 + $0x450] sm:$0xff]
    %v233 = vld [vmem:[%s2 + $0x458] sm:$0xff]
    %v234 = vld [vmem:[%s2 + $0x460] sm:$0xff]
    %v235 = vld [vmem:[%s2 + $0x468] sm:$0xff]
    %v236 = vld [vmem:[%s2 + $0x470] sm:$0xff]
    %v237 = vld [vmem:[%s2 + $0x478] sm:$0xff]
    %v238 = vld [vmem:[%s2 + $0x480] sm:$0xff]
    %v239 = vld [vmem:[%s2 + $0x488] sm:$0xff]
    %v240 = vld [vmem:[%s2 + $0x490] sm:$0xff]
    %v241 = vld [vmem:[%s2 + $0x498] sm:$0xff]
    %v242 = vld [vmem:[%s2 + $0x4a0] sm:$0xff]
    %v243 = vld [vmem:[%s2 + $0x4a8] sm:$0xff]
    %v244 = vld [vmem:[%s2 + $0x4b0] sm:$0xff]
    %v245 = vld [vmem:[%s2 + $0x4b8] sm:$0xff]
    %v246 = vld [vmem:[%s2 + $0x4c0] sm:$0xff]
    %v247 = vld [vmem:[%s2 + $0x4c8] sm:$0xff]
    %v248 = vld [vmem:[%s2 + $0x4d0] sm:$0xff]
    %v249 = vld [vmem:[%s2 + $0x4d8] sm:$0xff]
    %v250 = vld [vmem:[%s2 + $0x4e0] sm:$0xff]
    %v251 = vld [vmem:[%s2 + $0x4e8] sm:$0xff]
    %v252 = vld [vmem:[%s2 + $0x4f0] sm:$0xff]
    %v253 = vld [vmem:[%s2 + $0x4f8] sm:$0xff]
    %v254 = vld [vmem:[%s2 + $0x500] sm:$0xff]
    %v255 = vld [vmem:[%s2 + $0x508] sm:$0xff]
    %v256 = vld [vmem:[%s2 + $0x510] sm:$0xff]
    %v257 = vld [vmem:[%s2 + $0x518] sm:$0xff]
    %v258 = vld [vmem:[%s2 + $0x520] sm:$0xff]
    %v259 = vld [vmem:[%s2 + $0x528] sm:$0xff]
    %v260 = vld [vmem:[%s2 + $0x530] sm:$0xff]
    %v261 = vld [vmem:[%s2 + $0x538] sm:$0xff]
    %v262 = vld [vmem:[%s2 + $0x540] sm:$0xff]
    %v263 = vld [vmem:[%s2 + $0x548] sm:$0xff]
    %v264 = vld [vmem:[%s2 + $0x550] sm:$0xff]
    %v265 = vld [vmem:[%s2 + $0x558] sm:$0xff]
    %v266 = vld [vmem:[%s2 + $0x560] sm:$0xff]
    %v267 = vld [vmem:[%s2 + $0x568] sm:$0xff]
    %v268 = vld [vmem:[%s2 + $0x570] sm:$0xff]
    %v269 = vld [vmem:[%s2 + $0x578] sm:$0xff]
    %v270 = vld [vmem:[%s2 + $0x580] sm:$0xff]
    %v271 = vld [vmem:[%s2 + $0x588] sm:$0xff]
    %v272 = vld [vmem:[%s2 + $0x590] sm:$0xff]
    %v273 = vld [vmem:[%s2 + $0x598] sm:$0xff]
    %v274 = vld [vmem:[%s2 + $0x5a0] sm:$0xff]
    %v275 = vld [vmem:[%s2 + $0x5a8] sm:$0xff]
    %v276 = vld [vmem:[%s2 + $0x5b0] sm:$0xff]
    %v277 = vld [vmem:[%s2 + $0x5b8] sm:$0xff]
    %v278 = vld [vmem:[%s2 + $0x5c0] sm:$0xff]
    %v279 = vld [vmem:[%s2 + $0x5c8] sm:$0xff]
    %v280 = vld [vmem:[%s2 + $0x5d0] sm:$0xff]
    %v281 = vld [vmem:[%s2 + $0x5d8] sm:$0xff]
    %v282 = vld [vmem:[%s2 + $0x5e0] sm:$0xff]
    %v283 = vld [vmem:[%s2 + $0x5e8] sm:$0xff]
    %v284 = vld [vmem:[%s2 + $0x5f0] sm:$0xff]
    %v285 = vld [vmem:[%s2 + $0x5f8] sm:$0xff]
    %v286 = vld [vmem:[%s2 + $0x600] sm:$0xff]
    %v287 = vld [vmem:[%s2 + $0x608] sm:$0xff]
    %v288 = vld [vmem:[%s2 + $0x610] sm:$0xff]
    %v289 = vld [vmem:[%s2 + $0x618] sm:$0xff]
    %v290 = vld [vmem:[%s2 + $0x620] sm:$0xff]
    %v291 = vld [vmem:[%s2 + $0x628] sm:$0xff]
    %v292 = vld [vmem:[%s2 + $0x630] sm:$0xff]
    %v293 = vld [vmem:[%s2 + $0x638] sm:$0xff]
    %v294 = vld [vmem:[%s2 + $0x640] sm:$0xff]
    %v295 = vld [vmem:[%s2 + $0x648] sm:$0xff]
    %v296 = vld [vmem:[%s2 + $0x650] sm:$0xff]
    %v297 = vld [vmem:[%s2 + $0x658] sm:$0xff]
    %v298 = vld [vmem:[%s2 + $0x660] sm:$0xff]
    %v299 = vld [vmem:[%s2 + $0x668] sm:$0xff]
    %v300 = vld [vmem:[%s2 + $0x670] sm:$0xff]
    %v301 = vld [vmem:[%s2 + $0x678] sm:$0xff]
    %v302 = vld [vmem:[%s2 + $0x680] sm:$0xff]
    %v303 = vld [vmem:[%s2 + $0x688] sm:$0xff]
    %v304 = vld [vmem:[%s2 + $0x690] sm:$0xff]
    %v305 = vld [vmem:[%s2 + $0x698] sm:$0xff]
    %v306 = vld [vmem:[%s2 + $0x6a0] sm:$0xff]
    %v307 = vld [vmem:[%s2 + $0x6a8] sm:$0xff]
    %v308 = vld [vmem:[%s2 + $0x6b0] sm:$0xff]
    %v309 = vld [vmem:[%s2 + $0x6b8] sm:$0xff]
    %v310 = vld [vmem:[%s2 + $0x6c0] sm:$0xff]
    %v311 = vld [vmem:[%s2 + $0x6c8] sm:$0xff]
    %v312 = vld [vmem:[%s2 + $0x6d0] sm:$0xff]
    %v313 = vld [vmem:[%s2 + $0x6d8] sm:$0xff]
    %v314 = vld [vmem:[%s2 + $0x6e0] sm:$0xff]
    %v315 = vld [vmem:[%s2 + $0x6e8] sm:$0xff]
    %v316 = vld [vmem:[%s2 + $0x6f0] sm:$0xff]
    %v317 = vld [vmem:[%s2 + $0x6f8] sm:$0xff]
    %v318 = vld [vmem:[%s2 + $0x700] sm:$0xff]
    %v319 = vld [vmem:[%s2 + $0x708] sm:$0xff]
    %v320 = vld [vmem:[%s2 + $0x710] sm:$0xff]
    %v321 = vld [vmem:[%s2 + $0x718] sm:$0xff]
    %v322 = vld [vmem:[%s2 + $0x720] sm:$0xff]
    %v323 = vld [vmem:[%s2 + $0x728] sm:$0xff]
    %v324 = vld [vmem:[%s2 + $0x730] sm:$0xff]
    %v325 = vld [vmem:[%s2 + $0x738] sm:$0xff]
    %v326 = vld [vmem:[%s2 + $0x740] sm:$0xff]
    %v327 = vld [vmem:[%s2 + $0x748] sm:$0xff]
    %v328 = vld [vmem:[%s2 + $0x750] sm:$0xff]
    %v329 = vld [vmem:[%s2 + $0x758] sm:$0xff]
    %v330 = vld [vmem:[%s2 + $0x760] sm:$0xff]
    %v331 = vld [vmem:[%s2 + $0x768] sm:$0xff]
    %v332 = vld [vmem:[%s2 + $0x770] sm:$0xff]
    %v333 = vld [vmem:[%s2 + $0x778] sm:$0xff]
    %v334 = vld [vmem:[%s2 + $0x780] sm:$0xff]
    %v335 = vld [vmem:[%s2 + $0x788] sm:$0xff]
    %v336 = vld [vmem:[%s2 + $0x790] sm:$0xff]
    %v337 = vld [vmem:[%s2 + $0x798] sm:$0xff]
    %v338 = vld [vmem:[%s2 + $0x7a0] sm:$0xff]
    %v339 = vld [vmem:[%s2 + $0x7a8] sm:$0xff]
    %v340 = vld [vmem:[%s2 + $0x7b0] sm:$0xff]
    %v341 = vld [vmem:[%s2 + $0x7b8] sm:$0xff]
    %v342 = vld [vmem:[%s2 + $0x7c0] sm:$0xff]
    %v343 = vld [vmem:[%s2 + $0x7c8] sm:$0xff]
    %v344 = vld [vmem:[%s2 + $0x7d0] sm:$0xff]
    %v345 = vld [vmem:[%s2 + $0x7d8] sm:$0xff]
    %v346 = vld [vmem:[%s2 + $0x7e0] sm:$0xff]
    %v347 = vld [vmem:[%s2 + $0x7e8] sm:$0xff]
    %v348 = vld [vmem:[%s2 + $0x7f0] sm:$0xff]
    %v349 = vld [vmem:[%s2 + $0x7f8] sm:$0xff]
    %v350 = vld [vmem:[#allocation2] sm:$0xf]
    %v351 = vld [vmem:[#allocation3] sm:$0x3]
    %v352 = vld [vmem:[#allocation4] sm:$0x3]
    %v353 = vld [vmem:[#allocation5] sm:$0xf]
    %355 = vst [vmem:[#allocation1] ss:$4 sm:$0xff] %v350
    %v356 = vld.sshfl [vmem:[#allocation1] sm:$0xff pattern:$0x73625140]
    %v357 = vld.sshfl [vmem:[#allocation1 + $0x8] sm:$0xff pattern:$0x73625140]
    %360 = vmatpush.msra.mxu0 %v214
    %361 = vmatpush.msra.mxu0 %v206
    %362 = vmatpush.msra.mxu0 %v198
    %363 = vmatpush.msra.mxu0 %v190
    %364 = vmatpush.msra.mxu0 %v182
    %365 = vmatpush.msra.mxu0 %v174
    %366 = vmatpush.msra.mxu0 %v166
    %367 = vmatpush.msra.mxu0 %v158
    %368 = vmatpush.msra.mxu0 %v150
    %369 = vmatpush.msra.mxu0 %v142
    %370 = vmatpush.msra.mxu0 %v134
    %371 = vmatpush.msra.mxu0 %v126
    %372 = vmatpush.msra.mxu0 %v118
    %373 = vmatpush.msra.mxu0 %v110
    %374 = vmatpush.msra.mxu0 %v102
    %375 = vmatpush.msra.mxu0 %v94
    %376 = vmatmul.f32.gmra.mxu0 %v356
    %v377 = vpop.f32.mrf.mxu0
    %v378 = vadd.f32 0.0, %v377
    %379 = vdwg.mxu0
    %380 = vmatpush.msra.mxu0 %v342
    %381 = vmatpush.msra.mxu0 %v334
    %382 = vmatpush.msra.mxu0 %v326
    %383 = vmatpush.msra.mxu0 %v318
    %384 = vmatpush.msra.mxu0 %v310
    %385 = vmatpush.msra.mxu0 %v302
    %386 = vmatpush.msra.mxu0 %v294
    %387 = vmatpush.msra.mxu0 %v286
    %388 = vmatpush.msra.mxu0 %v278
    %389 = vmatpush.msra.mxu0 %v270
    %390 = vmatpush.msra.mxu0 %v262
    %391 = vmatpush.msra.mxu0 %v254
    %392 = vmatpush.msra.mxu0 %v246
    %393 = vmatpush.msra.mxu0 %v238
    %394 = vmatpush.msra.mxu0 %v230
    %395 = vmatpush.msra.mxu0 %v222
    %396 = vmatmul.f32.gmra.mxu0 %v357
    %v397 = vpop.f32.mrf.mxu0
    %v398 = vadd.f32 %v378, %v397
    %399 = vdwg.mxu0
    %400 = vmatpush.msra.mxu0 %v215
    %401 = vmatpush.msra.mxu0 %v207
    %402 = vmatpush.msra.mxu0 %v199
    %403 = vmatpush.msra.mxu0 %v191
    %404 = vmatpush.msra.mxu0 %v183
    %405 = vmatpush.msra.mxu0 %v175
    %406 = vmatpush.msra.mxu0 %v167
    %407 = vmatpush.msra.mxu0 %v159
    %408 = vmatpush.msra.mxu0 %v151
    %409 = vmatpush.msra.mxu0 %v143
    %410 = vmatpush.msra.mxu0 %v135
    %411 = vmatpush.msra.mxu0 %v127
    %412 = vmatpush.msra.mxu0 %v119
    %413 = vmatpush.msra.mxu0 %v111
    %414 = vmatpush.msra.mxu0 %v103
    %415 = vmatpush.msra.mxu0 %v95
    %416 = vmatmul.f32.gmra.mxu0 %v356
    %v417 = vpop.f32.mrf.mxu0
    %v418 = vadd.f32 0.0, %v417
    %419 = vdwg.mxu0
    %420 = vmatpush.msra.mxu0 %v343
    %421 = vmatpush.msra.mxu0 %v335
    %422 = vmatpush.msra.mxu0 %v327
    %423 = vmatpush.msra.mxu0 %v319
    %424 = vmatpush.msra.mxu0 %v311
    %425 = vmatpush.msra.mxu0 %v303
    %426 = vmatpush.msra.mxu0 %v295
    %427 = vmatpush.msra.mxu0 %v287
    %428 = vmatpush.msra.mxu0 %v279
    %429 = vmatpush.msra.mxu0 %v271
    %430 = vmatpush.msra.mxu0 %v263
    %431 = vmatpush.msra.mxu0 %v255
    %432 = vmatpush.msra.mxu0 %v247
    %433 = vmatpush.msra.mxu0 %v239
    %434 = vmatpush.msra.mxu0 %v231
    %435 = vmatpush.msra.mxu0 %v223
    %436 = vmatmul.f32.gmra.mxu0 %v357
    %v437 = vpop.f32.mrf.mxu0
    %v438 = vadd.f32 %v418, %v437
    %439 = vdwg.mxu0
    %440 = vmatpush.msra.mxu0 %v216
    %441 = vmatpush.msra.mxu0 %v208
    %442 = vmatpush.msra.mxu0 %v200
    %443 = vmatpush.msra.mxu0 %v192
    %444 = vmatpush.msra.mxu0 %v184
    %445 = vmatpush.msra.mxu0 %v176
    %446 = vmatpush.msra.mxu0 %v168
    %447 = vmatpush.msra.mxu0 %v160
    %448 = vmatpush.msra.mxu0 %v152
    %449 = vmatpush.msra.mxu0 %v144
    %450 = vmatpush.msra.mxu0 %v136
    %451 = vmatpush.msra.mxu0 %v128
    %452 = vmatpush.msra.mxu0 %v120
    %453 = vmatpush.msra.mxu0 %v112
    %454 = vmatpush.msra.mxu0 %v104
    %455 = vmatpush.msra.mxu0 %v96
    %456 = vmatmul.f32.gmra.mxu0 %v356
    %v457 = vpop.f32.mrf.mxu0
    %v458 = vadd.f32 0.0, %v457
    %459 = vdwg.mxu0
    %460 = vmatpush.msra.mxu0 %v344
    %461 = vmatpush.msra.mxu0 %v336
    %462 = vmatpush.msra.mxu0 %v328
    %463 = vmatpush.msra.mxu0 %v320
    %464 = vmatpush.msra.mxu0 %v312
    %465 = vmatpush.msra.mxu0 %v304
    %466 = vmatpush.msra.mxu0 %v296
    %467 = vmatpush.msra.mxu0 %v288
    %468 = vmatpush.msra.mxu0 %v280
    %469 = vmatpush.msra.mxu0 %v272
    %470 = vmatpush.msra.mxu0 %v264
    %471 = vmatpush.msra.mxu0 %v256
    %472 = vmatpush.msra.mxu0 %v248
    %473 = vmatpush.msra.mxu0 %v240
    %474 = vmatpush.msra.mxu0 %v232
    %475 = vmatpush.msra.mxu0 %v224
    %476 = vmatmul.f32.gmra.mxu0 %v357
    %v477 = vpop.f32.mrf.mxu0
    %v478 = vadd.f32 %v458, %v477
    %479 = vdwg.mxu0
    %480 = vmatpush.msra.mxu0 %v217
    %481 = vmatpush.msra.mxu0 %v209
    %482 = vmatpush.msra.mxu0 %v201
    %483 = vmatpush.msra.mxu0 %v193
    %484 = vmatpush.msra.mxu0 %v185
    %485 = vmatpush.msra.mxu0 %v177
    %486 = vmatpush.msra.mxu0 %v169
    %487 = vmatpush.msra.mxu0 %v161
    %488 = vmatpush.msra.mxu0 %v153
    %489 = vmatpush.msra.mxu0 %v145
    %490 = vmatpush.msra.mxu0 %v137
    %491 = vmatpush.msra.mxu0 %v129
    %492 = vmatpush.msra.mxu0 %v121
    %493 = vmatpush.msra.mxu0 %v113
    %494 = vmatpush.msra.mxu0 %v105
    %495 = vmatpush.msra.mxu0 %v97
    %496 = vmatmul.f32.gmra.mxu0 %v356
    %v497 = vpop.f32.mrf.mxu0
    %v498 = vadd.f32 0.0, %v497
    %499 = vdwg.mxu0
    %500 = vmatpush.msra.mxu0 %v345
    %501 = vmatpush.msra.mxu0 %v337
    %502 = vmatpush.msra.mxu0 %v329
    %503 = vmatpush.msra.mxu0 %v321
    %504 = vmatpush.msra.mxu0 %v313
    %505 = vmatpush.msra.mxu0 %v305
    %506 = vmatpush.msra.mxu0 %v297
    %507 = vmatpush.msra.mxu0 %v289
    %508 = vmatpush.msra.mxu0 %v281
    %509 = vmatpush.msra.mxu0 %v273
    %510 = vmatpush.msra.mxu0 %v265
    %511 = vmatpush.msra.mxu0 %v257
    %512 = vmatpush.msra.mxu0 %v249
    %513 = vmatpush.msra.mxu0 %v241
    %514 = vmatpush.msra.mxu0 %v233
    %515 = vmatpush.msra.mxu0 %v225
    %516 = vmatmul.f32.gmra.mxu0 %v357
    %v517 = vpop.f32.mrf.mxu0
    %v518 = vadd.f32 %v498, %v517
    %519 = vdwg.mxu0
    %520 = vmatpush.msra.mxu0 %v218
    %521 = vmatpush.msra.mxu0 %v210
    %522 = vmatpush.msra.mxu0 %v202
    %523 = vmatpush.msra.mxu0 %v194
    %524 = vmatpush.msra.mxu0 %v186
    %525 = vmatpush.msra.mxu0 %v178
    %526 = vmatpush.msra.mxu0 %v170
    %527 = vmatpush.msra.mxu0 %v162
    %528 = vmatpush.msra.mxu0 %v154
    %529 = vmatpush.msra.mxu0 %v146
    %530 = vmatpush.msra.mxu0 %v138
    %531 = vmatpush.msra.mxu0 %v130
    %532 = vmatpush.msra.mxu0 %v122
    %533 = vmatpush.msra.mxu0 %v114
    %534 = vmatpush.msra.mxu0 %v106
    %535 = vmatpush.msra.mxu0 %v98
    %536 = vmatmul.f32.gmra.mxu0 %v356
    %v537 = vpop.f32.mrf.mxu0
    %v538 = vadd.f32 0.0, %v537
    %539 = vdwg.mxu0
    %540 = vmatpush.msra.mxu0 %v346
    %541 = vmatpush.msra.mxu0 %v338
    %542 = vmatpush.msra.mxu0 %v330
    %543 = vmatpush.msra.mxu0 %v322
    %544 = vmatpush.msra.mxu0 %v314
    %545 = vmatpush.msra.mxu0 %v306
    %546 = vmatpush.msra.mxu0 %v298
    %547 = vmatpush.msra.mxu0 %v290
    %548 = vmatpush.msra.mxu0 %v282
    %549 = vmatpush.msra.mxu0 %v274
    %550 = vmatpush.msra.mxu0 %v266
    %551 = vmatpush.msra.mxu0 %v258
    %552 = vmatpush.msra.mxu0 %v250
    %553 = vmatpush.msra.mxu0 %v242
    %554 = vmatpush.msra.mxu0 %v234
    %555 = vmatpush.msra.mxu0 %v226
    %556 = vmatmul.f32.gmra.mxu0 %v357
    %v557 = vpop.f32.mrf.mxu0
    %v558 = vadd.f32 %v538, %v557
    %559 = vdwg.mxu0
    %560 = vmatpush.msra.mxu0 %v219
    %561 = vmatpush.msra.mxu0 %v211
    %562 = vmatpush.msra.mxu0 %v203
    %563 = vmatpush.msra.mxu0 %v195
    %564 = vmatpush.msra.mxu0 %v187
    %565 = vmatpush.msra.mxu0 %v179
    %566 = vmatpush.msra.mxu0 %v171
    %567 = vmatpush.msra.mxu0 %v163
    %568 = vmatpush.msra.mxu0 %v155
    %569 = vmatpush.msra.mxu0 %v147
    %570 = vmatpush.msra.mxu0 %v139
    %571 = vmatpush.msra.mxu0 %v131
    %572 = vmatpush.msra.mxu0 %v123
    %573 = vmatpush.msra.mxu0 %v115
    %574 = vmatpush.msra.mxu0 %v107
    %575 = vmatpush.msra.mxu0 %v99
    %576 = vmatmul.f32.gmra.mxu0 %v356
    %v577 = vpop.f32.mrf.mxu0
    %v578 = vadd.f32 0.0, %v577
    %579 = vdwg.mxu0
    %580 = vmatpush.msra.mxu0 %v347
    %581 = vmatpush.msra.mxu0 %v339
    %582 = vmatpush.msra.mxu0 %v331
    %583 = vmatpush.msra.mxu0 %v323
    %584 = vmatpush.msra.mxu0 %v315
    %585 = vmatpush.msra.mxu0 %v307
    %586 = vmatpush.msra.mxu0 %v299
    %587 = vmatpush.msra.mxu0 %v291
    %588 = vmatpush.msra.mxu0 %v283
    %589 = vmatpush.msra.mxu0 %v275
    %590 = vmatpush.msra.mxu0 %v267
    %591 = vmatpush.msra.mxu0 %v259
    %592 = vmatpush.msra.mxu0 %v251
    %593 = vmatpush.msra.mxu0 %v243
    %594 = vmatpush.msra.mxu0 %v235
    %595 = vmatpush.msra.mxu0 %v227
    %596 = vmatmul.f32.gmra.mxu0 %v357
    %v597 = vpop.f32.mrf.mxu0
    %v598 = vadd.f32 %v578, %v597
    %599 = vdwg.mxu0
    %600 = vmatpush.msra.mxu0 %v220
    %601 = vmatpush.msra.mxu0 %v212
    %602 = vmatpush.msra.mxu0 %v204
    %603 = vmatpush.msra.mxu0 %v196
    %604 = vmatpush.msra.mxu0 %v188
    %605 = vmatpush.msra.mxu0 %v180
    %606 = vmatpush.msra.mxu0 %v172
    %607 = vmatpush.msra.mxu0 %v164
    %608 = vmatpush.msra.mxu0 %v156
    %609 = vmatpush.msra.mxu0 %v148
    %610 = vmatpush.msra.mxu0 %v140
    %611 = vmatpush.msra.mxu0 %v132
    %612 = vmatpush.msra.mxu0 %v124
    %613 = vmatpush.msra.mxu0 %v116
    %614 = vmatpush.msra.mxu0 %v108
    %615 = vmatpush.msra.mxu0 %v100
    %616 = vmatmul.f32.gmra.mxu0 %v356
    %v617 = vpop.f32.mrf.mxu0
    %v618 = vadd.f32 0.0, %v617
    %619 = vdwg.mxu0
    %620 = vmatpush.msra.mxu0 %v348
    %621 = vmatpush.msra.mxu0 %v340
    %622 = vmatpush.msra.mxu0 %v332
    %623 = vmatpush.msra.mxu0 %v324
    %624 = vmatpush.msra.mxu0 %v316
    %625 = vmatpush.msra.mxu0 %v308
    %626 = vmatpush.msra.mxu0 %v300
    %627 = vmatpush.msra.mxu0 %v292
    %628 = vmatpush.msra.mxu0 %v284
    %629 = vmatpush.msra.mxu0 %v276
    %630 = vmatpush.msra.mxu0 %v268
    %631 = vmatpush.msra.mxu0 %v260
    %632 = vmatpush.msra.mxu0 %v252
    %633 = vmatpush.msra.mxu0 %v244
    %634 = vmatpush.msra.mxu0 %v236
    %635 = vmatpush.msra.mxu0 %v228
    %636 = vmatmul.f32.gmra.mxu0 %v357
    %v637 = vpop.f32.mrf.mxu0
    %v638 = vadd.f32 %v618, %v637
    %639 = vdwg.mxu0
    %640 = vmatpush.msra.mxu0 %v221
    %641 = vmatpush.msra.mxu0 %v213
    %642 = vmatpush.msra.mxu0 %v205
    %643 = vmatpush.msra.mxu0 %v197
    %644 = vmatpush.msra.mxu0 %v189
    %645 = vmatpush.msra.mxu0 %v181
    %646 = vmatpush.msra.mxu0 %v173
    %647 = vmatpush.msra.mxu0 %v165
    %648 = vmatpush.msra.mxu0 %v157
    %649 = vmatpush.msra.mxu0 %v149
    %650 = vmatpush.msra.mxu0 %v141
    %651 = vmatpush.msra.mxu0 %v133
    %652 = vmatpush.msra.mxu0 %v125
    %653 = vmatpush.msra.mxu0 %v117
    %654 = vmatpush.msra.mxu0 %v109
    %655 = vmatpush.msra.mxu0 %v101
    %656 = vmatmul.f32.gmra.mxu0 %v356
    %v657 = vpop.f32.mrf.mxu0
    %v658 = vadd.f32 0.0, %v657
    %659 = vdwg.mxu0
    %660 = vmatpush.msra.mxu0 %v349
    %661 = vmatpush.msra.mxu0 %v341
    %662 = vmatpush.msra.mxu0 %v333
    %663 = vmatpush.msra.mxu0 %v325
    %664 = vmatpush.msra.mxu0 %v317
    %665 = vmatpush.msra.mxu0 %v309
    %666 = vmatpush.msra.mxu0 %v301
    %667 = vmatpush.msra.mxu0 %v293
    %668 = vmatpush.msra.mxu0 %v285
    %669 = vmatpush.msra.mxu0 %v277
    %670 = vmatpush.msra.mxu0 %v269
    %671 = vmatpush.msra.mxu0 %v261
    %672 = vmatpush.msra.mxu0 %v253
    %673 = vmatpush.msra.mxu0 %v245
    %674 = vmatpush.msra.mxu0 %v237
    %675 = vmatpush.msra.mxu0 %v229
    %676 = vmatmul.f32.gmra.mxu0 %v357
    %v677 = vpop.f32.mrf.mxu0
    %v678 = vadd.f32 %v658, %v677
    %679 = vdwg.mxu0
    %v680 = vld [vmem:[#allocation7] ss:$8 sm:$0xf]
    %s681 = scalar_lea.vmem [#allocation7], 32
    %v682 = vld [vmem:[%s681] ss:$8 sm:$0xf]
    %685 = vst [vmem:[#allocation1] ss:$9 sm:$0xff] %v680
    %s686 = scalar_lea.vmem [#allocation1], 1
    %687 = vst [vmem:[%s686] ss:$9 sm:$0xff] %v682
    %v688 = vld [vmem:[#allocation1] sm:$0xff]
    %v689 = vld [vmem:[#allocation1 + $0x9] sm:$0xff]
    %v690 = vld [vmem:[#allocation1 + $0x12] sm:$0xff]
    %v691 = vld [vmem:[#allocation1 + $0x1b] sm:$0xff]
    %v696 = vadd.f32 %v398, %v688
    %v697 = vadd.f32 %v438, %v689
    %v698 = vadd.f32 %v478, %v690
    %v699 = vadd.f32 %v518, %v691
    %s700 = scalar_lea.vmem [#allocation8], 7
    %v701 = vld [vmem:[%s700] ss:$8 sm:$0xf]
    %s702 = scalar_lea.vmem [#allocation8], 39
    %v703 = vld [vmem:[%s702] ss:$8 sm:$0xf]
    %706 = vst [vmem:[#allocation1] ss:$9 sm:$0xff] %v701
    %s707 = scalar_lea.vmem [#allocation1], 1
    %708 = vst [vmem:[%s707] ss:$9 sm:$0xff] %v703
    %v709 = vld [vmem:[#allocation1] sm:$0xff]
    %v710 = vld [vmem:[#allocation1 + $0x9] sm:$0xff]
    %v711 = vld [vmem:[#allocation1 + $0x12] sm:$0xff]
    %v712 = vld [vmem:[#allocation1 + $0x1b] sm:$0xff]
    %v717 = vadd.f32 %v558, %v709
    %v718 = vadd.f32 %v598, %v710
    %v719 = vadd.f32 %v638, %v711
    %v720 = vadd.f32 %v678, %v712
    %v721 = vxor.u32 %v696, 2147483648
    %v722 = vmul.f32 %v721, 1.442695
    %v723 = vpow.pop %v722
    %v724 = vadd.f32 %v723, 1.0
    %v725 = vrcp.pop %v724
    %v726 = vmul.f32 %v724, %v725
    %v727 = vsub.f32 1.0, %v726
    %v728 = vmul.f32 %v725, %v727
    %v729 = vadd.f32 %v725, %v728
    %vm730 = vweird.f32 %v724
    %vm731 = vweird.f32 %v725
    %vm732 = vmor %vm730, %vm731
    %v733 = vsel %vm732, %v725, %v729
    %v734 = vand.u32 2147483647, %v724
    %vm735 = vcmp.eq.f32.partialorder %v734, 8.507059e+37
    %v736 = vand.u32 %v724, 2147483648
    %v737 = vor.u32 1.1754944e-38, %v736
    %v738 = vsel %vm735, %v737, %v733
    %v739 = vmul.f32 1.0, %v738
    %v740 = vxor.u32 %v697, 2147483648
    %v741 = vmul.f32 %v740, 1.442695
    %v742 = vpow.pop %v741
    %v743 = vadd.f32 %v742, 1.0
    %v744 = vrcp.pop %v743
    %v745 = vmul.f32 %v743, %v744
    %v746 = vsub.f32 1.0, %v745
    %v747 = vmul.f32 %v744, %v746
    %v748 = vadd.f32 %v744, %v747
    %vm749 = vweird.f32 %v743
    %vm750 = vweird.f32 %v744
    %vm751 = vmor %vm749, %vm750
    %v752 = vsel %vm751, %v744, %v748
    %v753 = vand.u32 2147483647, %v743
    %vm754 = vcmp.eq.f32.partialorder %v753, 8.507059e+37
    %v755 = vand.u32 %v743, 2147483648
    %v756 = vor.u32 1.1754944e-38, %v755
    %v757 = vsel %vm754, %v756, %v752
    %v758 = vmul.f32 1.0, %v757
    %v759 = vtanh.pop %v698
    %v760 = vxor.u32 %v699, 2147483648
    %v761 = vmul.f32 %v760, 1.442695
    %v762 = vpow.pop %v761
    %v763 = vadd.f32 %v762, 1.0
    %v764 = vrcp.pop %v763
    %v765 = vmul.f32 %v763, %v764
    %v766 = vsub.f32 1.0, %v765
    %v767 = vmul.f32 %v764, %v766
    %v768 = vadd.f32 %v764, %v767
    %vm769 = vweird.f32 %v763
    %vm770 = vweird.f32 %v764
    %vm771 = vmor %vm769, %vm770
    %v772 = vsel %vm771, %v764, %v768
    %v773 = vand.u32 2147483647, %v763
    %vm774 = vcmp.eq.f32.partialorder %v773, 8.507059e+37
    %v775 = vand.u32 %v763, 2147483648
    %v776 = vor.u32 1.1754944e-38, %v775
    %v777 = vsel %vm774, %v776, %v772
    %v778 = vmul.f32 1.0, %v777
    %v779 = vmul.f32 %v758, %v351
    %v780 = vmul.f32 %v739, %v759
    %v781 = vadd.f32 %v779, %v780
    %v782 = vtanh.pop %v781
    %v783 = vmul.f32 %v778, %v782
    %v784 = vxor.u32 %v717, 2147483648
    %v785 = vmul.f32 %v784, 1.442695
    %v786 = vpow.pop %v785
    %v787 = vadd.f32 %v786, 1.0
    %v788 = vrcp.pop %v787
    %v789 = vmul.f32 %v787, %v788
    %v790 = vsub.f32 1.0, %v789
    %v791 = vmul.f32 %v788, %v790
    %v792 = vadd.f32 %v788, %v791
    %vm793 = vweird.f32 %v787
    %vm794 = vweird.f32 %v788
    %vm795 = vmor %vm793, %vm794
    %v796 = vsel %vm795, %v788, %v792
    %v797 = vand.u32 2147483647, %v787
    %vm798 = vcmp.eq.f32.partialorder %v797, 8.507059e+37
    %v799 = vand.u32 %v787, 2147483648
    %v800 = vor.u32 1.1754944e-38, %v799
    %v801 = vsel %vm798, %v800, %v796
    %v802 = vmul.f32 1.0, %v801
    %v803 = vxor.u32 %v718, 2147483648
    %v804 = vmul.f32 %v803, 1.442695
    %v805 = vpow.pop %v804
    %v806 = vadd.f32 %v805, 1.0
    %v807 = vrcp.pop %v806
    %v808 = vmul.f32 %v806, %v807
    %v809 = vsub.f32 1.0, %v808
    %v810 = vmul.f32 %v807, %v809
    %v811 = vadd.f32 %v807, %v810
    %vm812 = vweird.f32 %v806
    %vm813 = vweird.f32 %v807
    %vm814 = vmor %vm812, %vm813
    %v815 = vsel %vm814, %v807, %v811
    %v816 = vand.u32 2147483647, %v806
    %vm817 = vcmp.eq.f32.partialorder %v816, 8.507059e+37
    %v818 = vand.u32 %v806, 2147483648
    %v819 = vor.u32 1.1754944e-38, %v818
    %v820 = vsel %vm817, %v819, %v815
    %v821 = vmul.f32 1.0, %v820
    %v822 = vtanh.pop %v719
    %v823 = vxor.u32 %v720, 2147483648
    %v824 = vmul.f32 %v823, 1.442695
    %v825 = vpow.pop %v824
    %v826 = vadd.f32 %v825, 1.0
    %v827 = vrcp.pop %v826
    %v828 = vmul.f32 %v826, %v827
    %v829 = vsub.f32 1.0, %v828
    %v830 = vmul.f32 %v827, %v829
    %v831 = vadd.f32 %v827, %v830
    %vm832 = vweird.f32 %v826
    %vm833 = vweird.f32 %v827
    %vm834 = vmor %vm832, %vm833
    %v835 = vsel %vm834, %v827, %v831
    %v836 = vand.u32 2147483647, %v826
    %vm837 = vcmp.eq.f32.partialorder %v836, 8.507059e+37
    %v838 = vand.u32 %v826, 2147483648
    %v839 = vor.u32 1.1754944e-38, %v838
    %v840 = vsel %vm837, %v839, %v835
    %v841 = vmul.f32 1.0, %v840
    %v842 = vmul.f32 %v821, %v352
    %v843 = vmul.f32 %v802, %v822
    %v844 = vadd.f32 %v842, %v843
    %v845 = vtanh.pop %v844
    %v846 = vmul.f32 %v841, %v845
    %v849 = vrot.slane %v846, 6
    %vm850 = vcmask 1041408
    %v851 = vsel %vm850, %v783, %v849
    %v853 = vadd.f32 %v353, %v851
    %854 = vmatpush.msra.mxu0 %v214
    %855 = vmatpush.msra.mxu0 %v206
    %856 = vmatpush.msra.mxu0 %v198
    %857 = vmatpush.msra.mxu0 %v190
    %858 = vmatpush.msra.mxu0 %v182
    %859 = vmatpush.msra.mxu0 %v174
    %860 = vmatpush.msra.mxu0 %v166
    %861 = vmatpush.msra.mxu0 %v158
    %862 = vmatpush.msra.mxu0 %v150
    %863 = vmatpush.msra.mxu0 %v142
    %864 = vmatpush.msra.mxu0 %v134
    %865 = vmatpush.msra.mxu0 %v126
    %866 = vmatpush.msra.mxu0 %v118
    %867 = vmatpush.msra.mxu0 %v110
    %868 = vmatpush.msra.mxu0 %v102
    %869 = vmatpush.msra.mxu0 %v94
    %870 = vmatmul.f32.gmra.mxu0 %v783
    %v871 = vpop.f32.mrf.mxu0
    %v872 = vadd.f32 0.0, %v871
    %873 = vdwg.mxu0
    %874 = vmatpush.msra.mxu0 %v342
    %875 = vmatpush.msra.mxu0 %v334
    %876 = vmatpush.msra.mxu0 %v326
    %877 = vmatpush.msra.mxu0 %v318
    %878 = vmatpush.msra.mxu0 %v310
    %879 = vmatpush.msra.mxu0 %v302
    %880 = vmatpush.msra.mxu0 %v294
    %881 = vmatpush.msra.mxu0 %v286
    %882 = vmatpush.msra.mxu0 %v278
    %883 = vmatpush.msra.mxu0 %v270
    %884 = vmatpush.msra.mxu0 %v262
    %885 = vmatpush.msra.mxu0 %v254
    %886 = vmatpush.msra.mxu0 %v246
    %887 = vmatpush.msra.mxu0 %v238
    %888 = vmatpush.msra.mxu0 %v230
    %889 = vmatpush.msra.mxu0 %v222
    %890 = vmatmul.f32.gmra.mxu0 %v846
    %v891 = vpop.f32.mrf.mxu0
    %v892 = vadd.f32 %v872, %v891
    %893 = vdwg.mxu0
    %894 = vmatpush.msra.mxu0 %v215
    %895 = vmatpush.msra.mxu0 %v207
    %896 = vmatpush.msra.mxu0 %v199
    %897 = vmatpush.msra.mxu0 %v191
    %898 = vmatpush.msra.mxu0 %v183
    %899 = vmatpush.msra.mxu0 %v175
    %900 = vmatpush.msra.mxu0 %v167
    %901 = vmatpush.msra.mxu0 %v159
    %902 = vmatpush.msra.mxu0 %v151
    %903 = vmatpush.msra.mxu0 %v143
    %904 = vmatpush.msra.mxu0 %v135
    %905 = vmatpush.msra.mxu0 %v127
    %906 = vmatpush.msra.mxu0 %v119
    %907 = vmatpush.msra.mxu0 %v111
    %908 = vmatpush.msra.mxu0 %v103
    %909 = vmatpush.msra.mxu0 %v95
    %910 = vmatmul.f32.gmra.mxu0 %v783
    %v911 = vpop.f32.mrf.mxu0
    %v912 = vadd.f32 0.0, %v911
    %913 = vdwg.mxu0
    %914 = vmatpush.msra.mxu0 %v343
    %915 = vmatpush.msra.mxu0 %v335
    %916 = vmatpush.msra.mxu0 %v327
    %917 = vmatpush.msra.mxu0 %v319
    %918 = vmatpush.msra.mxu0 %v311
    %919 = vmatpush.msra.mxu0 %v303
    %920 = vmatpush.msra.mxu0 %v295
    %921 = vmatpush.msra.mxu0 %v287
    %922 = vmatpush.msra.mxu0 %v279
    %923 = vmatpush.msra.mxu0 %v271
    %924 = vmatpush.msra.mxu0 %v263
    %925 = vmatpush.msra.mxu0 %v255
    %926 = vmatpush.msra.mxu0 %v247
    %927 = vmatpush.msra.mxu0 %v239
    %928 = vmatpush.msra.mxu0 %v231
    %929 = vmatpush.msra.mxu0 %v223
    %930 = vmatmul.f32.gmra.mxu0 %v846
    %v931 = vpop.f32.mrf.mxu0
    %v932 = vadd.f32 %v912, %v931
    %933 = vdwg.mxu0
    %934 = vmatpush.msra.mxu0 %v216
    %935 = vmatpush.msra.mxu0 %v208
    %936 = vmatpush.msra.mxu0 %v200
    %937 = vmatpush.msra.mxu0 %v192
    %938 = vmatpush.msra.mxu0 %v184
    %939 = vmatpush.msra.mxu0 %v176
    %940 = vmatpush.msra.mxu0 %v168
    %941 = vmatpush.msra.mxu0 %v160
    %942 = vmatpush.msra.mxu0 %v152
    %943 = vmatpush.msra.mxu0 %v144
    %944 = vmatpush.msra.mxu0 %v136
    %945 = vmatpush.msra.mxu0 %v128
    %946 = vmatpush.msra.mxu0 %v120
    %947 = vmatpush.msra.mxu0 %v112
    %948 = vmatpush.msra.mxu0 %v104
    %949 = vmatpush.msra.mxu0 %v96
    %950 = vmatmul.f32.gmra.mxu0 %v783
    %v951 = vpop.f32.mrf.mxu0
    %v952 = vadd.f32 0.0, %v951
    %953 = vdwg.mxu0
    %954 = vmatpush.msra.mxu0 %v344
    %955 = vmatpush.msra.mxu0 %v336
    %956 = vmatpush.msra.mxu0 %v328
    %957 = vmatpush.msra.mxu0 %v320
    %958 = vmatpush.msra.mxu0 %v312
    %959 = vmatpush.msra.mxu0 %v304
    %960 = vmatpush.msra.mxu0 %v296
    %961 = vmatpush.msra.mxu0 %v288
    %962 = vmatpush.msra.mxu0 %v280
    %963 = vmatpush.msra.mxu0 %v272
    %964 = vmatpush.msra.mxu0 %v264
    %965 = vmatpush.msra.mxu0 %v256
    %966 = vmatpush.msra.mxu0 %v248
    %967 = vmatpush.msra.mxu0 %v240
    %968 = vmatpush.msra.mxu0 %v232
    %969 = vmatpush.msra.mxu0 %v224
    %970 = vmatmul.f32.gmra.mxu0 %v846
    %v971 = vpop.f32.mrf.mxu0
    %v972 = vadd.f32 %v952, %v971
    %973 = vdwg.mxu0
    %974 = vmatpush.msra.mxu0 %v217
    %975 = vmatpush.msra.mxu0 %v209
    %976 = vmatpush.msra.mxu0 %v201
    %977 = vmatpush.msra.mxu0 %v193
    %978 = vmatpush.msra.mxu0 %v185
    %979 = vmatpush.msra.mxu0 %v177
    %980 = vmatpush.msra.mxu0 %v169
    %981 = vmatpush.msra.mxu0 %v161
    %982 = vmatpush.msra.mxu0 %v153
    %983 = vmatpush.msra.mxu0 %v145
    %984 = vmatpush.msra.mxu0 %v137
    %985 = vmatpush.msra.mxu0 %v129
    %986 = vmatpush.msra.mxu0 %v121
    %987 = vmatpush.msra.mxu0 %v113
    %988 = vmatpush.msra.mxu0 %v105
    %989 = vmatpush.msra.mxu0 %v97
    %990 = vmatmul.f32.gmra.mxu0 %v783
    %v991 = vpop.f32.mrf.mxu0
    %v992 = vadd.f32 0.0, %v991
    %993 = vdwg.mxu0
    %994 = vmatpush.msra.mxu0 %v345
    %995 = vmatpush.msra.mxu0 %v337
    %996 = vmatpush.msra.mxu0 %v329
    %997 = vmatpush.msra.mxu0 %v321
    %998 = vmatpush.msra.mxu0 %v313
    %999 = vmatpush.msra.mxu0 %v305
    %1000 = vmatpush.msra.mxu0 %v297
    %1001 = vmatpush.msra.mxu0 %v289
    %1002 = vmatpush.msra.mxu0 %v281
    %1003 = vmatpush.msra.mxu0 %v273
    %1004 = vmatpush.msra.mxu0 %v265
    %1005 = vmatpush.msra.mxu0 %v257
    %1006 = vmatpush.msra.mxu0 %v249
    %1007 = vmatpush.msra.mxu0 %v241
    %1008 = vmatpush.msra.mxu0 %v233
    %1009 = vmatpush.msra.mxu0 %v225
    %1010 = vmatmul.f32.gmra.mxu0 %v846
    %v1011 = vpop.f32.mrf.mxu0
    %v1012 = vadd.f32 %v992, %v1011
    %1013 = vdwg.mxu0
    %1014 = vmatpush.msra.mxu0 %v218
    %1015 = vmatpush.msra.mxu0 %v210
    %1016 = vmatpush.msra.mxu0 %v202
    %1017 = vmatpush.msra.mxu0 %v194
    %1018 = vmatpush.msra.mxu0 %v186
    %1019 = vmatpush.msra.mxu0 %v178
    %1020 = vmatpush.msra.mxu0 %v170
    %1021 = vmatpush.msra.mxu0 %v162
    %1022 = vmatpush.msra.mxu0 %v154
    %1023 = vmatpush.msra.mxu0 %v146
    %1024 = vmatpush.msra.mxu0 %v138
    %1025 = vmatpush.msra.mxu0 %v130
    %1026 = vmatpush.msra.mxu0 %v122
    %1027 = vmatpush.msra.mxu0 %v114
    %1028 = vmatpush.msra.mxu0 %v106
    %1029 = vmatpush.msra.mxu0 %v98
    %1030 = vmatmul.f32.gmra.mxu0 %v783
    %v1031 = vpop.f32.mrf.mxu0
    %v1032 = vadd.f32 0.0, %v1031
    %1033 = vdwg.mxu0
    %1034 = vmatpush.msra.mxu0 %v346
    %1035 = vmatpush.msra.mxu0 %v338
    %1036 = vmatpush.msra.mxu0 %v330
    %1037 = vmatpush.msra.mxu0 %v322
    %1038 = vmatpush.msra.mxu0 %v314
    %1039 = vmatpush.msra.mxu0 %v306
    %1040 = vmatpush.msra.mxu0 %v298
    %1041 = vmatpush.msra.mxu0 %v290
    %1042 = vmatpush.msra.mxu0 %v282
    %1043 = vmatpush.msra.mxu0 %v274
    %1044 = vmatpush.msra.mxu0 %v266
    %1045 = vmatpush.msra.mxu0 %v258
    %1046 = vmatpush.msra.mxu0 %v250
    %1047 = vmatpush.msra.mxu0 %v242
    %1048 = vmatpush.msra.mxu0 %v234
    %1049 = vmatpush.msra.mxu0 %v226
    %1050 = vmatmul.f32.gmra.mxu0 %v846
    %v1051 = vpop.f32.mrf.mxu0
    %v1052 = vadd.f32 %v1032, %v1051
    %1053 = vdwg.mxu0
    %1054 = vmatpush.msra.mxu0 %v219
    %1055 = vmatpush.msra.mxu0 %v211
    %1056 = vmatpush.msra.mxu0 %v203
    %1057 = vmatpush.msra.mxu0 %v195
    %1058 = vmatpush.msra.mxu0 %v187
    %1059 = vmatpush.msra.mxu0 %v179
    %1060 = vmatpush.msra.mxu0 %v171
    %1061 = vmatpush.msra.mxu0 %v163
    %1062 = vmatpush.msra.mxu0 %v155
    %1063 = vmatpush.msra.mxu0 %v147
    %1064 = vmatpush.msra.mxu0 %v139
    %1065 = vmatpush.msra.mxu0 %v131
    %1066 = vmatpush.msra.mxu0 %v123
    %1067 = vmatpush.msra.mxu0 %v115
    %1068 = vmatpush.msra.mxu0 %v107
    %1069 = vmatpush.msra.mxu0 %v99
    %1070 = vmatmul.f32.gmra.mxu0 %v783
    %v1071 = vpop.f32.mrf.mxu0
    %v1072 = vadd.f32 0.0, %v1071
    %1073 = vdwg.mxu0
    %1074 = vmatpush.msra.mxu0 %v347
    %1075 = vmatpush.msra.mxu0 %v339
    %1076 = vmatpush.msra.mxu0 %v331
    %1077 = vmatpush.msra.mxu0 %v323
    %1078 = vmatpush.msra.mxu0 %v315
    %1079 = vmatpush.msra.mxu0 %v307
    %1080 = vmatpush.msra.mxu0 %v299
    %1081 = vmatpush.msra.mxu0 %v291
    %1082 = vmatpush.msra.mxu0 %v283
    %1083 = vmatpush.msra.mxu0 %v275
    %1084 = vmatpush.msra.mxu0 %v267
    %1085 = vmatpush.msra.mxu0 %v259
    %1086 = vmatpush.msra.mxu0 %v251
    %1087 = vmatpush.msra.mxu0 %v243
    %1088 = vmatpush.msra.mxu0 %v235
    %1089 = vmatpush.msra.mxu0 %v227
    %1090 = vmatmul.f32.gmra.mxu0 %v846
    %v1091 = vpop.f32.mrf.mxu0
    %v1092 = vadd.f32 %v1072, %v1091
    %1093 = vdwg.mxu0
    %1094 = vmatpush.msra.mxu0 %v220
    %1095 = vmatpush.msra.mxu0 %v212
    %1096 = vmatpush.msra.mxu0 %v204
    %1097 = vmatpush.msra.mxu0 %v196
    %1098 = vmatpush.msra.mxu0 %v188
    %1099 = vmatpush.msra.mxu0 %v180
    %1100 = vmatpush.msra.mxu0 %v172
    %1101 = vmatpush.msra.mxu0 %v164
    %1102 = vmatpush.msra.mxu0 %v156
    %1103 = vmatpush.msra.mxu0 %v148
    %1104 = vmatpush.msra.mxu0 %v140
    %1105 = vmatpush.msra.mxu0 %v132
    %1106 = vmatpush.msra.mxu0 %v124
    %1107 = vmatpush.msra.mxu0 %v116
    %1108 = vmatpush.msra.mxu0 %v108
    %1109 = vmatpush.msra.mxu0 %v100
    %1110 = vmatmul.f32.gmra.mxu0 %v783
    %v1111 = vpop.f32.mrf.mxu0
    %v1112 = vadd.f32 0.0, %v1111
    %1113 = vdwg.mxu0
    %1114 = vmatpush.msra.mxu0 %v348
    %1115 = vmatpush.msra.mxu0 %v340
    %1116 = vmatpush.msra.mxu0 %v332
    %1117 = vmatpush.msra.mxu0 %v324
    %1118 = vmatpush.msra.mxu0 %v316
    %1119 = vmatpush.msra.mxu0 %v308
    %1120 = vmatpush.msra.mxu0 %v300
    %1121 = vmatpush.msra.mxu0 %v292
    %1122 = vmatpush.msra.mxu0 %v284
    %1123 = vmatpush.msra.mxu0 %v276
    %1124 = vmatpush.msra.mxu0 %v268
    %1125 = vmatpush.msra.mxu0 %v260
    %1126 = vmatpush.msra.mxu0 %v252
    %1127 = vmatpush.msra.mxu0 %v244
    %1128 = vmatpush.msra.mxu0 %v236
    %1129 = vmatpush.msra.mxu0 %v228
    %1130 = vmatmul.f32.gmra.mxu0 %v846
    %v1131 = vpop.f32.mrf.mxu0
    %v1132 = vadd.f32 %v1112, %v1131
    %1133 = vdwg.mxu0
    %1134 = vmatpush.msra.mxu0 %v221
    %1135 = vmatpush.msra.mxu0 %v213
    %1136 = vmatpush.msra.mxu0 %v205
    %1137 = vmatpush.msra.mxu0 %v197
    %1138 = vmatpush.msra.mxu0 %v189
    %1139 = vmatpush.msra.mxu0 %v181
    %1140 = vmatpush.msra.mxu0 %v173
    %1141 = vmatpush.msra.mxu0 %v165
    %1142 = vmatpush.msra.mxu0 %v157
    %1143 = vmatpush.msra.mxu0 %v149
    %1144 = vmatpush.msra.mxu0 %v141
    %1145 = vmatpush.msra.mxu0 %v133
    %1146 = vmatpush.msra.mxu0 %v125
    %1147 = vmatpush.msra.mxu0 %v117
    %1148 = vmatpush.msra.mxu0 %v109
    %1149 = vmatpush.msra.mxu0 %v101
    %1150 = vmatmul.f32.gmra.mxu0 %v783
    %v1151 = vpop.f32.mrf.mxu0
    %v1152 = vadd.f32 0.0, %v1151
    %1153 = vdwg.mxu0
    %1154 = vmatpush.msra.mxu0 %v349
    %1155 = vmatpush.msra.mxu0 %v341
    %1156 = vmatpush.msra.mxu0 %v333
    %1157 = vmatpush.msra.mxu0 %v325
    %1158 = vmatpush.msra.mxu0 %v317
    %1159 = vmatpush.msra.mxu0 %v309
    %1160 = vmatpush.msra.mxu0 %v301
    %1161 = vmatpush.msra.mxu0 %v293
    %1162 = vmatpush.msra.mxu0 %v285
    %1163 = vmatpush.msra.mxu0 %v277
    %1164 = vmatpush.msra.mxu0 %v269
    %1165 = vmatpush.msra.mxu0 %v261
    %1166 = vmatpush.msra.mxu0 %v253
    %1167 = vmatpush.msra.mxu0 %v245
    %1168 = vmatpush.msra.mxu0 %v237
    %1169 = vmatpush.msra.mxu0 %v229
    %1170 = vmatmul.f32.gmra.mxu0 %v846
    %v1171 = vpop.f32.mrf.mxu0
    %v1172 = vadd.f32 %v1152, %v1171
    %1173 = vdwg.mxu0
    %s1174 = scalar_lea.vmem [#allocation7], 1
    %v1175 = vld [vmem:[%s1174] ss:$8 sm:$0xf]
    %s1176 = scalar_lea.vmem [#allocation7], 33
    %v1177 = vld [vmem:[%s1176] ss:$8 sm:$0xf]
    %1180 = vst [vmem:[#allocation1] ss:$9 sm:$0xff] %v1175
    %s1181 = scalar_lea.vmem [#allocation1], 1
    %1182 = vst [vmem:[%s1181] ss:$9 sm:$0xff] %v1177
    %v1183 = vld [vmem:[#allocation1] sm:$0xff]
    %v1184 = vld [vmem:[#allocation1 + $0x9] sm:$0xff]
    %v1185 = vld [vmem:[#allocation1 + $0x12] sm:$0xff]
    %v1186 = vld [vmem:[#allocation1 + $0x1b] sm:$0xff]
    %v1191 = vadd.f32 %v892, %v1183
    %v1192 = vadd.f32 %v932, %v1184
    %v1193 = vadd.f32 %v972, %v1185
    %v1194 = vadd.f32 %v1012, %v1186
    %s1195 = scalar_lea.vmem [#allocation8], 6
    %v1196 = vld [vmem:[%s1195] ss:$8 sm:$0xf]
    %s1197 = scalar_lea.vmem [#allocation8], 38
    %v1198 = vld [vmem:[%s1197] ss:$8 sm:$0xf]
    %1201 = vst [vmem:[#allocation1] ss:$9 sm:$0xff] %v1196
    %s1202 = scalar_lea.vmem [#allocation1], 1
    %1203 = vst [vmem:[%s1202] ss:$9 sm:$0xff] %v1198
    %v1204 = vld [vmem:[#allocation1] sm:$0xff]
    %v1205 = vld [vmem:[#allocation1 + $0x9] sm:$0xff]
    %v1206 = vld [vmem:[#allocation1 + $0x12] sm:$0xff]
    %v1207 = vld [vmem:[#allocation1 + $0x1b] sm:$0xff]
    %v1212 = vadd.f32 %v1052, %v1204
    %v1213 = vadd.f32 %v1092, %v1205
    %v1214 = vadd.f32 %v1132, %v1206
    %v1215 = vadd.f32 %v1172, %v1207
    %v1216 = vxor.u32 %v1191, 2147483648
    %v1217 = vmul.f32 %v1216, 1.442695
    %v1218 = vpow.pop %v1217
    %v1219 = vadd.f32 %v1218, 1.0
    %v1220 = vrcp.pop %v1219
    %v1221 = vmul.f32 %v1219, %v1220
    %v1222 = vsub.f32 1.0, %v1221
    %v1223 = vmul.f32 %v1220, %v1222
    %v1224 = vadd.f32 %v1220, %v1223
    %vm1225 = vweird.f32 %v1219
    %vm1226 = vweird.f32 %v1220
    %vm1227 = vmor %vm1225, %vm1226
    %v1228 = vsel %vm1227, %v1220, %v1224
    %v1229 = vand.u32 2147483647, %v1219
    %vm1230 = vcmp.eq.f32.partialorder %v1229, 8.507059e+37
    %v1231 = vand.u32 %v1219, 2147483648
    %v1232 = vor.u32 1.1754944e-38, %v1231
    %v1233 = vsel %vm1230, %v1232, %v1228
    %v1234 = vmul.f32 1.0, %v1233
    %v1235 = vxor.u32 %v1192, 2147483648
    %v1236 = vmul.f32 %v1235, 1.442695
    %v1237 = vpow.pop %v1236
    %v1238 = vadd.f32 %v1237, 1.0
    %v1239 = vrcp.pop %v1238
    %v1240 = vmul.f32 %v1238, %v1239
    %v1241 = vsub.f32 1.0, %v1240
    %v1242 = vmul.f32 %v1239, %v1241
    %v1243 = vadd.f32 %v1239, %v1242
    %vm1244 = vweird.f32 %v1238
    %vm1245 = vweird.f32 %v1239
    %vm1246 = vmor %vm1244, %vm1245
    %v1247 = vsel %vm1246, %v1239, %v1243
    %v1248 = vand.u32 2147483647, %v1238
    %vm1249 = vcmp.eq.f32.partialorder %v1248, 8.507059e+37
    %v1250 = vand.u32 %v1238, 2147483648
    %v1251 = vor.u32 1.1754944e-38, %v1250
    %v1252 = vsel %vm1249, %v1251, %v1247
    %v1253 = vmul.f32 1.0, %v1252
    %v1254 = vtanh.pop %v1193
    %v1255 = vxor.u32 %v1194, 2147483648
    %v1256 = vmul.f32 %v1255, 1.442695
    %v1257 = vpow.pop %v1256
    %v1258 = vadd.f32 %v1257, 1.0
    %v1259 = vrcp.pop %v1258
    %v1260 = vmul.f32 %v1258, %v1259
    %v1261 = vsub.f32 1.0, %v1260
    %v1262 = vmul.f32 %v1259, %v1261
    %v1263 = vadd.f32 %v1259, %v1262
    %vm1264 = vweird.f32 %v1258
    %vm1265 = vweird.f32 %v1259
    %vm1266 = vmor %vm1264, %vm1265
    %v1267 = vsel %vm1266, %v1259, %v1263
    %v1268 = vand.u32 2147483647, %v1258
    %vm1269 = vcmp.eq.f32.partialorder %v1268, 8.507059e+37
    %v1270 = vand.u32 %v1258, 2147483648
    %v1271 = vor.u32 1.1754944e-38, %v1270
    %v1272 = vsel %vm1269, %v1271, %v1267
    %v1273 = vmul.f32 1.0, %v1272
    %v1274 = vmul.f32 %v1253, %v781
    %v1275 = vmul.f32 %v1234, %v1254
    %v1276 = vadd.f32 %v1274, %v1275
    %v1277 = vtanh.pop %v1276
    %v1278 = vmul.f32 %v1273, %v1277
    %v1279 = vxor.u32 %v1212, 2147483648
    %v1280 = vmul.f32 %v1279, 1.442695
    %v1281 = vpow.pop %v1280
    %v1282 = vadd.f32 %v1281, 1.0
    %v1283 = vrcp.pop %v1282
    %v1284 = vmul.f32 %v1282, %v1283
    %v1285 = vsub.f32 1.0, %v1284
    %v1286 = vmul.f32 %v1283, %v1285
    %v1287 = vadd.f32 %v1283, %v1286
    %vm1288 = vweird.f32 %v1282
    %vm1289 = vweird.f32 %v1283
    %vm1290 = vmor %vm1288, %vm1289
    %v1291 = vsel %vm1290, %v1283, %v1287
    %v1292 = vand.u32 2147483647, %v1282
    %vm1293 = vcmp.eq.f32.partialorder %v1292, 8.507059e+37
    %v1294 = vand.u32 %v1282, 2147483648
    %v1295 = vor.u32 1.1754944e-38, %v1294
    %v1296 = vsel %vm1293, %v1295, %v1291
    %v1297 = vmul.f32 1.0, %v1296
    %v1298 = vxor.u32 %v1213, 2147483648
    %v1299 = vmul.f32 %v1298, 1.442695
    %v1300 = vpow.pop %v1299
    %v1301 = vadd.f32 %v1300, 1.0
    %v1302 = vrcp.pop %v1301
    %v1303 = vmul.f32 %v1301, %v1302
    %v1304 = vsub.f32 1.0, %v1303
    %v1305 = vmul.f32 %v1302, %v1304
    %v1306 = vadd.f32 %v1302, %v1305
    %vm1307 = vweird.f32 %v1301
    %vm1308 = vweird.f32 %v1302
    %vm1309 = vmor %vm1307, %vm1308
    %v1310 = vsel %vm1309, %v1302, %v1306
    %v1311 = vand.u32 2147483647, %v1301
    %vm1312 = vcmp.eq.f32.partialorder %v1311, 8.507059e+37
    %v1313 = vand.u32 %v1301, 2147483648
    %v1314 = vor.u32 1.1754944e-38, %v1313
    %v1315 = vsel %vm1312, %v1314, %v1310
    %v1316 = vmul.f32 1.0, %v1315
    %v1317 = vtanh.pop %v1214
    %v1318 = vxor.u32 %v1215, 2147483648
    %v1319 = vmul.f32 %v1318, 1.442695
    %v1320 = vpow.pop %v1319
    %v1321 = vadd.f32 %v1320, 1.0
    %v1322 = vrcp.pop %v1321
    %v1323 = vmul.f32 %v1321, %v1322
    %v1324 = vsub.f32 1.0, %v1323
    %v1325 = vmul.f32 %v1322, %v1324
    %v1326 = vadd.f32 %v1322, %v1325
    %vm1327 = vweird.f32 %v1321
    %vm1328 = vweird.f32 %v1322
    %vm1329 = vmor %vm1327, %vm1328
    %v1330 = vsel %vm1329, %v1322, %v1326
    %v1331 = vand.u32 2147483647, %v1321
    %vm1332 = vcmp.eq.f32.partialorder %v1331, 8.507059e+37
    %v1333 = vand.u32 %v1321, 2147483648
    %v1334 = vor.u32 1.1754944e-38, %v1333
    %v1335 = vsel %vm1332, %v1334, %v1330
    %v1336 = vmul.f32 1.0, %v1335
    %v1337 = vmul.f32 %v1316, %v844
    %v1338 = vmul.f32 %v1297, %v1317
    %v1339 = vadd.f32 %v1337, %v1338
    %v1340 = vtanh.pop %v1339
    %v1341 = vmul.f32 %v1336, %v1340
    %v1344 = vrot.slane %v1341, 6
    %v1345 = vsel %vm850, %v1278, %v1344
    %v1347 = vadd.f32 %v853, %v1345
    %1348 = vmatpush.msra.mxu0 %v214
    %1349 = vmatpush.msra.mxu0 %v206
    %1350 = vmatpush.msra.mxu0 %v198
    %1351 = vmatpush.msra.mxu0 %v190
    %1352 = vmatpush.msra.mxu0 %v182
    %1353 = vmatpush.msra.mxu0 %v174
    %1354 = vmatpush.msra.mxu0 %v166
    %1355 = vmatpush.msra.mxu0 %v158
    %1356 = vmatpush.msra.mxu0 %v150
    %1357 = vmatpush.msra.mxu0 %v142
    %1358 = vmatpush.msra.mxu0 %v134
    %1359 = vmatpush.msra.mxu0 %v126
    %1360 = vmatpush.msra.mxu0 %v118
    %1361 = vmatpush.msra.mxu0 %v110
    %1362 = vmatpush.msra.mxu0 %v102
    %1363 = vmatpush.msra.mxu0 %v94
    %1364 = vmatmul.f32.gmra.mxu0 %v1278
    %v1365 = vpop.f32.mrf.mxu0
    %v1366 = vadd.f32 0.0, %v1365
    %1367 = vdwg.mxu0
    %1368 = vmatpush.msra.mxu0 %v342
    %1369 = vmatpush.msra.mxu0 %v334
    %1370 = vmatpush.msra.mxu0 %v326
    %1371 = vmatpush.msra.mxu0 %v318
    %1372 = vmatpush.msra.mxu0 %v310
    %1373 = vmatpush.msra.mxu0 %v302
    %1374 = vmatpush.msra.mxu0 %v294
    %1375 = vmatpush.msra.mxu0 %v286
    %1376 = vmatpush.msra.mxu0 %v278
    %1377 = vmatpush.msra.mxu0 %v270
    %1378 = vmatpush.msra.mxu0 %v262
    %1379 = vmatpush.msra.mxu0 %v254
    %1380 = vmatpush.msra.mxu0 %v246
    %1381 = vmatpush.msra.mxu0 %v238
    %1382 = vmatpush.msra.mxu0 %v230
    %1383 = vmatpush.msra.mxu0 %v222
    %1384 = vmatmul.f32.gmra.mxu0 %v1341
    %v1385 = vpop.f32.mrf.mxu0
    %v1386 = vadd.f32 %v1366, %v1385
    %1387 = vdwg.mxu0
    %1388 = vmatpush.msra.mxu0 %v215
    %1389 = vmatpush.msra.mxu0 %v207
    %1390 = vmatpush.msra.mxu0 %v199
    %1391 = vmatpush.msra.mxu0 %v191
    %1392 = vmatpush.msra.mxu0 %v183
    %1393 = vmatpush.msra.mxu0 %v175
    %1394 = vmatpush.msra.mxu0 %v167
    %1395 = vmatpush.msra.mxu0 %v159
    %1396 = vmatpush.msra.mxu0 %v151
    %1397 = vmatpush.msra.mxu0 %v143
    %1398 = vmatpush.msra.mxu0 %v135
    %1399 = vmatpush.msra.mxu0 %v127
    %1400 = vmatpush.msra.mxu0 %v119
    %1401 = vmatpush.msra.mxu0 %v111
    %1402 = vmatpush.msra.mxu0 %v103
    %1403 = vmatpush.msra.mxu0 %v95
    %1404 = vmatmul.f32.gmra.mxu0 %v1278
    %v1405 = vpop.f32.mrf.mxu0
    %v1406 = vadd.f32 0.0, %v1405
    %1407 = vdwg.mxu0
    %1408 = vmatpush.msra.mxu0 %v343
    %1409 = vmatpush.msra.mxu0 %v335
    %1410 = vmatpush.msra.mxu0 %v327
    %1411 = vmatpush.msra.mxu0 %v319
    %1412 = vmatpush.msra.mxu0 %v311
    %1413 = vmatpush.msra.mxu0 %v303
    %1414 = vmatpush.msra.mxu0 %v295
    %1415 = vmatpush.msra.mxu0 %v287
    %1416 = vmatpush.msra.mxu0 %v279
    %1417 = vmatpush.msra.mxu0 %v271
    %1418 = vmatpush.msra.mxu0 %v263
    %1419 = vmatpush.msra.mxu0 %v255
    %1420 = vmatpush.msra.mxu0 %v247
    %1421 = vmatpush.msra.mxu0 %v239
    %1422 = vmatpush.msra.mxu0 %v231
    %1423 = vmatpush.msra.mxu0 %v223
    %1424 = vmatmul.f32.gmra.mxu0 %v1341
    %v1425 = vpop.f32.mrf.mxu0
    %v1426 = vadd.f32 %v1406, %v1425
    %1427 = vdwg.mxu0
    %1428 = vmatpush.msra.mxu0 %v216
    %1429 = vmatpush.msra.mxu0 %v208
    %1430 = vmatpush.msra.mxu0 %v200
    %1431 = vmatpush.msra.mxu0 %v192
    %1432 = vmatpush.msra.mxu0 %v184
    %1433 = vmatpush.msra.mxu0 %v176
    %1434 = vmatpush.msra.mxu0 %v168
    %1435 = vmatpush.msra.mxu0 %v160
    %1436 = vmatpush.msra.mxu0 %v152
    %1437 = vmatpush.msra.mxu0 %v144
    %1438 = vmatpush.msra.mxu0 %v136
    %1439 = vmatpush.msra.mxu0 %v128
    %1440 = vmatpush.msra.mxu0 %v120
    %1441 = vmatpush.msra.mxu0 %v112
    %1442 = vmatpush.msra.mxu0 %v104
    %1443 = vmatpush.msra.mxu0 %v96
    %1444 = vmatmul.f32.gmra.mxu0 %v1278
    %v1445 = vpop.f32.mrf.mxu0
    %v1446 = vadd.f32 0.0, %v1445
    %1447 = vdwg.mxu0
    %1448 = vmatpush.msra.mxu0 %v344
    %1449 = vmatpush.msra.mxu0 %v336
    %1450 = vmatpush.msra.mxu0 %v328
    %1451 = vmatpush.msra.mxu0 %v320
    %1452 = vmatpush.msra.mxu0 %v312
    %1453 = vmatpush.msra.mxu0 %v304
    %1454 = vmatpush.msra.mxu0 %v296
    %1455 = vmatpush.msra.mxu0 %v288
    %1456 = vmatpush.msra.mxu0 %v280
    %1457 = vmatpush.msra.mxu0 %v272
    %1458 = vmatpush.msra.mxu0 %v264
    %1459 = vmatpush.msra.mxu0 %v256
    %1460 = vmatpush.msra.mxu0 %v248
    %1461 = vmatpush.msra.mxu0 %v240
    %1462 = vmatpush.msra.mxu0 %v232
    %1463 = vmatpush.msra.mxu0 %v224
    %1464 = vmatmul.f32.gmra.mxu0 %v1341
    %v1465 = vpop.f32.mrf.mxu0
    %v1466 = vadd.f32 %v1446, %v1465
    %1467 = vdwg.mxu0
    %1468 = vmatpush.msra.mxu0 %v217
    %1469 = vmatpush.msra.mxu0 %v209
    %1470 = vmatpush.msra.mxu0 %v201
    %1471 = vmatpush.msra.mxu0 %v193
    %1472 = vmatpush.msra.mxu0 %v185
    %1473 = vmatpush.msra.mxu0 %v177
    %1474 = vmatpush.msra.mxu0 %v169
    %1475 = vmatpush.msra.mxu0 %v161
    %1476 = vmatpush.msra.mxu0 %v153
    %1477 = vmatpush.msra.mxu0 %v145
    %1478 = vmatpush.msra.mxu0 %v137
    %1479 = vmatpush.msra.mxu0 %v129
    %1480 = vmatpush.msra.mxu0 %v121
    %1481 = vmatpush.msra.mxu0 %v113
    %1482 = vmatpush.msra.mxu0 %v105
    %1483 = vmatpush.msra.mxu0 %v97
    %1484 = vmatmul.f32.gmra.mxu0 %v1278
    %v1485 = vpop.f32.mrf.mxu0
    %v1486 = vadd.f32 0.0, %v1485
    %1487 = vdwg.mxu0
    %1488 = vmatpush.msra.mxu0 %v345
    %1489 = vmatpush.msra.mxu0 %v337
    %1490 = vmatpush.msra.mxu0 %v329
    %1491 = vmatpush.msra.mxu0 %v321
    %1492 = vmatpush.msra.mxu0 %v313
    %1493 = vmatpush.msra.mxu0 %v305
    %1494 = vmatpush.msra.mxu0 %v297
    %1495 = vmatpush.msra.mxu0 %v289
    %1496 = vmatpush.msra.mxu0 %v281
    %1497 = vmatpush.msra.mxu0 %v273
    %1498 = vmatpush.msra.mxu0 %v265
    %1499 = vmatpush.msra.mxu0 %v257
    %1500 = vmatpush.msra.mxu0 %v249
    %1501 = vmatpush.msra.mxu0 %v241
    %1502 = vmatpush.msra.mxu0 %v233
    %1503 = vmatpush.msra.mxu0 %v225
    %1504 = vmatmul.f32.gmra.mxu0 %v1341
    %v1505 = vpop.f32.mrf.mxu0
    %v1506 = vadd.f32 %v1486, %v1505
    %1507 = vdwg.mxu0
    %1508 = vmatpush.msra.mxu0 %v218
    %1509 = vmatpush.msra.mxu0 %v210
    %1510 = vmatpush.msra.mxu0 %v202
    %1511 = vmatpush.msra.mxu0 %v194
    %1512 = vmatpush.msra.mxu0 %v186
    %1513 = vmatpush.msra.mxu0 %v178
    %1514 = vmatpush.msra.mxu0 %v170
    %1515 = vmatpush.msra.mxu0 %v162
    %1516 = vmatpush.msra.mxu0 %v154
    %1517 = vmatpush.msra.mxu0 %v146
    %1518 = vmatpush.msra.mxu0 %v138
    %1519 = vmatpush.msra.mxu0 %v130
    %1520 = vmatpush.msra.mxu0 %v122
    %1521 = vmatpush.msra.mxu0 %v114
    %1522 = vmatpush.msra.mxu0 %v106
    %1523 = vmatpush.msra.mxu0 %v98
    %1524 = vmatmul.f32.gmra.mxu0 %v1278
    %v1525 = vpop.f32.mrf.mxu0
    %v1526 = vadd.f32 0.0, %v1525
    %1527 = vdwg.mxu0
    %1528 = vmatpush.msra.mxu0 %v346
    %1529 = vmatpush.msra.mxu0 %v338
    %1530 = vmatpush.msra.mxu0 %v330
    %1531 = vmatpush.msra.mxu0 %v322
    %1532 = vmatpush.msra.mxu0 %v314
    %1533 = vmatpush.msra.mxu0 %v306
    %1534 = vmatpush.msra.mxu0 %v298
    %1535 = vmatpush.msra.mxu0 %v290
    %1536 = vmatpush.msra.mxu0 %v282
    %1537 = vmatpush.msra.mxu0 %v274
    %1538 = vmatpush.msra.mxu0 %v266
    %1539 = vmatpush.msra.mxu0 %v258
    %1540 = vmatpush.msra.mxu0 %v250
    %1541 = vmatpush.msra.mxu0 %v242
    %1542 = vmatpush.msra.mxu0 %v234
    %1543 = vmatpush.msra.mxu0 %v226
    %1544 = vmatmul.f32.gmra.mxu0 %v1341
    %v1545 = vpop.f32.mrf.mxu0
    %v1546 = vadd.f32 %v1526, %v1545
    %1547 = vdwg.mxu0
    %1548 = vmatpush.msra.mxu0 %v219
    %1549 = vmatpush.msra.mxu0 %v211
    %1550 = vmatpush.msra.mxu0 %v203
    %1551 = vmatpush.msra.mxu0 %v195
    %1552 = vmatpush.msra.mxu0 %v187
    %1553 = vmatpush.msra.mxu0 %v179
    %1554 = vmatpush.msra.mxu0 %v171
    %1555 = vmatpush.msra.mxu0 %v163
    %1556 = vmatpush.msra.mxu0 %v155
    %1557 = vmatpush.msra.mxu0 %v147
    %1558 = vmatpush.msra.mxu0 %v139
    %1559 = vmatpush.msra.mxu0 %v131
    %1560 = vmatpush.msra.mxu0 %v123
    %1561 = vmatpush.msra.mxu0 %v115
    %1562 = vmatpush.msra.mxu0 %v107
    %1563 = vmatpush.msra.mxu0 %v99
    %1564 = vmatmul.f32.gmra.mxu0 %v1278
    %v1565 = vpop.f32.mrf.mxu0
    %v1566 = vadd.f32 0.0, %v1565
    %1567 = vdwg.mxu0
    %1568 = vmatpush.msra.mxu0 %v347
    %1569 = vmatpush.msra.mxu0 %v339
    %1570 = vmatpush.msra.mxu0 %v331
    %1571 = vmatpush.msra.mxu0 %v323
    %1572 = vmatpush.msra.mxu0 %v315
    %1573 = vmatpush.msra.mxu0 %v307
    %1574 = vmatpush.msra.mxu0 %v299
    %1575 = vmatpush.msra.mxu0 %v291
    %1576 = vmatpush.msra.mxu0 %v283
    %1577 = vmatpush.msra.mxu0 %v275
    %1578 = vmatpush.msra.mxu0 %v267
    %1579 = vmatpush.msra.mxu0 %v259
    %1580 = vmatpush.msra.mxu0 %v251
    %1581 = vmatpush.msra.mxu0 %v243
    %1582 = vmatpush.msra.mxu0 %v235
    %1583 = vmatpush.msra.mxu0 %v227
    %1584 = vmatmul.f32.gmra.mxu0 %v1341
    %v1585 = vpop.f32.mrf.mxu0
    %v1586 = vadd.f32 %v1566, %v1585
    %1587 = vdwg.mxu0
    %1588 = vmatpush.msra.mxu0 %v220
    %1589 = vmatpush.msra.mxu0 %v212
    %1590 = vmatpush.msra.mxu0 %v204
    %1591 = vmatpush.msra.mxu0 %v196
    %1592 = vmatpush.msra.mxu0 %v188
    %1593 = vmatpush.msra.mxu0 %v180
    %1594 = vmatpush.msra.mxu0 %v172
    %1595 = vmatpush.msra.mxu0 %v164
    %1596 = vmatpush.msra.mxu0 %v156
    %1597 = vmatpush.msra.mxu0 %v148
    %1598 = vmatpush.msra.mxu0 %v140
    %1599 = vmatpush.msra.mxu0 %v132
    %1600 = vmatpush.msra.mxu0 %v124
    %1601 = vmatpush.msra.mxu0 %v116
    %1602 = vmatpush.msra.mxu0 %v108
    %1603 = vmatpush.msra.mxu0 %v100
    %1604 = vmatmul.f32.gmra.mxu0 %v1278
    %v1605 = vpop.f32.mrf.mxu0
    %v1606 = vadd.f32 0.0, %v1605
    %1607 = vdwg.mxu0
    %1608 = vmatpush.msra.mxu0 %v348
    %1609 = vmatpush.msra.mxu0 %v340
    %1610 = vmatpush.msra.mxu0 %v332
    %1611 = vmatpush.msra.mxu0 %v324
    %1612 = vmatpush.msra.mxu0 %v316
    %1613 = vmatpush.msra.mxu0 %v308
    %1614 = vmatpush.msra.mxu0 %v300
    %1615 = vmatpush.msra.mxu0 %v292
    %1616 = vmatpush.msra.mxu0 %v284
    %1617 = vmatpush.msra.mxu0 %v276
    %1618 = vmatpush.msra.mxu0 %v268
    %1619 = vmatpush.msra.mxu0 %v260
    %1620 = vmatpush.msra.mxu0 %v252
    %1621 = vmatpush.msra.mxu0 %v244
    %1622 = vmatpush.msra.mxu0 %v236
    %1623 = vmatpush.msra.mxu0 %v228
    %1624 = vmatmul.f32.gmra.mxu0 %v1341
    %v1625 = vpop.f32.mrf.mxu0
    %v1626 = vadd.f32 %v1606, %v1625
    %1627 = vdwg.mxu0
    %1628 = vmatpush.msra.mxu0 %v221
    %1629 = vmatpush.msra.mxu0 %v213
    %1630 = vmatpush.msra.mxu0 %v205
    %1631 = vmatpush.msra.mxu0 %v197
    %1632 = vmatpush.msra.mxu0 %v189
    %1633 = vmatpush.msra.mxu0 %v181
    %1634 = vmatpush.msra.mxu0 %v173
    %1635 = vmatpush.msra.mxu0 %v165
    %1636 = vmatpush.msra.mxu0 %v157
    %1637 = vmatpush.msra.mxu0 %v149
    %1638 = vmatpush.msra.mxu0 %v141
    %1639 = vmatpush.msra.mxu0 %v133
    %1640 = vmatpush.msra.mxu0 %v125
    %1641 = vmatpush.msra.mxu0 %v117
    %1642 = vmatpush.msra.mxu0 %v109
    %1643 = vmatpush.msra.mxu0 %v101
    %1644 = vmatmul.f32.gmra.mxu0 %v1278
    %v1645 = vpop.f32.mrf.mxu0
    %v1646 = vadd.f32 0.0, %v1645
    %1647 = vdwg.mxu0
    %1648 = vmatpush.msra.mxu0 %v349
    %1649 = vmatpush.msra.mxu0 %v341
    %1650 = vmatpush.msra.mxu0 %v333
    %1651 = vmatpush.msra.mxu0 %v325
    %1652 = vmatpush.msra.mxu0 %v317
    %1653 = vmatpush.msra.mxu0 %v309
    %1654 = vmatpush.msra.mxu0 %v301
    %1655 = vmatpush.msra.mxu0 %v293
    %1656 = vmatpush.msra.mxu0 %v285
    %1657 = vmatpush.msra.mxu0 %v277
    %1658 = vmatpush.msra.mxu0 %v269
    %1659 = vmatpush.msra.mxu0 %v261
    %1660 = vmatpush.msra.mxu0 %v253
    %1661 = vmatpush.msra.mxu0 %v245
    %1662 = vmatpush.msra.mxu0 %v237
    %1663 = vmatpush.msra.mxu0 %v229
    %1664 = vmatmul.f32.gmra.mxu0 %v1341
    %v1665 = vpop.f32.mrf.mxu0
    %v1666 = vadd.f32 %v1646, %v1665
    %1667 = vdwg.mxu0
    %s1668 = scalar_lea.vmem [#allocation7], 2
    %v1669 = vld [vmem:[%s1668] ss:$8 sm:$0xf]
    %s1670 = scalar_lea.vmem [#allocation7], 34
    %v1671 = vld [vmem:[%s1670] ss:$8 sm:$0xf]
    %1674 = vst [vmem:[#allocation1] ss:$9 sm:$0xff] %v1669
    %s1675 = scalar_lea.vmem [#allocation1], 1
    %1676 = vst [vmem:[%s1675] ss:$9 sm:$0xff] %v1671
    %v1677 = vld [vmem:[#allocation1] sm:$0xff]
    %v1678 = vld [vmem:[#allocation1 + $0x9] sm:$0xff]
    %v1679 = vld [vmem:[#allocation1 + $0x12] sm:$0xff]
    %v1680 = vld [vmem:[#allocation1 + $0x1b] sm:$0xff]
    %v1685 = vadd.f32 %v1386, %v1677
    %v1686 = vadd.f32 %v1426, %v1678
    %v1687 = vadd.f32 %v1466, %v1679
    %v1688 = vadd.f32 %v1506, %v1680
    %s1689 = scalar_lea.vmem [#allocation8], 5
    %v1690 = vld [vmem:[%s1689] ss:$8 sm:$0xf]
    %s1691 = scalar_lea.vmem [#allocation8], 37
    %v1692 = vld [vmem:[%s1691] ss:$8 sm:$0xf]
    %1695 = vst [vmem:[#allocation1] ss:$9 sm:$0xff] %v1690
    %s1696 = scalar_lea.vmem [#allocation1], 1
    %1697 = vst [vmem:[%s1696] ss:$9 sm:$0xff] %v1692
    %v1698 = vld [vmem:[#allocation1] sm:$0xff]
    %v1699 = vld [vmem:[#allocation1 + $0x9] sm:$0xff]
    %v1700 = vld [vmem:[#allocation1 + $0x12] sm:$0xff]
    %v1701 = vld [vmem:[#allocation1 + $0x1b] sm:$0xff]
    %v1706 = vadd.f32 %v1546, %v1698
    %v1707 = vadd.f32 %v1586, %v1699
    %v1708 = vadd.f32 %v1626, %v1700
    %v1709 = vadd.f32 %v1666, %v1701
    %v1710 = vxor.u32 %v1685, 2147483648
    %v1711 = vmul.f32 %v1710, 1.442695
    %v1712 = vpow.pop %v1711
    %v1713 = vadd.f32 %v1712, 1.0
    %v1714 = vrcp.pop %v1713
    %v1715 = vmul.f32 %v1713, %v1714
    %v1716 = vsub.f32 1.0, %v1715
    %v1717 = vmul.f32 %v1714, %v1716
    %v1718 = vadd.f32 %v1714, %v1717
    %vm1719 = vweird.f32 %v1713
    %vm1720 = vweird.f32 %v1714
    %vm1721 = vmor %vm1719, %vm1720
    %v1722 = vsel %vm1721, %v1714, %v1718
    %v1723 = vand.u32 2147483647, %v1713
    %vm1724 = vcmp.eq.f32.partialorder %v1723, 8.507059e+37
    %v1725 = vand.u32 %v1713, 2147483648
    %v1726 = vor.u32 1.1754944e-38, %v1725
    %v1727 = vsel %vm1724, %v1726, %v1722
    %v1728 = vmul.f32 1.0, %v1727
    %v1729 = vxor.u32 %v1686, 2147483648
    %v1730 = vmul.f32 %v1729, 1.442695
    %v1731 = vpow.pop %v1730
    %v1732 = vadd.f32 %v1731, 1.0
    %v1733 = vrcp.pop %v1732
    %v1734 = vmul.f32 %v1732, %v1733
    %v1735 = vsub.f32 1.0, %v1734
    %v1736 = vmul.f32 %v1733, %v1735
    %v1737 = vadd.f32 %v1733, %v1736
    %vm1738 = vweird.f32 %v1732
    %vm1739 = vweird.f32 %v1733
    %vm1740 = vmor %vm1738, %vm1739
    %v1741 = vsel %vm1740, %v1733, %v1737
    %v1742 = vand.u32 2147483647, %v1732
    %vm1743 = vcmp.eq.f32.partialorder %v1742, 8.507059e+37
    %v1744 = vand.u32 %v1732, 2147483648
    %v1745 = vor.u32 1.1754944e-38, %v1744
    %v1746 = vsel %vm1743, %v1745, %v1741
    %v1747 = vmul.f32 1.0, %v1746
    %v1748 = vtanh.pop %v1687
    %v1749 = vxor.u32 %v1688, 2147483648
    %v1750 = vmul.f32 %v1749, 1.442695
    %v1751 = vpow.pop %v1750
    %v1752 = vadd.f32 %v1751, 1.0
    %v1753 = vrcp.pop %v1752
    %v1754 = vmul.f32 %v1752, %v1753
    %v1755 = vsub.f32 1.0, %v1754
    %v1756 = vmul.f32 %v1753, %v1755
    %v1757 = vadd.f32 %v1753, %v1756
    %vm1758 = vweird.f32 %v1752
    %vm1759 = vweird.f32 %v1753
    %vm1760 = vmor %vm1758, %vm1759
    %v1761 = vsel %vm1760, %v1753, %v1757
    %v1762 = vand.u32 2147483647, %v1752
    %vm1763 = vcmp.eq.f32.partialorder %v1762, 8.507059e+37
    %v1764 = vand.u32 %v1752, 2147483648
    %v1765 = vor.u32 1.1754944e-38, %v1764
    %v1766 = vsel %vm1763, %v1765, %v1761
    %v1767 = vmul.f32 1.0, %v1766
    %v1768 = vmul.f32 %v1747, %v1276
    %v1769 = vmul.f32 %v1728, %v1748
    %v1770 = vadd.f32 %v1768, %v1769
    %v1771 = vtanh.pop %v1770
    %v1772 = vmul.f32 %v1767, %v1771
    %v1773 = vxor.u32 %v1706, 2147483648
    %v1774 = vmul.f32 %v1773, 1.442695
    %v1775 = vpow.pop %v1774
    %v1776 = vadd.f32 %v1775, 1.0
    %v1777 = vrcp.pop %v1776
    %v1778 = vmul.f32 %v1776, %v1777
    %v1779 = vsub.f32 1.0, %v1778
    %v1780 = vmul.f32 %v1777, %v1779
    %v1781 = vadd.f32 %v1777, %v1780
    %vm1782 = vweird.f32 %v1776
    %vm1783 = vweird.f32 %v1777
    %vm1784 = vmor %vm1782, %vm1783
    %v1785 = vsel %vm1784, %v1777, %v1781
    %v1786 = vand.u32 2147483647, %v1776
    %vm1787 = vcmp.eq.f32.partialorder %v1786, 8.507059e+37
    %v1788 = vand.u32 %v1776, 2147483648
    %v1789 = vor.u32 1.1754944e-38, %v1788
    %v1790 = vsel %vm1787, %v1789, %v1785
    %v1791 = vmul.f32 1.0, %v1790
    %v1792 = vxor.u32 %v1707, 2147483648
    %v1793 = vmul.f32 %v1792, 1.442695
    %v1794 = vpow.pop %v1793
    %v1795 = vadd.f32 %v1794, 1.0
    %v1796 = vrcp.pop %v1795
    %v1797 = vmul.f32 %v1795, %v1796
    %v1798 = vsub.f32 1.0, %v1797
    %v1799 = vmul.f32 %v1796, %v1798
    %v1800 = vadd.f32 %v1796, %v1799
    %vm1801 = vweird.f32 %v1795
    %vm1802 = vweird.f32 %v1796
    %vm1803 = vmor %vm1801, %vm1802
    %v1804 = vsel %vm1803, %v1796, %v1800
    %v1805 = vand.u32 2147483647, %v1795
    %vm1806 = vcmp.eq.f32.partialorder %v1805, 8.507059e+37
    %v1807 = vand.u32 %v1795, 2147483648
    %v1808 = vor.u32 1.1754944e-38, %v1807
    %v1809 = vsel %vm1806, %v1808, %v1804
    %v1810 = vmul.f32 1.0, %v1809
    %v1811 = vtanh.pop %v1708
    %v1812 = vxor.u32 %v1709, 2147483648
    %v1813 = vmul.f32 %v1812, 1.442695
    %v1814 = vpow.pop %v1813
    %v1815 = vadd.f32 %v1814, 1.0
    %v1816 = vrcp.pop %v1815
    %v1817 = vmul.f32 %v1815, %v1816
    %v1818 = vsub.f32 1.0, %v1817
    %v1819 = vmul.f32 %v1816, %v1818
    %v1820 = vadd.f32 %v1816, %v1819
    %vm1821 = vweird.f32 %v1815
    %vm1822 = vweird.f32 %v1816
    %vm1823 = vmor %vm1821, %vm1822
    %v1824 = vsel %vm1823, %v1816, %v1820
    %v1825 = vand.u32 2147483647, %v1815
    %vm1826 = vcmp.eq.f32.partialorder %v1825, 8.507059e+37
    %v1827 = vand.u32 %v1815, 2147483648
    %v1828 = vor.u32 1.1754944e-38, %v1827
    %v1829 = vsel %vm1826, %v1828, %v1824
    %v1830 = vmul.f32 1.0, %v1829
    %v1831 = vmul.f32 %v1810, %v1339
    %v1832 = vmul.f32 %v1791, %v1811
    %v1833 = vadd.f32 %v1831, %v1832
    %v1834 = vtanh.pop %v1833
    %v1835 = vmul.f32 %v1830, %v1834
    %v1838 = vrot.slane %v1835, 6
    %v1839 = vsel %vm850, %v1772, %v1838
    %v1841 = vadd.f32 %v1347, %v1839
    %1842 = vmatpush.msra.mxu0 %v214
    %1843 = vmatpush.msra.mxu0 %v206
    %1844 = vmatpush.msra.mxu0 %v198
    %1845 = vmatpush.msra.mxu0 %v190
    %1846 = vmatpush.msra.mxu0 %v182
    %1847 = vmatpush.msra.mxu0 %v174
    %1848 = vmatpush.msra.mxu0 %v166
    %1849 = vmatpush.msra.mxu0 %v158
    %1850 = vmatpush.msra.mxu0 %v150
    %1851 = vmatpush.msra.mxu0 %v142
    %1852 = vmatpush.msra.mxu0 %v134
    %1853 = vmatpush.msra.mxu0 %v126
    %1854 = vmatpush.msra.mxu0 %v118
    %1855 = vmatpush.msra.mxu0 %v110
    %1856 = vmatpush.msra.mxu0 %v102
    %1857 = vmatpush.msra.mxu0 %v94
    %1858 = vmatmul.f32.gmra.mxu0 %v1772
    %v1859 = vpop.f32.mrf.mxu0
    %v1860 = vadd.f32 0.0, %v1859
    %1861 = vdwg.mxu0
    %1862 = vmatpush.msra.mxu0 %v342
    %1863 = vmatpush.msra.mxu0 %v334
    %1864 = vmatpush.msra.mxu0 %v326
    %1865 = vmatpush.msra.mxu0 %v318
    %1866 = vmatpush.msra.mxu0 %v310
    %1867 = vmatpush.msra.mxu0 %v302
    %1868 = vmatpush.msra.mxu0 %v294
    %1869 = vmatpush.msra.mxu0 %v286
    %1870 = vmatpush.msra.mxu0 %v278
    %1871 = vmatpush.msra.mxu0 %v270
    %1872 = vmatpush.msra.mxu0 %v262
    %1873 = vmatpush.msra.mxu0 %v254
    %1874 = vmatpush.msra.mxu0 %v246
    %1875 = vmatpush.msra.mxu0 %v238
    %1876 = vmatpush.msra.mxu0 %v230
    %1877 = vmatpush.msra.mxu0 %v222
    %1878 = vmatmul.f32.gmra.mxu0 %v1835
    %v1879 = vpop.f32.mrf.mxu0
    %v1880 = vadd.f32 %v1860, %v1879
    %1881 = vdwg.mxu0
    %1882 = vmatpush.msra.mxu0 %v215
    %1883 = vmatpush.msra.mxu0 %v207
    %1884 = vmatpush.msra.mxu0 %v199
    %1885 = vmatpush.msra.mxu0 %v191
    %1886 = vmatpush.msra.mxu0 %v183
    %1887 = vmatpush.msra.mxu0 %v175
    %1888 = vmatpush.msra.mxu0 %v167
    %1889 = vmatpush.msra.mxu0 %v159
    %1890 = vmatpush.msra.mxu0 %v151
    %1891 = vmatpush.msra.mxu0 %v143
    %1892 = vmatpush.msra.mxu0 %v135
    %1893 = vmatpush.msra.mxu0 %v127
    %1894 = vmatpush.msra.mxu0 %v119
    %1895 = vmatpush.msra.mxu0 %v111
    %1896 = vmatpush.msra.mxu0 %v103
    %1897 = vmatpush.msra.mxu0 %v95
    %1898 = vmatmul.f32.gmra.mxu0 %v1772
    %v1899 = vpop.f32.mrf.mxu0
    %v1900 = vadd.f32 0.0, %v1899
    %1901 = vdwg.mxu0
    %1902 = vmatpush.msra.mxu0 %v343
    %1903 = vmatpush.msra.mxu0 %v335
    %1904 = vmatpush.msra.mxu0 %v327
    %1905 = vmatpush.msra.mxu0 %v319
    %1906 = vmatpush.msra.mxu0 %v311
    %1907 = vmatpush.msra.mxu0 %v303
    %1908 = vmatpush.msra.mxu0 %v295
    %1909 = vmatpush.msra.mxu0 %v287
    %1910 = vmatpush.msra.mxu0 %v279
    %1911 = vmatpush.msra.mxu0 %v271
    %1912 = vmatpush.msra.mxu0 %v263
    %1913 = vmatpush.msra.mxu0 %v255
    %1914 = vmatpush.msra.mxu0 %v247
    %1915 = vmatpush.msra.mxu0 %v239
    %1916 = vmatpush.msra.mxu0 %v231
    %1917 = vmatpush.msra.mxu0 %v223
    %1918 = vmatmul.f32.gmra.mxu0 %v1835
    %v1919 = vpop.f32.mrf.mxu0
    %v1920 = vadd.f32 %v1900, %v1919
    %1921 = vdwg.mxu0
    %1922 = vmatpush.msra.mxu0 %v216
    %1923 = vmatpush.msra.mxu0 %v208
    %1924 = vmatpush.msra.mxu0 %v200
    %1925 = vmatpush.msra.mxu0 %v192
    %1926 = vmatpush.msra.mxu0 %v184
    %1927 = vmatpush.msra.mxu0 %v176
    %1928 = vmatpush.msra.mxu0 %v168
    %1929 = vmatpush.msra.mxu0 %v160
    %1930 = vmatpush.msra.mxu0 %v152
    %1931 = vmatpush.msra.mxu0 %v144
    %1932 = vmatpush.msra.mxu0 %v136
    %1933 = vmatpush.msra.mxu0 %v128
    %1934 = vmatpush.msra.mxu0 %v120
    %1935 = vmatpush.msra.mxu0 %v112
    %1936 = vmatpush.msra.mxu0 %v104
    %1937 = vmatpush.msra.mxu0 %v96
    %1938 = vmatmul.f32.gmra.mxu0 %v1772
    %v1939 = vpop.f32.mrf.mxu0
    %v1940 = vadd.f32 0.0, %v1939
    %1941 = vdwg.mxu0
    %1942 = vmatpush.msra.mxu0 %v344
    %1943 = vmatpush.msra.mxu0 %v336
    %1944 = vmatpush.msra.mxu0 %v328
    %1945 = vmatpush.msra.mxu0 %v320
    %1946 = vmatpush.msra.mxu0 %v312
    %1947 = vmatpush.msra.mxu0 %v304
    %1948 = vmatpush.msra.mxu0 %v296
    %1949 = vmatpush.msra.mxu0 %v288
    %1950 = vmatpush.msra.mxu0 %v280
    %1951 = vmatpush.msra.mxu0 %v272
    %1952 = vmatpush.msra.mxu0 %v264
    %1953 = vmatpush.msra.mxu0 %v256
    %1954 = vmatpush.msra.mxu0 %v248
    %1955 = vmatpush.msra.mxu0 %v240
    %1956 = vmatpush.msra.mxu0 %v232
    %1957 = vmatpush.msra.mxu0 %v224
    %1958 = vmatmul.f32.gmra.mxu0 %v1835
    %v1959 = vpop.f32.mrf.mxu0
    %v1960 = vadd.f32 %v1940, %v1959
    %1961 = vdwg.mxu0
    %1962 = vmatpush.msra.mxu0 %v217
    %1963 = vmatpush.msra.mxu0 %v209
    %1964 = vmatpush.msra.mxu0 %v201
    %1965 = vmatpush.msra.mxu0 %v193
    %1966 = vmatpush.msra.mxu0 %v185
    %1967 = vmatpush.msra.mxu0 %v177
    %1968 = vmatpush.msra.mxu0 %v169
    %1969 = vmatpush.msra.mxu0 %v161
    %1970 = vmatpush.msra.mxu0 %v153
    %1971 = vmatpush.msra.mxu0 %v145
    %1972 = vmatpush.msra.mxu0 %v137
    %1973 = vmatpush.msra.mxu0 %v129
    %1974 = vmatpush.msra.mxu0 %v121
    %1975 = vmatpush.msra.mxu0 %v113
    %1976 = vmatpush.msra.mxu0 %v105
    %1977 = vmatpush.msra.mxu0 %v97
    %1978 = vmatmul.f32.gmra.mxu0 %v1772
    %v1979 = vpop.f32.mrf.mxu0
    %v1980 = vadd.f32 0.0, %v1979
    %1981 = vdwg.mxu0
    %1982 = vmatpush.msra.mxu0 %v345
    %1983 = vmatpush.msra.mxu0 %v337
    %1984 = vmatpush.msra.mxu0 %v329
    %1985 = vmatpush.msra.mxu0 %v321
    %1986 = vmatpush.msra.mxu0 %v313
    %1987 = vmatpush.msra.mxu0 %v305
    %1988 = vmatpush.msra.mxu0 %v297
    %1989 = vmatpush.msra.mxu0 %v289
    %1990 = vmatpush.msra.mxu0 %v281
    %1991 = vmatpush.msra.mxu0 %v273
    %1992 = vmatpush.msra.mxu0 %v265
    %1993 = vmatpush.msra.mxu0 %v257
    %1994 = vmatpush.msra.mxu0 %v249
    %1995 = vmatpush.msra.mxu0 %v241
    %1996 = vmatpush.msra.mxu0 %v233
    %1997 = vmatpush.msra.mxu0 %v225
    %1998 = vmatmul.f32.gmra.mxu0 %v1835
    %v1999 = vpop.f32.mrf.mxu0
    %v2000 = vadd.f32 %v1980, %v1999
    %2001 = vdwg.mxu0
    %2002 = vmatpush.msra.mxu0 %v218
    %2003 = vmatpush.msra.mxu0 %v210
    %2004 = vmatpush.msra.mxu0 %v202
    %2005 = vmatpush.msra.mxu0 %v194
    %2006 = vmatpush.msra.mxu0 %v186
    %2007 = vmatpush.msra.mxu0 %v178
    %2008 = vmatpush.msra.mxu0 %v170
    %2009 = vmatpush.msra.mxu0 %v162
    %2010 = vmatpush.msra.mxu0 %v154
    %2011 = vmatpush.msra.mxu0 %v146
    %2012 = vmatpush.msra.mxu0 %v138
    %2013 = vmatpush.msra.mxu0 %v130
    %2014 = vmatpush.msra.mxu0 %v122
    %2015 = vmatpush.msra.mxu0 %v114
    %2016 = vmatpush.msra.mxu0 %v106
    %2017 = vmatpush.msra.mxu0 %v98
    %2018 = vmatmul.f32.gmra.mxu0 %v1772
    %v2019 = vpop.f32.mrf.mxu0
    %v2020 = vadd.f32 0.0, %v2019
    %2021 = vdwg.mxu0
    %2022 = vmatpush.msra.mxu0 %v346
    %2023 = vmatpush.msra.mxu0 %v338
    %2024 = vmatpush.msra.mxu0 %v330
    %2025 = vmatpush.msra.mxu0 %v322
    %2026 = vmatpush.msra.mxu0 %v314
    %2027 = vmatpush.msra.mxu0 %v306
    %2028 = vmatpush.msra.mxu0 %v298
    %2029 = vmatpush.msra.mxu0 %v290
    %2030 = vmatpush.msra.mxu0 %v282
    %2031 = vmatpush.msra.mxu0 %v274
    %2032 = vmatpush.msra.mxu0 %v266
    %2033 = vmatpush.msra.mxu0 %v258
    %2034 = vmatpush.msra.mxu0 %v250
    %2035 = vmatpush.msra.mxu0 %v242
    %2036 = vmatpush.msra.mxu0 %v234
    %2037 = vmatpush.msra.mxu0 %v226
    %2038 = vmatmul.f32.gmra.mxu0 %v1835
    %v2039 = vpop.f32.mrf.mxu0
    %v2040 = vadd.f32 %v2020, %v2039
    %2041 = vdwg.mxu0
    %2042 = vmatpush.msra.mxu0 %v219
    %2043 = vmatpush.msra.mxu0 %v211
    %2044 = vmatpush.msra.mxu0 %v203
    %2045 = vmatpush.msra.mxu0 %v195
    %2046 = vmatpush.msra.mxu0 %v187
    %2047 = vmatpush.msra.mxu0 %v179
    %2048 = vmatpush.msra.mxu0 %v171
    %2049 = vmatpush.msra.mxu0 %v163
    %2050 = vmatpush.msra.mxu0 %v155
    %2051 = vmatpush.msra.mxu0 %v147
    %2052 = vmatpush.msra.mxu0 %v139
    %2053 = vmatpush.msra.mxu0 %v131
    %2054 = vmatpush.msra.mxu0 %v123
    %2055 = vmatpush.msra.mxu0 %v115
    %2056 = vmatpush.msra.mxu0 %v107
    %2057 = vmatpush.msra.mxu0 %v99
    %2058 = vmatmul.f32.gmra.mxu0 %v1772
    %v2059 = vpop.f32.mrf.mxu0
    %v2060 = vadd.f32 0.0, %v2059
    %2061 = vdwg.mxu0
    %2062 = vmatpush.msra.mxu0 %v347
    %2063 = vmatpush.msra.mxu0 %v339
    %2064 = vmatpush.msra.mxu0 %v331
    %2065 = vmatpush.msra.mxu0 %v323
    %2066 = vmatpush.msra.mxu0 %v315
    %2067 = vmatpush.msra.mxu0 %v307
    %2068 = vmatpush.msra.mxu0 %v299
    %2069 = vmatpush.msra.mxu0 %v291
    %2070 = vmatpush.msra.mxu0 %v283
    %2071 = vmatpush.msra.mxu0 %v275
    %2072 = vmatpush.msra.mxu0 %v267
    %2073 = vmatpush.msra.mxu0 %v259
    %2074 = vmatpush.msra.mxu0 %v251
    %2075 = vmatpush.msra.mxu0 %v243
    %2076 = vmatpush.msra.mxu0 %v235
    %2077 = vmatpush.msra.mxu0 %v227
    %2078 = vmatmul.f32.gmra.mxu0 %v1835
    %v2079 = vpop.f32.mrf.mxu0
    %v2080 = vadd.f32 %v2060, %v2079
    %2081 = vdwg.mxu0
    %2082 = vmatpush.msra.mxu0 %v220
    %2083 = vmatpush.msra.mxu0 %v212
    %2084 = vmatpush.msra.mxu0 %v204
    %2085 = vmatpush.msra.mxu0 %v196
    %2086 = vmatpush.msra.mxu0 %v188
    %2087 = vmatpush.msra.mxu0 %v180
    %2088 = vmatpush.msra.mxu0 %v172
    %2089 = vmatpush.msra.mxu0 %v164
    %2090 = vmatpush.msra.mxu0 %v156
    %2091 = vmatpush.msra.mxu0 %v148
    %2092 = vmatpush.msra.mxu0 %v140
    %2093 = vmatpush.msra.mxu0 %v132
    %2094 = vmatpush.msra.mxu0 %v124
    %2095 = vmatpush.msra.mxu0 %v116
    %2096 = vmatpush.msra.mxu0 %v108
    %2097 = vmatpush.msra.mxu0 %v100
    %2098 = vmatmul.f32.gmra.mxu0 %v1772
    %v2099 = vpop.f32.mrf.mxu0
    %v2100 = vadd.f32 0.0, %v2099
    %2101 = vdwg.mxu0
    %2102 = vmatpush.msra.mxu0 %v348
    %2103 = vmatpush.msra.mxu0 %v340
    %2104 = vmatpush.msra.mxu0 %v332
    %2105 = vmatpush.msra.mxu0 %v324
    %2106 = vmatpush.msra.mxu0 %v316
    %2107 = vmatpush.msra.mxu0 %v308
    %2108 = vmatpush.msra.mxu0 %v300
    %2109 = vmatpush.msra.mxu0 %v292
    %2110 = vmatpush.msra.mxu0 %v284
    %2111 = vmatpush.msra.mxu0 %v276
    %2112 = vmatpush.msra.mxu0 %v268
    %2113 = vmatpush.msra.mxu0 %v260
    %2114 = vmatpush.msra.mxu0 %v252
    %2115 = vmatpush.msra.mxu0 %v244
    %2116 = vmatpush.msra.mxu0 %v236
    %2117 = vmatpush.msra.mxu0 %v228
    %2118 = vmatmul.f32.gmra.mxu0 %v1835
    %v2119 = vpop.f32.mrf.mxu0
    %v2120 = vadd.f32 %v2100, %v2119
    %2121 = vdwg.mxu0
    %2122 = vmatpush.msra.mxu0 %v221
    %2123 = vmatpush.msra.mxu0 %v213
    %2124 = vmatpush.msra.mxu0 %v205
    %2125 = vmatpush.msra.mxu0 %v197
    %2126 = vmatpush.msra.mxu0 %v189
    %2127 = vmatpush.msra.mxu0 %v181
    %2128 = vmatpush.msra.mxu0 %v173
    %2129 = vmatpush.msra.mxu0 %v165
    %2130 = vmatpush.msra.mxu0 %v157
    %2131 = vmatpush.msra.mxu0 %v149
    %2132 = vmatpush.msra.mxu0 %v141
    %2133 = vmatpush.msra.mxu0 %v133
    %2134 = vmatpush.msra.mxu0 %v125
    %2135 = vmatpush.msra.mxu0 %v117
    %2136 = vmatpush.msra.mxu0 %v109
    %2137 = vmatpush.msra.mxu0 %v101
    %2138 = vmatmul.f32.gmra.mxu0 %v1772
    %v2139 = vpop.f32.mrf.mxu0
    %v2140 = vadd.f32 0.0, %v2139
    %2141 = vdwg.mxu0
    %2142 = vmatpush.msra.mxu0 %v349
    %2143 = vmatpush.msra.mxu0 %v341
    %2144 = vmatpush.msra.mxu0 %v333
    %2145 = vmatpush.msra.mxu0 %v325
    %2146 = vmatpush.msra.mxu0 %v317
    %2147 = vmatpush.msra.mxu0 %v309
    %2148 = vmatpush.msra.mxu0 %v301
    %2149 = vmatpush.msra.mxu0 %v293
    %2150 = vmatpush.msra.mxu0 %v285
    %2151 = vmatpush.msra.mxu0 %v277
    %2152 = vmatpush.msra.mxu0 %v269
    %2153 = vmatpush.msra.mxu0 %v261
    %2154 = vmatpush.msra.mxu0 %v253
    %2155 = vmatpush.msra.mxu0 %v245
    %2156 = vmatpush.msra.mxu0 %v237
    %2157 = vmatpush.msra.mxu0 %v229
    %2158 = vmatmul.f32.gmra.mxu0 %v1835
    %v2159 = vpop.f32.mrf.mxu0
    %v2160 = vadd.f32 %v2140, %v2159
    %2161 = vdwg.mxu0
    %s2162 = scalar_lea.vmem [#allocation7], 3
    %v2163 = vld [vmem:[%s2162] ss:$8 sm:$0xf]
    %s2164 = scalar_lea.vmem [#allocation7], 35
    %v2165 = vld [vmem:[%s2164] ss:$8 sm:$0xf]
    %2168 = vst [vmem:[#allocation1] ss:$9 sm:$0xff] %v2163
    %s2169 = scalar_lea.vmem [#allocation1], 1
    %2170 = vst [vmem:[%s2169] ss:$9 sm:$0xff] %v2165
    %v2171 = vld [vmem:[#allocation1] sm:$0xff]
    %v2172 = vld [vmem:[#allocation1 + $0x9] sm:$0xff]
    %v2173 = vld [vmem:[#allocation1 + $0x12] sm:$0xff]
    %v2174 = vld [vmem:[#allocation1 + $0x1b] sm:$0xff]
    %v2179 = vadd.f32 %v1880, %v2171
    %v2180 = vadd.f32 %v1920, %v2172
    %v2181 = vadd.f32 %v1960, %v2173
    %v2182 = vadd.f32 %v2000, %v2174
    %s2183 = scalar_lea.vmem [#allocation8], 4
    %v2184 = vld [vmem:[%s2183] ss:$8 sm:$0xf]
    %s2185 = scalar_lea.vmem [#allocation8], 36
    %v2186 = vld [vmem:[%s2185] ss:$8 sm:$0xf]
    %2189 = vst [vmem:[#allocation1] ss:$9 sm:$0xff] %v2184
    %s2190 = scalar_lea.vmem [#allocation1], 1
    %2191 = vst [vmem:[%s2190] ss:$9 sm:$0xff] %v2186
    %v2192 = vld [vmem:[#allocation1] sm:$0xff]
    %v2193 = vld [vmem:[#allocation1 + $0x9] sm:$0xff]
    %v2194 = vld [vmem:[#allocation1 + $0x12] sm:$0xff]
    %v2195 = vld [vmem:[#allocation1 + $0x1b] sm:$0xff]
    %v2200 = vadd.f32 %v2040, %v2192
    %v2201 = vadd.f32 %v2080, %v2193
    %v2202 = vadd.f32 %v2120, %v2194
    %v2203 = vadd.f32 %v2160, %v2195
    %v2204 = vxor.u32 %v2179, 2147483648
    %v2205 = vmul.f32 %v2204, 1.442695
    %v2206 = vpow.pop %v2205
    %v2207 = vadd.f32 %v2206, 1.0
    %v2208 = vrcp.pop %v2207
    %v2209 = vmul.f32 %v2207, %v2208
    %v2210 = vsub.f32 1.0, %v2209
    %v2211 = vmul.f32 %v2208, %v2210
    %v2212 = vadd.f32 %v2208, %v2211
    %vm2213 = vweird.f32 %v2207
    %vm2214 = vweird.f32 %v2208
    %vm2215 = vmor %vm2213, %vm2214
    %v2216 = vsel %vm2215, %v2208, %v2212
    %v2217 = vand.u32 2147483647, %v2207
    %vm2218 = vcmp.eq.f32.partialorder %v2217, 8.507059e+37
    %v2219 = vand.u32 %v2207, 2147483648
    %v2220 = vor.u32 1.1754944e-38, %v2219
    %v2221 = vsel %vm2218, %v2220, %v2216
    %v2222 = vmul.f32 1.0, %v2221
    %v2223 = vxor.u32 %v2180, 2147483648
    %v2224 = vmul.f32 %v2223, 1.442695
    %v2225 = vpow.pop %v2224
    %v2226 = vadd.f32 %v2225, 1.0
    %v2227 = vrcp.pop %v2226
    %v2228 = vmul.f32 %v2226, %v2227
    %v2229 = vsub.f32 1.0, %v2228
    %v2230 = vmul.f32 %v2227, %v2229
    %v2231 = vadd.f32 %v2227, %v2230
    %vm2232 = vweird.f32 %v2226
    %vm2233 = vweird.f32 %v2227
    %vm2234 = vmor %vm2232, %vm2233
    %v2235 = vsel %vm2234, %v2227, %v2231
    %v2236 = vand.u32 2147483647, %v2226
    %vm2237 = vcmp.eq.f32.partialorder %v2236, 8.507059e+37
    %v2238 = vand.u32 %v2226, 2147483648
    %v2239 = vor.u32 1.1754944e-38, %v2238
    %v2240 = vsel %vm2237, %v2239, %v2235
    %v2241 = vmul.f32 1.0, %v2240
    %v2242 = vtanh.pop %v2181
    %v2243 = vxor.u32 %v2182, 2147483648
    %v2244 = vmul.f32 %v2243, 1.442695
    %v2245 = vpow.pop %v2244
    %v2246 = vadd.f32 %v2245, 1.0
    %v2247 = vrcp.pop %v2246
    %v2248 = vmul.f32 %v2246, %v2247
    %v2249 = vsub.f32 1.0, %v2248
    %v2250 = vmul.f32 %v2247, %v2249
    %v2251 = vadd.f32 %v2247, %v2250
    %vm2252 = vweird.f32 %v2246
    %vm2253 = vweird.f32 %v2247
    %vm2254 = vmor %vm2252, %vm2253
    %v2255 = vsel %vm2254, %v2247, %v2251
    %v2256 = vand.u32 2147483647, %v2246
    %vm2257 = vcmp.eq.f32.partialorder %v2256, 8.507059e+37
    %v2258 = vand.u32 %v2246, 2147483648
    %v2259 = vor.u32 1.1754944e-38, %v2258
    %v2260 = vsel %vm2257, %v2259, %v2255
    %v2261 = vmul.f32 1.0, %v2260
    %v2262 = vmul.f32 %v2241, %v1770
    %v2263 = vmul.f32 %v2222, %v2242
    %v2264 = vadd.f32 %v2262, %v2263
    %v2265 = vtanh.pop %v2264
    %v2266 = vmul.f32 %v2261, %v2265
    %v2267 = vxor.u32 %v2200, 2147483648
    %v2268 = vmul.f32 %v2267, 1.442695
    %v2269 = vpow.pop %v2268
    %v2270 = vadd.f32 %v2269, 1.0
    %v2271 = vrcp.pop %v2270
    %v2272 = vmul.f32 %v2270, %v2271
    %v2273 = vsub.f32 1.0, %v2272
    %v2274 = vmul.f32 %v2271, %v2273
    %v2275 = vadd.f32 %v2271, %v2274
    %vm2276 = vweird.f32 %v2270
    %vm2277 = vweird.f32 %v2271
    %vm2278 = vmor %vm2276, %vm2277
    %v2279 = vsel %vm2278, %v2271, %v2275
    %v2280 = vand.u32 2147483647, %v2270
    %vm2281 = vcmp.eq.f32.partialorder %v2280, 8.507059e+37
    %v2282 = vand.u32 %v2270, 2147483648
    %v2283 = vor.u32 1.1754944e-38, %v2282
    %v2284 = vsel %vm2281, %v2283, %v2279
    %v2285 = vmul.f32 1.0, %v2284
    %v2286 = vxor.u32 %v2201, 2147483648
    %v2287 = vmul.f32 %v2286, 1.442695
    %v2288 = vpow.pop %v2287
    %v2289 = vadd.f32 %v2288, 1.0
    %v2290 = vrcp.pop %v2289
    %v2291 = vmul.f32 %v2289, %v2290
    %v2292 = vsub.f32 1.0, %v2291
    %v2293 = vmul.f32 %v2290, %v2292
    %v2294 = vadd.f32 %v2290, %v2293
    %vm2295 = vweird.f32 %v2289
    %vm2296 = vweird.f32 %v2290
    %vm2297 = vmor %vm2295, %vm2296
    %v2298 = vsel %vm2297, %v2290, %v2294
    %v2299 = vand.u32 2147483647, %v2289
    %vm2300 = vcmp.eq.f32.partialorder %v2299, 8.507059e+37
    %v2301 = vand.u32 %v2289, 2147483648
    %v2302 = vor.u32 1.1754944e-38, %v2301
    %v2303 = vsel %vm2300, %v2302, %v2298
    %v2304 = vmul.f32 1.0, %v2303
    %v2305 = vtanh.pop %v2202
    %v2306 = vxor.u32 %v2203, 2147483648
    %v2307 = vmul.f32 %v2306, 1.442695
    %v2308 = vpow.pop %v2307
    %v2309 = vadd.f32 %v2308, 1.0
    %v2310 = vrcp.pop %v2309
    %v2311 = vmul.f32 %v2309, %v2310
    %v2312 = vsub.f32 1.0, %v2311
    %v2313 = vmul.f32 %v2310, %v2312
    %v2314 = vadd.f32 %v2310, %v2313
    %vm2315 = vweird.f32 %v2309
    %vm2316 = vweird.f32 %v2310
    %vm2317 = vmor %vm2315, %vm2316
    %v2318 = vsel %vm2317, %v2310, %v2314
    %v2319 = vand.u32 2147483647, %v2309
    %vm2320 = vcmp.eq.f32.partialorder %v2319, 8.507059e+37
    %v2321 = vand.u32 %v2309, 2147483648
    %v2322 = vor.u32 1.1754944e-38, %v2321
    %v2323 = vsel %vm2320, %v2322, %v2318
    %v2324 = vmul.f32 1.0, %v2323
    %v2325 = vmul.f32 %v2304, %v1833
    %v2326 = vmul.f32 %v2285, %v2305
    %v2327 = vadd.f32 %v2325, %v2326
    %v2328 = vtanh.pop %v2327
    %v2329 = vmul.f32 %v2324, %v2328
    %v2332 = vrot.slane %v2329, 6
    %v2333 = vsel %vm850, %v2266, %v2332
    %v2335 = vadd.f32 %v1841, %v2333
    %2336 = vmatpush.msra.mxu0 %v214
    %2337 = vmatpush.msra.mxu0 %v206
    %2338 = vmatpush.msra.mxu0 %v198
    %2339 = vmatpush.msra.mxu0 %v190
    %2340 = vmatpush.msra.mxu0 %v182
    %2341 = vmatpush.msra.mxu0 %v174
    %2342 = vmatpush.msra.mxu0 %v166
    %2343 = vmatpush.msra.mxu0 %v158
    %2344 = vmatpush.msra.mxu0 %v150
    %2345 = vmatpush.msra.mxu0 %v142
    %2346 = vmatpush.msra.mxu0 %v134
    %2347 = vmatpush.msra.mxu0 %v126
    %2348 = vmatpush.msra.mxu0 %v118
    %2349 = vmatpush.msra.mxu0 %v110
    %2350 = vmatpush.msra.mxu0 %v102
    %2351 = vmatpush.msra.mxu0 %v94
    %2352 = vmatmul.f32.gmra.mxu0 %v2266
    %v2353 = vpop.f32.mrf.mxu0
    %v2354 = vadd.f32 0.0, %v2353
    %2355 = vdwg.mxu0
    %2356 = vmatpush.msra.mxu0 %v342
    %2357 = vmatpush.msra.mxu0 %v334
    %2358 = vmatpush.msra.mxu0 %v326
    %2359 = vmatpush.msra.mxu0 %v318
    %2360 = vmatpush.msra.mxu0 %v310
    %2361 = vmatpush.msra.mxu0 %v302
    %2362 = vmatpush.msra.mxu0 %v294
    %2363 = vmatpush.msra.mxu0 %v286
    %2364 = vmatpush.msra.mxu0 %v278
    %2365 = vmatpush.msra.mxu0 %v270
    %2366 = vmatpush.msra.mxu0 %v262
    %2367 = vmatpush.msra.mxu0 %v254
    %2368 = vmatpush.msra.mxu0 %v246
    %2369 = vmatpush.msra.mxu0 %v238
    %2370 = vmatpush.msra.mxu0 %v230
    %2371 = vmatpush.msra.mxu0 %v222
    %2372 = vmatmul.f32.gmra.mxu0 %v2329
    %v2373 = vpop.f32.mrf.mxu0
    %v2374 = vadd.f32 %v2354, %v2373
    %2375 = vdwg.mxu0
    %2376 = vmatpush.msra.mxu0 %v215
    %2377 = vmatpush.msra.mxu0 %v207
    %2378 = vmatpush.msra.mxu0 %v199
    %2379 = vmatpush.msra.mxu0 %v191
    %2380 = vmatpush.msra.mxu0 %v183
    %2381 = vmatpush.msra.mxu0 %v175
    %2382 = vmatpush.msra.mxu0 %v167
    %2383 = vmatpush.msra.mxu0 %v159
    %2384 = vmatpush.msra.mxu0 %v151
    %2385 = vmatpush.msra.mxu0 %v143
    %2386 = vmatpush.msra.mxu0 %v135
    %2387 = vmatpush.msra.mxu0 %v127
    %2388 = vmatpush.msra.mxu0 %v119
    %2389 = vmatpush.msra.mxu0 %v111
    %2390 = vmatpush.msra.mxu0 %v103
    %2391 = vmatpush.msra.mxu0 %v95
    %2392 = vmatmul.f32.gmra.mxu0 %v2266
    %v2393 = vpop.f32.mrf.mxu0
    %v2394 = vadd.f32 0.0, %v2393
    %2395 = vdwg.mxu0
    %2396 = vmatpush.msra.mxu0 %v343
    %2397 = vmatpush.msra.mxu0 %v335
    %2398 = vmatpush.msra.mxu0 %v327
    %2399 = vmatpush.msra.mxu0 %v319
    %2400 = vmatpush.msra.mxu0 %v311
    %2401 = vmatpush.msra.mxu0 %v303
    %2402 = vmatpush.msra.mxu0 %v295
    %2403 = vmatpush.msra.mxu0 %v287
    %2404 = vmatpush.msra.mxu0 %v279
    %2405 = vmatpush.msra.mxu0 %v271
    %2406 = vmatpush.msra.mxu0 %v263
    %2407 = vmatpush.msra.mxu0 %v255
    %2408 = vmatpush.msra.mxu0 %v247
    %2409 = vmatpush.msra.mxu0 %v239
    %2410 = vmatpush.msra.mxu0 %v231
    %2411 = vmatpush.msra.mxu0 %v223
    %2412 = vmatmul.f32.gmra.mxu0 %v2329
    %v2413 = vpop.f32.mrf.mxu0
    %v2414 = vadd.f32 %v2394, %v2413
    %2415 = vdwg.mxu0
    %2416 = vmatpush.msra.mxu0 %v216
    %2417 = vmatpush.msra.mxu0 %v208
    %2418 = vmatpush.msra.mxu0 %v200
    %2419 = vmatpush.msra.mxu0 %v192
    %2420 = vmatpush.msra.mxu0 %v184
    %2421 = vmatpush.msra.mxu0 %v176
    %2422 = vmatpush.msra.mxu0 %v168
    %2423 = vmatpush.msra.mxu0 %v160
    %2424 = vmatpush.msra.mxu0 %v152
    %2425 = vmatpush.msra.mxu0 %v144
    %2426 = vmatpush.msra.mxu0 %v136
    %2427 = vmatpush.msra.mxu0 %v128
    %2428 = vmatpush.msra.mxu0 %v120
    %2429 = vmatpush.msra.mxu0 %v112
    %2430 = vmatpush.msra.mxu0 %v104
    %2431 = vmatpush.msra.mxu0 %v96
    %2432 = vmatmul.f32.gmra.mxu0 %v2266
    %v2433 = vpop.f32.mrf.mxu0
    %v2434 = vadd.f32 0.0, %v2433
    %2435 = vdwg.mxu0
    %2436 = vmatpush.msra.mxu0 %v344
    %2437 = vmatpush.msra.mxu0 %v336
    %2438 = vmatpush.msra.mxu0 %v328
    %2439 = vmatpush.msra.mxu0 %v320
    %2440 = vmatpush.msra.mxu0 %v312
    %2441 = vmatpush.msra.mxu0 %v304
    %2442 = vmatpush.msra.mxu0 %v296
    %2443 = vmatpush.msra.mxu0 %v288
    %2444 = vmatpush.msra.mxu0 %v280
    %2445 = vmatpush.msra.mxu0 %v272
    %2446 = vmatpush.msra.mxu0 %v264
    %2447 = vmatpush.msra.mxu0 %v256
    %2448 = vmatpush.msra.mxu0 %v248
    %2449 = vmatpush.msra.mxu0 %v240
    %2450 = vmatpush.msra.mxu0 %v232
    %2451 = vmatpush.msra.mxu0 %v224
    %2452 = vmatmul.f32.gmra.mxu0 %v2329
    %v2453 = vpop.f32.mrf.mxu0
    %v2454 = vadd.f32 %v2434, %v2453
    %2455 = vdwg.mxu0
    %2456 = vmatpush.msra.mxu0 %v217
    %2457 = vmatpush.msra.mxu0 %v209
    %2458 = vmatpush.msra.mxu0 %v201
    %2459 = vmatpush.msra.mxu0 %v193
    %2460 = vmatpush.msra.mxu0 %v185
    %2461 = vmatpush.msra.mxu0 %v177
    %2462 = vmatpush.msra.mxu0 %v169
    %2463 = vmatpush.msra.mxu0 %v161
    %2464 = vmatpush.msra.mxu0 %v153
    %2465 = vmatpush.msra.mxu0 %v145
    %2466 = vmatpush.msra.mxu0 %v137
    %2467 = vmatpush.msra.mxu0 %v129
    %2468 = vmatpush.msra.mxu0 %v121
    %2469 = vmatpush.msra.mxu0 %v113
    %2470 = vmatpush.msra.mxu0 %v105
    %2471 = vmatpush.msra.mxu0 %v97
    %2472 = vmatmul.f32.gmra.mxu0 %v2266
    %v2473 = vpop.f32.mrf.mxu0
    %v2474 = vadd.f32 0.0, %v2473
    %2475 = vdwg.mxu0
    %2476 = vmatpush.msra.mxu0 %v345
    %2477 = vmatpush.msra.mxu0 %v337
    %2478 = vmatpush.msra.mxu0 %v329
    %2479 = vmatpush.msra.mxu0 %v321
    %2480 = vmatpush.msra.mxu0 %v313
    %2481 = vmatpush.msra.mxu0 %v305
    %2482 = vmatpush.msra.mxu0 %v297
    %2483 = vmatpush.msra.mxu0 %v289
    %2484 = vmatpush.msra.mxu0 %v281
    %2485 = vmatpush.msra.mxu0 %v273
    %2486 = vmatpush.msra.mxu0 %v265
    %2487 = vmatpush.msra.mxu0 %v257
    %2488 = vmatpush.msra.mxu0 %v249
    %2489 = vmatpush.msra.mxu0 %v241
    %2490 = vmatpush.msra.mxu0 %v233
    %2491 = vmatpush.msra.mxu0 %v225
    %2492 = vmatmul.f32.gmra.mxu0 %v2329
    %v2493 = vpop.f32.mrf.mxu0
    %v2494 = vadd.f32 %v2474, %v2493
    %2495 = vdwg.mxu0
    %2496 = vmatpush.msra.mxu0 %v218
    %2497 = vmatpush.msra.mxu0 %v210
    %2498 = vmatpush.msra.mxu0 %v202
    %2499 = vmatpush.msra.mxu0 %v194
    %2500 = vmatpush.msra.mxu0 %v186
    %2501 = vmatpush.msra.mxu0 %v178
    %2502 = vmatpush.msra.mxu0 %v170
    %2503 = vmatpush.msra.mxu0 %v162
    %2504 = vmatpush.msra.mxu0 %v154
    %2505 = vmatpush.msra.mxu0 %v146
    %2506 = vmatpush.msra.mxu0 %v138
    %2507 = vmatpush.msra.mxu0 %v130
    %2508 = vmatpush.msra.mxu0 %v122
    %2509 = vmatpush.msra.mxu0 %v114
    %2510 = vmatpush.msra.mxu0 %v106
    %2511 = vmatpush.msra.mxu0 %v98
    %2512 = vmatmul.f32.gmra.mxu0 %v2266
    %v2513 = vpop.f32.mrf.mxu0
    %v2514 = vadd.f32 0.0, %v2513
    %2515 = vdwg.mxu0
    %2516 = vmatpush.msra.mxu0 %v346
    %2517 = vmatpush.msra.mxu0 %v338
    %2518 = vmatpush.msra.mxu0 %v330
    %2519 = vmatpush.msra.mxu0 %v322
    %2520 = vmatpush.msra.mxu0 %v314
    %2521 = vmatpush.msra.mxu0 %v306
    %2522 = vmatpush.msra.mxu0 %v298
    %2523 = vmatpush.msra.mxu0 %v290
    %2524 = vmatpush.msra.mxu0 %v282
    %2525 = vmatpush.msra.mxu0 %v274
    %2526 = vmatpush.msra.mxu0 %v266
    %2527 = vmatpush.msra.mxu0 %v258
    %2528 = vmatpush.msra.mxu0 %v250
    %2529 = vmatpush.msra.mxu0 %v242
    %2530 = vmatpush.msra.mxu0 %v234
    %2531 = vmatpush.msra.mxu0 %v226
    %2532 = vmatmul.f32.gmra.mxu0 %v2329
    %v2533 = vpop.f32.mrf.mxu0
    %v2534 = vadd.f32 %v2514, %v2533
    %2535 = vdwg.mxu0
    %2536 = vmatpush.msra.mxu0 %v219
    %2537 = vmatpush.msra.mxu0 %v211
    %2538 = vmatpush.msra.mxu0 %v203
    %2539 = vmatpush.msra.mxu0 %v195
    %2540 = vmatpush.msra.mxu0 %v187
    %2541 = vmatpush.msra.mxu0 %v179
    %2542 = vmatpush.msra.mxu0 %v171
    %2543 = vmatpush.msra.mxu0 %v163
    %2544 = vmatpush.msra.mxu0 %v155
    %2545 = vmatpush.msra.mxu0 %v147
    %2546 = vmatpush.msra.mxu0 %v139
    %2547 = vmatpush.msra.mxu0 %v131
    %2548 = vmatpush.msra.mxu0 %v123
    %2549 = vmatpush.msra.mxu0 %v115
    %2550 = vmatpush.msra.mxu0 %v107
    %2551 = vmatpush.msra.mxu0 %v99
    %2552 = vmatmul.f32.gmra.mxu0 %v2266
    %v2553 = vpop.f32.mrf.mxu0
    %v2554 = vadd.f32 0.0, %v2553
    %2555 = vdwg.mxu0
    %2556 = vmatpush.msra.mxu0 %v347
    %2557 = vmatpush.msra.mxu0 %v339
    %2558 = vmatpush.msra.mxu0 %v331
    %2559 = vmatpush.msra.mxu0 %v323
    %2560 = vmatpush.msra.mxu0 %v315
    %2561 = vmatpush.msra.mxu0 %v307
    %2562 = vmatpush.msra.mxu0 %v299
    %2563 = vmatpush.msra.mxu0 %v291
    %2564 = vmatpush.msra.mxu0 %v283
    %2565 = vmatpush.msra.mxu0 %v275
    %2566 = vmatpush.msra.mxu0 %v267
    %2567 = vmatpush.msra.mxu0 %v259
    %2568 = vmatpush.msra.mxu0 %v251
    %2569 = vmatpush.msra.mxu0 %v243
    %2570 = vmatpush.msra.mxu0 %v235
    %2571 = vmatpush.msra.mxu0 %v227
    %2572 = vmatmul.f32.gmra.mxu0 %v2329
    %v2573 = vpop.f32.mrf.mxu0
    %v2574 = vadd.f32 %v2554, %v2573
    %2575 = vdwg.mxu0
    %2576 = vmatpush.msra.mxu0 %v220
    %2577 = vmatpush.msra.mxu0 %v212
    %2578 = vmatpush.msra.mxu0 %v204
    %2579 = vmatpush.msra.mxu0 %v196
    %2580 = vmatpush.msra.mxu0 %v188
    %2581 = vmatpush.msra.mxu0 %v180
    %2582 = vmatpush.msra.mxu0 %v172
    %2583 = vmatpush.msra.mxu0 %v164
    %2584 = vmatpush.msra.mxu0 %v156
    %2585 = vmatpush.msra.mxu0 %v148
    %2586 = vmatpush.msra.mxu0 %v140
    %2587 = vmatpush.msra.mxu0 %v132
    %2588 = vmatpush.msra.mxu0 %v124
    %2589 = vmatpush.msra.mxu0 %v116
    %2590 = vmatpush.msra.mxu0 %v108
    %2591 = vmatpush.msra.mxu0 %v100
    %2592 = vmatmul.f32.gmra.mxu0 %v2266
    %v2593 = vpop.f32.mrf.mxu0
    %v2594 = vadd.f32 0.0, %v2593
    %2595 = vdwg.mxu0
    %2596 = vmatpush.msra.mxu0 %v348
    %2597 = vmatpush.msra.mxu0 %v340
    %2598 = vmatpush.msra.mxu0 %v332
    %2599 = vmatpush.msra.mxu0 %v324
    %2600 = vmatpush.msra.mxu0 %v316
    %2601 = vmatpush.msra.mxu0 %v308
    %2602 = vmatpush.msra.mxu0 %v300
    %2603 = vmatpush.msra.mxu0 %v292
    %2604 = vmatpush.msra.mxu0 %v284
    %2605 = vmatpush.msra.mxu0 %v276
    %2606 = vmatpush.msra.mxu0 %v268
    %2607 = vmatpush.msra.mxu0 %v260
    %2608 = vmatpush.msra.mxu0 %v252
    %2609 = vmatpush.msra.mxu0 %v244
    %2610 = vmatpush.msra.mxu0 %v236
    %2611 = vmatpush.msra.mxu0 %v228
    %2612 = vmatmul.f32.gmra.mxu0 %v2329
    %v2613 = vpop.f32.mrf.mxu0
    %v2614 = vadd.f32 %v2594, %v2613
    %2615 = vdwg.mxu0
    %2616 = vmatpush.msra.mxu0 %v221
    %2617 = vmatpush.msra.mxu0 %v213
    %2618 = vmatpush.msra.mxu0 %v205
    %2619 = vmatpush.msra.mxu0 %v197
    %2620 = vmatpush.msra.mxu0 %v189
    %2621 = vmatpush.msra.mxu0 %v181
    %2622 = vmatpush.msra.mxu0 %v173
    %2623 = vmatpush.msra.mxu0 %v165
    %2624 = vmatpush.msra.mxu0 %v157
    %2625 = vmatpush.msra.mxu0 %v149
    %2626 = vmatpush.msra.mxu0 %v141
    %2627 = vmatpush.msra.mxu0 %v133
    %2628 = vmatpush.msra.mxu0 %v125
    %2629 = vmatpush.msra.mxu0 %v117
    %2630 = vmatpush.msra.mxu0 %v109
    %2631 = vmatpush.msra.mxu0 %v101
    %2632 = vmatmul.f32.gmra.mxu0 %v2266
    %v2633 = vpop.f32.mrf.mxu0
    %v2634 = vadd.f32 0.0, %v2633
    %2635 = vdwg.mxu0
    %2636 = vmatpush.msra.mxu0 %v349
    %2637 = vmatpush.msra.mxu0 %v341
    %2638 = vmatpush.msra.mxu0 %v333
    %2639 = vmatpush.msra.mxu0 %v325
    %2640 = vmatpush.msra.mxu0 %v317
    %2641 = vmatpush.msra.mxu0 %v309
    %2642 = vmatpush.msra.mxu0 %v301
    %2643 = vmatpush.msra.mxu0 %v293
    %2644 = vmatpush.msra.mxu0 %v285
    %2645 = vmatpush.msra.mxu0 %v277
    %2646 = vmatpush.msra.mxu0 %v269
    %2647 = vmatpush.msra.mxu0 %v261
    %2648 = vmatpush.msra.mxu0 %v253
    %2649 = vmatpush.msra.mxu0 %v245
    %2650 = vmatpush.msra.mxu0 %v237
    %2651 = vmatpush.msra.mxu0 %v229
    %2652 = vmatmul.f32.gmra.mxu0 %v2329
    %v2653 = vpop.f32.mrf.mxu0
    %v2654 = vadd.f32 %v2634, %v2653
    %2655 = vdwg.mxu0
    %s2656 = scalar_lea.vmem [#allocation7], 4
    %v2657 = vld [vmem:[%s2656] ss:$8 sm:$0xf]
    %s2658 = scalar_lea.vmem [#allocation7], 36
    %v2659 = vld [vmem:[%s2658] ss:$8 sm:$0xf]
    %2662 = vst [vmem:[#allocation1] ss:$9 sm:$0xff] %v2657
    %s2663 = scalar_lea.vmem [#allocation1], 1
    %2664 = vst [vmem:[%s2663] ss:$9 sm:$0xff] %v2659
    %v2665 = vld [vmem:[#allocation1] sm:$0xff]
    %v2666 = vld [vmem:[#allocation1 + $0x9] sm:$0xff]
    %v2667 = vld [vmem:[#allocation1 + $0x12] sm:$0xff]
    %v2668 = vld [vmem:[#allocation1 + $0x1b] sm:$0xff]
    %v2673 = vadd.f32 %v2374, %v2665
    %v2674 = vadd.f32 %v2414, %v2666
    %v2675 = vadd.f32 %v2454, %v2667
    %v2676 = vadd.f32 %v2494, %v2668
    %s2677 = scalar_lea.vmem [#allocation8], 3
    %v2678 = vld [vmem:[%s2677] ss:$8 sm:$0xf]
    %s2679 = scalar_lea.vmem [#allocation8], 35
    %v2680 = vld [vmem:[%s2679] ss:$8 sm:$0xf]
    %2683 = vst [vmem:[#allocation1] ss:$9 sm:$0xff] %v2678
    %s2684 = scalar_lea.vmem [#allocation1], 1
    %2685 = vst [vmem:[%s2684] ss:$9 sm:$0xff] %v2680
    %v2686 = vld [vmem:[#allocation1] sm:$0xff]
    %v2687 = vld [vmem:[#allocation1 + $0x9] sm:$0xff]
    %v2688 = vld [vmem:[#allocation1 + $0x12] sm:$0xff]
    %v2689 = vld [vmem:[#allocation1 + $0x1b] sm:$0xff]
    %v2694 = vadd.f32 %v2534, %v2686
    %v2695 = vadd.f32 %v2574, %v2687
    %v2696 = vadd.f32 %v2614, %v2688
    %v2697 = vadd.f32 %v2654, %v2689
    %v2698 = vxor.u32 %v2673, 2147483648
    %v2699 = vmul.f32 %v2698, 1.442695
    %v2700 = vpow.pop %v2699
    %v2701 = vadd.f32 %v2700, 1.0
    %v2702 = vrcp.pop %v2701
    %v2703 = vmul.f32 %v2701, %v2702
    %v2704 = vsub.f32 1.0, %v2703
    %v2705 = vmul.f32 %v2702, %v2704
    %v2706 = vadd.f32 %v2702, %v2705
    %vm2707 = vweird.f32 %v2701
    %vm2708 = vweird.f32 %v2702
    %vm2709 = vmor %vm2707, %vm2708
    %v2710 = vsel %vm2709, %v2702, %v2706
    %v2711 = vand.u32 2147483647, %v2701
    %vm2712 = vcmp.eq.f32.partialorder %v2711, 8.507059e+37
    %v2713 = vand.u32 %v2701, 2147483648
    %v2714 = vor.u32 1.1754944e-38, %v2713
    %v2715 = vsel %vm2712, %v2714, %v2710
    %v2716 = vmul.f32 1.0, %v2715
    %v2717 = vxor.u32 %v2674, 2147483648
    %v2718 = vmul.f32 %v2717, 1.442695
    %v2719 = vpow.pop %v2718
    %v2720 = vadd.f32 %v2719, 1.0
    %v2721 = vrcp.pop %v2720
    %v2722 = vmul.f32 %v2720, %v2721
    %v2723 = vsub.f32 1.0, %v2722
    %v2724 = vmul.f32 %v2721, %v2723
    %v2725 = vadd.f32 %v2721, %v2724
    %vm2726 = vweird.f32 %v2720
    %vm2727 = vweird.f32 %v2721
    %vm2728 = vmor %vm2726, %vm2727
    %v2729 = vsel %vm2728, %v2721, %v2725
    %v2730 = vand.u32 2147483647, %v2720
    %vm2731 = vcmp.eq.f32.partialorder %v2730, 8.507059e+37
    %v2732 = vand.u32 %v2720, 2147483648
    %v2733 = vor.u32 1.1754944e-38, %v2732
    %v2734 = vsel %vm2731, %v2733, %v2729
    %v2735 = vmul.f32 1.0, %v2734
    %v2736 = vtanh.pop %v2675
    %v2737 = vxor.u32 %v2676, 2147483648
    %v2738 = vmul.f32 %v2737, 1.442695
    %v2739 = vpow.pop %v2738
    %v2740 = vadd.f32 %v2739, 1.0
    %v2741 = vrcp.pop %v2740
    %v2742 = vmul.f32 %v2740, %v2741
    %v2743 = vsub.f32 1.0, %v2742
    %v2744 = vmul.f32 %v2741, %v2743
    %v2745 = vadd.f32 %v2741, %v2744
    %vm2746 = vweird.f32 %v2740
    %vm2747 = vweird.f32 %v2741
    %vm2748 = vmor %vm2746, %vm2747
    %v2749 = vsel %vm2748, %v2741, %v2745
    %v2750 = vand.u32 2147483647, %v2740
    %vm2751 = vcmp.eq.f32.partialorder %v2750, 8.507059e+37
    %v2752 = vand.u32 %v2740, 2147483648
    %v2753 = vor.u32 1.1754944e-38, %v2752
    %v2754 = vsel %vm2751, %v2753, %v2749
    %v2755 = vmul.f32 1.0, %v2754
    %v2756 = vmul.f32 %v2735, %v2264
    %v2757 = vmul.f32 %v2716, %v2736
    %v2758 = vadd.f32 %v2756, %v2757
    %v2759 = vtanh.pop %v2758
    %v2760 = vmul.f32 %v2755, %v2759
    %v2761 = vxor.u32 %v2694, 2147483648
    %v2762 = vmul.f32 %v2761, 1.442695
    %v2763 = vpow.pop %v2762
    %v2764 = vadd.f32 %v2763, 1.0
    %v2765 = vrcp.pop %v2764
    %v2766 = vmul.f32 %v2764, %v2765
    %v2767 = vsub.f32 1.0, %v2766
    %v2768 = vmul.f32 %v2765, %v2767
    %v2769 = vadd.f32 %v2765, %v2768
    %vm2770 = vweird.f32 %v2764
    %vm2771 = vweird.f32 %v2765
    %vm2772 = vmor %vm2770, %vm2771
    %v2773 = vsel %vm2772, %v2765, %v2769
    %v2774 = vand.u32 2147483647, %v2764
    %vm2775 = vcmp.eq.f32.partialorder %v2774, 8.507059e+37
    %v2776 = vand.u32 %v2764, 2147483648
    %v2777 = vor.u32 1.1754944e-38, %v2776
    %v2778 = vsel %vm2775, %v2777, %v2773
    %v2779 = vmul.f32 1.0, %v2778
    %v2780 = vxor.u32 %v2695, 2147483648
    %v2781 = vmul.f32 %v2780, 1.442695
    %v2782 = vpow.pop %v2781
    %v2783 = vadd.f32 %v2782, 1.0
    %v2784 = vrcp.pop %v2783
    %v2785 = vmul.f32 %v2783, %v2784
    %v2786 = vsub.f32 1.0, %v2785
    %v2787 = vmul.f32 %v2784, %v2786
    %v2788 = vadd.f32 %v2784, %v2787
    %vm2789 = vweird.f32 %v2783
    %vm2790 = vweird.f32 %v2784
    %vm2791 = vmor %vm2789, %vm2790
    %v2792 = vsel %vm2791, %v2784, %v2788
    %v2793 = vand.u32 2147483647, %v2783
    %vm2794 = vcmp.eq.f32.partialorder %v2793, 8.507059e+37
    %v2795 = vand.u32 %v2783, 2147483648
    %v2796 = vor.u32 1.1754944e-38, %v2795
    %v2797 = vsel %vm2794, %v2796, %v2792
    %v2798 = vmul.f32 1.0, %v2797
    %v2799 = vtanh.pop %v2696
    %v2800 = vxor.u32 %v2697, 2147483648
    %v2801 = vmul.f32 %v2800, 1.442695
    %v2802 = vpow.pop %v2801
    %v2803 = vadd.f32 %v2802, 1.0
    %v2804 = vrcp.pop %v2803
    %v2805 = vmul.f32 %v2803, %v2804
    %v2806 = vsub.f32 1.0, %v2805
    %v2807 = vmul.f32 %v2804, %v2806
    %v2808 = vadd.f32 %v2804, %v2807
    %vm2809 = vweird.f32 %v2803
    %vm2810 = vweird.f32 %v2804
    %vm2811 = vmor %vm2809, %vm2810
    %v2812 = vsel %vm2811, %v2804, %v2808
    %v2813 = vand.u32 2147483647, %v2803
    %vm2814 = vcmp.eq.f32.partialorder %v2813, 8.507059e+37
    %v2815 = vand.u32 %v2803, 2147483648
    %v2816 = vor.u32 1.1754944e-38, %v2815
    %v2817 = vsel %vm2814, %v2816, %v2812
    %v2818 = vmul.f32 1.0, %v2817
    %v2819 = vmul.f32 %v2798, %v2327
    %v2820 = vmul.f32 %v2779, %v2799
    %v2821 = vadd.f32 %v2819, %v2820
    %v2822 = vtanh.pop %v2821
    %v2823 = vmul.f32 %v2818, %v2822
    %v2826 = vrot.slane %v2823, 6
    %v2827 = vsel %vm850, %v2760, %v2826
    %v2829 = vadd.f32 %v2335, %v2827
    %2830 = vmatpush.msra.mxu0 %v214
    %2831 = vmatpush.msra.mxu0 %v206
    %2832 = vmatpush.msra.mxu0 %v198
    %2833 = vmatpush.msra.mxu0 %v190
    %2834 = vmatpush.msra.mxu0 %v182
    %2835 = vmatpush.msra.mxu0 %v174
    %2836 = vmatpush.msra.mxu0 %v166
    %2837 = vmatpush.msra.mxu0 %v158
    %2838 = vmatpush.msra.mxu0 %v150
    %2839 = vmatpush.msra.mxu0 %v142
    %2840 = vmatpush.msra.mxu0 %v134
    %2841 = vmatpush.msra.mxu0 %v126
    %2842 = vmatpush.msra.mxu0 %v118
    %2843 = vmatpush.msra.mxu0 %v110
    %2844 = vmatpush.msra.mxu0 %v102
    %2845 = vmatpush.msra.mxu0 %v94
    %2846 = vmatmul.f32.gmra.mxu0 %v2760
    %v2847 = vpop.f32.mrf.mxu0
    %v2848 = vadd.f32 0.0, %v2847
    %2849 = vdwg.mxu0
    %2850 = vmatpush.msra.mxu0 %v342
    %2851 = vmatpush.msra.mxu0 %v334
    %2852 = vmatpush.msra.mxu0 %v326
    %2853 = vmatpush.msra.mxu0 %v318
    %2854 = vmatpush.msra.mxu0 %v310
    %2855 = vmatpush.msra.mxu0 %v302
    %2856 = vmatpush.msra.mxu0 %v294
    %2857 = vmatpush.msra.mxu0 %v286
    %2858 = vmatpush.msra.mxu0 %v278
    %2859 = vmatpush.msra.mxu0 %v270
    %2860 = vmatpush.msra.mxu0 %v262
    %2861 = vmatpush.msra.mxu0 %v254
    %2862 = vmatpush.msra.mxu0 %v246
    %2863 = vmatpush.msra.mxu0 %v238
    %2864 = vmatpush.msra.mxu0 %v230
    %2865 = vmatpush.msra.mxu0 %v222
    %2866 = vmatmul.f32.gmra.mxu0 %v2823
    %v2867 = vpop.f32.mrf.mxu0
    %v2868 = vadd.f32 %v2848, %v2867
    %2869 = vdwg.mxu0
    %2870 = vmatpush.msra.mxu0 %v215
    %2871 = vmatpush.msra.mxu0 %v207
    %2872 = vmatpush.msra.mxu0 %v199
    %2873 = vmatpush.msra.mxu0 %v191
    %2874 = vmatpush.msra.mxu0 %v183
    %2875 = vmatpush.msra.mxu0 %v175
    %2876 = vmatpush.msra.mxu0 %v167
    %2877 = vmatpush.msra.mxu0 %v159
    %2878 = vmatpush.msra.mxu0 %v151
    %2879 = vmatpush.msra.mxu0 %v143
    %2880 = vmatpush.msra.mxu0 %v135
    %2881 = vmatpush.msra.mxu0 %v127
    %2882 = vmatpush.msra.mxu0 %v119
    %2883 = vmatpush.msra.mxu0 %v111
    %2884 = vmatpush.msra.mxu0 %v103
    %2885 = vmatpush.msra.mxu0 %v95
    %2886 = vmatmul.f32.gmra.mxu0 %v2760
    %v2887 = vpop.f32.mrf.mxu0
    %v2888 = vadd.f32 0.0, %v2887
    %2889 = vdwg.mxu0
    %2890 = vmatpush.msra.mxu0 %v343
    %2891 = vmatpush.msra.mxu0 %v335
    %2892 = vmatpush.msra.mxu0 %v327
    %2893 = vmatpush.msra.mxu0 %v319
    %2894 = vmatpush.msra.mxu0 %v311
    %2895 = vmatpush.msra.mxu0 %v303
    %2896 = vmatpush.msra.mxu0 %v295
    %2897 = vmatpush.msra.mxu0 %v287
    %2898 = vmatpush.msra.mxu0 %v279
    %2899 = vmatpush.msra.mxu0 %v271
    %2900 = vmatpush.msra.mxu0 %v263
    %2901 = vmatpush.msra.mxu0 %v255
    %2902 = vmatpush.msra.mxu0 %v247
    %2903 = vmatpush.msra.mxu0 %v239
    %2904 = vmatpush.msra.mxu0 %v231
    %2905 = vmatpush.msra.mxu0 %v223
    %2906 = vmatmul.f32.gmra.mxu0 %v2823
    %v2907 = vpop.f32.mrf.mxu0
    %v2908 = vadd.f32 %v2888, %v2907
    %2909 = vdwg.mxu0
    %2910 = vmatpush.msra.mxu0 %v216
    %2911 = vmatpush.msra.mxu0 %v208
    %2912 = vmatpush.msra.mxu0 %v200
    %2913 = vmatpush.msra.mxu0 %v192
    %2914 = vmatpush.msra.mxu0 %v184
    %2915 = vmatpush.msra.mxu0 %v176
    %2916 = vmatpush.msra.mxu0 %v168
    %2917 = vmatpush.msra.mxu0 %v160
    %2918 = vmatpush.msra.mxu0 %v152
    %2919 = vmatpush.msra.mxu0 %v144
    %2920 = vmatpush.msra.mxu0 %v136
    %2921 = vmatpush.msra.mxu0 %v128
    %2922 = vmatpush.msra.mxu0 %v120
    %2923 = vmatpush.msra.mxu0 %v112
    %2924 = vmatpush.msra.mxu0 %v104
    %2925 = vmatpush.msra.mxu0 %v96
    %2926 = vmatmul.f32.gmra.mxu0 %v2760
    %v2927 = vpop.f32.mrf.mxu0
    %v2928 = vadd.f32 0.0, %v2927
    %2929 = vdwg.mxu0
    %2930 = vmatpush.msra.mxu0 %v344
    %2931 = vmatpush.msra.mxu0 %v336
    %2932 = vmatpush.msra.mxu0 %v328
    %2933 = vmatpush.msra.mxu0 %v320
    %2934 = vmatpush.msra.mxu0 %v312
    %2935 = vmatpush.msra.mxu0 %v304
    %2936 = vmatpush.msra.mxu0 %v296
    %2937 = vmatpush.msra.mxu0 %v288
    %2938 = vmatpush.msra.mxu0 %v280
    %2939 = vmatpush.msra.mxu0 %v272
    %2940 = vmatpush.msra.mxu0 %v264
    %2941 = vmatpush.msra.mxu0 %v256
    %2942 = vmatpush.msra.mxu0 %v248
    %2943 = vmatpush.msra.mxu0 %v240
    %2944 = vmatpush.msra.mxu0 %v232
    %2945 = vmatpush.msra.mxu0 %v224
    %2946 = vmatmul.f32.gmra.mxu0 %v2823
    %v2947 = vpop.f32.mrf.mxu0
    %v2948 = vadd.f32 %v2928, %v2947
    %2949 = vdwg.mxu0
    %2950 = vmatpush.msra.mxu0 %v217
    %2951 = vmatpush.msra.mxu0 %v209
    %2952 = vmatpush.msra.mxu0 %v201
    %2953 = vmatpush.msra.mxu0 %v193
    %2954 = vmatpush.msra.mxu0 %v185
    %2955 = vmatpush.msra.mxu0 %v177
    %2956 = vmatpush.msra.mxu0 %v169
    %2957 = vmatpush.msra.mxu0 %v161
    %2958 = vmatpush.msra.mxu0 %v153
    %2959 = vmatpush.msra.mxu0 %v145
    %2960 = vmatpush.msra.mxu0 %v137
    %2961 = vmatpush.msra.mxu0 %v129
    %2962 = vmatpush.msra.mxu0 %v121
    %2963 = vmatpush.msra.mxu0 %v113
    %2964 = vmatpush.msra.mxu0 %v105
    %2965 = vmatpush.msra.mxu0 %v97
    %2966 = vmatmul.f32.gmra.mxu0 %v2760
    %v2967 = vpop.f32.mrf.mxu0
    %v2968 = vadd.f32 0.0, %v2967
    %2969 = vdwg.mxu0
    %2970 = vmatpush.msra.mxu0 %v345
    %2971 = vmatpush.msra.mxu0 %v337
    %2972 = vmatpush.msra.mxu0 %v329
    %2973 = vmatpush.msra.mxu0 %v321
    %2974 = vmatpush.msra.mxu0 %v313
    %2975 = vmatpush.msra.mxu0 %v305
    %2976 = vmatpush.msra.mxu0 %v297
    %2977 = vmatpush.msra.mxu0 %v289
    %2978 = vmatpush.msra.mxu0 %v281
    %2979 = vmatpush.msra.mxu0 %v273
    %2980 = vmatpush.msra.mxu0 %v265
    %2981 = vmatpush.msra.mxu0 %v257
    %2982 = vmatpush.msra.mxu0 %v249
    %2983 = vmatpush.msra.mxu0 %v241
    %2984 = vmatpush.msra.mxu0 %v233
    %2985 = vmatpush.msra.mxu0 %v225
    %2986 = vmatmul.f32.gmra.mxu0 %v2823
    %v2987 = vpop.f32.mrf.mxu0
    %v2988 = vadd.f32 %v2968, %v2987
    %2989 = vdwg.mxu0
    %2990 = vmatpush.msra.mxu0 %v218
    %2991 = vmatpush.msra.mxu0 %v210
    %2992 = vmatpush.msra.mxu0 %v202
    %2993 = vmatpush.msra.mxu0 %v194
    %2994 = vmatpush.msra.mxu0 %v186
    %2995 = vmatpush.msra.mxu0 %v178
    %2996 = vmatpush.msra.mxu0 %v170
    %2997 = vmatpush.msra.mxu0 %v162
    %2998 = vmatpush.msra.mxu0 %v154
    %2999 = vmatpush.msra.mxu0 %v146
    %3000 = vmatpush.msra.mxu0 %v138
    %3001 = vmatpush.msra.mxu0 %v130
    %3002 = vmatpush.msra.mxu0 %v122
    %3003 = vmatpush.msra.mxu0 %v114
    %3004 = vmatpush.msra.mxu0 %v106
    %3005 = vmatpush.msra.mxu0 %v98
    %3006 = vmatmul.f32.gmra.mxu0 %v2760
    %v3007 = vpop.f32.mrf.mxu0
    %v3008 = vadd.f32 0.0, %v3007
    %3009 = vdwg.mxu0
    %3010 = vmatpush.msra.mxu0 %v346
    %3011 = vmatpush.msra.mxu0 %v338
    %3012 = vmatpush.msra.mxu0 %v330
    %3013 = vmatpush.msra.mxu0 %v322
    %3014 = vmatpush.msra.mxu0 %v314
    %3015 = vmatpush.msra.mxu0 %v306
    %3016 = vmatpush.msra.mxu0 %v298
    %3017 = vmatpush.msra.mxu0 %v290
    %3018 = vmatpush.msra.mxu0 %v282
    %3019 = vmatpush.msra.mxu0 %v274
    %3020 = vmatpush.msra.mxu0 %v266
    %3021 = vmatpush.msra.mxu0 %v258
    %3022 = vmatpush.msra.mxu0 %v250
    %3023 = vmatpush.msra.mxu0 %v242
    %3024 = vmatpush.msra.mxu0 %v234
    %3025 = vmatpush.msra.mxu0 %v226
    %3026 = vmatmul.f32.gmra.mxu0 %v2823
    %v3027 = vpop.f32.mrf.mxu0
    %v3028 = vadd.f32 %v3008, %v3027
    %3029 = vdwg.mxu0
    %3030 = vmatpush.msra.mxu0 %v219
    %3031 = vmatpush.msra.mxu0 %v211
    %3032 = vmatpush.msra.mxu0 %v203
    %3033 = vmatpush.msra.mxu0 %v195
    %3034 = vmatpush.msra.mxu0 %v187
    %3035 = vmatpush.msra.mxu0 %v179
    %3036 = vmatpush.msra.mxu0 %v171
    %3037 = vmatpush.msra.mxu0 %v163
    %3038 = vmatpush.msra.mxu0 %v155
    %3039 = vmatpush.msra.mxu0 %v147
    %3040 = vmatpush.msra.mxu0 %v139
    %3041 = vmatpush.msra.mxu0 %v131
    %3042 = vmatpush.msra.mxu0 %v123
    %3043 = vmatpush.msra.mxu0 %v115
    %3044 = vmatpush.msra.mxu0 %v107
    %3045 = vmatpush.msra.mxu0 %v99
    %3046 = vmatmul.f32.gmra.mxu0 %v2760
    %v3047 = vpop.f32.mrf.mxu0
    %v3048 = vadd.f32 0.0, %v3047
    %3049 = vdwg.mxu0
    %3050 = vmatpush.msra.mxu0 %v347
    %3051 = vmatpush.msra.mxu0 %v339
    %3052 = vmatpush.msra.mxu0 %v331
    %3053 = vmatpush.msra.mxu0 %v323
    %3054 = vmatpush.msra.mxu0 %v315
    %3055 = vmatpush.msra.mxu0 %v307
    %3056 = vmatpush.msra.mxu0 %v299
    %3057 = vmatpush.msra.mxu0 %v291
    %3058 = vmatpush.msra.mxu0 %v283
    %3059 = vmatpush.msra.mxu0 %v275
    %3060 = vmatpush.msra.mxu0 %v267
    %3061 = vmatpush.msra.mxu0 %v259
    %3062 = vmatpush.msra.mxu0 %v251
    %3063 = vmatpush.msra.mxu0 %v243
    %3064 = vmatpush.msra.mxu0 %v235
    %3065 = vmatpush.msra.mxu0 %v227
    %3066 = vmatmul.f32.gmra.mxu0 %v2823
    %v3067 = vpop.f32.mrf.mxu0
    %v3068 = vadd.f32 %v3048, %v3067
    %3069 = vdwg.mxu0
    %3070 = vmatpush.msra.mxu0 %v220
    %3071 = vmatpush.msra.mxu0 %v212
    %3072 = vmatpush.msra.mxu0 %v204
    %3073 = vmatpush.msra.mxu0 %v196
    %3074 = vmatpush.msra.mxu0 %v188
    %3075 = vmatpush.msra.mxu0 %v180
    %3076 = vmatpush.msra.mxu0 %v172
    %3077 = vmatpush.msra.mxu0 %v164
    %3078 = vmatpush.msra.mxu0 %v156
    %3079 = vmatpush.msra.mxu0 %v148
    %3080 = vmatpush.msra.mxu0 %v140
    %3081 = vmatpush.msra.mxu0 %v132
    %3082 = vmatpush.msra.mxu0 %v124
    %3083 = vmatpush.msra.mxu0 %v116
    %3084 = vmatpush.msra.mxu0 %v108
    %3085 = vmatpush.msra.mxu0 %v100
    %3086 = vmatmul.f32.gmra.mxu0 %v2760
    %v3087 = vpop.f32.mrf.mxu0
    %v3088 = vadd.f32 0.0, %v3087
    %3089 = vdwg.mxu0
    %3090 = vmatpush.msra.mxu0 %v348
    %3091 = vmatpush.msra.mxu0 %v340
    %3092 = vmatpush.msra.mxu0 %v332
    %3093 = vmatpush.msra.mxu0 %v324
    %3094 = vmatpush.msra.mxu0 %v316
    %3095 = vmatpush.msra.mxu0 %v308
    %3096 = vmatpush.msra.mxu0 %v300
    %3097 = vmatpush.msra.mxu0 %v292
    %3098 = vmatpush.msra.mxu0 %v284
    %3099 = vmatpush.msra.mxu0 %v276
    %3100 = vmatpush.msra.mxu0 %v268
    %3101 = vmatpush.msra.mxu0 %v260
    %3102 = vmatpush.msra.mxu0 %v252
    %3103 = vmatpush.msra.mxu0 %v244
    %3104 = vmatpush.msra.mxu0 %v236
    %3105 = vmatpush.msra.mxu0 %v228
    %3106 = vmatmul.f32.gmra.mxu0 %v2823
    %v3107 = vpop.f32.mrf.mxu0
    %v3108 = vadd.f32 %v3088, %v3107
    %3109 = vdwg.mxu0
    %3110 = vmatpush.msra.mxu0 %v221
    %3111 = vmatpush.msra.mxu0 %v213
    %3112 = vmatpush.msra.mxu0 %v205
    %3113 = vmatpush.msra.mxu0 %v197
    %3114 = vmatpush.msra.mxu0 %v189
    %3115 = vmatpush.msra.mxu0 %v181
    %3116 = vmatpush.msra.mxu0 %v173
    %3117 = vmatpush.msra.mxu0 %v165
    %3118 = vmatpush.msra.mxu0 %v157
    %3119 = vmatpush.msra.mxu0 %v149
    %3120 = vmatpush.msra.mxu0 %v141
    %3121 = vmatpush.msra.mxu0 %v133
    %3122 = vmatpush.msra.mxu0 %v125
    %3123 = vmatpush.msra.mxu0 %v117
    %3124 = vmatpush.msra.mxu0 %v109
    %3125 = vmatpush.msra.mxu0 %v101
    %3126 = vmatmul.f32.gmra.mxu0 %v2760
    %v3127 = vpop.f32.mrf.mxu0
    %v3128 = vadd.f32 0.0, %v3127
    %3129 = vdwg.mxu0
    %3130 = vmatpush.msra.mxu0 %v349
    %3131 = vmatpush.msra.mxu0 %v341
    %3132 = vmatpush.msra.mxu0 %v333
    %3133 = vmatpush.msra.mxu0 %v325
    %3134 = vmatpush.msra.mxu0 %v317
    %3135 = vmatpush.msra.mxu0 %v309
    %3136 = vmatpush.msra.mxu0 %v301
    %3137 = vmatpush.msra.mxu0 %v293
    %3138 = vmatpush.msra.mxu0 %v285
    %3139 = vmatpush.msra.mxu0 %v277
    %3140 = vmatpush.msra.mxu0 %v269
    %3141 = vmatpush.msra.mxu0 %v261
    %3142 = vmatpush.msra.mxu0 %v253
    %3143 = vmatpush.msra.mxu0 %v245
    %3144 = vmatpush.msra.mxu0 %v237
    %3145 = vmatpush.msra.mxu0 %v229
    %3146 = vmatmul.f32.gmra.mxu0 %v2823
    %v3147 = vpop.f32.mrf.mxu0
    %v3148 = vadd.f32 %v3128, %v3147
    %3149 = vdwg.mxu0
    %s3150 = scalar_lea.vmem [#allocation7], 5
    %v3151 = vld [vmem:[%s3150] ss:$8 sm:$0xf]
    %s3152 = scalar_lea.vmem [#allocation7], 37
    %v3153 = vld [vmem:[%s3152] ss:$8 sm:$0xf]
    %3156 = vst [vmem:[#allocation1] ss:$9 sm:$0xff] %v3151
    %s3157 = scalar_lea.vmem [#allocation1], 1
    %3158 = vst [vmem:[%s3157] ss:$9 sm:$0xff] %v3153
    %v3159 = vld [vmem:[#allocation1] sm:$0xff]
    %v3160 = vld [vmem:[#allocation1 + $0x9] sm:$0xff]
    %v3161 = vld [vmem:[#allocation1 + $0x12] sm:$0xff]
    %v3162 = vld [vmem:[#allocation1 + $0x1b] sm:$0xff]
    %v3167 = vadd.f32 %v2868, %v3159
    %v3168 = vadd.f32 %v2908, %v3160
    %v3169 = vadd.f32 %v2948, %v3161
    %v3170 = vadd.f32 %v2988, %v3162
    %s3171 = scalar_lea.vmem [#allocation8], 2
    %v3172 = vld [vmem:[%s3171] ss:$8 sm:$0xf]
    %s3173 = scalar_lea.vmem [#allocation8], 34
    %v3174 = vld [vmem:[%s3173] ss:$8 sm:$0xf]
    %3177 = vst [vmem:[#allocation1] ss:$9 sm:$0xff] %v3172
    %s3178 = scalar_lea.vmem [#allocation1], 1
    %3179 = vst [vmem:[%s3178] ss:$9 sm:$0xff] %v3174
    %v3180 = vld [vmem:[#allocation1] sm:$0xff]
    %v3181 = vld [vmem:[#allocation1 + $0x9] sm:$0xff]
    %v3182 = vld [vmem:[#allocation1 + $0x12] sm:$0xff]
    %v3183 = vld [vmem:[#allocation1 + $0x1b] sm:$0xff]
    %v3188 = vadd.f32 %v3028, %v3180
    %v3189 = vadd.f32 %v3068, %v3181
    %v3190 = vadd.f32 %v3108, %v3182
    %v3191 = vadd.f32 %v3148, %v3183
    %v3192 = vxor.u32 %v3167, 2147483648
    %v3193 = vmul.f32 %v3192, 1.442695
    %v3194 = vpow.pop %v3193
    %v3195 = vadd.f32 %v3194, 1.0
    %v3196 = vrcp.pop %v3195
    %v3197 = vmul.f32 %v3195, %v3196
    %v3198 = vsub.f32 1.0, %v3197
    %v3199 = vmul.f32 %v3196, %v3198
    %v3200 = vadd.f32 %v3196, %v3199
    %vm3201 = vweird.f32 %v3195
    %vm3202 = vweird.f32 %v3196
    %vm3203 = vmor %vm3201, %vm3202
    %v3204 = vsel %vm3203, %v3196, %v3200
    %v3205 = vand.u32 2147483647, %v3195
    %vm3206 = vcmp.eq.f32.partialorder %v3205, 8.507059e+37
    %v3207 = vand.u32 %v3195, 2147483648
    %v3208 = vor.u32 1.1754944e-38, %v3207
    %v3209 = vsel %vm3206, %v3208, %v3204
    %v3210 = vmul.f32 1.0, %v3209
    %v3211 = vxor.u32 %v3168, 2147483648
    %v3212 = vmul.f32 %v3211, 1.442695
    %v3213 = vpow.pop %v3212
    %v3214 = vadd.f32 %v3213, 1.0
    %v3215 = vrcp.pop %v3214
    %v3216 = vmul.f32 %v3214, %v3215
    %v3217 = vsub.f32 1.0, %v3216
    %v3218 = vmul.f32 %v3215, %v3217
    %v3219 = vadd.f32 %v3215, %v3218
    %vm3220 = vweird.f32 %v3214
    %vm3221 = vweird.f32 %v3215
    %vm3222 = vmor %vm3220, %vm3221
    %v3223 = vsel %vm3222, %v3215, %v3219
    %v3224 = vand.u32 2147483647, %v3214
    %vm3225 = vcmp.eq.f32.partialorder %v3224, 8.507059e+37
    %v3226 = vand.u32 %v3214, 2147483648
    %v3227 = vor.u32 1.1754944e-38, %v3226
    %v3228 = vsel %vm3225, %v3227, %v3223
    %v3229 = vmul.f32 1.0, %v3228
    %v3230 = vtanh.pop %v3169
    %v3231 = vxor.u32 %v3170, 2147483648
    %v3232 = vmul.f32 %v3231, 1.442695
    %v3233 = vpow.pop %v3232
    %v3234 = vadd.f32 %v3233, 1.0
    %v3235 = vrcp.pop %v3234
    %v3236 = vmul.f32 %v3234, %v3235
    %v3237 = vsub.f32 1.0, %v3236
    %v3238 = vmul.f32 %v3235, %v3237
    %v3239 = vadd.f32 %v3235, %v3238
    %vm3240 = vweird.f32 %v3234
    %vm3241 = vweird.f32 %v3235
    %vm3242 = vmor %vm3240, %vm3241
    %v3243 = vsel %vm3242, %v3235, %v3239
    %v3244 = vand.u32 2147483647, %v3234
    %vm3245 = vcmp.eq.f32.partialorder %v3244, 8.507059e+37
    %v3246 = vand.u32 %v3234, 2147483648
    %v3247 = vor.u32 1.1754944e-38, %v3246
    %v3248 = vsel %vm3245, %v3247, %v3243
    %v3249 = vmul.f32 1.0, %v3248
    %v3250 = vmul.f32 %v3229, %v2758
    %v3251 = vmul.f32 %v3210, %v3230
    %v3252 = vadd.f32 %v3250, %v3251
    %v3253 = vtanh.pop %v3252
    %v3254 = vmul.f32 %v3249, %v3253
    %v3255 = vxor.u32 %v3188, 2147483648
    %v3256 = vmul.f32 %v3255, 1.442695
    %v3257 = vpow.pop %v3256
    %v3258 = vadd.f32 %v3257, 1.0
    %v3259 = vrcp.pop %v3258
    %v3260 = vmul.f32 %v3258, %v3259
    %v3261 = vsub.f32 1.0, %v3260
    %v3262 = vmul.f32 %v3259, %v3261
    %v3263 = vadd.f32 %v3259, %v3262
    %vm3264 = vweird.f32 %v3258
    %vm3265 = vweird.f32 %v3259
    %vm3266 = vmor %vm3264, %vm3265
    %v3267 = vsel %vm3266, %v3259, %v3263
    %v3268 = vand.u32 2147483647, %v3258
    %vm3269 = vcmp.eq.f32.partialorder %v3268, 8.507059e+37
    %v3270 = vand.u32 %v3258, 2147483648
    %v3271 = vor.u32 1.1754944e-38, %v3270
    %v3272 = vsel %vm3269, %v3271, %v3267
    %v3273 = vmul.f32 1.0, %v3272
    %v3274 = vxor.u32 %v3189, 2147483648
    %v3275 = vmul.f32 %v3274, 1.442695
    %v3276 = vpow.pop %v3275
    %v3277 = vadd.f32 %v3276, 1.0
    %v3278 = vrcp.pop %v3277
    %v3279 = vmul.f32 %v3277, %v3278
    %v3280 = vsub.f32 1.0, %v3279
    %v3281 = vmul.f32 %v3278, %v3280
    %v3282 = vadd.f32 %v3278, %v3281
    %vm3283 = vweird.f32 %v3277
    %vm3284 = vweird.f32 %v3278
    %vm3285 = vmor %vm3283, %vm3284
    %v3286 = vsel %vm3285, %v3278, %v3282
    %v3287 = vand.u32 2147483647, %v3277
    %vm3288 = vcmp.eq.f32.partialorder %v3287, 8.507059e+37
    %v3289 = vand.u32 %v3277, 2147483648
    %v3290 = vor.u32 1.1754944e-38, %v3289
    %v3291 = vsel %vm3288, %v3290, %v3286
    %v3292 = vmul.f32 1.0, %v3291
    %v3293 = vtanh.pop %v3190
    %v3294 = vxor.u32 %v3191, 2147483648
    %v3295 = vmul.f32 %v3294, 1.442695
    %v3296 = vpow.pop %v3295
    %v3297 = vadd.f32 %v3296, 1.0
    %v3298 = vrcp.pop %v3297
    %v3299 = vmul.f32 %v3297, %v3298
    %v3300 = vsub.f32 1.0, %v3299
    %v3301 = vmul.f32 %v3298, %v3300
    %v3302 = vadd.f32 %v3298, %v3301
    %vm3303 = vweird.f32 %v3297
    %vm3304 = vweird.f32 %v3298
    %vm3305 = vmor %vm3303, %vm3304
    %v3306 = vsel %vm3305, %v3298, %v3302
    %v3307 = vand.u32 2147483647, %v3297
    %vm3308 = vcmp.eq.f32.partialorder %v3307, 8.507059e+37
    %v3309 = vand.u32 %v3297, 2147483648
    %v3310 = vor.u32 1.1754944e-38, %v3309
    %v3311 = vsel %vm3308, %v3310, %v3306
    %v3312 = vmul.f32 1.0, %v3311
    %v3313 = vmul.f32 %v3292, %v2821
    %v3314 = vmul.f32 %v3273, %v3293
    %v3315 = vadd.f32 %v3313, %v3314
    %v3316 = vtanh.pop %v3315
    %v3317 = vmul.f32 %v3312, %v3316
    %v3320 = vrot.slane %v3317, 6
    %v3321 = vsel %vm850, %v3254, %v3320
    %v3323 = vadd.f32 %v2829, %v3321
    %3324 = vmatpush.msra.mxu0 %v214
    %3325 = vmatpush.msra.mxu0 %v206
    %3326 = vmatpush.msra.mxu0 %v198
    %3327 = vmatpush.msra.mxu0 %v190
    %3328 = vmatpush.msra.mxu0 %v182
    %3329 = vmatpush.msra.mxu0 %v174
    %3330 = vmatpush.msra.mxu0 %v166
    %3331 = vmatpush.msra.mxu0 %v158
    %3332 = vmatpush.msra.mxu0 %v150
    %3333 = vmatpush.msra.mxu0 %v142
    %3334 = vmatpush.msra.mxu0 %v134
    %3335 = vmatpush.msra.mxu0 %v126
    %3336 = vmatpush.msra.mxu0 %v118
    %3337 = vmatpush.msra.mxu0 %v110
    %3338 = vmatpush.msra.mxu0 %v102
    %3339 = vmatpush.msra.mxu0 %v94
    %3340 = vmatmul.f32.gmra.mxu0 %v3254
    %v3341 = vpop.f32.mrf.mxu0
    %v3342 = vadd.f32 0.0, %v3341
    %3343 = vdwg.mxu0
    %3344 = vmatpush.msra.mxu0 %v342
    %3345 = vmatpush.msra.mxu0 %v334
    %3346 = vmatpush.msra.mxu0 %v326
    %3347 = vmatpush.msra.mxu0 %v318
    %3348 = vmatpush.msra.mxu0 %v310
    %3349 = vmatpush.msra.mxu0 %v302
    %3350 = vmatpush.msra.mxu0 %v294
    %3351 = vmatpush.msra.mxu0 %v286
    %3352 = vmatpush.msra.mxu0 %v278
    %3353 = vmatpush.msra.mxu0 %v270
    %3354 = vmatpush.msra.mxu0 %v262
    %3355 = vmatpush.msra.mxu0 %v254
    %3356 = vmatpush.msra.mxu0 %v246
    %3357 = vmatpush.msra.mxu0 %v238
    %3358 = vmatpush.msra.mxu0 %v230
    %3359 = vmatpush.msra.mxu0 %v222
    %3360 = vmatmul.f32.gmra.mxu0 %v3317
    %v3361 = vpop.f32.mrf.mxu0
    %v3362 = vadd.f32 %v3342, %v3361
    %3363 = vdwg.mxu0
    %3364 = vmatpush.msra.mxu0 %v215
    %3365 = vmatpush.msra.mxu0 %v207
    %3366 = vmatpush.msra.mxu0 %v199
    %3367 = vmatpush.msra.mxu0 %v191
    %3368 = vmatpush.msra.mxu0 %v183
    %3369 = vmatpush.msra.mxu0 %v175
    %3370 = vmatpush.msra.mxu0 %v167
    %3371 = vmatpush.msra.mxu0 %v159
    %3372 = vmatpush.msra.mxu0 %v151
    %3373 = vmatpush.msra.mxu0 %v143
    %3374 = vmatpush.msra.mxu0 %v135
    %3375 = vmatpush.msra.mxu0 %v127
    %3376 = vmatpush.msra.mxu0 %v119
    %3377 = vmatpush.msra.mxu0 %v111
    %3378 = vmatpush.msra.mxu0 %v103
    %3379 = vmatpush.msra.mxu0 %v95
    %3380 = vmatmul.f32.gmra.mxu0 %v3254
    %v3381 = vpop.f32.mrf.mxu0
    %v3382 = vadd.f32 0.0, %v3381
    %3383 = vdwg.mxu0
    %3384 = vmatpush.msra.mxu0 %v343
    %3385 = vmatpush.msra.mxu0 %v335
    %3386 = vmatpush.msra.mxu0 %v327
    %3387 = vmatpush.msra.mxu0 %v319
    %3388 = vmatpush.msra.mxu0 %v311
    %3389 = vmatpush.msra.mxu0 %v303
    %3390 = vmatpush.msra.mxu0 %v295
    %3391 = vmatpush.msra.mxu0 %v287
    %3392 = vmatpush.msra.mxu0 %v279
    %3393 = vmatpush.msra.mxu0 %v271
    %3394 = vmatpush.msra.mxu0 %v263
    %3395 = vmatpush.msra.mxu0 %v255
    %3396 = vmatpush.msra.mxu0 %v247
    %3397 = vmatpush.msra.mxu0 %v239
    %3398 = vmatpush.msra.mxu0 %v231
    %3399 = vmatpush.msra.mxu0 %v223
    %3400 = vmatmul.f32.gmra.mxu0 %v3317
    %v3401 = vpop.f32.mrf.mxu0
    %v3402 = vadd.f32 %v3382, %v3401
    %3403 = vdwg.mxu0
    %3404 = vmatpush.msra.mxu0 %v216
    %3405 = vmatpush.msra.mxu0 %v208
    %3406 = vmatpush.msra.mxu0 %v200
    %3407 = vmatpush.msra.mxu0 %v192
    %3408 = vmatpush.msra.mxu0 %v184
    %3409 = vmatpush.msra.mxu0 %v176
    %3410 = vmatpush.msra.mxu0 %v168
    %3411 = vmatpush.msra.mxu0 %v160
    %3412 = vmatpush.msra.mxu0 %v152
    %3413 = vmatpush.msra.mxu0 %v144
    %3414 = vmatpush.msra.mxu0 %v136
    %3415 = vmatpush.msra.mxu0 %v128
    %3416 = vmatpush.msra.mxu0 %v120
    %3417 = vmatpush.msra.mxu0 %v112
    %3418 = vmatpush.msra.mxu0 %v104
    %3419 = vmatpush.msra.mxu0 %v96
    %3420 = vmatmul.f32.gmra.mxu0 %v3254
    %v3421 = vpop.f32.mrf.mxu0
    %v3422 = vadd.f32 0.0, %v3421
    %3423 = vdwg.mxu0
    %3424 = vmatpush.msra.mxu0 %v344
    %3425 = vmatpush.msra.mxu0 %v336
    %3426 = vmatpush.msra.mxu0 %v328
    %3427 = vmatpush.msra.mxu0 %v320
    %3428 = vmatpush.msra.mxu0 %v312
    %3429 = vmatpush.msra.mxu0 %v304
    %3430 = vmatpush.msra.mxu0 %v296
    %3431 = vmatpush.msra.mxu0 %v288
    %3432 = vmatpush.msra.mxu0 %v280
    %3433 = vmatpush.msra.mxu0 %v272
    %3434 = vmatpush.msra.mxu0 %v264
    %3435 = vmatpush.msra.mxu0 %v256
    %3436 = vmatpush.msra.mxu0 %v248
    %3437 = vmatpush.msra.mxu0 %v240
    %3438 = vmatpush.msra.mxu0 %v232
    %3439 = vmatpush.msra.mxu0 %v224
    %3440 = vmatmul.f32.gmra.mxu0 %v3317
    %v3441 = vpop.f32.mrf.mxu0
    %v3442 = vadd.f32 %v3422, %v3441
    %3443 = vdwg.mxu0
    %3444 = vmatpush.msra.mxu0 %v217
    %3445 = vmatpush.msra.mxu0 %v209
    %3446 = vmatpush.msra.mxu0 %v201
    %3447 = vmatpush.msra.mxu0 %v193
    %3448 = vmatpush.msra.mxu0 %v185
    %3449 = vmatpush.msra.mxu0 %v177
    %3450 = vmatpush.msra.mxu0 %v169
    %3451 = vmatpush.msra.mxu0 %v161
    %3452 = vmatpush.msra.mxu0 %v153
    %3453 = vmatpush.msra.mxu0 %v145
    %3454 = vmatpush.msra.mxu0 %v137
    %3455 = vmatpush.msra.mxu0 %v129
    %3456 = vmatpush.msra.mxu0 %v121
    %3457 = vmatpush.msra.mxu0 %v113
    %3458 = vmatpush.msra.mxu0 %v105
    %3459 = vmatpush.msra.mxu0 %v97
    %3460 = vmatmul.f32.gmra.mxu0 %v3254
    %v3461 = vpop.f32.mrf.mxu0
    %v3462 = vadd.f32 0.0, %v3461
    %3463 = vdwg.mxu0
    %3464 = vmatpush.msra.mxu0 %v345
    %3465 = vmatpush.msra.mxu0 %v337
    %3466 = vmatpush.msra.mxu0 %v329
    %3467 = vmatpush.msra.mxu0 %v321
    %3468 = vmatpush.msra.mxu0 %v313
    %3469 = vmatpush.msra.mxu0 %v305
    %3470 = vmatpush.msra.mxu0 %v297
    %3471 = vmatpush.msra.mxu0 %v289
    %3472 = vmatpush.msra.mxu0 %v281
    %3473 = vmatpush.msra.mxu0 %v273
    %3474 = vmatpush.msra.mxu0 %v265
    %3475 = vmatpush.msra.mxu0 %v257
    %3476 = vmatpush.msra.mxu0 %v249
    %3477 = vmatpush.msra.mxu0 %v241
    %3478 = vmatpush.msra.mxu0 %v233
    %3479 = vmatpush.msra.mxu0 %v225
    %3480 = vmatmul.f32.gmra.mxu0 %v3317
    %v3481 = vpop.f32.mrf.mxu0
    %v3482 = vadd.f32 %v3462, %v3481
    %3483 = vdwg.mxu0
    %3484 = vmatpush.msra.mxu0 %v218
    %3485 = vmatpush.msra.mxu0 %v210
    %3486 = vmatpush.msra.mxu0 %v202
    %3487 = vmatpush.msra.mxu0 %v194
    %3488 = vmatpush.msra.mxu0 %v186
    %3489 = vmatpush.msra.mxu0 %v178
    %3490 = vmatpush.msra.mxu0 %v170
    %3491 = vmatpush.msra.mxu0 %v162
    %3492 = vmatpush.msra.mxu0 %v154
    %3493 = vmatpush.msra.mxu0 %v146
    %3494 = vmatpush.msra.mxu0 %v138
    %3495 = vmatpush.msra.mxu0 %v130
    %3496 = vmatpush.msra.mxu0 %v122
    %3497 = vmatpush.msra.mxu0 %v114
    %3498 = vmatpush.msra.mxu0 %v106
    %3499 = vmatpush.msra.mxu0 %v98
    %3500 = vmatmul.f32.gmra.mxu0 %v3254
    %v3501 = vpop.f32.mrf.mxu0
    %v3502 = vadd.f32 0.0, %v3501
    %3503 = vdwg.mxu0
    %3504 = vmatpush.msra.mxu0 %v346
    %3505 = vmatpush.msra.mxu0 %v338
    %3506 = vmatpush.msra.mxu0 %v330
    %3507 = vmatpush.msra.mxu0 %v322
    %3508 = vmatpush.msra.mxu0 %v314
    %3509 = vmatpush.msra.mxu0 %v306
    %3510 = vmatpush.msra.mxu0 %v298
    %3511 = vmatpush.msra.mxu0 %v290
    %3512 = vmatpush.msra.mxu0 %v282
    %3513 = vmatpush.msra.mxu0 %v274
    %3514 = vmatpush.msra.mxu0 %v266
    %3515 = vmatpush.msra.mxu0 %v258
    %3516 = vmatpush.msra.mxu0 %v250
    %3517 = vmatpush.msra.mxu0 %v242
    %3518 = vmatpush.msra.mxu0 %v234
    %3519 = vmatpush.msra.mxu0 %v226
    %3520 = vmatmul.f32.gmra.mxu0 %v3317
    %v3521 = vpop.f32.mrf.mxu0
    %v3522 = vadd.f32 %v3502, %v3521
    %3523 = vdwg.mxu0
    %3524 = vmatpush.msra.mxu0 %v219
    %3525 = vmatpush.msra.mxu0 %v211
    %3526 = vmatpush.msra.mxu0 %v203
    %3527 = vmatpush.msra.mxu0 %v195
    %3528 = vmatpush.msra.mxu0 %v187
    %3529 = vmatpush.msra.mxu0 %v179
    %3530 = vmatpush.msra.mxu0 %v171
    %3531 = vmatpush.msra.mxu0 %v163
    %3532 = vmatpush.msra.mxu0 %v155
    %3533 = vmatpush.msra.mxu0 %v147
    %3534 = vmatpush.msra.mxu0 %v139
    %3535 = vmatpush.msra.mxu0 %v131
    %3536 = vmatpush.msra.mxu0 %v123
    %3537 = vmatpush.msra.mxu0 %v115
    %3538 = vmatpush.msra.mxu0 %v107
    %3539 = vmatpush.msra.mxu0 %v99
    %3540 = vmatmul.f32.gmra.mxu0 %v3254
    %v3541 = vpop.f32.mrf.mxu0
    %v3542 = vadd.f32 0.0, %v3541
    %3543 = vdwg.mxu0
    %3544 = vmatpush.msra.mxu0 %v347
    %3545 = vmatpush.msra.mxu0 %v339
    %3546 = vmatpush.msra.mxu0 %v331
    %3547 = vmatpush.msra.mxu0 %v323
    %3548 = vmatpush.msra.mxu0 %v315
    %3549 = vmatpush.msra.mxu0 %v307
    %3550 = vmatpush.msra.mxu0 %v299
    %3551 = vmatpush.msra.mxu0 %v291
    %3552 = vmatpush.msra.mxu0 %v283
    %3553 = vmatpush.msra.mxu0 %v275
    %3554 = vmatpush.msra.mxu0 %v267
    %3555 = vmatpush.msra.mxu0 %v259
    %3556 = vmatpush.msra.mxu0 %v251
    %3557 = vmatpush.msra.mxu0 %v243
    %3558 = vmatpush.msra.mxu0 %v235
    %3559 = vmatpush.msra.mxu0 %v227
    %3560 = vmatmul.f32.gmra.mxu0 %v3317
    %v3561 = vpop.f32.mrf.mxu0
    %v3562 = vadd.f32 %v3542, %v3561
    %3563 = vdwg.mxu0
    %3564 = vmatpush.msra.mxu0 %v220
    %3565 = vmatpush.msra.mxu0 %v212
    %3566 = vmatpush.msra.mxu0 %v204
    %3567 = vmatpush.msra.mxu0 %v196
    %3568 = vmatpush.msra.mxu0 %v188
    %3569 = vmatpush.msra.mxu0 %v180
    %3570 = vmatpush.msra.mxu0 %v172
    %3571 = vmatpush.msra.mxu0 %v164
    %3572 = vmatpush.msra.mxu0 %v156
    %3573 = vmatpush.msra.mxu0 %v148
    %3574 = vmatpush.msra.mxu0 %v140
    %3575 = vmatpush.msra.mxu0 %v132
    %3576 = vmatpush.msra.mxu0 %v124
    %3577 = vmatpush.msra.mxu0 %v116
    %3578 = vmatpush.msra.mxu0 %v108
    %3579 = vmatpush.msra.mxu0 %v100
    %3580 = vmatmul.f32.gmra.mxu0 %v3254
    %v3581 = vpop.f32.mrf.mxu0
    %v3582 = vadd.f32 0.0, %v3581
    %3583 = vdwg.mxu0
    %3584 = vmatpush.msra.mxu0 %v348
    %3585 = vmatpush.msra.mxu0 %v340
    %3586 = vmatpush.msra.mxu0 %v332
    %3587 = vmatpush.msra.mxu0 %v324
    %3588 = vmatpush.msra.mxu0 %v316
    %3589 = vmatpush.msra.mxu0 %v308
    %3590 = vmatpush.msra.mxu0 %v300
    %3591 = vmatpush.msra.mxu0 %v292
    %3592 = vmatpush.msra.mxu0 %v284
    %3593 = vmatpush.msra.mxu0 %v276
    %3594 = vmatpush.msra.mxu0 %v268
    %3595 = vmatpush.msra.mxu0 %v260
    %3596 = vmatpush.msra.mxu0 %v252
    %3597 = vmatpush.msra.mxu0 %v244
    %3598 = vmatpush.msra.mxu0 %v236
    %3599 = vmatpush.msra.mxu0 %v228
    %3600 = vmatmul.f32.gmra.mxu0 %v3317
    %v3601 = vpop.f32.mrf.mxu0
    %v3602 = vadd.f32 %v3582, %v3601
    %3603 = vdwg.mxu0
    %3604 = vmatpush.msra.mxu0 %v221
    %3605 = vmatpush.msra.mxu0 %v213
    %3606 = vmatpush.msra.mxu0 %v205
    %3607 = vmatpush.msra.mxu0 %v197
    %3608 = vmatpush.msra.mxu0 %v189
    %3609 = vmatpush.msra.mxu0 %v181
    %3610 = vmatpush.msra.mxu0 %v173
    %3611 = vmatpush.msra.mxu0 %v165
    %3612 = vmatpush.msra.mxu0 %v157
    %3613 = vmatpush.msra.mxu0 %v149
    %3614 = vmatpush.msra.mxu0 %v141
    %3615 = vmatpush.msra.mxu0 %v133
    %3616 = vmatpush.msra.mxu0 %v125
    %3617 = vmatpush.msra.mxu0 %v117
    %3618 = vmatpush.msra.mxu0 %v109
    %3619 = vmatpush.msra.mxu0 %v101
    %3620 = vmatmul.f32.gmra.mxu0 %v3254
    %v3621 = vpop.f32.mrf.mxu0
    %v3622 = vadd.f32 0.0, %v3621
    %3623 = vdwg.mxu0
    %3624 = vmatpush.msra.mxu0 %v349
    %3625 = vmatpush.msra.mxu0 %v341
    %3626 = vmatpush.msra.mxu0 %v333
    %3627 = vmatpush.msra.mxu0 %v325
    %3628 = vmatpush.msra.mxu0 %v317
    %3629 = vmatpush.msra.mxu0 %v309
    %3630 = vmatpush.msra.mxu0 %v301
    %3631 = vmatpush.msra.mxu0 %v293
    %3632 = vmatpush.msra.mxu0 %v285
    %3633 = vmatpush.msra.mxu0 %v277
    %3634 = vmatpush.msra.mxu0 %v269
    %3635 = vmatpush.msra.mxu0 %v261
    %3636 = vmatpush.msra.mxu0 %v253
    %3637 = vmatpush.msra.mxu0 %v245
    %3638 = vmatpush.msra.mxu0 %v237
    %3639 = vmatpush.msra.mxu0 %v229
    %3640 = vmatmul.f32.gmra.mxu0 %v3317
    %v3641 = vpop.f32.mrf.mxu0
    %v3642 = vadd.f32 %v3622, %v3641
    %3643 = vdwg.mxu0
    %s3644 = scalar_lea.vmem [#allocation7], 6
    %v3645 = vld [vmem:[%s3644] ss:$8 sm:$0xf]
    %s3646 = scalar_lea.vmem [#allocation7], 38
    %v3647 = vld [vmem:[%s3646] ss:$8 sm:$0xf]
    %3650 = vst [vmem:[#allocation1] ss:$9 sm:$0xff] %v3645
    %s3651 = scalar_lea.vmem [#allocation1], 1
    %3652 = vst [vmem:[%s3651] ss:$9 sm:$0xff] %v3647
    %v3653 = vld [vmem:[#allocation1] sm:$0xff]
    %v3654 = vld [vmem:[#allocation1 + $0x9] sm:$0xff]
    %v3655 = vld [vmem:[#allocation1 + $0x12] sm:$0xff]
    %v3656 = vld [vmem:[#allocation1 + $0x1b] sm:$0xff]
    %v3661 = vadd.f32 %v3362, %v3653
    %v3662 = vadd.f32 %v3402, %v3654
    %v3663 = vadd.f32 %v3442, %v3655
    %v3664 = vadd.f32 %v3482, %v3656
    %s3665 = scalar_lea.vmem [#allocation8], 1
    %v3666 = vld [vmem:[%s3665] ss:$8 sm:$0xf]
    %s3667 = scalar_lea.vmem [#allocation8], 33
    %v3668 = vld [vmem:[%s3667] ss:$8 sm:$0xf]
    %3671 = vst [vmem:[#allocation1] ss:$9 sm:$0xff] %v3666
    %s3672 = scalar_lea.vmem [#allocation1], 1
    %3673 = vst [vmem:[%s3672] ss:$9 sm:$0xff] %v3668
    %v3674 = vld [vmem:[#allocation1] sm:$0xff]
    %v3675 = vld [vmem:[#allocation1 + $0x9] sm:$0xff]
    %v3676 = vld [vmem:[#allocation1 + $0x12] sm:$0xff]
    %v3677 = vld [vmem:[#allocation1 + $0x1b] sm:$0xff]
    %v3682 = vadd.f32 %v3522, %v3674
    %v3683 = vadd.f32 %v3562, %v3675
    %v3684 = vadd.f32 %v3602, %v3676
    %v3685 = vadd.f32 %v3642, %v3677
    %v3686 = vxor.u32 %v3661, 2147483648
    %v3687 = vmul.f32 %v3686, 1.442695
    %v3688 = vpow.pop %v3687
    %v3689 = vadd.f32 %v3688, 1.0
    %v3690 = vrcp.pop %v3689
    %v3691 = vmul.f32 %v3689, %v3690
    %v3692 = vsub.f32 1.0, %v3691
    %v3693 = vmul.f32 %v3690, %v3692
    %v3694 = vadd.f32 %v3690, %v3693
    %vm3695 = vweird.f32 %v3689
    %vm3696 = vweird.f32 %v3690
    %vm3697 = vmor %vm3695, %vm3696
    %v3698 = vsel %vm3697, %v3690, %v3694
    %v3699 = vand.u32 2147483647, %v3689
    %vm3700 = vcmp.eq.f32.partialorder %v3699, 8.507059e+37
    %v3701 = vand.u32 %v3689, 2147483648
    %v3702 = vor.u32 1.1754944e-38, %v3701
    %v3703 = vsel %vm3700, %v3702, %v3698
    %v3704 = vmul.f32 1.0, %v3703
    %v3705 = vxor.u32 %v3662, 2147483648
    %v3706 = vmul.f32 %v3705, 1.442695
    %v3707 = vpow.pop %v3706
    %v3708 = vadd.f32 %v3707, 1.0
    %v3709 = vrcp.pop %v3708
    %v3710 = vmul.f32 %v3708, %v3709
    %v3711 = vsub.f32 1.0, %v3710
    %v3712 = vmul.f32 %v3709, %v3711
    %v3713 = vadd.f32 %v3709, %v3712
    %vm3714 = vweird.f32 %v3708
    %vm3715 = vweird.f32 %v3709
    %vm3716 = vmor %vm3714, %vm3715
    %v3717 = vsel %vm3716, %v3709, %v3713
    %v3718 = vand.u32 2147483647, %v3708
    %vm3719 = vcmp.eq.f32.partialorder %v3718, 8.507059e+37
    %v3720 = vand.u32 %v3708, 2147483648
    %v3721 = vor.u32 1.1754944e-38, %v3720
    %v3722 = vsel %vm3719, %v3721, %v3717
    %v3723 = vmul.f32 1.0, %v3722
    %v3724 = vtanh.pop %v3663
    %v3725 = vxor.u32 %v3664, 2147483648
    %v3726 = vmul.f32 %v3725, 1.442695
    %v3727 = vpow.pop %v3726
    %v3728 = vadd.f32 %v3727, 1.0
    %v3729 = vrcp.pop %v3728
    %v3730 = vmul.f32 %v3728, %v3729
    %v3731 = vsub.f32 1.0, %v3730
    %v3732 = vmul.f32 %v3729, %v3731
    %v3733 = vadd.f32 %v3729, %v3732
    %vm3734 = vweird.f32 %v3728
    %vm3735 = vweird.f32 %v3729
    %vm3736 = vmor %vm3734, %vm3735
    %v3737 = vsel %vm3736, %v3729, %v3733
    %v3738 = vand.u32 2147483647, %v3728
    %vm3739 = vcmp.eq.f32.partialorder %v3738, 8.507059e+37
    %v3740 = vand.u32 %v3728, 2147483648
    %v3741 = vor.u32 1.1754944e-38, %v3740
    %v3742 = vsel %vm3739, %v3741, %v3737
    %v3743 = vmul.f32 1.0, %v3742
    %v3744 = vmul.f32 %v3723, %v3252
    %v3745 = vmul.f32 %v3704, %v3724
    %v3746 = vadd.f32 %v3744, %v3745
    %v3747 = vtanh.pop %v3746
    %v3748 = vmul.f32 %v3743, %v3747
    %v3749 = vxor.u32 %v3682, 2147483648
    %v3750 = vmul.f32 %v3749, 1.442695
    %v3751 = vpow.pop %v3750
    %v3752 = vadd.f32 %v3751, 1.0
    %v3753 = vrcp.pop %v3752
    %v3754 = vmul.f32 %v3752, %v3753
    %v3755 = vsub.f32 1.0, %v3754
    %v3756 = vmul.f32 %v3753, %v3755
    %v3757 = vadd.f32 %v3753, %v3756
    %vm3758 = vweird.f32 %v3752
    %vm3759 = vweird.f32 %v3753
    %vm3760 = vmor %vm3758, %vm3759
    %v3761 = vsel %vm3760, %v3753, %v3757
    %v3762 = vand.u32 2147483647, %v3752
    %vm3763 = vcmp.eq.f32.partialorder %v3762, 8.507059e+37
    %v3764 = vand.u32 %v3752, 2147483648
    %v3765 = vor.u32 1.1754944e-38, %v3764
    %v3766 = vsel %vm3763, %v3765, %v3761
    %v3767 = vmul.f32 1.0, %v3766
    %v3768 = vxor.u32 %v3683, 2147483648
    %v3769 = vmul.f32 %v3768, 1.442695
    %v3770 = vpow.pop %v3769
    %v3771 = vadd.f32 %v3770, 1.0
    %v3772 = vrcp.pop %v3771
    %v3773 = vmul.f32 %v3771, %v3772
    %v3774 = vsub.f32 1.0, %v3773
    %v3775 = vmul.f32 %v3772, %v3774
    %v3776 = vadd.f32 %v3772, %v3775
    %vm3777 = vweird.f32 %v3771
    %vm3778 = vweird.f32 %v3772
    %vm3779 = vmor %vm3777, %vm3778
    %v3780 = vsel %vm3779, %v3772, %v3776
    %v3781 = vand.u32 2147483647, %v3771
    %vm3782 = vcmp.eq.f32.partialorder %v3781, 8.507059e+37
    %v3783 = vand.u32 %v3771, 2147483648
    %v3784 = vor.u32 1.1754944e-38, %v3783
    %v3785 = vsel %vm3782, %v3784, %v3780
    %v3786 = vmul.f32 1.0, %v3785
    %v3787 = vtanh.pop %v3684
    %v3788 = vxor.u32 %v3685, 2147483648
    %v3789 = vmul.f32 %v3788, 1.442695
    %v3790 = vpow.pop %v3789
    %v3791 = vadd.f32 %v3790, 1.0
    %v3792 = vrcp.pop %v3791
    %v3793 = vmul.f32 %v3791, %v3792
    %v3794 = vsub.f32 1.0, %v3793
    %v3795 = vmul.f32 %v3792, %v3794
    %v3796 = vadd.f32 %v3792, %v3795
    %vm3797 = vweird.f32 %v3791
    %vm3798 = vweird.f32 %v3792
    %vm3799 = vmor %vm3797, %vm3798
    %v3800 = vsel %vm3799, %v3792, %v3796
    %v3801 = vand.u32 2147483647, %v3791
    %vm3802 = vcmp.eq.f32.partialorder %v3801, 8.507059e+37
    %v3803 = vand.u32 %v3791, 2147483648
    %v3804 = vor.u32 1.1754944e-38, %v3803
    %v3805 = vsel %vm3802, %v3804, %v3800
    %v3806 = vmul.f32 1.0, %v3805
    %v3807 = vmul.f32 %v3786, %v3315
    %v3808 = vmul.f32 %v3767, %v3787
    %v3809 = vadd.f32 %v3807, %v3808
    %v3810 = vtanh.pop %v3809
    %v3811 = vmul.f32 %v3806, %v3810
    %v3814 = vrot.slane %v3811, 6
    %v3815 = vsel %vm850, %v3748, %v3814
    %v3817 = vadd.f32 %v3323, %v3815
    %3818 = vmatpush.msra.mxu0 %v214
    %3819 = vmatpush.msra.mxu0 %v206
    %3820 = vmatpush.msra.mxu0 %v198
    %3821 = vmatpush.msra.mxu0 %v190
    %3822 = vmatpush.msra.mxu0 %v182
    %3823 = vmatpush.msra.mxu0 %v174
    %3824 = vmatpush.msra.mxu0 %v166
    %3825 = vmatpush.msra.mxu0 %v158
    %3826 = vmatpush.msra.mxu0 %v150
    %3827 = vmatpush.msra.mxu0 %v142
    %3828 = vmatpush.msra.mxu0 %v134
    %3829 = vmatpush.msra.mxu0 %v126
    %3830 = vmatpush.msra.mxu0 %v118
    %3831 = vmatpush.msra.mxu0 %v110
    %3832 = vmatpush.msra.mxu0 %v102
    %3833 = vmatpush.msra.mxu0 %v94
    %3834 = vmatmul.f32.gmra.mxu0 %v3748
    %v3835 = vpop.f32.mrf.mxu0
    %v3836 = vadd.f32 0.0, %v3835
    %3837 = vdwg.mxu0
    %3838 = vmatpush.msra.mxu0 %v342
    %3839 = vmatpush.msra.mxu0 %v334
    %3840 = vmatpush.msra.mxu0 %v326
    %3841 = vmatpush.msra.mxu0 %v318
    %3842 = vmatpush.msra.mxu0 %v310
    %3843 = vmatpush.msra.mxu0 %v302
    %3844 = vmatpush.msra.mxu0 %v294
    %3845 = vmatpush.msra.mxu0 %v286
    %3846 = vmatpush.msra.mxu0 %v278
    %3847 = vmatpush.msra.mxu0 %v270
    %3848 = vmatpush.msra.mxu0 %v262
    %3849 = vmatpush.msra.mxu0 %v254
    %3850 = vmatpush.msra.mxu0 %v246
    %3851 = vmatpush.msra.mxu0 %v238
    %3852 = vmatpush.msra.mxu0 %v230
    %3853 = vmatpush.msra.mxu0 %v222
    %3854 = vmatmul.f32.gmra.mxu0 %v3811
    %v3855 = vpop.f32.mrf.mxu0
    %v3856 = vadd.f32 %v3836, %v3855
    %3857 = vdwg.mxu0
    %3858 = vmatpush.msra.mxu0 %v215
    %3859 = vmatpush.msra.mxu0 %v207
    %3860 = vmatpush.msra.mxu0 %v199
    %3861 = vmatpush.msra.mxu0 %v191
    %3862 = vmatpush.msra.mxu0 %v183
    %3863 = vmatpush.msra.mxu0 %v175
    %3864 = vmatpush.msra.mxu0 %v167
    %3865 = vmatpush.msra.mxu0 %v159
    %3866 = vmatpush.msra.mxu0 %v151
    %3867 = vmatpush.msra.mxu0 %v143
    %3868 = vmatpush.msra.mxu0 %v135
    %3869 = vmatpush.msra.mxu0 %v127
    %3870 = vmatpush.msra.mxu0 %v119
    %3871 = vmatpush.msra.mxu0 %v111
    %3872 = vmatpush.msra.mxu0 %v103
    %3873 = vmatpush.msra.mxu0 %v95
    %3874 = vmatmul.f32.gmra.mxu0 %v3748
    %v3875 = vpop.f32.mrf.mxu0
    %v3876 = vadd.f32 0.0, %v3875
    %3877 = vdwg.mxu0
    %3878 = vmatpush.msra.mxu0 %v343
    %3879 = vmatpush.msra.mxu0 %v335
    %3880 = vmatpush.msra.mxu0 %v327
    %3881 = vmatpush.msra.mxu0 %v319
    %3882 = vmatpush.msra.mxu0 %v311
    %3883 = vmatpush.msra.mxu0 %v303
    %3884 = vmatpush.msra.mxu0 %v295
    %3885 = vmatpush.msra.mxu0 %v287
    %3886 = vmatpush.msra.mxu0 %v279
    %3887 = vmatpush.msra.mxu0 %v271
    %3888 = vmatpush.msra.mxu0 %v263
    %3889 = vmatpush.msra.mxu0 %v255
    %3890 = vmatpush.msra.mxu0 %v247
    %3891 = vmatpush.msra.mxu0 %v239
    %3892 = vmatpush.msra.mxu0 %v231
    %3893 = vmatpush.msra.mxu0 %v223
    %3894 = vmatmul.f32.gmra.mxu0 %v3811
    %v3895 = vpop.f32.mrf.mxu0
    %v3896 = vadd.f32 %v3876, %v3895
    %3897 = vdwg.mxu0
    %3898 = vmatpush.msra.mxu0 %v216
    %3899 = vmatpush.msra.mxu0 %v208
    %3900 = vmatpush.msra.mxu0 %v200
    %3901 = vmatpush.msra.mxu0 %v192
    %3902 = vmatpush.msra.mxu0 %v184
    %3903 = vmatpush.msra.mxu0 %v176
    %3904 = vmatpush.msra.mxu0 %v168
    %3905 = vmatpush.msra.mxu0 %v160
    %3906 = vmatpush.msra.mxu0 %v152
    %3907 = vmatpush.msra.mxu0 %v144
    %3908 = vmatpush.msra.mxu0 %v136
    %3909 = vmatpush.msra.mxu0 %v128
    %3910 = vmatpush.msra.mxu0 %v120
    %3911 = vmatpush.msra.mxu0 %v112
    %3912 = vmatpush.msra.mxu0 %v104
    %3913 = vmatpush.msra.mxu0 %v96
    %3914 = vmatmul.f32.gmra.mxu0 %v3748
    %v3915 = vpop.f32.mrf.mxu0
    %v3916 = vadd.f32 0.0, %v3915
    %3917 = vdwg.mxu0
    %3918 = vmatpush.msra.mxu0 %v344
    %3919 = vmatpush.msra.mxu0 %v336
    %3920 = vmatpush.msra.mxu0 %v328
    %3921 = vmatpush.msra.mxu0 %v320
    %3922 = vmatpush.msra.mxu0 %v312
    %3923 = vmatpush.msra.mxu0 %v304
    %3924 = vmatpush.msra.mxu0 %v296
    %3925 = vmatpush.msra.mxu0 %v288
    %3926 = vmatpush.msra.mxu0 %v280
    %3927 = vmatpush.msra.mxu0 %v272
    %3928 = vmatpush.msra.mxu0 %v264
    %3929 = vmatpush.msra.mxu0 %v256
    %3930 = vmatpush.msra.mxu0 %v248
    %3931 = vmatpush.msra.mxu0 %v240
    %3932 = vmatpush.msra.mxu0 %v232
    %3933 = vmatpush.msra.mxu0 %v224
    %3934 = vmatmul.f32.gmra.mxu0 %v3811
    %v3935 = vpop.f32.mrf.mxu0
    %v3936 = vadd.f32 %v3916, %v3935
    %3937 = vdwg.mxu0
    %3938 = vmatpush.msra.mxu0 %v217
    %3939 = vmatpush.msra.mxu0 %v209
    %3940 = vmatpush.msra.mxu0 %v201
    %3941 = vmatpush.msra.mxu0 %v193
    %3942 = vmatpush.msra.mxu0 %v185
    %3943 = vmatpush.msra.mxu0 %v177
    %3944 = vmatpush.msra.mxu0 %v169
    %3945 = vmatpush.msra.mxu0 %v161
    %3946 = vmatpush.msra.mxu0 %v153
    %3947 = vmatpush.msra.mxu0 %v145
    %3948 = vmatpush.msra.mxu0 %v137
    %3949 = vmatpush.msra.mxu0 %v129
    %3950 = vmatpush.msra.mxu0 %v121
    %3951 = vmatpush.msra.mxu0 %v113
    %3952 = vmatpush.msra.mxu0 %v105
    %3953 = vmatpush.msra.mxu0 %v97
    %3954 = vmatmul.f32.gmra.mxu0 %v3748
    %v3955 = vpop.f32.mrf.mxu0
    %v3956 = vadd.f32 0.0, %v3955
    %3957 = vdwg.mxu0
    %3958 = vmatpush.msra.mxu0 %v345
    %3959 = vmatpush.msra.mxu0 %v337
    %3960 = vmatpush.msra.mxu0 %v329
    %3961 = vmatpush.msra.mxu0 %v321
    %3962 = vmatpush.msra.mxu0 %v313
    %3963 = vmatpush.msra.mxu0 %v305
    %3964 = vmatpush.msra.mxu0 %v297
    %3965 = vmatpush.msra.mxu0 %v289
    %3966 = vmatpush.msra.mxu0 %v281
    %3967 = vmatpush.msra.mxu0 %v273
    %3968 = vmatpush.msra.mxu0 %v265
    %3969 = vmatpush.msra.mxu0 %v257
    %3970 = vmatpush.msra.mxu0 %v249
    %3971 = vmatpush.msra.mxu0 %v241
    %3972 = vmatpush.msra.mxu0 %v233
    %3973 = vmatpush.msra.mxu0 %v225
    %3974 = vmatmul.f32.gmra.mxu0 %v3811
    %v3975 = vpop.f32.mrf.mxu0
    %v3976 = vadd.f32 %v3956, %v3975
    %3977 = vdwg.mxu0
    %3978 = vmatpush.msra.mxu0 %v218
    %3979 = vmatpush.msra.mxu0 %v210
    %3980 = vmatpush.msra.mxu0 %v202
    %3981 = vmatpush.msra.mxu0 %v194
    %3982 = vmatpush.msra.mxu0 %v186
    %3983 = vmatpush.msra.mxu0 %v178
    %3984 = vmatpush.msra.mxu0 %v170
    %3985 = vmatpush.msra.mxu0 %v162
    %3986 = vmatpush.msra.mxu0 %v154
    %3987 = vmatpush.msra.mxu0 %v146
    %3988 = vmatpush.msra.mxu0 %v138
    %3989 = vmatpush.msra.mxu0 %v130
    %3990 = vmatpush.msra.mxu0 %v122
    %3991 = vmatpush.msra.mxu0 %v114
    %3992 = vmatpush.msra.mxu0 %v106
    %3993 = vmatpush.msra.mxu0 %v98
    %3994 = vmatmul.f32.gmra.mxu0 %v3748
    %v3995 = vpop.f32.mrf.mxu0
    %v3996 = vadd.f32 0.0, %v3995
    %3997 = vdwg.mxu0
    %3998 = vmatpush.msra.mxu0 %v346
    %3999 = vmatpush.msra.mxu0 %v338
    %4000 = vmatpush.msra.mxu0 %v330
    %4001 = vmatpush.msra.mxu0 %v322
    %4002 = vmatpush.msra.mxu0 %v314
    %4003 = vmatpush.msra.mxu0 %v306
    %4004 = vmatpush.msra.mxu0 %v298
    %4005 = vmatpush.msra.mxu0 %v290
    %4006 = vmatpush.msra.mxu0 %v282
    %4007 = vmatpush.msra.mxu0 %v274
    %4008 = vmatpush.msra.mxu0 %v266
    %4009 = vmatpush.msra.mxu0 %v258
    %4010 = vmatpush.msra.mxu0 %v250
    %4011 = vmatpush.msra.mxu0 %v242
    %4012 = vmatpush.msra.mxu0 %v234
    %4013 = vmatpush.msra.mxu0 %v226
    %4014 = vmatmul.f32.gmra.mxu0 %v3811
    %v4015 = vpop.f32.mrf.mxu0
    %v4016 = vadd.f32 %v3996, %v4015
    %4017 = vdwg.mxu0
    %4018 = vmatpush.msra.mxu0 %v219
    %4019 = vmatpush.msra.mxu0 %v211
    %4020 = vmatpush.msra.mxu0 %v203
    %4021 = vmatpush.msra.mxu0 %v195
    %4022 = vmatpush.msra.mxu0 %v187
    %4023 = vmatpush.msra.mxu0 %v179
    %4024 = vmatpush.msra.mxu0 %v171
    %4025 = vmatpush.msra.mxu0 %v163
    %4026 = vmatpush.msra.mxu0 %v155
    %4027 = vmatpush.msra.mxu0 %v147
    %4028 = vmatpush.msra.mxu0 %v139
    %4029 = vmatpush.msra.mxu0 %v131
    %4030 = vmatpush.msra.mxu0 %v123
    %4031 = vmatpush.msra.mxu0 %v115
    %4032 = vmatpush.msra.mxu0 %v107
    %4033 = vmatpush.msra.mxu0 %v99
    %4034 = vmatmul.f32.gmra.mxu0 %v3748
    %v4035 = vpop.f32.mrf.mxu0
    %v4036 = vadd.f32 0.0, %v4035
    %4037 = vdwg.mxu0
    %4038 = vmatpush.msra.mxu0 %v347
    %4039 = vmatpush.msra.mxu0 %v339
    %4040 = vmatpush.msra.mxu0 %v331
    %4041 = vmatpush.msra.mxu0 %v323
    %4042 = vmatpush.msra.mxu0 %v315
    %4043 = vmatpush.msra.mxu0 %v307
    %4044 = vmatpush.msra.mxu0 %v299
    %4045 = vmatpush.msra.mxu0 %v291
    %4046 = vmatpush.msra.mxu0 %v283
    %4047 = vmatpush.msra.mxu0 %v275
    %4048 = vmatpush.msra.mxu0 %v267
    %4049 = vmatpush.msra.mxu0 %v259
    %4050 = vmatpush.msra.mxu0 %v251
    %4051 = vmatpush.msra.mxu0 %v243
    %4052 = vmatpush.msra.mxu0 %v235
    %4053 = vmatpush.msra.mxu0 %v227
    %4054 = vmatmul.f32.gmra.mxu0 %v3811
    %v4055 = vpop.f32.mrf.mxu0
    %v4056 = vadd.f32 %v4036, %v4055
    %4057 = vdwg.mxu0
    %4058 = vmatpush.msra.mxu0 %v220
    %4059 = vmatpush.msra.mxu0 %v212
    %4060 = vmatpush.msra.mxu0 %v204
    %4061 = vmatpush.msra.mxu0 %v196
    %4062 = vmatpush.msra.mxu0 %v188
    %4063 = vmatpush.msra.mxu0 %v180
    %4064 = vmatpush.msra.mxu0 %v172
    %4065 = vmatpush.msra.mxu0 %v164
    %4066 = vmatpush.msra.mxu0 %v156
    %4067 = vmatpush.msra.mxu0 %v148
    %4068 = vmatpush.msra.mxu0 %v140
    %4069 = vmatpush.msra.mxu0 %v132
    %4070 = vmatpush.msra.mxu0 %v124
    %4071 = vmatpush.msra.mxu0 %v116
    %4072 = vmatpush.msra.mxu0 %v108
    %4073 = vmatpush.msra.mxu0 %v100
    %4074 = vmatmul.f32.gmra.mxu0 %v3748
    %v4075 = vpop.f32.mrf.mxu0
    %v4076 = vadd.f32 0.0, %v4075
    %4077 = vdwg.mxu0
    %4078 = vmatpush.msra.mxu0 %v348
    %4079 = vmatpush.msra.mxu0 %v340
    %4080 = vmatpush.msra.mxu0 %v332
    %4081 = vmatpush.msra.mxu0 %v324
    %4082 = vmatpush.msra.mxu0 %v316
    %4083 = vmatpush.msra.mxu0 %v308
    %4084 = vmatpush.msra.mxu0 %v300
    %4085 = vmatpush.msra.mxu0 %v292
    %4086 = vmatpush.msra.mxu0 %v284
    %4087 = vmatpush.msra.mxu0 %v276
    %4088 = vmatpush.msra.mxu0 %v268
    %4089 = vmatpush.msra.mxu0 %v260
    %4090 = vmatpush.msra.mxu0 %v252
    %4091 = vmatpush.msra.mxu0 %v244
    %4092 = vmatpush.msra.mxu0 %v236
    %4093 = vmatpush.msra.mxu0 %v228
    %4094 = vmatmul.f32.gmra.mxu0 %v3811
    %v4095 = vpop.f32.mrf.mxu0
    %v4096 = vadd.f32 %v4076, %v4095
    %4097 = vdwg.mxu0
    %4098 = vmatpush.msra.mxu0 %v221
    %4099 = vmatpush.msra.mxu0 %v213
    %4100 = vmatpush.msra.mxu0 %v205
    %4101 = vmatpush.msra.mxu0 %v197
    %4102 = vmatpush.msra.mxu0 %v189
    %4103 = vmatpush.msra.mxu0 %v181
    %4104 = vmatpush.msra.mxu0 %v173
    %4105 = vmatpush.msra.mxu0 %v165
    %4106 = vmatpush.msra.mxu0 %v157
    %4107 = vmatpush.msra.mxu0 %v149
    %4108 = vmatpush.msra.mxu0 %v141
    %4109 = vmatpush.msra.mxu0 %v133
    %4110 = vmatpush.msra.mxu0 %v125
    %4111 = vmatpush.msra.mxu0 %v117
    %4112 = vmatpush.msra.mxu0 %v109
    %4113 = vmatpush.msra.mxu0 %v101
    %4114 = vmatmul.f32.gmra.mxu0 %v3748
    %v4115 = vpop.f32.mrf.mxu0
    %v4116 = vadd.f32 0.0, %v4115
    %4117 = vdwg.mxu0
    %4118 = vmatpush.msra.mxu0 %v349
    %4119 = vmatpush.msra.mxu0 %v341
    %4120 = vmatpush.msra.mxu0 %v333
    %4121 = vmatpush.msra.mxu0 %v325
    %4122 = vmatpush.msra.mxu0 %v317
    %4123 = vmatpush.msra.mxu0 %v309
    %4124 = vmatpush.msra.mxu0 %v301
    %4125 = vmatpush.msra.mxu0 %v293
    %4126 = vmatpush.msra.mxu0 %v285
    %4127 = vmatpush.msra.mxu0 %v277
    %4128 = vmatpush.msra.mxu0 %v269
    %4129 = vmatpush.msra.mxu0 %v261
    %4130 = vmatpush.msra.mxu0 %v253
    %4131 = vmatpush.msra.mxu0 %v245
    %4132 = vmatpush.msra.mxu0 %v237
    %4133 = vmatpush.msra.mxu0 %v229
    %4134 = vmatmul.f32.gmra.mxu0 %v3811
    %v4135 = vpop.f32.mrf.mxu0
    %v4136 = vadd.f32 %v4116, %v4135
    %4137 = vdwg.mxu0
    %s4138 = scalar_lea.vmem [#allocation7], 7
    %v4139 = vld [vmem:[%s4138] ss:$8 sm:$0xf]
    %s4140 = scalar_lea.vmem [#allocation7], 39
    %v4141 = vld [vmem:[%s4140] ss:$8 sm:$0xf]
    %4144 = vst [vmem:[#allocation1] ss:$9 sm:$0xff] %v4139
    %s4145 = scalar_lea.vmem [#allocation1], 1
    %4146 = vst [vmem:[%s4145] ss:$9 sm:$0xff] %v4141
    %v4147 = vld [vmem:[#allocation1] sm:$0xff]
    %v4148 = vld [vmem:[#allocation1 + $0x9] sm:$0xff]
    %v4149 = vld [vmem:[#allocation1 + $0x12] sm:$0xff]
    %v4150 = vld [vmem:[#allocation1 + $0x1b] sm:$0xff]
    %v4155 = vadd.f32 %v3856, %v4147
    %v4156 = vadd.f32 %v3896, %v4148
    %v4157 = vadd.f32 %v3936, %v4149
    %v4158 = vadd.f32 %v3976, %v4150
    %v4159 = vld [vmem:[#allocation8] ss:$8 sm:$0xf]
    %s4160 = scalar_lea.vmem [#allocation8], 32
    %v4161 = vld [vmem:[%s4160] ss:$8 sm:$0xf]
    %4164 = vst [vmem:[#allocation1] ss:$9 sm:$0xff] %v4159
    %s4165 = scalar_lea.vmem [#allocation1], 1
    %4166 = vst [vmem:[%s4165] ss:$9 sm:$0xff] %v4161
    %v4167 = vld [vmem:[#allocation1] sm:$0xff]
    %v4168 = vld [vmem:[#allocation1 + $0x9] sm:$0xff]
    %v4169 = vld [vmem:[#allocation1 + $0x12] sm:$0xff]
    %v4170 = vld [vmem:[#allocation1 + $0x1b] sm:$0xff]
    %v4175 = vadd.f32 %v4016, %v4167
    %v4176 = vadd.f32 %v4056, %v4168
    %v4177 = vadd.f32 %v4096, %v4169
    %v4178 = vadd.f32 %v4136, %v4170
    %v4179 = vxor.u32 %v4155, 2147483648
    %v4180 = vmul.f32 %v4179, 1.442695
    %v4181 = vpow.pop %v4180
    %v4182 = vadd.f32 %v4181, 1.0
    %v4183 = vrcp.pop %v4182
    %v4184 = vmul.f32 %v4182, %v4183
    %v4185 = vsub.f32 1.0, %v4184
    %v4186 = vmul.f32 %v4183, %v4185
    %v4187 = vadd.f32 %v4183, %v4186
    %vm4188 = vweird.f32 %v4182
    %vm4189 = vweird.f32 %v4183
    %vm4190 = vmor %vm4188, %vm4189
    %v4191 = vsel %vm4190, %v4183, %v4187
    %v4192 = vand.u32 2147483647, %v4182
    %vm4193 = vcmp.eq.f32.partialorder %v4192, 8.507059e+37
    %v4194 = vand.u32 %v4182, 2147483648
    %v4195 = vor.u32 1.1754944e-38, %v4194
    %v4196 = vsel %vm4193, %v4195, %v4191
    %v4197 = vmul.f32 1.0, %v4196
    %v4198 = vxor.u32 %v4156, 2147483648
    %v4199 = vmul.f32 %v4198, 1.442695
    %v4200 = vpow.pop %v4199
    %v4201 = vadd.f32 %v4200, 1.0
    %v4202 = vrcp.pop %v4201
    %v4203 = vmul.f32 %v4201, %v4202
    %v4204 = vsub.f32 1.0, %v4203
    %v4205 = vmul.f32 %v4202, %v4204
    %v4206 = vadd.f32 %v4202, %v4205
    %vm4207 = vweird.f32 %v4201
    %vm4208 = vweird.f32 %v4202
    %vm4209 = vmor %vm4207, %vm4208
    %v4210 = vsel %vm4209, %v4202, %v4206
    %v4211 = vand.u32 2147483647, %v4201
    %vm4212 = vcmp.eq.f32.partialorder %v4211, 8.507059e+37
    %v4213 = vand.u32 %v4201, 2147483648
    %v4214 = vor.u32 1.1754944e-38, %v4213
    %v4215 = vsel %vm4212, %v4214, %v4210
    %v4216 = vmul.f32 1.0, %v4215
    %v4217 = vtanh.pop %v4157
    %v4218 = vxor.u32 %v4158, 2147483648
    %v4219 = vmul.f32 %v4218, 1.442695
    %v4220 = vpow.pop %v4219
    %v4221 = vadd.f32 %v4220, 1.0
    %v4222 = vrcp.pop %v4221
    %v4223 = vmul.f32 %v4221, %v4222
    %v4224 = vsub.f32 1.0, %v4223
    %v4225 = vmul.f32 %v4222, %v4224
    %v4226 = vadd.f32 %v4222, %v4225
    %vm4227 = vweird.f32 %v4221
    %vm4228 = vweird.f32 %v4222
    %vm4229 = vmor %vm4227, %vm4228
    %v4230 = vsel %vm4229, %v4222, %v4226
    %v4231 = vand.u32 2147483647, %v4221
    %vm4232 = vcmp.eq.f32.partialorder %v4231, 8.507059e+37
    %v4233 = vand.u32 %v4221, 2147483648
    %v4234 = vor.u32 1.1754944e-38, %v4233
    %v4235 = vsel %vm4232, %v4234, %v4230
    %v4236 = vmul.f32 1.0, %v4235
    %v4237 = vmul.f32 %v4216, %v3746
    %v4238 = vmul.f32 %v4197, %v4217
    %v4239 = vadd.f32 %v4237, %v4238
    %v4240 = vtanh.pop %v4239
    %v4241 = vmul.f32 %v4236, %v4240
    %v4242 = vxor.u32 %v4175, 2147483648
    %v4243 = vmul.f32 %v4242, 1.442695
    %v4244 = vpow.pop %v4243
    %v4245 = vadd.f32 %v4244, 1.0
    %v4246 = vrcp.pop %v4245
    %v4247 = vmul.f32 %v4245, %v4246
    %v4248 = vsub.f32 1.0, %v4247
    %v4249 = vmul.f32 %v4246, %v4248
    %v4250 = vadd.f32 %v4246, %v4249
    %vm4251 = vweird.f32 %v4245
    %vm4252 = vweird.f32 %v4246
    %vm4253 = vmor %vm4251, %vm4252
    %v4254 = vsel %vm4253, %v4246, %v4250
    %v4255 = vand.u32 2147483647, %v4245
    %vm4256 = vcmp.eq.f32.partialorder %v4255, 8.507059e+37
    %v4257 = vand.u32 %v4245, 2147483648
    %v4258 = vor.u32 1.1754944e-38, %v4257
    %v4259 = vsel %vm4256, %v4258, %v4254
    %v4260 = vmul.f32 1.0, %v4259
    %v4261 = vxor.u32 %v4176, 2147483648
    %v4262 = vmul.f32 %v4261, 1.442695
    %v4263 = vpow.pop %v4262
    %v4264 = vadd.f32 %v4263, 1.0
    %v4265 = vrcp.pop %v4264
    %v4266 = vmul.f32 %v4264, %v4265
    %v4267 = vsub.f32 1.0, %v4266
    %v4268 = vmul.f32 %v4265, %v4267
    %v4269 = vadd.f32 %v4265, %v4268
    %vm4270 = vweird.f32 %v4264
    %vm4271 = vweird.f32 %v4265
    %vm4272 = vmor %vm4270, %vm4271
    %v4273 = vsel %vm4272, %v4265, %v4269
    %v4274 = vand.u32 2147483647, %v4264
    %vm4275 = vcmp.eq.f32.partialorder %v4274, 8.507059e+37
    %v4276 = vand.u32 %v4264, 2147483648
    %v4277 = vor.u32 1.1754944e-38, %v4276
    %v4278 = vsel %vm4275, %v4277, %v4273
    %v4279 = vmul.f32 1.0, %v4278
    %v4280 = vtanh.pop %v4177
    %v4281 = vxor.u32 %v4178, 2147483648
    %v4282 = vmul.f32 %v4281, 1.442695
    %v4283 = vpow.pop %v4282
    %v4284 = vadd.f32 %v4283, 1.0
    %v4285 = vrcp.pop %v4284
    %v4286 = vmul.f32 %v4284, %v4285
    %v4287 = vsub.f32 1.0, %v4286
    %v4288 = vmul.f32 %v4285, %v4287
    %v4289 = vadd.f32 %v4285, %v4288
    %vm4290 = vweird.f32 %v4284
    %vm4291 = vweird.f32 %v4285
    %vm4292 = vmor %vm4290, %vm4291
    %v4293 = vsel %vm4292, %v4285, %v4289
    %v4294 = vand.u32 2147483647, %v4284
    %vm4295 = vcmp.eq.f32.partialorder %v4294, 8.507059e+37
    %v4296 = vand.u32 %v4284, 2147483648
    %v4297 = vor.u32 1.1754944e-38, %v4296
    %v4298 = vsel %vm4295, %v4297, %v4293
    %v4299 = vmul.f32 1.0, %v4298
    %v4300 = vmul.f32 %v4279, %v3809
    %v4301 = vmul.f32 %v4260, %v4280
    %v4302 = vadd.f32 %v4300, %v4301
    %v4303 = vtanh.pop %v4302
    %v4304 = vmul.f32 %v4299, %v4303
    %v4307 = vrot.slane %v4304, 6
    %v4308 = vsel %vm850, %v4241, %v4307
    %v4310 = vadd.f32 %v3817, %v4308
    %4311 = vst [vmem:[#allocation2] sm:$0xf] %v4308
    %4312 = vst [vmem:[#allocation3] sm:$0x3] %v4239
    %4313 = vst [vmem:[#allocation4] sm:$0x3] %v4302
    %4314 = vst [vmem:[#allocation5] sm:$0xf] %v4310
    // Predicated region
    $region64: #{bert_lstm_cnn_forward.3} parent=1 // pred_check
      %p4315 = pneg %p86
    $region65: #{bert_lstm_cnn_forward.3} parent=1 // pred_check_branch
      %4317 = sbr.rel (%p4315) target = $region67
    $region66: #{bert_lstm_cnn_forward.3} parent=1 // pred_region
      %4318 = vst [vmem:[#allocation6] sm:$0xf] %v851
      %4319 = vst [vmem:[%s3] sm:$0xf] %v4310
      %s4320 = scalar_lea.vmem %s3, 4
      %4321 = vst [vmem:[%s4320] sm:$0xf] %v4308
      %v4322 = vld [vmem:[#allocation6] sm:$0xf]
      %s4323 = scalar_lea.vmem %s3, 8
      %4324 = vst [vmem:[%s4323] sm:$0xf] %v4322
    $region67: #{bert_lstm_cnn_forward.3} parent=1 // pred_fallthru
      _
    // Predicated region
    $region68: #{bert_lstm_cnn_forward.3} parent=1 // pred_check
      _
    $region69: #{bert_lstm_cnn_forward.3} parent=1 // pred_check_branch
      %4326 = sbr.rel (0) target = $region71
    $region70: #{bert_lstm_cnn_forward.3} parent=1 // pred_region
      _
    $region71: #{bert_lstm_cnn_forward.3} parent=1 // pred_fallthru
      _
    // Predicated region
    $region72: #{bert_lstm_cnn_forward.3} parent=1 // pred_check
      _
    $region73: #{bert_lstm_cnn_forward.3} parent=1 // pred_check_branch
      %4328 = sbr.rel (0) target = $region75
    $region74: #{bert_lstm_cnn_forward.3} parent=1 // pred_region
      _
    $region75: #{bert_lstm_cnn_forward.3} parent=1 // pred_fallthru
      _

</llo_original>
